<compile_context>
chip_gen: v6e
topology: v6e:2x2x1
jax: 0.10.0
libtpu: 0.0.40
codegen_flags: <defaults>
</compile_context>

<pallas_src>
import functools

import jax
import jax.numpy as jnp
from jax.experimental import pallas as pl
from jax.experimental.pallas import tpu as pltpu

IMAGE_SIZE = 784
H_DIM = 400
Z_DIM = 20

# Lane-padded (multiples of 128) feature dims.
IMAGE_PAD = 896   # 7 * 128
H_PAD = 512       # 4 * 128
Z_PAD = 128       # 1 * 128


def _round_up(n, m):
    return ((n + m - 1) // m) * m


def _pick_batch_tile():
    """Per-generation batch tile: large enough to fill the MXU M dimension and
    amortize per-grid-step overhead, small enough to stay well inside VMEM on
    v7x (64 MiB) and to leave >=2 grid steps for its two TensorCores."""
    try:
        kind = jax.devices()[0].device_kind.lower()
    except Exception:
        return 256
    if "v6" in kind:      # 128 MiB VMEM, single TC -> go bigger
        return 512
    return 256            # v5e / v7x / other


def _autoencoder_kernel(x_ref,
                        w1_ref, b1_ref,
                        w2_ref, b2_ref,
                        w3_ref, b3_ref,
                        w4_ref, b4_ref,
                        out_ref):
    # bf16 operands on the MXU, f32 accumulation; elementwise path stays f32.
    x = x_ref[...]
    b1 = b1_ref[...]
    b2 = b2_ref[...]
    b3 = b3_ref[...]
    b4 = b4_ref[...]

    # encoder: Linear(784,400) -> ReLU -> Linear(400,20)
    h = jnp.dot(x, w1_ref[...], preferred_element_type=jnp.float32) + b1
    h = jnp.maximum(h, 0.0).astype(jnp.bfloat16)
    z = jnp.dot(h, w2_ref[...], preferred_element_type=jnp.float32) + b2
    z = z.astype(jnp.bfloat16)

    # decoder: Linear(20,400) -> ReLU -> Linear(400,784) -> Sigmoid
    d = jnp.dot(z, w3_ref[...], preferred_element_type=jnp.float32) + b3
    d = jnp.maximum(d, 0.0).astype(jnp.bfloat16)
    y = jnp.dot(d, w4_ref[...], preferred_element_type=jnp.float32) + b4
    out_ref[...] = jax.nn.sigmoid(y).astype(out_ref.dtype)


def _pad2(a, rows, cols, dtype=None):
    a = jnp.pad(a, ((0, rows - a.shape[0]), (0, cols - a.shape[1])))
    return a if dtype is None else a.astype(dtype)


def autoencoder_forward(x, params, *, batch_tile=None):
    """x: (B, 784) float32. Returns reconstruction (B, 784) float32."""
    (w1, b1), (w2, b2), (w3, b3), (w4, b4) = params
    if batch_tile is None:
        batch_tile = _pick_batch_tile()

    B = x.shape[0]
    Bp = _round_up(max(B, batch_tile), batch_tile)

    # Zero-pad every feature dim to a lane multiple; the padded rows/cols are
    # exactly zero so the dots are unchanged, and padded output columns/rows are
    # sliced off below. Weights (and x) are cast to bf16; biases stay f32.
    w1p = _pad2(w1, IMAGE_PAD, H_PAD, jnp.bfloat16)
    w2p = _pad2(w2, H_PAD, Z_PAD, jnp.bfloat16)
    w3p = _pad2(w3, Z_PAD, H_PAD, jnp.bfloat16)
    w4p = _pad2(w4, H_PAD, IMAGE_PAD, jnp.bfloat16)
    b1p = _pad2(b1, 1, H_PAD)
    b2p = _pad2(b2, 1, Z_PAD)
    b3p = _pad2(b3, 1, H_PAD)
    b4p = _pad2(b4, 1, IMAGE_PAD)
    xp = _pad2(x, Bp, IMAGE_PAD, jnp.bfloat16)

    grid = (Bp // batch_tile,)

    def x_map(i):
        return (i, 0)

    def full_map(i):
        return (0, 0)

    flops = 2 * Bp * (IMAGE_PAD * H_PAD + H_PAD * Z_PAD
                      + Z_PAD * H_PAD + H_PAD * IMAGE_PAD)
    weight_bytes = (sum(int(w.size) * 2 for w in (w1p, w2p, w3p, w4p))
                    + sum(int(b.size) * 4 for b in (b1p, b2p, b3p, b4p)))
    bytes_accessed = int(xp.size) * 2 + Bp * IMAGE_PAD * 4 + weight_bytes

    out = pl.pallas_call(
        _autoencoder_kernel,
        out_shape=jax.ShapeDtypeStruct((Bp, IMAGE_PAD), jnp.float32),
        grid_spec=pltpu.PrefetchScalarGridSpec(
            num_scalar_prefetch=0,
            grid=grid,
            in_specs=[
                pl.BlockSpec((batch_tile, IMAGE_PAD), x_map),      # x
                pl.BlockSpec((IMAGE_PAD, H_PAD), full_map),        # W1
                pl.BlockSpec((1, H_PAD), full_map),                # b1
                pl.BlockSpec((H_PAD, Z_PAD), full_map),            # W2
                pl.BlockSpec((1, Z_PAD), full_map),                # b2
                pl.BlockSpec((Z_PAD, H_PAD), full_map),            # W3
                pl.BlockSpec((1, H_PAD), full_map),                # b3
                pl.BlockSpec((H_PAD, IMAGE_PAD), full_map),        # W4
                pl.BlockSpec((1, IMAGE_PAD), full_map),            # b4
            ],
            out_specs=pl.BlockSpec((batch_tile, IMAGE_PAD), x_map),
        ),
        compiler_params=pltpu.CompilerParams(
            dimension_semantics=("parallel",),
            vmem_limit_bytes=48 * 1024 * 1024,
        ),
        cost_estimate=pl.CostEstimate(
            flops=flops,
            transcendentals=Bp * IMAGE_PAD,      # sigmoid exp
            bytes_accessed=bytes_accessed,
        ),
    )(xp, w1p, b1p, w2p, b2p, w3p, b3p, w4p, b4p)

    return out[:B, :IMAGE_SIZE]


def init_params(key):
    """Synthetic nn.Linear-style parameters, stored transposed as (in, out);
    biases kept 2-D (1, out) for the kernel."""
    def linear(key, fan_in, fan_out):
        kw, kb = jax.random.split(key)
        bound = 1.0 / jnp.sqrt(fan_in)
        w = jax.random.uniform(kw, (fan_in, fan_out), jnp.float32, -bound, bound)
        b = jax.random.uniform(kb, (1, fan_out), jnp.float32, -bound, bound)
        return w, b

    k1, k2, k3, k4 = jax.random.split(key, 4)
    return (
        linear(k1, IMAGE_SIZE, H_DIM),
        linear(k2, H_DIM, Z_DIM),
        linear(k3, Z_DIM, H_DIM),
        linear(k4, H_DIM, IMAGE_SIZE),
    )


def reference_forward(x, params, *, matmul_dtype=jnp.float32):
    (w1, b1), (w2, b2), (w3, b3), (w4, b4) = params

    def mm(a, w):
        return jnp.dot(a.astype(matmul_dtype), w.astype(matmul_dtype),
                       preferred_element_type=jnp.float32)

    h = jnp.maximum(mm(x, w1) + b1, 0.0)
    z = mm(h, w2) + b2
    d = jnp.maximum(mm(z, w3) + b3, 0.0)
    return jax.nn.sigmoid(mm(d, w4) + b4)


if __name__ == "__main__":
    key = jax.random.PRNGKey(0)
    kp, kx = jax.random.split(key)

    params = init_params(kp)
    batch = 300   # not a multiple of the batch tile: exercises row padding/slicing
    x = jax.random.uniform(kx, (batch, IMAGE_SIZE), jnp.float32)  # "flattened images"

    fwd = jax.jit(functools.partial(autoencoder_forward, params=params))
    out = jax.block_until_ready(fwd(x))
    assert out.shape == (batch, IMAGE_SIZE)

    # Reference mimicking the kernel numerics (bf16 matmul operands, f32 accumulate).
    ref_bf16 = reference_forward(x, params, matmul_dtype=jnp.bfloat16)
    assert jnp.allclose(out, ref_bf16, atol=5e-3, rtol=0.0), "mismatch vs bf16 reference"

    # Full-f32 reference: only bf16 rounding error expected on the sigmoid output.
    ref_f32 = reference_forward(x, params)
    assert jnp.allclose(out, ref_f32, atol=5e-2, rtol=0.0), "mismatch vs f32 reference"

    print("KERNEL_OK")
</pallas_src>

<mosaic_0001>
module attributes {stable_mosaic.version = 11 : i64} {
  func.func @_autoencoder_kernel(%arg0: i32, %arg1: memref<256x896xbf16, #tpu.memory_space<vmem>>, %arg2: memref<896x512xbf16, #tpu.memory_space<vmem>>, %arg3: memref<1x512xf32, #tpu.memory_space<vmem>>, %arg4: memref<512x128xbf16, #tpu.memory_space<vmem>>, %arg5: memref<1x128xf32, #tpu.memory_space<vmem>>, %arg6: memref<128x512xbf16, #tpu.memory_space<vmem>>, %arg7: memref<1x512xf32, #tpu.memory_space<vmem>>, %arg8: memref<512x896xbf16, #tpu.memory_space<vmem>>, %arg9: memref<1x896xf32, #tpu.memory_space<vmem>>, %arg10: memref<256x896xf32, #tpu.memory_space<vmem>>) attributes {dimension_semantics = [#tpu.dimension_semantics<parallel>], iteration_bounds = array<i64: 2>, scalar_prefetch = 0 : i64, scratch_operands = 0 : i64, tpu.core_type = #tpu.core_type<tc>, window_params = [{transform_indices = @transform_0, window_bounds = array<i64: 256, 896>}, {pipeline_mode = #tpu.pipeline_mode<synchronous>, transform_indices = @transform_1, window_bounds = array<i64: 896, 512>}, {pipeline_mode = #tpu.pipeline_mode<synchronous>, transform_indices = @transform_2, window_bounds = array<i64: 1, 512>}, {pipeline_mode = #tpu.pipeline_mode<synchronous>, transform_indices = @transform_3, window_bounds = array<i64: 512, 128>}, {pipeline_mode = #tpu.pipeline_mode<synchronous>, transform_indices = @transform_4, window_bounds = array<i64: 1, 128>}, {pipeline_mode = #tpu.pipeline_mode<synchronous>, transform_indices = @transform_5, window_bounds = array<i64: 128, 512>}, {pipeline_mode = #tpu.pipeline_mode<synchronous>, transform_indices = @transform_6, window_bounds = array<i64: 1, 512>}, {pipeline_mode = #tpu.pipeline_mode<synchronous>, transform_indices = @transform_7, window_bounds = array<i64: 512, 896>}, {pipeline_mode = #tpu.pipeline_mode<synchronous>, transform_indices = @transform_8, window_bounds = array<i64: 1, 896>}, {transform_indices = @transform_9, window_bounds = array<i64: 256, 896>}]} {
    %c0 = arith.constant 0 : index
    %c0_0 = arith.constant 0 : index
    %0 = vector.load %arg1[%c0, %c0_0] : memref<256x896xbf16, #tpu.memory_space<vmem>>, vector<256x896xbf16>
    %c0_1 = arith.constant 0 : index
    %c0_2 = arith.constant 0 : index
    %1 = vector.load %arg3[%c0_1, %c0_2] : memref<1x512xf32, #tpu.memory_space<vmem>>, vector<1x512xf32>
    %c0_3 = arith.constant 0 : index
    %c0_4 = arith.constant 0 : index
    %2 = vector.load %arg5[%c0_3, %c0_4] : memref<1x128xf32, #tpu.memory_space<vmem>>, vector<1x128xf32>
    %c0_5 = arith.constant 0 : index
    %c0_6 = arith.constant 0 : index
    %3 = vector.load %arg7[%c0_5, %c0_6] : memref<1x512xf32, #tpu.memory_space<vmem>>, vector<1x512xf32>
    %c0_7 = arith.constant 0 : index
    %c0_8 = arith.constant 0 : index
    %4 = vector.load %arg9[%c0_7, %c0_8] : memref<1x896xf32, #tpu.memory_space<vmem>>, vector<1x896xf32>
    %c0_9 = arith.constant 0 : index
    %c0_10 = arith.constant 0 : index
    %5 = vector.load %arg2[%c0_9, %c0_10] : memref<896x512xbf16, #tpu.memory_space<vmem>>, vector<896x512xbf16>
    %cst = arith.constant dense<0.000000e+00> : vector<256x512xf32>
    %6 = tpu.matmul %0, %5, %cst {dimension_numbers = #tpu.dot_dimension_numbers<[1], [0], [0], [1], [0, 0, 1, 1], [], []>} : vector<256x896xbf16>, vector<896x512xbf16>, vector<256x512xf32> -> vector<256x512xf32>
    %7 = vector.broadcast %1 : vector<1x512xf32> to vector<256x512xf32>
    %8 = arith.addf %6, %7 : vector<256x512xf32>
    %cst_11 = arith.constant 0.000000e+00 : f32
    %9 = vector.broadcast %cst_11 : f32 to vector<256x512xf32>
    %10 = arith.maximumf %8, %9 : vector<256x512xf32>
    %11 = arith.truncf %10 : vector<256x512xf32> to vector<256x512xbf16>
    %c0_12 = arith.constant 0 : index
    %c0_13 = arith.constant 0 : index
    %12 = vector.load %arg4[%c0_12, %c0_13] : memref<512x128xbf16, #tpu.memory_space<vmem>>, vector<512x128xbf16>
    %cst_14 = arith.constant dense<0.000000e+00> : vector<256x128xf32>
    %13 = tpu.matmul %11, %12, %cst_14 {dimension_numbers = #tpu.dot_dimension_numbers<[1], [0], [0], [1], [0, 0, 1, 1], [], []>} : vector<256x512xbf16>, vector<512x128xbf16>, vector<256x128xf32> -> vector<256x128xf32>
    %14 = vector.broadcast %2 : vector<1x128xf32> to vector<256x128xf32>
    %15 = arith.addf %13, %14 : vector<256x128xf32>
    %16 = arith.truncf %15 : vector<256x128xf32> to vector<256x128xbf16>
    %c0_15 = arith.constant 0 : index
    %c0_16 = arith.constant 0 : index
    %17 = vector.load %arg6[%c0_15, %c0_16] : memref<128x512xbf16, #tpu.memory_space<vmem>>, vector<128x512xbf16>
    %cst_17 = arith.constant dense<0.000000e+00> : vector<256x512xf32>
    %18 = tpu.matmul %16, %17, %cst_17 {dimension_numbers = #tpu.dot_dimension_numbers<[1], [0], [0], [1], [0, 0, 1, 1], [], []>} : vector<256x128xbf16>, vector<128x512xbf16>, vector<256x512xf32> -> vector<256x512xf32>
    %19 = vector.broadcast %3 : vector<1x512xf32> to vector<256x512xf32>
    %20 = arith.addf %18, %19 : vector<256x512xf32>
    %cst_18 = arith.constant 0.000000e+00 : f32
    %21 = vector.broadcast %cst_18 : f32 to vector<256x512xf32>
    %22 = arith.maximumf %20, %21 : vector<256x512xf32>
    %23 = arith.truncf %22 : vector<256x512xf32> to vector<256x512xbf16>
    %c0_19 = arith.constant 0 : index
    %c0_20 = arith.constant 0 : index
    %24 = vector.load %arg8[%c0_19, %c0_20] : memref<512x896xbf16, #tpu.memory_space<vmem>>, vector<512x896xbf16>
    %cst_21 = arith.constant dense<0.000000e+00> : vector<256x896xf32>
    %25 = tpu.matmul %23, %24, %cst_21 {dimension_numbers = #tpu.dot_dimension_numbers<[1], [0], [0], [1], [0, 0, 1, 1], [], []>} : vector<256x512xbf16>, vector<512x896xbf16>, vector<256x896xf32> -> vector<256x896xf32>
    %26 = vector.broadcast %4 : vector<1x896xf32> to vector<256x896xf32>
    %27 = arith.addf %25, %26 : vector<256x896xf32>
    %28 = arith.negf %27 : vector<256x896xf32>
    %29 = math.exp %28 : vector<256x896xf32>
    %cst_22 = arith.constant 1.000000e+00 : f32
    %30 = vector.broadcast %cst_22 : f32 to vector<256x896xf32>
    %31 = arith.addf %30, %29 : vector<256x896xf32>
    %32 = arith.divf %30, %31 : vector<256x896xf32>
    %c0_23 = arith.constant 0 : index
    %c0_24 = arith.constant 0 : index
    %33 = vector.load %arg10[%c0_23, %c0_24] : memref<256x896xf32, #tpu.memory_space<vmem>>, vector<256x896xf32>
    tpu.vector_store %arg10[%c0_23, %c0_24], %32 {strides = array<i32>} : memref<256x896xf32, #tpu.memory_space<vmem>>, vector<256x896xf32>,
    return
  }
  func.func @transform_0(%arg0: i32) -> (i32, i32) {
    %c0_i32 = arith.constant 0 : i32
    %c0_i32_0 = arith.constant 0 : i32
    return %arg0, %c0_i32 : i32, i32
  }
  func.func @transform_1(%arg0: i32) -> (i32, i32) {
    %c0_i32 = arith.constant 0 : i32
    %c0_i32_0 = arith.constant 0 : i32
    %c0_i32_1 = arith.constant 0 : i32
    return %c0_i32, %c0_i32_0 : i32, i32
  }
  func.func @transform_2(%arg0: i32) -> (i32, i32) {
    %c0_i32 = arith.constant 0 : i32
    %c0_i32_0 = arith.constant 0 : i32
    %c0_i32_1 = arith.constant 0 : i32
    return %c0_i32, %c0_i32_0 : i32, i32
  }
  func.func @transform_3(%arg0: i32) -> (i32, i32) {
    %c0_i32 = arith.constant 0 : i32
    %c0_i32_0 = arith.constant 0 : i32
    %c0_i32_1 = arith.constant 0 : i32
    return %c0_i32, %c0_i32_0 : i32, i32
  }
  func.func @transform_4(%arg0: i32) -> (i32, i32) {
    %c0_i32 = arith.constant 0 : i32
    %c0_i32_0 = arith.constant 0 : i32
    %c0_i32_1 = arith.constant 0 : i32
    return %c0_i32, %c0_i32_0 : i32, i32
  }
  func.func @transform_5(%arg0: i32) -> (i32, i32) {
    %c0_i32 = arith.constant 0 : i32
    %c0_i32_0 = arith.constant 0 : i32
    %c0_i32_1 = arith.constant 0 : i32
    return %c0_i32, %c0_i32_0 : i32, i32
  }
  func.func @transform_6(%arg0: i32) -> (i32, i32) {
    %c0_i32 = arith.constant 0 : i32
    %c0_i32_0 = arith.constant 0 : i32
    %c0_i32_1 = arith.constant 0 : i32
    return %c0_i32, %c0_i32_0 : i32, i32
  }
  func.func @transform_7(%arg0: i32) -> (i32, i32) {
    %c0_i32 = arith.constant 0 : i32
    %c0_i32_0 = arith.constant 0 : i32
    %c0_i32_1 = arith.constant 0 : i32
    return %c0_i32, %c0_i32_0 : i32, i32
  }
  func.func @transform_8(%arg0: i32) -> (i32, i32) {
    %c0_i32 = arith.constant 0 : i32
    %c0_i32_0 = arith.constant 0 : i32
    %c0_i32_1 = arith.constant 0 : i32
    return %c0_i32, %c0_i32_0 : i32, i32
  }
  func.func @transform_9(%arg0: i32) -> (i32, i32) {
    %c0_i32 = arith.constant 0 : i32
    %c0_i32_0 = arith.constant 0 : i32
    return %arg0, %c0_i32 : i32, i32
  }
}

</mosaic_0001>

<llo_original>
// kernel: autoencoder_forward.1
$region0: #{autoencoder_forward.1}
  #allocation0 [shape = 'u32[]', space=smem, size = 0x4, offset = 0x4, fixed_abs, tag = 'smem constant byte address 0x4 - core index']
  #allocation1 [shape = 'u32[144,128]{1,0:T(1,128)}', space=vmem, size = 0x12000, scoped, tag = 'internal scratch']
  %s0 = inlined_call_operand.vmem [shape: bf16[512,896], index: 0, kind: input, shape index: {}]
  %s1 = inlined_call_operand.vmem [shape: bf16[896,512], index: 1, kind: input, shape index: {}]
  %s2 = inlined_call_operand.vmem [shape: f32[1,512], index: 2, kind: input, shape index: {}]
  %s3 = inlined_call_operand.vmem [shape: bf16[512,128], index: 3, kind: input, shape index: {}]
  %s4 = inlined_call_operand.vmem [shape: f32[1,128], index: 4, kind: input, shape index: {}]
  %s5 = inlined_call_operand.vmem [shape: bf16[128,512], index: 5, kind: input, shape index: {}]
  %s6 = inlined_call_operand.vmem [shape: f32[1,512], index: 6, kind: input, shape index: {}]
  %s7 = inlined_call_operand.vmem [shape: bf16[512,896], index: 7, kind: input, shape index: {}]
  %s8 = inlined_call_operand.vmem [shape: f32[1,896], index: 8, kind: input, shape index: {}]
  %s9 = inlined_call_operand.vmem [shape: f32[512,896], index: 9, kind: output, shape index: {}]
  %s10 = sld [smem:[#allocation0]]
  $region69: #{autoencoder_forward.1} parent=0
    _
  %s12 = ssub.s32 1, %s10
  %s13 = scalar_select 0, %s12, %s10
  loop: start=0, step=1, limit=4
  $region2: #{autoencoder_forward.1} parent=0 // loop_pre_header
    _
  $region3: #{autoencoder_forward.1} parent=0 // loop_header
    %s15 = sphi 0, %s19
    %p16 = scmp.ge.s32.totalorder %s15, 4
    %s25 = sphi 0, %s27
    %s28 = sphi 0, %s25
    %s29 = sphi 0, %s28
    %s45 = sphi 0, %s29
    %s49 = sphi 0, %s49
    %s51 = sphi 0, %s49
    %s52 = sphi 0, %s51
    %s66 = sphi 0, %s52
    %s70 = sphi 0, %s70
    %s72 = sphi 0, %s70
    %s73 = sphi 0, %s72
    %s87 = sphi 0, %s73
    %s91 = sphi 0, %s91
    %s93 = sphi 0, %s91
    %s94 = sphi 0, %s93
    %s108 = sphi 0, %s94
    %s112 = sphi 0, %s112
    %s114 = sphi 0, %s112
    %s115 = sphi 0, %s114
    %s129 = sphi 0, %s115
    %s133 = sphi 0, %s133
    %s135 = sphi 0, %s133
    %s136 = sphi 0, %s135
    %s150 = sphi 0, %s136
    %s154 = sphi 0, %s154
    %s156 = sphi 0, %s154
    %s157 = sphi 0, %s156
    %s171 = sphi 0, %s157
    %s175 = sphi 0, %s175
    %s177 = sphi 0, %s175
    %s178 = sphi 0, %s177
    %s192 = sphi 0, %s178
    %s196 = sphi 0, %s196
    %s198 = sphi 0, %s196
    %s199 = sphi 0, %s198
    %s213 = sphi 0, %s199
    %s219 = sphi 0, %s221
    %s222 = sphi 0, %s219
    %s223 = sphi 0, %s222
    %s239 = sphi 0, %s223
  $region4: #{autoencoder_forward.1} parent=0 // loop_header_branch
    %18 = sbr.rel (%p16) target = $region8
  $region5: #{autoencoder_forward.1} parent=0 // loop_body
    %s20 = ssub.s32 %s15, 1
    %s21 = ssub.s32 %s15, 2
    %s22 = sadd.s32 %s15, 1
    %s23 = ssub.s32 %s15, %s22
    %p24 = scmp.eq.s32.totalorder %s23, 0
    %s26 = sadd.s32 %s25, 1
    %s27 = scalar_select %p24, %s25, %s26
    %p30 = pneg %p24
    %p31 = scmp.eq.s32.totalorder %s15, 1
    %p32 = por %p30, %p31
    %p33 = scmp.ne.s32.totalorder %s25, %s28
    %p34 = scmp.eq.s32.totalorder %s15, 0
    %p35 = por %p33, %p34
    %p36 = scmp.ne.s32.totalorder %s25, %s28
    %p37 = scmp.eq.s32.totalorder %s20, 1
    %p38 = por %p36, %p37
    %p39 = scmp.ne.s32.totalorder %s28, %s29
    %p40 = scmp.eq.s32.totalorder %s20, 0
    %p41 = por %p39, %p40
    %p42 = scmp.ne.s32.totalorder %s28, %s29
    %p43 = scmp.eq.s32.totalorder %s21, 1
    %p44 = por %p42, %p43
    %p46 = scmp.ne.s32.totalorder %s29, %s45
    %p47 = scmp.eq.s32.totalorder %s21, 0
    %p48 = por %p46, %p47
    %s50 = sadd.s32 %s49, 1
    %p53 = scmp.eq.s32.totalorder %s15, 1
    %p54 = scmp.ne.s32.totalorder %s49, %s51
    %p55 = scmp.eq.s32.totalorder %s15, 0
    %p56 = por %p54, %p55
    %p57 = scmp.ne.s32.totalorder %s49, %s51
    %p58 = scmp.eq.s32.totalorder %s20, 1
    %p59 = por %p57, %p58
    %p60 = scmp.ne.s32.totalorder %s51, %s52
    %p61 = scmp.eq.s32.totalorder %s20, 0
    %p62 = por %p60, %p61
    %p63 = scmp.ne.s32.totalorder %s51, %s52
    %p64 = scmp.eq.s32.totalorder %s21, 1
    %p65 = por %p63, %p64
    %p67 = scmp.ne.s32.totalorder %s52, %s66
    %p68 = scmp.eq.s32.totalorder %s21, 0
    %p69 = por %p67, %p68
    %s71 = sadd.s32 %s70, 1
    %p74 = scmp.eq.s32.totalorder %s15, 1
    %p75 = scmp.ne.s32.totalorder %s70, %s72
    %p76 = scmp.eq.s32.totalorder %s15, 0
    %p77 = por %p75, %p76
    %p78 = scmp.ne.s32.totalorder %s70, %s72
    %p79 = scmp.eq.s32.totalorder %s20, 1
    %p80 = por %p78, %p79
    %p81 = scmp.ne.s32.totalorder %s72, %s73
    %p82 = scmp.eq.s32.totalorder %s20, 0
    %p83 = por %p81, %p82
    %p84 = scmp.ne.s32.totalorder %s72, %s73
    %p85 = scmp.eq.s32.totalorder %s21, 1
    %p86 = por %p84, %p85
    %p88 = scmp.ne.s32.totalorder %s73, %s87
    %p89 = scmp.eq.s32.totalorder %s21, 0
    %p90 = por %p88, %p89
    %s92 = sadd.s32 %s91, 1
    %p95 = scmp.eq.s32.totalorder %s15, 1
    %p96 = scmp.ne.s32.totalorder %s91, %s93
    %p97 = scmp.eq.s32.totalorder %s15, 0
    %p98 = por %p96, %p97
    %p99 = scmp.ne.s32.totalorder %s91, %s93
    %p100 = scmp.eq.s32.totalorder %s20, 1
    %p101 = por %p99, %p100
    %p102 = scmp.ne.s32.totalorder %s93, %s94
    %p103 = scmp.eq.s32.totalorder %s20, 0
    %p104 = por %p102, %p103
    %p105 = scmp.ne.s32.totalorder %s93, %s94
    %p106 = scmp.eq.s32.totalorder %s21, 1
    %p107 = por %p105, %p106
    %p109 = scmp.ne.s32.totalorder %s94, %s108
    %p110 = scmp.eq.s32.totalorder %s21, 0
    %p111 = por %p109, %p110
    %s113 = sadd.s32 %s112, 1
    %p116 = scmp.eq.s32.totalorder %s15, 1
    %p117 = scmp.ne.s32.totalorder %s112, %s114
    %p118 = scmp.eq.s32.totalorder %s15, 0
    %p119 = por %p117, %p118
    %p120 = scmp.ne.s32.totalorder %s112, %s114
    %p121 = scmp.eq.s32.totalorder %s20, 1
    %p122 = por %p120, %p121
    %p123 = scmp.ne.s32.totalorder %s114, %s115
    %p124 = scmp.eq.s32.totalorder %s20, 0
    %p125 = por %p123, %p124
    %p126 = scmp.ne.s32.totalorder %s114, %s115
    %p127 = scmp.eq.s32.totalorder %s21, 1
    %p128 = por %p126, %p127
    %p130 = scmp.ne.s32.totalorder %s115, %s129
    %p131 = scmp.eq.s32.totalorder %s21, 0
    %p132 = por %p130, %p131
    %s134 = sadd.s32 %s133, 1
    %p137 = scmp.eq.s32.totalorder %s15, 1
    %p138 = scmp.ne.s32.totalorder %s133, %s135
    %p139 = scmp.eq.s32.totalorder %s15, 0
    %p140 = por %p138, %p139
    %p141 = scmp.ne.s32.totalorder %s133, %s135
    %p142 = scmp.eq.s32.totalorder %s20, 1
    %p143 = por %p141, %p142
    %p144 = scmp.ne.s32.totalorder %s135, %s136
    %p145 = scmp.eq.s32.totalorder %s20, 0
    %p146 = por %p144, %p145
    %p147 = scmp.ne.s32.totalorder %s135, %s136
    %p148 = scmp.eq.s32.totalorder %s21, 1
    %p149 = por %p147, %p148
    %p151 = scmp.ne.s32.totalorder %s136, %s150
    %p152 = scmp.eq.s32.totalorder %s21, 0
    %p153 = por %p151, %p152
    %s155 = sadd.s32 %s154, 1
    %p158 = scmp.eq.s32.totalorder %s15, 1
    %p159 = scmp.ne.s32.totalorder %s154, %s156
    %p160 = scmp.eq.s32.totalorder %s15, 0
    %p161 = por %p159, %p160
    %p162 = scmp.ne.s32.totalorder %s154, %s156
    %p163 = scmp.eq.s32.totalorder %s20, 1
    %p164 = por %p162, %p163
    %p165 = scmp.ne.s32.totalorder %s156, %s157
    %p166 = scmp.eq.s32.totalorder %s20, 0
    %p167 = por %p165, %p166
    %p168 = scmp.ne.s32.totalorder %s156, %s157
    %p169 = scmp.eq.s32.totalorder %s21, 1
    %p170 = por %p168, %p169
    %p172 = scmp.ne.s32.totalorder %s157, %s171
    %p173 = scmp.eq.s32.totalorder %s21, 0
    %p174 = por %p172, %p173
    %s176 = sadd.s32 %s175, 1
    %p179 = scmp.eq.s32.totalorder %s15, 1
    %p180 = scmp.ne.s32.totalorder %s175, %s177
    %p181 = scmp.eq.s32.totalorder %s15, 0
    %p182 = por %p180, %p181
    %p183 = scmp.ne.s32.totalorder %s175, %s177
    %p184 = scmp.eq.s32.totalorder %s20, 1
    %p185 = por %p183, %p184
    %p186 = scmp.ne.s32.totalorder %s177, %s178
    %p187 = scmp.eq.s32.totalorder %s20, 0
    %p188 = por %p186, %p187
    %p189 = scmp.ne.s32.totalorder %s177, %s178
    %p190 = scmp.eq.s32.totalorder %s21, 1
    %p191 = por %p189, %p190
    %p193 = scmp.ne.s32.totalorder %s178, %s192
    %p194 = scmp.eq.s32.totalorder %s21, 0
    %p195 = por %p193, %p194
    %s197 = sadd.s32 %s196, 1
    %p200 = scmp.eq.s32.totalorder %s15, 1
    %p201 = scmp.ne.s32.totalorder %s196, %s198
    %p202 = scmp.eq.s32.totalorder %s15, 0
    %p203 = por %p201, %p202
    %p204 = scmp.ne.s32.totalorder %s196, %s198
    %p205 = scmp.eq.s32.totalorder %s20, 1
    %p206 = por %p204, %p205
    %p207 = scmp.ne.s32.totalorder %s198, %s199
    %p208 = scmp.eq.s32.totalorder %s20, 0
    %p209 = por %p207, %p208
    %p210 = scmp.ne.s32.totalorder %s198, %s199
    %p211 = scmp.eq.s32.totalorder %s21, 1
    %p212 = por %p210, %p211
    %p214 = scmp.ne.s32.totalorder %s199, %s213
    %p215 = scmp.eq.s32.totalorder %s21, 0
    %p216 = por %p214, %p215
    %s217 = ssub.s32 %s15, %s22
    %p218 = scmp.eq.s32.totalorder %s217, 0
    %s220 = sadd.s32 %s219, 1
    %s221 = scalar_select %p218, %s219, %s220
    %p224 = pneg %p218
    %p225 = scmp.eq.s32.totalorder %s15, 1
    %p226 = por %p224, %p225
    %p227 = scmp.ne.s32.totalorder %s219, %s222
    %p228 = scmp.eq.s32.totalorder %s15, 0
    %p229 = por %p227, %p228
    %p230 = scmp.ne.s32.totalorder %s219, %s222
    %p231 = scmp.eq.s32.totalorder %s20, 1
    %p232 = por %p230, %p231
    %p233 = scmp.ne.s32.totalorder %s222, %s223
    %p234 = scmp.eq.s32.totalorder %s20, 0
    %p235 = por %p233, %p234
    %p236 = scmp.ne.s32.totalorder %s222, %s223
    %p237 = scmp.eq.s32.totalorder %s21, 1
    %p238 = por %p236, %p237
    %p240 = scmp.ne.s32.totalorder %s223, %s239
    %p241 = scmp.eq.s32.totalorder %s21, 0
    %p242 = por %p240, %p241
    %p243 = scmp.le.s32.totalorder 1, %s15
    %p244 = scmp.lt.s32.totalorder %s15, 3
    %p245 = pnand %p243, %p244
    %p246 = pneg %p245
    // Predicated region
    $region9: #{autoencoder_forward.1} parent=5 // pred_check
      _
    $region10: #{autoencoder_forward.1} parent=5 // pred_check_branch
      %248 = sbr.rel (%p245) target = $region12
    $region11: #{autoencoder_forward.1} parent=5 // pred_region
      %s249 = ssub.s32 %s15, 1
      // Predicated region
      $region13: #{autoencoder_forward.1} parent=11 // pred_check
        %p250 = pneg %p62
      $region14: #{autoencoder_forward.1} parent=11 // pred_check_branch
        %252 = sbr.rel (%p250) target = $region16
      $region15: #{autoencoder_forward.1} parent=11 // pred_region
        _
      $region16: #{autoencoder_forward.1} parent=11 // pred_fallthru
        _
      // Predicated region
      $region17: #{autoencoder_forward.1} parent=11 // pred_check
        %p253 = pneg %p83
      $region18: #{autoencoder_forward.1} parent=11 // pred_check_branch
        %255 = sbr.rel (%p253) target = $region20
      $region19: #{autoencoder_forward.1} parent=11 // pred_region
        _
      $region20: #{autoencoder_forward.1} parent=11 // pred_fallthru
        _
      // Predicated region
      $region21: #{autoencoder_forward.1} parent=11 // pred_check
        %p256 = pneg %p104
      $region22: #{autoencoder_forward.1} parent=11 // pred_check_branch
        %258 = sbr.rel (%p256) target = $region24
      $region23: #{autoencoder_forward.1} parent=11 // pred_region
        _
      $region24: #{autoencoder_forward.1} parent=11 // pred_fallthru
        _
      // Predicated region
      $region25: #{autoencoder_forward.1} parent=11 // pred_check
        %p259 = pneg %p125
      $region26: #{autoencoder_forward.1} parent=11 // pred_check_branch
        %261 = sbr.rel (%p259) target = $region28
      $region27: #{autoencoder_forward.1} parent=11 // pred_region
        _
      $region28: #{autoencoder_forward.1} parent=11 // pred_fallthru
        _
      // Predicated region
      $region29: #{autoencoder_forward.1} parent=11 // pred_check
        %p262 = pneg %p146
      $region30: #{autoencoder_forward.1} parent=11 // pred_check_branch
        %264 = sbr.rel (%p262) target = $region32
      $region31: #{autoencoder_forward.1} parent=11 // pred_region
        _
      $region32: #{autoencoder_forward.1} parent=11 // pred_fallthru
        _
      // Predicated region
      $region33: #{autoencoder_forward.1} parent=11 // pred_check
        %p265 = pneg %p167
      $region34: #{autoencoder_forward.1} parent=11 // pred_check_branch
        %267 = sbr.rel (%p265) target = $region36
      $region35: #{autoencoder_forward.1} parent=11 // pred_region
        _
      $region36: #{autoencoder_forward.1} parent=11 // pred_fallthru
        _
      // Predicated region
      $region37: #{autoencoder_forward.1} parent=11 // pred_check
        %p268 = pneg %p188
      $region38: #{autoencoder_forward.1} parent=11 // pred_check_branch
        %270 = sbr.rel (%p268) target = $region40
      $region39: #{autoencoder_forward.1} parent=11 // pred_region
        _
      $region40: #{autoencoder_forward.1} parent=11 // pred_fallthru
        _
      // Predicated region
      $region41: #{autoencoder_forward.1} parent=11 // pred_check
        %p271 = pneg %p209
      $region42: #{autoencoder_forward.1} parent=11 // pred_check_branch
        %273 = sbr.rel (%p271) target = $region44
      $region43: #{autoencoder_forward.1} parent=11 // pred_region
        _
      $region44: #{autoencoder_forward.1} parent=11 // pred_fallthru
        _
    $region12: #{autoencoder_forward.1} parent=5 // pred_fallthru
      _
    %p274 = scmp.lt.s32.totalorder %s15, 2
    // Predicated region
    $region45: #{autoencoder_forward.1} parent=5 // pred_check
      %p275 = pneg %p274
    $region46: #{autoencoder_forward.1} parent=5 // pred_check_branch
      %277 = sbr.rel (%p275) target = $region48
    $region47: #{autoencoder_forward.1} parent=5 // pred_region
      // Predicated region
      $region49: #{autoencoder_forward.1} parent=47 // pred_check
        %p278 = pneg %p35
      $region50: #{autoencoder_forward.1} parent=47 // pred_check_branch
        %280 = sbr.rel (%p278) target = $region52
      $region51: #{autoencoder_forward.1} parent=47 // pred_region
        %s281 = smul.u32 32, %s15
        %p282 = scmp.lt.s32.totalorder %s281, 63
        %s283 = scalar_select %p282, %s281, 63
        %s284 = smul.addr %s283, 7
        %s285 = smul.addr %s284, 4
        %s286 = scalar_lea.vmem %s0, %s285
        %s287 = smul.u32 32, %s15
      $region52: #{autoencoder_forward.1} parent=47 // pred_fallthru
        _
    $region48: #{autoencoder_forward.1} parent=5 // pred_fallthru
      _
    %p288 = scmp.le.s32.totalorder 1, %s15
    %p289 = scmp.lt.s32.totalorder %s15, 3
    %p290 = pnand %p288, %p289
    %p291 = pneg %p290
    // Predicated region
    $region53: #{autoencoder_forward.1} parent=5 // pred_check
      _
    $region54: #{autoencoder_forward.1} parent=5 // pred_check_branch
      %293 = sbr.rel (%p290) target = $region56
    $region55: #{autoencoder_forward.1} parent=5 // pred_region
      %s294 = ssub.s32 %s15, 1
      %s295 = smul.u32 32, %s20
      %p296 = scmp.lt.s32.totalorder %s295, 63
      %s297 = scalar_select %p296, %s295, 63
      %s298 = smul.addr %s297, 7
      %s299 = smul.addr %s298, 4
      %s300 = scalar_lea.vmem %s0, %s299
      %p301 = pneg %p41
      %p302 = pneg %p38
      %p303 = pneg %p62
      %p304 = pneg %p59
      %p305 = pneg %p83
      %p306 = pneg %p80
      %p307 = pneg %p104
      %p308 = pneg %p101
      %p309 = pneg %p125
      %p310 = pneg %p122
      %p311 = pneg %p146
      %p312 = pneg %p143
      %p313 = pneg %p167
      %p314 = pneg %p164
      %p315 = pneg %p188
      %p316 = pneg %p185
      %p317 = pneg %p209
      %p318 = pneg %p206
      %p319 = pneg %p235
      %p320 = pneg %p232
      %s321 = smul.u32 32, %s20
      %p322 = scmp.lt.s32.totalorder %s321, 63
      %s323 = scalar_select %p322, %s321, 63
      %s324 = smul.addr %s323, 7
      %s325 = smul.addr %s324, 8
      %s326 = scalar_lea.vmem %s9, %s325
      %s327 = smul.u32 32, %s20
      %p328 = scmp.lt.s32.totalorder %s327, 63
      %s329 = scalar_select %p328, %s327, 63
      %s330 = smul.addr %s329, 7
      %s331 = smul.addr %s330, 4
      %s332 = scalar_lea.vmem %s0, %s331
      %s333 = smul.u32 32, %s20
      %s334 = smul.u32 32, %s20
      %p335 = scmp.lt.s32.totalorder %s334, 63
      %s336 = scalar_select %p335, %s334, 63
      %s337 = smul.addr %s336, 7
      %s338 = smul.addr %s337, 8
      %s339 = scalar_lea.vmem %s9, %s338
      %s340 = smul.u32 32, %s20
      %v342 = vld [vmem:[%s332] sm:$0xff]
      %v343 = vld [vmem:[%s332 + $0x8] sm:$0xff]
      %v344 = vld [vmem:[%s332 + $0x10] sm:$0xff]
      %v345 = vld [vmem:[%s332 + $0x18] sm:$0xf]
      %v346 = vld [vmem:[%s332 + $0x1c] sm:$0xff]
      %v347 = vld [vmem:[%s332 + $0x24] sm:$0xff]
      %v348 = vld [vmem:[%s332 + $0x2c] sm:$0xff]
      %v349 = vld [vmem:[%s332 + $0x34] sm:$0xf]
      %v350 = vld [vmem:[%s332 + $0x38] sm:$0xff]
      %v351 = vld [vmem:[%s332 + $0x40] sm:$0xff]
      %v352 = vld [vmem:[%s332 + $0x48] sm:$0xff]
      %v353 = vld [vmem:[%s332 + $0x50] sm:$0xf]
      %v354 = vld [vmem:[%s332 + $0x54] sm:$0xff]
      %v355 = vld [vmem:[%s332 + $0x5c] sm:$0xff]
      %v356 = vld [vmem:[%s332 + $0x64] sm:$0xff]
      %v357 = vld [vmem:[%s332 + $0x6c] sm:$0xf]
      %v358 = vld [vmem:[%s332 + $0x70] sm:$0xff]
      %v359 = vld [vmem:[%s332 + $0x78] sm:$0xff]
      %v360 = vld [vmem:[%s332 + $0x80] sm:$0xff]
      %v361 = vld [vmem:[%s332 + $0x88] sm:$0xf]
      %v362 = vld [vmem:[%s332 + $0x8c] sm:$0xff]
      %v363 = vld [vmem:[%s332 + $0x94] sm:$0xff]
      %v364 = vld [vmem:[%s332 + $0x9c] sm:$0xff]
      %v365 = vld [vmem:[%s332 + $0xa4] sm:$0xf]
      %v366 = vld [vmem:[%s332 + $0xa8] sm:$0xff]
      %v367 = vld [vmem:[%s332 + $0xb0] sm:$0xff]
      %v368 = vld [vmem:[%s332 + $0xb8] sm:$0xff]
      %v369 = vld [vmem:[%s332 + $0xc0] sm:$0xf]
      %v370 = vld [vmem:[%s332 + $0xc4] sm:$0xff]
      %v371 = vld [vmem:[%s332 + $0xcc] sm:$0xff]
      %v372 = vld [vmem:[%s332 + $0xd4] sm:$0xff]
      %v373 = vld [vmem:[%s332 + $0xdc] sm:$0xf]
      %v374 = vld [vmem:[%s332 + $0xe0] sm:$0xff]
      %v375 = vld [vmem:[%s332 + $0xe8] sm:$0xff]
      %v376 = vld [vmem:[%s332 + $0xf0] sm:$0xff]
      %v377 = vld [vmem:[%s332 + $0xf8] sm:$0xf]
      %v378 = vld [vmem:[%s332 + $0xfc] sm:$0xff]
      %v379 = vld [vmem:[%s332 + $0x104] sm:$0xff]
      %v380 = vld [vmem:[%s332 + $0x10c] sm:$0xff]
      %v381 = vld [vmem:[%s332 + $0x114] sm:$0xf]
      %v382 = vld [vmem:[%s332 + $0x118] sm:$0xff]
      %v383 = vld [vmem:[%s332 + $0x120] sm:$0xff]
      %v384 = vld [vmem:[%s332 + $0x128] sm:$0xff]
      %v385 = vld [vmem:[%s332 + $0x130] sm:$0xf]
      %v386 = vld [vmem:[%s332 + $0x134] sm:$0xff]
      %v387 = vld [vmem:[%s332 + $0x13c] sm:$0xff]
      %v388 = vld [vmem:[%s332 + $0x144] sm:$0xff]
      %v389 = vld [vmem:[%s332 + $0x14c] sm:$0xf]
      %v390 = vld [vmem:[%s332 + $0x150] sm:$0xff]
      %v391 = vld [vmem:[%s332 + $0x158] sm:$0xff]
      %v392 = vld [vmem:[%s332 + $0x160] sm:$0xff]
      %v393 = vld [vmem:[%s332 + $0x168] sm:$0xf]
      %v394 = vld [vmem:[%s332 + $0x16c] sm:$0xff]
      %v395 = vld [vmem:[%s332 + $0x174] sm:$0xff]
      %v396 = vld [vmem:[%s332 + $0x17c] sm:$0xff]
      %v397 = vld [vmem:[%s332 + $0x184] sm:$0xf]
      %v398 = vld [vmem:[%s332 + $0x188] sm:$0xff]
      %v399 = vld [vmem:[%s332 + $0x190] sm:$0xff]
      %v400 = vld [vmem:[%s332 + $0x198] sm:$0xff]
      %v401 = vld [vmem:[%s332 + $0x1a0] sm:$0xf]
      %v402 = vld [vmem:[%s332 + $0x1a4] sm:$0xff]
      %v403 = vld [vmem:[%s332 + $0x1ac] sm:$0xff]
      %v404 = vld [vmem:[%s332 + $0x1b4] sm:$0xff]
      %v405 = vld [vmem:[%s332 + $0x1bc] sm:$0xf]
      %v406 = vld [vmem:[%s332 + $0x1c0] sm:$0xff]
      %v407 = vld [vmem:[%s332 + $0x1c8] sm:$0xff]
      %v408 = vld [vmem:[%s332 + $0x1d0] sm:$0xff]
      %v409 = vld [vmem:[%s332 + $0x1d8] sm:$0xf]
      %v410 = vld [vmem:[%s332 + $0x1dc] sm:$0xff]
      %v411 = vld [vmem:[%s332 + $0x1e4] sm:$0xff]
      %v412 = vld [vmem:[%s332 + $0x1ec] sm:$0xff]
      %v413 = vld [vmem:[%s332 + $0x1f4] sm:$0xf]
      %v414 = vld [vmem:[%s332 + $0x1f8] sm:$0xff]
      %v415 = vld [vmem:[%s332 + $0x200] sm:$0xff]
      %v416 = vld [vmem:[%s332 + $0x208] sm:$0xff]
      %v417 = vld [vmem:[%s332 + $0x210] sm:$0xf]
      %v418 = vld [vmem:[%s332 + $0x214] sm:$0xff]
      %v419 = vld [vmem:[%s332 + $0x21c] sm:$0xff]
      %v420 = vld [vmem:[%s332 + $0x224] sm:$0xff]
      %v421 = vld [vmem:[%s332 + $0x22c] sm:$0xf]
      %v422 = vld [vmem:[%s332 + $0x230] sm:$0xff]
      %v423 = vld [vmem:[%s332 + $0x238] sm:$0xff]
      %v424 = vld [vmem:[%s332 + $0x240] sm:$0xff]
      %v425 = vld [vmem:[%s332 + $0x248] sm:$0xf]
      %v426 = vld [vmem:[%s332 + $0x24c] sm:$0xff]
      %v427 = vld [vmem:[%s332 + $0x254] sm:$0xff]
      %v428 = vld [vmem:[%s332 + $0x25c] sm:$0xff]
      %v429 = vld [vmem:[%s332 + $0x264] sm:$0xf]
      %v430 = vld [vmem:[%s332 + $0x268] sm:$0xff]
      %v431 = vld [vmem:[%s332 + $0x270] sm:$0xff]
      %v432 = vld [vmem:[%s332 + $0x278] sm:$0xff]
      %v433 = vld [vmem:[%s332 + $0x280] sm:$0xf]
      %v434 = vld [vmem:[%s332 + $0x284] sm:$0xff]
      %v435 = vld [vmem:[%s332 + $0x28c] sm:$0xff]
      %v436 = vld [vmem:[%s332 + $0x294] sm:$0xff]
      %v437 = vld [vmem:[%s332 + $0x29c] sm:$0xf]
      %v438 = vld [vmem:[%s332 + $0x2a0] sm:$0xff]
      %v439 = vld [vmem:[%s332 + $0x2a8] sm:$0xff]
      %v440 = vld [vmem:[%s332 + $0x2b0] sm:$0xff]
      %v441 = vld [vmem:[%s332 + $0x2b8] sm:$0xf]
      %v442 = vld [vmem:[%s332 + $0x2bc] sm:$0xff]
      %v443 = vld [vmem:[%s332 + $0x2c4] sm:$0xff]
      %v444 = vld [vmem:[%s332 + $0x2cc] sm:$0xff]
      %v445 = vld [vmem:[%s332 + $0x2d4] sm:$0xf]
      %v446 = vld [vmem:[%s332 + $0x2d8] sm:$0xff]
      %v447 = vld [vmem:[%s332 + $0x2e0] sm:$0xff]
      %v448 = vld [vmem:[%s332 + $0x2e8] sm:$0xff]
      %v449 = vld [vmem:[%s332 + $0x2f0] sm:$0xf]
      %v450 = vld [vmem:[%s332 + $0x2f4] sm:$0xff]
      %v451 = vld [vmem:[%s332 + $0x2fc] sm:$0xff]
      %v452 = vld [vmem:[%s332 + $0x304] sm:$0xff]
      %v453 = vld [vmem:[%s332 + $0x30c] sm:$0xf]
      %v454 = vld [vmem:[%s332 + $0x310] sm:$0xff]
      %v455 = vld [vmem:[%s332 + $0x318] sm:$0xff]
      %v456 = vld [vmem:[%s332 + $0x320] sm:$0xff]
      %v457 = vld [vmem:[%s332 + $0x328] sm:$0xf]
      %v458 = vld [vmem:[%s332 + $0x32c] sm:$0xff]
      %v459 = vld [vmem:[%s332 + $0x334] sm:$0xff]
      %v460 = vld [vmem:[%s332 + $0x33c] sm:$0xff]
      %v461 = vld [vmem:[%s332 + $0x344] sm:$0xf]
      %v462 = vld [vmem:[%s332 + $0x348] sm:$0xff]
      %v463 = vld [vmem:[%s332 + $0x350] sm:$0xff]
      %v464 = vld [vmem:[%s332 + $0x358] sm:$0xff]
      %v465 = vld [vmem:[%s332 + $0x360] sm:$0xf]
      %v466 = vld [vmem:[%s332 + $0x364] sm:$0xff]
      %v467 = vld [vmem:[%s332 + $0x36c] sm:$0xff]
      %v468 = vld [vmem:[%s332 + $0x374] sm:$0xff]
      %v469 = vld [vmem:[%s332 + $0x37c] sm:$0xf]
      %v470 = vld [vmem:[%s2] sm:$0xf]
      %v471 = vld [vmem:[%s4] sm:$0x1]
      %v472 = vld [vmem:[%s6] sm:$0xf]
      %v473 = vld [vmem:[%s8] sm:$0xff]
      %v474 = vld [vmem:[%s1] sm:$0xff]
      %v475 = vld [vmem:[%s1 + $0x8] sm:$0xff]
      %v476 = vld [vmem:[%s1 + $0x10] sm:$0xff]
      %v477 = vld [vmem:[%s1 + $0x18] sm:$0xff]
      %v478 = vld [vmem:[%s1 + $0x20] sm:$0xff]
      %v479 = vld [vmem:[%s1 + $0x28] sm:$0xff]
      %v480 = vld [vmem:[%s1 + $0x30] sm:$0xff]
      %v481 = vld [vmem:[%s1 + $0x38] sm:$0xff]
      %v482 = vld [vmem:[%s1 + $0x40] sm:$0xff]
      %v483 = vld [vmem:[%s1 + $0x48] sm:$0xff]
      %v484 = vld [vmem:[%s1 + $0x50] sm:$0xff]
      %v485 = vld [vmem:[%s1 + $0x58] sm:$0xff]
      %v486 = vld [vmem:[%s1 + $0x60] sm:$0xff]
      %v487 = vld [vmem:[%s1 + $0x68] sm:$0xff]
      %v488 = vld [vmem:[%s1 + $0x70] sm:$0xff]
      %v489 = vld [vmem:[%s1 + $0x78] sm:$0xff]
      %v490 = vld [vmem:[%s1 + $0x80] sm:$0xff]
      %v491 = vld [vmem:[%s1 + $0x88] sm:$0xff]
      %v492 = vld [vmem:[%s1 + $0x90] sm:$0xff]
      %v493 = vld [vmem:[%s1 + $0x98] sm:$0xff]
      %v494 = vld [vmem:[%s1 + $0xa0] sm:$0xff]
      %v495 = vld [vmem:[%s1 + $0xa8] sm:$0xff]
      %v496 = vld [vmem:[%s1 + $0xb0] sm:$0xff]
      %v497 = vld [vmem:[%s1 + $0xb8] sm:$0xff]
      %v498 = vld [vmem:[%s1 + $0xc0] sm:$0xff]
      %v499 = vld [vmem:[%s1 + $0xc8] sm:$0xff]
      %v500 = vld [vmem:[%s1 + $0xd0] sm:$0xff]
      %v501 = vld [vmem:[%s1 + $0xd8] sm:$0xff]
      %v502 = vld [vmem:[%s1 + $0xe0] sm:$0xff]
      %v503 = vld [vmem:[%s1 + $0xe8] sm:$0xff]
      %v504 = vld [vmem:[%s1 + $0xf0] sm:$0xff]
      %v505 = vld [vmem:[%s1 + $0xf8] sm:$0xff]
      %v506 = vld [vmem:[%s1 + $0x100] sm:$0xff]
      %v507 = vld [vmem:[%s1 + $0x108] sm:$0xff]
      %v508 = vld [vmem:[%s1 + $0x110] sm:$0xff]
      %v509 = vld [vmem:[%s1 + $0x118] sm:$0xff]
      %v510 = vld [vmem:[%s1 + $0x120] sm:$0xff]
      %v511 = vld [vmem:[%s1 + $0x128] sm:$0xff]
      %v512 = vld [vmem:[%s1 + $0x130] sm:$0xff]
      %v513 = vld [vmem:[%s1 + $0x138] sm:$0xff]
      %v514 = vld [vmem:[%s1 + $0x140] sm:$0xff]
      %v515 = vld [vmem:[%s1 + $0x148] sm:$0xff]
      %v516 = vld [vmem:[%s1 + $0x150] sm:$0xff]
      %v517 = vld [vmem:[%s1 + $0x158] sm:$0xff]
      %v518 = vld [vmem:[%s1 + $0x160] sm:$0xff]
      %v519 = vld [vmem:[%s1 + $0x168] sm:$0xff]
      %v520 = vld [vmem:[%s1 + $0x170] sm:$0xff]
      %v521 = vld [vmem:[%s1 + $0x178] sm:$0xff]
      %v522 = vld [vmem:[%s1 + $0x180] sm:$0xff]
      %v523 = vld [vmem:[%s1 + $0x188] sm:$0xff]
      %v524 = vld [vmem:[%s1 + $0x190] sm:$0xff]
      %v525 = vld [vmem:[%s1 + $0x198] sm:$0xff]
      %v526 = vld [vmem:[%s1 + $0x1a0] sm:$0xff]
      %v527 = vld [vmem:[%s1 + $0x1a8] sm:$0xff]
      %v528 = vld [vmem:[%s1 + $0x1b0] sm:$0xff]
      %v529 = vld [vmem:[%s1 + $0x1b8] sm:$0xff]
      %v530 = vld [vmem:[%s1 + $0x1c0] sm:$0xff]
      %v531 = vld [vmem:[%s1 + $0x1c8] sm:$0xff]
      %v532 = vld [vmem:[%s1 + $0x1d0] sm:$0xff]
      %v533 = vld [vmem:[%s1 + $0x1d8] sm:$0xff]
      %v534 = vld [vmem:[%s1 + $0x1e0] sm:$0xff]
      %v535 = vld [vmem:[%s1 + $0x1e8] sm:$0xff]
      %v536 = vld [vmem:[%s1 + $0x1f0] sm:$0xff]
      %v537 = vld [vmem:[%s1 + $0x1f8] sm:$0xff]
      %v538 = vld [vmem:[%s1 + $0x200] sm:$0xff]
      %v539 = vld [vmem:[%s1 + $0x208] sm:$0xff]
      %v540 = vld [vmem:[%s1 + $0x210] sm:$0xff]
      %v541 = vld [vmem:[%s1 + $0x218] sm:$0xff]
      %v542 = vld [vmem:[%s1 + $0x220] sm:$0xff]
      %v543 = vld [vmem:[%s1 + $0x228] sm:$0xff]
      %v544 = vld [vmem:[%s1 + $0x230] sm:$0xff]
      %v545 = vld [vmem:[%s1 + $0x238] sm:$0xff]
      %v546 = vld [vmem:[%s1 + $0x240] sm:$0xff]
      %v547 = vld [vmem:[%s1 + $0x248] sm:$0xff]
      %v548 = vld [vmem:[%s1 + $0x250] sm:$0xff]
      %v549 = vld [vmem:[%s1 + $0x258] sm:$0xff]
      %v550 = vld [vmem:[%s1 + $0x260] sm:$0xff]
      %v551 = vld [vmem:[%s1 + $0x268] sm:$0xff]
      %v552 = vld [vmem:[%s1 + $0x270] sm:$0xff]
      %v553 = vld [vmem:[%s1 + $0x278] sm:$0xff]
      %v554 = vld [vmem:[%s1 + $0x280] sm:$0xff]
      %v555 = vld [vmem:[%s1 + $0x288] sm:$0xff]
      %v556 = vld [vmem:[%s1 + $0x290] sm:$0xff]
      %v557 = vld [vmem:[%s1 + $0x298] sm:$0xff]
      %v558 = vld [vmem:[%s1 + $0x2a0] sm:$0xff]
      %v559 = vld [vmem:[%s1 + $0x2a8] sm:$0xff]
      %v560 = vld [vmem:[%s1 + $0x2b0] sm:$0xff]
      %v561 = vld [vmem:[%s1 + $0x2b8] sm:$0xff]
      %v562 = vld [vmem:[%s1 + $0x2c0] sm:$0xff]
      %v563 = vld [vmem:[%s1 + $0x2c8] sm:$0xff]
      %v564 = vld [vmem:[%s1 + $0x2d0] sm:$0xff]
      %v565 = vld [vmem:[%s1 + $0x2d8] sm:$0xff]
      %v566 = vld [vmem:[%s1 + $0x2e0] sm:$0xff]
      %v567 = vld [vmem:[%s1 + $0x2e8] sm:$0xff]
      %v568 = vld [vmem:[%s1 + $0x2f0] sm:$0xff]
      %v569 = vld [vmem:[%s1 + $0x2f8] sm:$0xff]
      %v570 = vld [vmem:[%s1 + $0x300] sm:$0xff]
      %v571 = vld [vmem:[%s1 + $0x308] sm:$0xff]
      %v572 = vld [vmem:[%s1 + $0x310] sm:$0xff]
      %v573 = vld [vmem:[%s1 + $0x318] sm:$0xff]
      %v574 = vld [vmem:[%s1 + $0x320] sm:$0xff]
      %v575 = vld [vmem:[%s1 + $0x328] sm:$0xff]
      %v576 = vld [vmem:[%s1 + $0x330] sm:$0xff]
      %v577 = vld [vmem:[%s1 + $0x338] sm:$0xff]
      %v578 = vld [vmem:[%s1 + $0x340] sm:$0xff]
      %v579 = vld [vmem:[%s1 + $0x348] sm:$0xff]
      %v580 = vld [vmem:[%s1 + $0x350] sm:$0xff]
      %v581 = vld [vmem:[%s1 + $0x358] sm:$0xff]
      %v582 = vld [vmem:[%s1 + $0x360] sm:$0xff]
      %v583 = vld [vmem:[%s1 + $0x368] sm:$0xff]
      %v584 = vld [vmem:[%s1 + $0x370] sm:$0xff]
      %v585 = vld [vmem:[%s1 + $0x378] sm:$0xff]
      %v586 = vld [vmem:[%s1 + $0x380] sm:$0xff]
      %v587 = vld [vmem:[%s1 + $0x388] sm:$0xff]
      %v588 = vld [vmem:[%s1 + $0x390] sm:$0xff]
      %v589 = vld [vmem:[%s1 + $0x398] sm:$0xff]
      %v590 = vld [vmem:[%s1 + $0x3a0] sm:$0xff]
      %v591 = vld [vmem:[%s1 + $0x3a8] sm:$0xff]
      %v592 = vld [vmem:[%s1 + $0x3b0] sm:$0xff]
      %v593 = vld [vmem:[%s1 + $0x3b8] sm:$0xff]
      %v594 = vld [vmem:[%s1 + $0x3c0] sm:$0xff]
      %v595 = vld [vmem:[%s1 + $0x3c8] sm:$0xff]
      %v596 = vld [vmem:[%s1 + $0x3d0] sm:$0xff]
      %v597 = vld [vmem:[%s1 + $0x3d8] sm:$0xff]
      %v598 = vld [vmem:[%s1 + $0x3e0] sm:$0xff]
      %v599 = vld [vmem:[%s1 + $0x3e8] sm:$0xff]
      %v600 = vld [vmem:[%s1 + $0x3f0] sm:$0xff]
      %v601 = vld [vmem:[%s1 + $0x3f8] sm:$0xff]
      %v602 = vld [vmem:[%s1 + $0x400] sm:$0xff]
      %v603 = vld [vmem:[%s1 + $0x408] sm:$0xff]
      %v604 = vld [vmem:[%s1 + $0x410] sm:$0xff]
      %v605 = vld [vmem:[%s1 + $0x418] sm:$0xff]
      %v606 = vld [vmem:[%s1 + $0x420] sm:$0xff]
      %v607 = vld [vmem:[%s1 + $0x428] sm:$0xff]
      %v608 = vld [vmem:[%s1 + $0x430] sm:$0xff]
      %v609 = vld [vmem:[%s1 + $0x438] sm:$0xff]
      %v610 = vld [vmem:[%s1 + $0x440] sm:$0xff]
      %v611 = vld [vmem:[%s1 + $0x448] sm:$0xff]
      %v612 = vld [vmem:[%s1 + $0x450] sm:$0xff]
      %v613 = vld [vmem:[%s1 + $0x458] sm:$0xff]
      %v614 = vld [vmem:[%s1 + $0x460] sm:$0xff]
      %v615 = vld [vmem:[%s1 + $0x468] sm:$0xff]
      %v616 = vld [vmem:[%s1 + $0x470] sm:$0xff]
      %v617 = vld [vmem:[%s1 + $0x478] sm:$0xff]
      %v618 = vld [vmem:[%s1 + $0x480] sm:$0xff]
      %v619 = vld [vmem:[%s1 + $0x488] sm:$0xff]
      %v620 = vld [vmem:[%s1 + $0x490] sm:$0xff]
      %v621 = vld [vmem:[%s1 + $0x498] sm:$0xff]
      %v622 = vld [vmem:[%s1 + $0x4a0] sm:$0xff]
      %v623 = vld [vmem:[%s1 + $0x4a8] sm:$0xff]
      %v624 = vld [vmem:[%s1 + $0x4b0] sm:$0xff]
      %v625 = vld [vmem:[%s1 + $0x4b8] sm:$0xff]
      %v626 = vld [vmem:[%s1 + $0x4c0] sm:$0xff]
      %v627 = vld [vmem:[%s1 + $0x4c8] sm:$0xff]
      %v628 = vld [vmem:[%s1 + $0x4d0] sm:$0xff]
      %v629 = vld [vmem:[%s1 + $0x4d8] sm:$0xff]
      %v630 = vld [vmem:[%s1 + $0x4e0] sm:$0xff]
      %v631 = vld [vmem:[%s1 + $0x4e8] sm:$0xff]
      %v632 = vld [vmem:[%s1 + $0x4f0] sm:$0xff]
      %v633 = vld [vmem:[%s1 + $0x4f8] sm:$0xff]
      %v634 = vld [vmem:[%s1 + $0x500] sm:$0xff]
      %v635 = vld [vmem:[%s1 + $0x508] sm:$0xff]
      %v636 = vld [vmem:[%s1 + $0x510] sm:$0xff]
      %v637 = vld [vmem:[%s1 + $0x518] sm:$0xff]
      %v638 = vld [vmem:[%s1 + $0x520] sm:$0xff]
      %v639 = vld [vmem:[%s1 + $0x528] sm:$0xff]
      %v640 = vld [vmem:[%s1 + $0x530] sm:$0xff]
      %v641 = vld [vmem:[%s1 + $0x538] sm:$0xff]
      %v642 = vld [vmem:[%s1 + $0x540] sm:$0xff]
      %v643 = vld [vmem:[%s1 + $0x548] sm:$0xff]
      %v644 = vld [vmem:[%s1 + $0x550] sm:$0xff]
      %v645 = vld [vmem:[%s1 + $0x558] sm:$0xff]
      %v646 = vld [vmem:[%s1 + $0x560] sm:$0xff]
      %v647 = vld [vmem:[%s1 + $0x568] sm:$0xff]
      %v648 = vld [vmem:[%s1 + $0x570] sm:$0xff]
      %v649 = vld [vmem:[%s1 + $0x578] sm:$0xff]
      %v650 = vld [vmem:[%s1 + $0x580] sm:$0xff]
      %v651 = vld [vmem:[%s1 + $0x588] sm:$0xff]
      %v652 = vld [vmem:[%s1 + $0x590] sm:$0xff]
      %v653 = vld [vmem:[%s1 + $0x598] sm:$0xff]
      %v654 = vld [vmem:[%s1 + $0x5a0] sm:$0xff]
      %v655 = vld [vmem:[%s1 + $0x5a8] sm:$0xff]
      %v656 = vld [vmem:[%s1 + $0x5b0] sm:$0xff]
      %v657 = vld [vmem:[%s1 + $0x5b8] sm:$0xff]
      %v658 = vld [vmem:[%s1 + $0x5c0] sm:$0xff]
      %v659 = vld [vmem:[%s1 + $0x5c8] sm:$0xff]
      %v660 = vld [vmem:[%s1 + $0x5d0] sm:$0xff]
      %v661 = vld [vmem:[%s1 + $0x5d8] sm:$0xff]
      %v662 = vld [vmem:[%s1 + $0x5e0] sm:$0xff]
      %v663 = vld [vmem:[%s1 + $0x5e8] sm:$0xff]
      %v664 = vld [vmem:[%s1 + $0x5f0] sm:$0xff]
      %v665 = vld [vmem:[%s1 + $0x5f8] sm:$0xff]
      %v666 = vld [vmem:[%s1 + $0x600] sm:$0xff]
      %v667 = vld [vmem:[%s1 + $0x608] sm:$0xff]
      %v668 = vld [vmem:[%s1 + $0x610] sm:$0xff]
      %v669 = vld [vmem:[%s1 + $0x618] sm:$0xff]
      %v670 = vld [vmem:[%s1 + $0x620] sm:$0xff]
      %v671 = vld [vmem:[%s1 + $0x628] sm:$0xff]
      %v672 = vld [vmem:[%s1 + $0x630] sm:$0xff]
      %v673 = vld [vmem:[%s1 + $0x638] sm:$0xff]
      %v674 = vld [vmem:[%s1 + $0x640] sm:$0xff]
      %v675 = vld [vmem:[%s1 + $0x648] sm:$0xff]
      %v676 = vld [vmem:[%s1 + $0x650] sm:$0xff]
      %v677 = vld [vmem:[%s1 + $0x658] sm:$0xff]
      %v678 = vld [vmem:[%s1 + $0x660] sm:$0xff]
      %v679 = vld [vmem:[%s1 + $0x668] sm:$0xff]
      %v680 = vld [vmem:[%s1 + $0x670] sm:$0xff]
      %v681 = vld [vmem:[%s1 + $0x678] sm:$0xff]
      %v682 = vld [vmem:[%s1 + $0x680] sm:$0xff]
      %v683 = vld [vmem:[%s1 + $0x688] sm:$0xff]
      %v684 = vld [vmem:[%s1 + $0x690] sm:$0xff]
      %v685 = vld [vmem:[%s1 + $0x698] sm:$0xff]
      %v686 = vld [vmem:[%s1 + $0x6a0] sm:$0xff]
      %v687 = vld [vmem:[%s1 + $0x6a8] sm:$0xff]
      %v688 = vld [vmem:[%s1 + $0x6b0] sm:$0xff]
      %v689 = vld [vmem:[%s1 + $0x6b8] sm:$0xff]
      %v690 = vld [vmem:[%s1 + $0x6c0] sm:$0xff]
      %v691 = vld [vmem:[%s1 + $0x6c8] sm:$0xff]
      %v692 = vld [vmem:[%s1 + $0x6d0] sm:$0xff]
      %v693 = vld [vmem:[%s1 + $0x6d8] sm:$0xff]
      %v694 = vld [vmem:[%s1 + $0x6e0] sm:$0xff]
      %v695 = vld [vmem:[%s1 + $0x6e8] sm:$0xff]
      %v696 = vld [vmem:[%s1 + $0x6f0] sm:$0xff]
      %v697 = vld [vmem:[%s1 + $0x6f8] sm:$0xff]
      %v699 = vlaneseq
      %v700 = vshrl.u32 %v699, 7
      %v701 = vsub.s32 0, %v700
      %v702 = vrot.slane %v470, %v701
      %v703 = vlaneseq
      %v704 = vshrl.u32 %v703, 7
      %v705 = vsub.s32 1, %v704
      %v706 = vrot.slane %v470, %v705
      %v707 = vlaneseq
      %v708 = vshrl.u32 %v707, 7
      %v709 = vsub.s32 2, %v708
      %v710 = vrot.slane %v470, %v709
      %v711 = vlaneseq
      %v712 = vshrl.u32 %v711, 7
      %v713 = vsub.s32 3, %v712
      %v714 = vrot.slane %v470, %v713
      %v847 = vunpack.c.l.b16 %v342
      %v848 = vunpack.c.h.b16 %v342
      %v849 = vunpack.c.l.b16 %v343
      %v850 = vunpack.c.h.b16 %v343
      %v851 = vunpack.c.l.b16 %v344
      %v852 = vunpack.c.h.b16 %v344
      %v853 = vunpack.c.l.b16 %v345
      %v854 = vunpack.c.l.b16 %v346
      %v855 = vunpack.c.h.b16 %v346
      %v856 = vunpack.c.l.b16 %v347
      %v857 = vunpack.c.h.b16 %v347
      %v858 = vunpack.c.l.b16 %v348
      %v859 = vunpack.c.h.b16 %v348
      %v860 = vunpack.c.l.b16 %v349
      %v861 = vunpack.c.l.b16 %v350
      %v862 = vunpack.c.h.b16 %v350
      %v863 = vunpack.c.l.b16 %v351
      %v864 = vunpack.c.h.b16 %v351
      %v865 = vunpack.c.l.b16 %v352
      %v866 = vunpack.c.h.b16 %v352
      %v867 = vunpack.c.l.b16 %v353
      %v868 = vunpack.c.l.b16 %v354
      %v869 = vunpack.c.h.b16 %v354
      %v870 = vunpack.c.l.b16 %v355
      %v871 = vunpack.c.h.b16 %v355
      %v872 = vunpack.c.l.b16 %v356
      %v873 = vunpack.c.h.b16 %v356
      %v874 = vunpack.c.l.b16 %v357
      %v875 = vunpack.c.l.b16 %v358
      %v876 = vunpack.c.h.b16 %v358
      %v877 = vunpack.c.l.b16 %v359
      %v878 = vunpack.c.h.b16 %v359
      %v879 = vunpack.c.l.b16 %v360
      %v880 = vunpack.c.h.b16 %v360
      %v881 = vunpack.c.l.b16 %v361
      %v882 = vunpack.c.l.b16 %v362
      %v883 = vunpack.c.h.b16 %v362
      %v884 = vunpack.c.l.b16 %v363
      %v885 = vunpack.c.h.b16 %v363
      %v886 = vunpack.c.l.b16 %v364
      %v887 = vunpack.c.h.b16 %v364
      %v888 = vunpack.c.l.b16 %v365
      %v889 = vunpack.c.l.b16 %v366
      %v890 = vunpack.c.h.b16 %v366
      %v891 = vunpack.c.l.b16 %v367
      %v892 = vunpack.c.h.b16 %v367
      %v893 = vunpack.c.l.b16 %v368
      %v894 = vunpack.c.h.b16 %v368
      %v895 = vunpack.c.l.b16 %v369
      %v896 = vunpack.c.l.b16 %v370
      %v897 = vunpack.c.h.b16 %v370
      %v898 = vunpack.c.l.b16 %v371
      %v899 = vunpack.c.h.b16 %v371
      %v900 = vunpack.c.l.b16 %v372
      %v901 = vunpack.c.h.b16 %v372
      %v902 = vunpack.c.l.b16 %v373
      %v903 = vunpack.c.l.b16 %v374
      %v904 = vunpack.c.h.b16 %v374
      %v905 = vunpack.c.l.b16 %v375
      %v906 = vunpack.c.h.b16 %v375
      %v907 = vunpack.c.l.b16 %v376
      %v908 = vunpack.c.h.b16 %v376
      %v909 = vunpack.c.l.b16 %v377
      %v910 = vunpack.c.l.b16 %v378
      %v911 = vunpack.c.h.b16 %v378
      %v912 = vunpack.c.l.b16 %v379
      %v913 = vunpack.c.h.b16 %v379
      %v914 = vunpack.c.l.b16 %v380
      %v915 = vunpack.c.h.b16 %v380
      %v916 = vunpack.c.l.b16 %v381
      %v917 = vunpack.c.l.b16 %v382
      %v918 = vunpack.c.h.b16 %v382
      %v919 = vunpack.c.l.b16 %v383
      %v920 = vunpack.c.h.b16 %v383
      %v921 = vunpack.c.l.b16 %v384
      %v922 = vunpack.c.h.b16 %v384
      %v923 = vunpack.c.l.b16 %v385
      %v924 = vunpack.c.l.b16 %v386
      %v925 = vunpack.c.h.b16 %v386
      %v926 = vunpack.c.l.b16 %v387
      %v927 = vunpack.c.h.b16 %v387
      %v928 = vunpack.c.l.b16 %v388
      %v929 = vunpack.c.h.b16 %v388
      %v930 = vunpack.c.l.b16 %v389
      %v931 = vunpack.c.l.b16 %v390
      %v932 = vunpack.c.h.b16 %v390
      %v933 = vunpack.c.l.b16 %v391
      %v934 = vunpack.c.h.b16 %v391
      %v935 = vunpack.c.l.b16 %v392
      %v936 = vunpack.c.h.b16 %v392
      %v937 = vunpack.c.l.b16 %v393
      %v938 = vunpack.c.l.b16 %v394
      %v939 = vunpack.c.h.b16 %v394
      %v940 = vunpack.c.l.b16 %v395
      %v941 = vunpack.c.h.b16 %v395
      %v942 = vunpack.c.l.b16 %v396
      %v943 = vunpack.c.h.b16 %v396
      %v944 = vunpack.c.l.b16 %v397
      %v945 = vunpack.c.l.b16 %v398
      %v946 = vunpack.c.h.b16 %v398
      %v947 = vunpack.c.l.b16 %v399
      %v948 = vunpack.c.h.b16 %v399
      %v949 = vunpack.c.l.b16 %v400
      %v950 = vunpack.c.h.b16 %v400
      %v951 = vunpack.c.l.b16 %v401
      %v952 = vunpack.c.l.b16 %v402
      %v953 = vunpack.c.h.b16 %v402
      %v954 = vunpack.c.l.b16 %v403
      %v955 = vunpack.c.h.b16 %v403
      %v956 = vunpack.c.l.b16 %v404
      %v957 = vunpack.c.h.b16 %v404
      %v958 = vunpack.c.l.b16 %v405
      %v959 = vunpack.c.l.b16 %v406
      %v960 = vunpack.c.h.b16 %v406
      %v961 = vunpack.c.l.b16 %v407
      %v962 = vunpack.c.h.b16 %v407
      %v963 = vunpack.c.l.b16 %v408
      %v964 = vunpack.c.h.b16 %v408
      %v965 = vunpack.c.l.b16 %v409
      %v966 = vunpack.c.l.b16 %v410
      %v967 = vunpack.c.h.b16 %v410
      %v968 = vunpack.c.l.b16 %v411
      %v969 = vunpack.c.h.b16 %v411
      %v970 = vunpack.c.l.b16 %v412
      %v971 = vunpack.c.h.b16 %v412
      %v972 = vunpack.c.l.b16 %v413
      %v973 = vunpack.c.l.b16 %v414
      %v974 = vunpack.c.h.b16 %v414
      %v975 = vunpack.c.l.b16 %v415
      %v976 = vunpack.c.h.b16 %v415
      %v977 = vunpack.c.l.b16 %v416
      %v978 = vunpack.c.h.b16 %v416
      %v979 = vunpack.c.l.b16 %v417
      %v980 = vunpack.c.l.b16 %v418
      %v981 = vunpack.c.h.b16 %v418
      %v982 = vunpack.c.l.b16 %v419
      %v983 = vunpack.c.h.b16 %v419
      %v984 = vunpack.c.l.b16 %v420
      %v985 = vunpack.c.h.b16 %v420
      %v986 = vunpack.c.l.b16 %v421
      %v987 = vunpack.c.l.b16 %v422
      %v988 = vunpack.c.h.b16 %v422
      %v989 = vunpack.c.l.b16 %v423
      %v990 = vunpack.c.h.b16 %v423
      %v991 = vunpack.c.l.b16 %v424
      %v992 = vunpack.c.h.b16 %v424
      %v993 = vunpack.c.l.b16 %v425
      %v994 = vunpack.c.l.b16 %v426
      %v995 = vunpack.c.h.b16 %v426
      %v996 = vunpack.c.l.b16 %v427
      %v997 = vunpack.c.h.b16 %v427
      %v998 = vunpack.c.l.b16 %v428
      %v999 = vunpack.c.h.b16 %v428
      %v1000 = vunpack.c.l.b16 %v429
      %v1001 = vunpack.c.l.b16 %v430
      %v1002 = vunpack.c.h.b16 %v430
      %v1003 = vunpack.c.l.b16 %v431
      %v1004 = vunpack.c.h.b16 %v431
      %v1005 = vunpack.c.l.b16 %v432
      %v1006 = vunpack.c.h.b16 %v432
      %v1007 = vunpack.c.l.b16 %v433
      %v1008 = vunpack.c.l.b16 %v434
      %v1009 = vunpack.c.h.b16 %v434
      %v1010 = vunpack.c.l.b16 %v435
      %v1011 = vunpack.c.h.b16 %v435
      %v1012 = vunpack.c.l.b16 %v436
      %v1013 = vunpack.c.h.b16 %v436
      %v1014 = vunpack.c.l.b16 %v437
      %v1015 = vunpack.c.l.b16 %v438
      %v1016 = vunpack.c.h.b16 %v438
      %v1017 = vunpack.c.l.b16 %v439
      %v1018 = vunpack.c.h.b16 %v439
      %v1019 = vunpack.c.l.b16 %v440
      %v1020 = vunpack.c.h.b16 %v440
      %v1021 = vunpack.c.l.b16 %v441
      %v1022 = vunpack.c.l.b16 %v442
      %v1023 = vunpack.c.h.b16 %v442
      %v1024 = vunpack.c.l.b16 %v443
      %v1025 = vunpack.c.h.b16 %v443
      %v1026 = vunpack.c.l.b16 %v444
      %v1027 = vunpack.c.h.b16 %v444
      %v1028 = vunpack.c.l.b16 %v445
      %v1029 = vunpack.c.l.b16 %v446
      %v1030 = vunpack.c.h.b16 %v446
      %v1031 = vunpack.c.l.b16 %v447
      %v1032 = vunpack.c.h.b16 %v447
      %v1033 = vunpack.c.l.b16 %v448
      %v1034 = vunpack.c.h.b16 %v448
      %v1035 = vunpack.c.l.b16 %v449
      %v1036 = vunpack.c.l.b16 %v450
      %v1037 = vunpack.c.h.b16 %v450
      %v1038 = vunpack.c.l.b16 %v451
      %v1039 = vunpack.c.h.b16 %v451
      %v1040 = vunpack.c.l.b16 %v452
      %v1041 = vunpack.c.h.b16 %v452
      %v1042 = vunpack.c.l.b16 %v453
      %v1043 = vunpack.c.l.b16 %v454
      %v1044 = vunpack.c.h.b16 %v454
      %v1045 = vunpack.c.l.b16 %v455
      %v1046 = vunpack.c.h.b16 %v455
      %v1047 = vunpack.c.l.b16 %v456
      %v1048 = vunpack.c.h.b16 %v456
      %v1049 = vunpack.c.l.b16 %v457
      %v1050 = vunpack.c.l.b16 %v458
      %v1051 = vunpack.c.h.b16 %v458
      %v1052 = vunpack.c.l.b16 %v459
      %v1053 = vunpack.c.h.b16 %v459
      %v1054 = vunpack.c.l.b16 %v460
      %v1055 = vunpack.c.h.b16 %v460
      %v1056 = vunpack.c.l.b16 %v461
      %v1057 = vunpack.c.l.b16 %v462
      %v1058 = vunpack.c.h.b16 %v462
      %v1059 = vunpack.c.l.b16 %v463
      %v1060 = vunpack.c.h.b16 %v463
      %v1061 = vunpack.c.l.b16 %v464
      %v1062 = vunpack.c.h.b16 %v464
      %v1063 = vunpack.c.l.b16 %v465
      %v1064 = vunpack.c.l.b16 %v466
      %v1065 = vunpack.c.h.b16 %v466
      %v1066 = vunpack.c.l.b16 %v467
      %v1067 = vunpack.c.h.b16 %v467
      %v1068 = vunpack.c.l.b16 %v468
      %v1069 = vunpack.c.h.b16 %v468
      %v1070 = vunpack.c.l.b16 %v469
      %v1071 = vpack.c.b16 %v854, %v847
      %v1072 = vpack.c.b16 %v855, %v848
      %v1073 = vpack.c.b16 %v856, %v849
      %v1074 = vpack.c.b16 %v857, %v850
      %v1075 = vpack.c.b16 %v858, %v851
      %v1076 = vpack.c.b16 %v859, %v852
      %v1077 = vpack.c.b16 %v860, %v853
      %v1078 = vpack.c.b16 %v868, %v861
      %v1079 = vpack.c.b16 %v869, %v862
      %v1080 = vpack.c.b16 %v870, %v863
      %v1081 = vpack.c.b16 %v871, %v864
      %v1082 = vpack.c.b16 %v872, %v865
      %v1083 = vpack.c.b16 %v873, %v866
      %v1084 = vpack.c.b16 %v874, %v867
      %v1085 = vpack.c.b16 %v882, %v875
      %v1086 = vpack.c.b16 %v883, %v876
      %v1087 = vpack.c.b16 %v884, %v877
      %v1088 = vpack.c.b16 %v885, %v878
      %v1089 = vpack.c.b16 %v886, %v879
      %v1090 = vpack.c.b16 %v887, %v880
      %v1091 = vpack.c.b16 %v888, %v881
      %v1092 = vpack.c.b16 %v896, %v889
      %v1093 = vpack.c.b16 %v897, %v890
      %v1094 = vpack.c.b16 %v898, %v891
      %v1095 = vpack.c.b16 %v899, %v892
      %v1096 = vpack.c.b16 %v900, %v893
      %v1097 = vpack.c.b16 %v901, %v894
      %v1098 = vpack.c.b16 %v902, %v895
      %v1099 = vpack.c.b16 %v910, %v903
      %v1100 = vpack.c.b16 %v911, %v904
      %v1101 = vpack.c.b16 %v912, %v905
      %v1102 = vpack.c.b16 %v913, %v906
      %v1103 = vpack.c.b16 %v914, %v907
      %v1104 = vpack.c.b16 %v915, %v908
      %v1105 = vpack.c.b16 %v916, %v909
      %v1106 = vpack.c.b16 %v924, %v917
      %v1107 = vpack.c.b16 %v925, %v918
      %v1108 = vpack.c.b16 %v926, %v919
      %v1109 = vpack.c.b16 %v927, %v920
      %v1110 = vpack.c.b16 %v928, %v921
      %v1111 = vpack.c.b16 %v929, %v922
      %v1112 = vpack.c.b16 %v930, %v923
      %v1113 = vpack.c.b16 %v938, %v931
      %v1114 = vpack.c.b16 %v939, %v932
      %v1115 = vpack.c.b16 %v940, %v933
      %v1116 = vpack.c.b16 %v941, %v934
      %v1117 = vpack.c.b16 %v942, %v935
      %v1118 = vpack.c.b16 %v943, %v936
      %v1119 = vpack.c.b16 %v944, %v937
      %v1120 = vpack.c.b16 %v952, %v945
      %v1121 = vpack.c.b16 %v953, %v946
      %v1122 = vpack.c.b16 %v954, %v947
      %v1123 = vpack.c.b16 %v955, %v948
      %v1124 = vpack.c.b16 %v956, %v949
      %v1125 = vpack.c.b16 %v957, %v950
      %v1126 = vpack.c.b16 %v958, %v951
      %v1127 = vpack.c.b16 %v966, %v959
      %v1128 = vpack.c.b16 %v967, %v960
      %v1129 = vpack.c.b16 %v968, %v961
      %v1130 = vpack.c.b16 %v969, %v962
      %v1131 = vpack.c.b16 %v970, %v963
      %v1132 = vpack.c.b16 %v971, %v964
      %v1133 = vpack.c.b16 %v972, %v965
      %v1134 = vpack.c.b16 %v980, %v973
      %v1135 = vpack.c.b16 %v981, %v974
      %v1136 = vpack.c.b16 %v982, %v975
      %v1137 = vpack.c.b16 %v983, %v976
      %v1138 = vpack.c.b16 %v984, %v977
      %v1139 = vpack.c.b16 %v985, %v978
      %v1140 = vpack.c.b16 %v986, %v979
      %v1141 = vpack.c.b16 %v994, %v987
      %v1142 = vpack.c.b16 %v995, %v988
      %v1143 = vpack.c.b16 %v996, %v989
      %v1144 = vpack.c.b16 %v997, %v990
      %v1145 = vpack.c.b16 %v998, %v991
      %v1146 = vpack.c.b16 %v999, %v992
      %v1147 = vpack.c.b16 %v1000, %v993
      %v1148 = vpack.c.b16 %v1008, %v1001
      %v1149 = vpack.c.b16 %v1009, %v1002
      %v1150 = vpack.c.b16 %v1010, %v1003
      %v1151 = vpack.c.b16 %v1011, %v1004
      %v1152 = vpack.c.b16 %v1012, %v1005
      %v1153 = vpack.c.b16 %v1013, %v1006
      %v1154 = vpack.c.b16 %v1014, %v1007
      %v1155 = vpack.c.b16 %v1022, %v1015
      %v1156 = vpack.c.b16 %v1023, %v1016
      %v1157 = vpack.c.b16 %v1024, %v1017
      %v1158 = vpack.c.b16 %v1025, %v1018
      %v1159 = vpack.c.b16 %v1026, %v1019
      %v1160 = vpack.c.b16 %v1027, %v1020
      %v1161 = vpack.c.b16 %v1028, %v1021
      %v1162 = vpack.c.b16 %v1036, %v1029
      %v1163 = vpack.c.b16 %v1037, %v1030
      %v1164 = vpack.c.b16 %v1038, %v1031
      %v1165 = vpack.c.b16 %v1039, %v1032
      %v1166 = vpack.c.b16 %v1040, %v1033
      %v1167 = vpack.c.b16 %v1041, %v1034
      %v1168 = vpack.c.b16 %v1042, %v1035
      %v1169 = vpack.c.b16 %v1050, %v1043
      %v1170 = vpack.c.b16 %v1051, %v1044
      %v1171 = vpack.c.b16 %v1052, %v1045
      %v1172 = vpack.c.b16 %v1053, %v1046
      %v1173 = vpack.c.b16 %v1054, %v1047
      %v1174 = vpack.c.b16 %v1055, %v1048
      %v1175 = vpack.c.b16 %v1056, %v1049
      %v1176 = vpack.c.b16 %v1064, %v1057
      %v1177 = vpack.c.b16 %v1065, %v1058
      %v1178 = vpack.c.b16 %v1066, %v1059
      %v1179 = vpack.c.b16 %v1067, %v1060
      %v1180 = vpack.c.b16 %v1068, %v1061
      %v1181 = vpack.c.b16 %v1069, %v1062
      %v1182 = vpack.c.b16 %v1070, %v1063
      %v1519 = vunpack.c.l.b16 %v474
      %v1520 = vunpack.c.h.b16 %v474
      %v1521 = vunpack.c.l.b16 %v475
      %v1522 = vunpack.c.h.b16 %v475
      %v1523 = vunpack.c.l.b16 %v476
      %v1524 = vunpack.c.h.b16 %v476
      %v1525 = vunpack.c.l.b16 %v477
      %v1526 = vunpack.c.h.b16 %v477
      %v1527 = vunpack.c.l.b16 %v478
      %v1528 = vunpack.c.h.b16 %v478
      %v1529 = vunpack.c.l.b16 %v479
      %v1530 = vunpack.c.h.b16 %v479
      %v1531 = vunpack.c.l.b16 %v480
      %v1532 = vunpack.c.h.b16 %v480
      %v1533 = vunpack.c.l.b16 %v481
      %v1534 = vunpack.c.h.b16 %v481
      %v1535 = vunpack.c.l.b16 %v482
      %v1536 = vunpack.c.h.b16 %v482
      %v1537 = vunpack.c.l.b16 %v483
      %v1538 = vunpack.c.h.b16 %v483
      %v1539 = vunpack.c.l.b16 %v484
      %v1540 = vunpack.c.h.b16 %v484
      %v1541 = vunpack.c.l.b16 %v485
      %v1542 = vunpack.c.h.b16 %v485
      %v1543 = vunpack.c.l.b16 %v486
      %v1544 = vunpack.c.h.b16 %v486
      %v1545 = vunpack.c.l.b16 %v487
      %v1546 = vunpack.c.h.b16 %v487
      %v1547 = vunpack.c.l.b16 %v488
      %v1548 = vunpack.c.h.b16 %v488
      %v1549 = vunpack.c.l.b16 %v489
      %v1550 = vunpack.c.h.b16 %v489
      %v1551 = vunpack.c.l.b16 %v490
      %v1552 = vunpack.c.h.b16 %v490
      %v1553 = vunpack.c.l.b16 %v491
      %v1554 = vunpack.c.h.b16 %v491
      %v1555 = vunpack.c.l.b16 %v492
      %v1556 = vunpack.c.h.b16 %v492
      %v1557 = vunpack.c.l.b16 %v493
      %v1558 = vunpack.c.h.b16 %v493
      %v1559 = vunpack.c.l.b16 %v494
      %v1560 = vunpack.c.h.b16 %v494
      %v1561 = vunpack.c.l.b16 %v495
      %v1562 = vunpack.c.h.b16 %v495
      %v1563 = vunpack.c.l.b16 %v496
      %v1564 = vunpack.c.h.b16 %v496
      %v1565 = vunpack.c.l.b16 %v497
      %v1566 = vunpack.c.h.b16 %v497
      %v1567 = vunpack.c.l.b16 %v498
      %v1568 = vunpack.c.h.b16 %v498
      %v1569 = vunpack.c.l.b16 %v499
      %v1570 = vunpack.c.h.b16 %v499
      %v1571 = vunpack.c.l.b16 %v500
      %v1572 = vunpack.c.h.b16 %v500
      %v1573 = vunpack.c.l.b16 %v501
      %v1574 = vunpack.c.h.b16 %v501
      %v1575 = vunpack.c.l.b16 %v502
      %v1576 = vunpack.c.h.b16 %v502
      %v1577 = vunpack.c.l.b16 %v503
      %v1578 = vunpack.c.h.b16 %v503
      %v1579 = vunpack.c.l.b16 %v504
      %v1580 = vunpack.c.h.b16 %v504
      %v1581 = vunpack.c.l.b16 %v505
      %v1582 = vunpack.c.h.b16 %v505
      %v1583 = vunpack.c.l.b16 %v506
      %v1584 = vunpack.c.h.b16 %v506
      %v1585 = vunpack.c.l.b16 %v507
      %v1586 = vunpack.c.h.b16 %v507
      %v1587 = vunpack.c.l.b16 %v508
      %v1588 = vunpack.c.h.b16 %v508
      %v1589 = vunpack.c.l.b16 %v509
      %v1590 = vunpack.c.h.b16 %v509
      %v1591 = vunpack.c.l.b16 %v510
      %v1592 = vunpack.c.h.b16 %v510
      %v1593 = vunpack.c.l.b16 %v511
      %v1594 = vunpack.c.h.b16 %v511
      %v1595 = vunpack.c.l.b16 %v512
      %v1596 = vunpack.c.h.b16 %v512
      %v1597 = vunpack.c.l.b16 %v513
      %v1598 = vunpack.c.h.b16 %v513
      %v1599 = vunpack.c.l.b16 %v514
      %v1600 = vunpack.c.h.b16 %v514
      %v1601 = vunpack.c.l.b16 %v515
      %v1602 = vunpack.c.h.b16 %v515
      %v1603 = vunpack.c.l.b16 %v516
      %v1604 = vunpack.c.h.b16 %v516
      %v1605 = vunpack.c.l.b16 %v517
      %v1606 = vunpack.c.h.b16 %v517
      %v1607 = vunpack.c.l.b16 %v518
      %v1608 = vunpack.c.h.b16 %v518
      %v1609 = vunpack.c.l.b16 %v519
      %v1610 = vunpack.c.h.b16 %v519
      %v1611 = vunpack.c.l.b16 %v520
      %v1612 = vunpack.c.h.b16 %v520
      %v1613 = vunpack.c.l.b16 %v521
      %v1614 = vunpack.c.h.b16 %v521
      %v1615 = vunpack.c.l.b16 %v522
      %v1616 = vunpack.c.h.b16 %v522
      %v1617 = vunpack.c.l.b16 %v523
      %v1618 = vunpack.c.h.b16 %v523
      %v1619 = vunpack.c.l.b16 %v524
      %v1620 = vunpack.c.h.b16 %v524
      %v1621 = vunpack.c.l.b16 %v525
      %v1622 = vunpack.c.h.b16 %v525
      %v1623 = vunpack.c.l.b16 %v526
      %v1624 = vunpack.c.h.b16 %v526
      %v1625 = vunpack.c.l.b16 %v527
      %v1626 = vunpack.c.h.b16 %v527
      %v1627 = vunpack.c.l.b16 %v528
      %v1628 = vunpack.c.h.b16 %v528
      %v1629 = vunpack.c.l.b16 %v529
      %v1630 = vunpack.c.h.b16 %v529
      %v1631 = vunpack.c.l.b16 %v530
      %v1632 = vunpack.c.h.b16 %v530
      %v1633 = vunpack.c.l.b16 %v531
      %v1634 = vunpack.c.h.b16 %v531
      %v1635 = vunpack.c.l.b16 %v532
      %v1636 = vunpack.c.h.b16 %v532
      %v1637 = vunpack.c.l.b16 %v533
      %v1638 = vunpack.c.h.b16 %v533
      %v1639 = vunpack.c.l.b16 %v534
      %v1640 = vunpack.c.h.b16 %v534
      %v1641 = vunpack.c.l.b16 %v535
      %v1642 = vunpack.c.h.b16 %v535
      %v1643 = vunpack.c.l.b16 %v536
      %v1644 = vunpack.c.h.b16 %v536
      %v1645 = vunpack.c.l.b16 %v537
      %v1646 = vunpack.c.h.b16 %v537
      %v1647 = vunpack.c.l.b16 %v538
      %v1648 = vunpack.c.h.b16 %v538
      %v1649 = vunpack.c.l.b16 %v539
      %v1650 = vunpack.c.h.b16 %v539
      %v1651 = vunpack.c.l.b16 %v540
      %v1652 = vunpack.c.h.b16 %v540
      %v1653 = vunpack.c.l.b16 %v541
      %v1654 = vunpack.c.h.b16 %v541
      %v1655 = vunpack.c.l.b16 %v542
      %v1656 = vunpack.c.h.b16 %v542
      %v1657 = vunpack.c.l.b16 %v543
      %v1658 = vunpack.c.h.b16 %v543
      %v1659 = vunpack.c.l.b16 %v544
      %v1660 = vunpack.c.h.b16 %v544
      %v1661 = vunpack.c.l.b16 %v545
      %v1662 = vunpack.c.h.b16 %v545
      %v1663 = vunpack.c.l.b16 %v546
      %v1664 = vunpack.c.h.b16 %v546
      %v1665 = vunpack.c.l.b16 %v547
      %v1666 = vunpack.c.h.b16 %v547
      %v1667 = vunpack.c.l.b16 %v548
      %v1668 = vunpack.c.h.b16 %v548
      %v1669 = vunpack.c.l.b16 %v549
      %v1670 = vunpack.c.h.b16 %v549
      %v1671 = vunpack.c.l.b16 %v550
      %v1672 = vunpack.c.h.b16 %v550
      %v1673 = vunpack.c.l.b16 %v551
      %v1674 = vunpack.c.h.b16 %v551
      %v1675 = vunpack.c.l.b16 %v552
      %v1676 = vunpack.c.h.b16 %v552
      %v1677 = vunpack.c.l.b16 %v553
      %v1678 = vunpack.c.h.b16 %v553
      %v1679 = vunpack.c.l.b16 %v554
      %v1680 = vunpack.c.h.b16 %v554
      %v1681 = vunpack.c.l.b16 %v555
      %v1682 = vunpack.c.h.b16 %v555
      %v1683 = vunpack.c.l.b16 %v556
      %v1684 = vunpack.c.h.b16 %v556
      %v1685 = vunpack.c.l.b16 %v557
      %v1686 = vunpack.c.h.b16 %v557
      %v1687 = vunpack.c.l.b16 %v558
      %v1688 = vunpack.c.h.b16 %v558
      %v1689 = vunpack.c.l.b16 %v559
      %v1690 = vunpack.c.h.b16 %v559
      %v1691 = vunpack.c.l.b16 %v560
      %v1692 = vunpack.c.h.b16 %v560
      %v1693 = vunpack.c.l.b16 %v561
      %v1694 = vunpack.c.h.b16 %v561
      %v1695 = vunpack.c.l.b16 %v562
      %v1696 = vunpack.c.h.b16 %v562
      %v1697 = vunpack.c.l.b16 %v563
      %v1698 = vunpack.c.h.b16 %v563
      %v1699 = vunpack.c.l.b16 %v564
      %v1700 = vunpack.c.h.b16 %v564
      %v1701 = vunpack.c.l.b16 %v565
      %v1702 = vunpack.c.h.b16 %v565
      %v1703 = vunpack.c.l.b16 %v566
      %v1704 = vunpack.c.h.b16 %v566
      %v1705 = vunpack.c.l.b16 %v567
      %v1706 = vunpack.c.h.b16 %v567
      %v1707 = vunpack.c.l.b16 %v568
      %v1708 = vunpack.c.h.b16 %v568
      %v1709 = vunpack.c.l.b16 %v569
      %v1710 = vunpack.c.h.b16 %v569
      %v1711 = vunpack.c.l.b16 %v570
      %v1712 = vunpack.c.h.b16 %v570
      %v1713 = vunpack.c.l.b16 %v571
      %v1714 = vunpack.c.h.b16 %v571
      %v1715 = vunpack.c.l.b16 %v572
      %v1716 = vunpack.c.h.b16 %v572
      %v1717 = vunpack.c.l.b16 %v573
      %v1718 = vunpack.c.h.b16 %v573
      %v1719 = vunpack.c.l.b16 %v574
      %v1720 = vunpack.c.h.b16 %v574
      %v1721 = vunpack.c.l.b16 %v575
      %v1722 = vunpack.c.h.b16 %v575
      %v1723 = vunpack.c.l.b16 %v576
      %v1724 = vunpack.c.h.b16 %v576
      %v1725 = vunpack.c.l.b16 %v577
      %v1726 = vunpack.c.h.b16 %v577
      %v1727 = vunpack.c.l.b16 %v578
      %v1728 = vunpack.c.h.b16 %v578
      %v1729 = vunpack.c.l.b16 %v579
      %v1730 = vunpack.c.h.b16 %v579
      %v1731 = vunpack.c.l.b16 %v580
      %v1732 = vunpack.c.h.b16 %v580
      %v1733 = vunpack.c.l.b16 %v581
      %v1734 = vunpack.c.h.b16 %v581
      %v1735 = vunpack.c.l.b16 %v582
      %v1736 = vunpack.c.h.b16 %v582
      %v1737 = vunpack.c.l.b16 %v583
      %v1738 = vunpack.c.h.b16 %v583
      %v1739 = vunpack.c.l.b16 %v584
      %v1740 = vunpack.c.h.b16 %v584
      %v1741 = vunpack.c.l.b16 %v585
      %v1742 = vunpack.c.h.b16 %v585
      %v1743 = vunpack.c.l.b16 %v586
      %v1744 = vunpack.c.h.b16 %v586
      %v1745 = vunpack.c.l.b16 %v587
      %v1746 = vunpack.c.h.b16 %v587
      %v1747 = vunpack.c.l.b16 %v588
      %v1748 = vunpack.c.h.b16 %v588
      %v1749 = vunpack.c.l.b16 %v589
      %v1750 = vunpack.c.h.b16 %v589
      %v1751 = vunpack.c.l.b16 %v590
      %v1752 = vunpack.c.h.b16 %v590
      %v1753 = vunpack.c.l.b16 %v591
      %v1754 = vunpack.c.h.b16 %v591
      %v1755 = vunpack.c.l.b16 %v592
      %v1756 = vunpack.c.h.b16 %v592
      %v1757 = vunpack.c.l.b16 %v593
      %v1758 = vunpack.c.h.b16 %v593
      %v1759 = vunpack.c.l.b16 %v594
      %v1760 = vunpack.c.h.b16 %v594
      %v1761 = vunpack.c.l.b16 %v595
      %v1762 = vunpack.c.h.b16 %v595
      %v1763 = vunpack.c.l.b16 %v596
      %v1764 = vunpack.c.h.b16 %v596
      %v1765 = vunpack.c.l.b16 %v597
      %v1766 = vunpack.c.h.b16 %v597
      %v1767 = vunpack.c.l.b16 %v598
      %v1768 = vunpack.c.h.b16 %v598
      %v1769 = vunpack.c.l.b16 %v599
      %v1770 = vunpack.c.h.b16 %v599
      %v1771 = vunpack.c.l.b16 %v600
      %v1772 = vunpack.c.h.b16 %v600
      %v1773 = vunpack.c.l.b16 %v601
      %v1774 = vunpack.c.h.b16 %v601
      %v1775 = vunpack.c.l.b16 %v602
      %v1776 = vunpack.c.h.b16 %v602
      %v1777 = vunpack.c.l.b16 %v603
      %v1778 = vunpack.c.h.b16 %v603
      %v1779 = vunpack.c.l.b16 %v604
      %v1780 = vunpack.c.h.b16 %v604
      %v1781 = vunpack.c.l.b16 %v605
      %v1782 = vunpack.c.h.b16 %v605
      %v1783 = vunpack.c.l.b16 %v606
      %v1784 = vunpack.c.h.b16 %v606
      %v1785 = vunpack.c.l.b16 %v607
      %v1786 = vunpack.c.h.b16 %v607
      %v1787 = vunpack.c.l.b16 %v608
      %v1788 = vunpack.c.h.b16 %v608
      %v1789 = vunpack.c.l.b16 %v609
      %v1790 = vunpack.c.h.b16 %v609
      %v1791 = vunpack.c.l.b16 %v610
      %v1792 = vunpack.c.h.b16 %v610
      %v1793 = vunpack.c.l.b16 %v611
      %v1794 = vunpack.c.h.b16 %v611
      %v1795 = vunpack.c.l.b16 %v612
      %v1796 = vunpack.c.h.b16 %v612
      %v1797 = vunpack.c.l.b16 %v613
      %v1798 = vunpack.c.h.b16 %v613
      %v1799 = vunpack.c.l.b16 %v614
      %v1800 = vunpack.c.h.b16 %v614
      %v1801 = vunpack.c.l.b16 %v615
      %v1802 = vunpack.c.h.b16 %v615
      %v1803 = vunpack.c.l.b16 %v616
      %v1804 = vunpack.c.h.b16 %v616
      %v1805 = vunpack.c.l.b16 %v617
      %v1806 = vunpack.c.h.b16 %v617
      %v1807 = vunpack.c.l.b16 %v618
      %v1808 = vunpack.c.h.b16 %v618
      %v1809 = vunpack.c.l.b16 %v619
      %v1810 = vunpack.c.h.b16 %v619
      %v1811 = vunpack.c.l.b16 %v620
      %v1812 = vunpack.c.h.b16 %v620
      %v1813 = vunpack.c.l.b16 %v621
      %v1814 = vunpack.c.h.b16 %v621
      %v1815 = vunpack.c.l.b16 %v622
      %v1816 = vunpack.c.h.b16 %v622
      %v1817 = vunpack.c.l.b16 %v623
      %v1818 = vunpack.c.h.b16 %v623
      %v1819 = vunpack.c.l.b16 %v624
      %v1820 = vunpack.c.h.b16 %v624
      %v1821 = vunpack.c.l.b16 %v625
      %v1822 = vunpack.c.h.b16 %v625
      %v1823 = vunpack.c.l.b16 %v626
      %v1824 = vunpack.c.h.b16 %v626
      %v1825 = vunpack.c.l.b16 %v627
      %v1826 = vunpack.c.h.b16 %v627
      %v1827 = vunpack.c.l.b16 %v628
      %v1828 = vunpack.c.h.b16 %v628
      %v1829 = vunpack.c.l.b16 %v629
      %v1830 = vunpack.c.h.b16 %v629
      %v1831 = vunpack.c.l.b16 %v630
      %v1832 = vunpack.c.h.b16 %v630
      %v1833 = vunpack.c.l.b16 %v631
      %v1834 = vunpack.c.h.b16 %v631
      %v1835 = vunpack.c.l.b16 %v632
      %v1836 = vunpack.c.h.b16 %v632
      %v1837 = vunpack.c.l.b16 %v633
      %v1838 = vunpack.c.h.b16 %v633
      %v1839 = vunpack.c.l.b16 %v634
      %v1840 = vunpack.c.h.b16 %v634
      %v1841 = vunpack.c.l.b16 %v635
      %v1842 = vunpack.c.h.b16 %v635
      %v1843 = vunpack.c.l.b16 %v636
      %v1844 = vunpack.c.h.b16 %v636
      %v1845 = vunpack.c.l.b16 %v637
      %v1846 = vunpack.c.h.b16 %v637
      %v1847 = vunpack.c.l.b16 %v638
      %v1848 = vunpack.c.h.b16 %v638
      %v1849 = vunpack.c.l.b16 %v639
      %v1850 = vunpack.c.h.b16 %v639
      %v1851 = vunpack.c.l.b16 %v640
      %v1852 = vunpack.c.h.b16 %v640
      %v1853 = vunpack.c.l.b16 %v641
      %v1854 = vunpack.c.h.b16 %v641
      %v1855 = vunpack.c.l.b16 %v642
      %v1856 = vunpack.c.h.b16 %v642
      %v1857 = vunpack.c.l.b16 %v643
      %v1858 = vunpack.c.h.b16 %v643
      %v1859 = vunpack.c.l.b16 %v644
      %v1860 = vunpack.c.h.b16 %v644
      %v1861 = vunpack.c.l.b16 %v645
      %v1862 = vunpack.c.h.b16 %v645
      %v1863 = vunpack.c.l.b16 %v646
      %v1864 = vunpack.c.h.b16 %v646
      %v1865 = vunpack.c.l.b16 %v647
      %v1866 = vunpack.c.h.b16 %v647
      %v1867 = vunpack.c.l.b16 %v648
      %v1868 = vunpack.c.h.b16 %v648
      %v1869 = vunpack.c.l.b16 %v649
      %v1870 = vunpack.c.h.b16 %v649
      %v1871 = vunpack.c.l.b16 %v650
      %v1872 = vunpack.c.h.b16 %v650
      %v1873 = vunpack.c.l.b16 %v651
      %v1874 = vunpack.c.h.b16 %v651
      %v1875 = vunpack.c.l.b16 %v652
      %v1876 = vunpack.c.h.b16 %v652
      %v1877 = vunpack.c.l.b16 %v653
      %v1878 = vunpack.c.h.b16 %v653
      %v1879 = vunpack.c.l.b16 %v654
      %v1880 = vunpack.c.h.b16 %v654
      %v1881 = vunpack.c.l.b16 %v655
      %v1882 = vunpack.c.h.b16 %v655
      %v1883 = vunpack.c.l.b16 %v656
      %v1884 = vunpack.c.h.b16 %v656
      %v1885 = vunpack.c.l.b16 %v657
      %v1886 = vunpack.c.h.b16 %v657
      %v1887 = vunpack.c.l.b16 %v658
      %v1888 = vunpack.c.h.b16 %v658
      %v1889 = vunpack.c.l.b16 %v659
      %v1890 = vunpack.c.h.b16 %v659
      %v1891 = vunpack.c.l.b16 %v660
      %v1892 = vunpack.c.h.b16 %v660
      %v1893 = vunpack.c.l.b16 %v661
      %v1894 = vunpack.c.h.b16 %v661
      %v1895 = vunpack.c.l.b16 %v662
      %v1896 = vunpack.c.h.b16 %v662
      %v1897 = vunpack.c.l.b16 %v663
      %v1898 = vunpack.c.h.b16 %v663
      %v1899 = vunpack.c.l.b16 %v664
      %v1900 = vunpack.c.h.b16 %v664
      %v1901 = vunpack.c.l.b16 %v665
      %v1902 = vunpack.c.h.b16 %v665
      %v1903 = vunpack.c.l.b16 %v666
      %v1904 = vunpack.c.h.b16 %v666
      %v1905 = vunpack.c.l.b16 %v667
      %v1906 = vunpack.c.h.b16 %v667
      %v1907 = vunpack.c.l.b16 %v668
      %v1908 = vunpack.c.h.b16 %v668
      %v1909 = vunpack.c.l.b16 %v669
      %v1910 = vunpack.c.h.b16 %v669
      %v1911 = vunpack.c.l.b16 %v670
      %v1912 = vunpack.c.h.b16 %v670
      %v1913 = vunpack.c.l.b16 %v671
      %v1914 = vunpack.c.h.b16 %v671
      %v1915 = vunpack.c.l.b16 %v672
      %v1916 = vunpack.c.h.b16 %v672
      %v1917 = vunpack.c.l.b16 %v673
      %v1918 = vunpack.c.h.b16 %v673
      %v1919 = vunpack.c.l.b16 %v674
      %v1920 = vunpack.c.h.b16 %v674
      %v1921 = vunpack.c.l.b16 %v675
      %v1922 = vunpack.c.h.b16 %v675
      %v1923 = vunpack.c.l.b16 %v676
      %v1924 = vunpack.c.h.b16 %v676
      %v1925 = vunpack.c.l.b16 %v677
      %v1926 = vunpack.c.h.b16 %v677
      %v1927 = vunpack.c.l.b16 %v678
      %v1928 = vunpack.c.h.b16 %v678
      %v1929 = vunpack.c.l.b16 %v679
      %v1930 = vunpack.c.h.b16 %v679
      %v1931 = vunpack.c.l.b16 %v680
      %v1932 = vunpack.c.h.b16 %v680
      %v1933 = vunpack.c.l.b16 %v681
      %v1934 = vunpack.c.h.b16 %v681
      %v1935 = vunpack.c.l.b16 %v682
      %v1936 = vunpack.c.h.b16 %v682
      %v1937 = vunpack.c.l.b16 %v683
      %v1938 = vunpack.c.h.b16 %v683
      %v1939 = vunpack.c.l.b16 %v684
      %v1940 = vunpack.c.h.b16 %v684
      %v1941 = vunpack.c.l.b16 %v685
      %v1942 = vunpack.c.h.b16 %v685
      %v1943 = vunpack.c.l.b16 %v686
      %v1944 = vunpack.c.h.b16 %v686
      %v1945 = vunpack.c.l.b16 %v687
      %v1946 = vunpack.c.h.b16 %v687
      %v1947 = vunpack.c.l.b16 %v688
      %v1948 = vunpack.c.h.b16 %v688
      %v1949 = vunpack.c.l.b16 %v689
      %v1950 = vunpack.c.h.b16 %v689
      %v1951 = vunpack.c.l.b16 %v690
      %v1952 = vunpack.c.h.b16 %v690
      %v1953 = vunpack.c.l.b16 %v691
      %v1954 = vunpack.c.h.b16 %v691
      %v1955 = vunpack.c.l.b16 %v692
      %v1956 = vunpack.c.h.b16 %v692
      %v1957 = vunpack.c.l.b16 %v693
      %v1958 = vunpack.c.h.b16 %v693
      %v1959 = vunpack.c.l.b16 %v694
      %v1960 = vunpack.c.h.b16 %v694
      %v1961 = vunpack.c.l.b16 %v695
      %v1962 = vunpack.c.h.b16 %v695
      %v1963 = vunpack.c.l.b16 %v696
      %v1964 = vunpack.c.h.b16 %v696
      %v1965 = vunpack.c.l.b16 %v697
      %v1966 = vunpack.c.h.b16 %v697
      %v1967 = vpack.c.b16 %v1523, %v1519
      %v1968 = vpack.c.b16 %v1524, %v1520
      %v1969 = vpack.c.b16 %v1525, %v1521
      %v1970 = vpack.c.b16 %v1526, %v1522
      %v1971 = vpack.c.b16 %v1531, %v1527
      %v1972 = vpack.c.b16 %v1532, %v1528
      %v1973 = vpack.c.b16 %v1533, %v1529
      %v1974 = vpack.c.b16 %v1534, %v1530
      %v1975 = vpack.c.b16 %v1539, %v1535
      %v1976 = vpack.c.b16 %v1540, %v1536
      %v1977 = vpack.c.b16 %v1541, %v1537
      %v1978 = vpack.c.b16 %v1542, %v1538
      %v1979 = vpack.c.b16 %v1547, %v1543
      %v1980 = vpack.c.b16 %v1548, %v1544
      %v1981 = vpack.c.b16 %v1549, %v1545
      %v1982 = vpack.c.b16 %v1550, %v1546
      %v1983 = vpack.c.b16 %v1555, %v1551
      %v1984 = vpack.c.b16 %v1556, %v1552
      %v1985 = vpack.c.b16 %v1557, %v1553
      %v1986 = vpack.c.b16 %v1558, %v1554
      %v1987 = vpack.c.b16 %v1563, %v1559
      %v1988 = vpack.c.b16 %v1564, %v1560
      %v1989 = vpack.c.b16 %v1565, %v1561
      %v1990 = vpack.c.b16 %v1566, %v1562
      %v1991 = vpack.c.b16 %v1571, %v1567
      %v1992 = vpack.c.b16 %v1572, %v1568
      %v1993 = vpack.c.b16 %v1573, %v1569
      %v1994 = vpack.c.b16 %v1574, %v1570
      %v1995 = vpack.c.b16 %v1579, %v1575
      %v1996 = vpack.c.b16 %v1580, %v1576
      %v1997 = vpack.c.b16 %v1581, %v1577
      %v1998 = vpack.c.b16 %v1582, %v1578
      %v1999 = vpack.c.b16 %v1587, %v1583
      %v2000 = vpack.c.b16 %v1588, %v1584
      %v2001 = vpack.c.b16 %v1589, %v1585
      %v2002 = vpack.c.b16 %v1590, %v1586
      %v2003 = vpack.c.b16 %v1595, %v1591
      %v2004 = vpack.c.b16 %v1596, %v1592
      %v2005 = vpack.c.b16 %v1597, %v1593
      %v2006 = vpack.c.b16 %v1598, %v1594
      %v2007 = vpack.c.b16 %v1603, %v1599
      %v2008 = vpack.c.b16 %v1604, %v1600
      %v2009 = vpack.c.b16 %v1605, %v1601
      %v2010 = vpack.c.b16 %v1606, %v1602
      %v2011 = vpack.c.b16 %v1611, %v1607
      %v2012 = vpack.c.b16 %v1612, %v1608
      %v2013 = vpack.c.b16 %v1613, %v1609
      %v2014 = vpack.c.b16 %v1614, %v1610
      %v2015 = vpack.c.b16 %v1619, %v1615
      %v2016 = vpack.c.b16 %v1620, %v1616
      %v2017 = vpack.c.b16 %v1621, %v1617
      %v2018 = vpack.c.b16 %v1622, %v1618
      %v2019 = vpack.c.b16 %v1627, %v1623
      %v2020 = vpack.c.b16 %v1628, %v1624
      %v2021 = vpack.c.b16 %v1629, %v1625
      %v2022 = vpack.c.b16 %v1630, %v1626
      %v2023 = vpack.c.b16 %v1635, %v1631
      %v2024 = vpack.c.b16 %v1636, %v1632
      %v2025 = vpack.c.b16 %v1637, %v1633
      %v2026 = vpack.c.b16 %v1638, %v1634
      %v2027 = vpack.c.b16 %v1643, %v1639
      %v2028 = vpack.c.b16 %v1644, %v1640
      %v2029 = vpack.c.b16 %v1645, %v1641
      %v2030 = vpack.c.b16 %v1646, %v1642
      %v2031 = vpack.c.b16 %v1651, %v1647
      %v2032 = vpack.c.b16 %v1652, %v1648
      %v2033 = vpack.c.b16 %v1653, %v1649
      %v2034 = vpack.c.b16 %v1654, %v1650
      %v2035 = vpack.c.b16 %v1659, %v1655
      %v2036 = vpack.c.b16 %v1660, %v1656
      %v2037 = vpack.c.b16 %v1661, %v1657
      %v2038 = vpack.c.b16 %v1662, %v1658
      %v2039 = vpack.c.b16 %v1667, %v1663
      %v2040 = vpack.c.b16 %v1668, %v1664
      %v2041 = vpack.c.b16 %v1669, %v1665
      %v2042 = vpack.c.b16 %v1670, %v1666
      %v2043 = vpack.c.b16 %v1675, %v1671
      %v2044 = vpack.c.b16 %v1676, %v1672
      %v2045 = vpack.c.b16 %v1677, %v1673
      %v2046 = vpack.c.b16 %v1678, %v1674
      %v2047 = vpack.c.b16 %v1683, %v1679
      %v2048 = vpack.c.b16 %v1684, %v1680
      %v2049 = vpack.c.b16 %v1685, %v1681
      %v2050 = vpack.c.b16 %v1686, %v1682
      %v2051 = vpack.c.b16 %v1691, %v1687
      %v2052 = vpack.c.b16 %v1692, %v1688
      %v2053 = vpack.c.b16 %v1693, %v1689
      %v2054 = vpack.c.b16 %v1694, %v1690
      %v2055 = vpack.c.b16 %v1699, %v1695
      %v2056 = vpack.c.b16 %v1700, %v1696
      %v2057 = vpack.c.b16 %v1701, %v1697
      %v2058 = vpack.c.b16 %v1702, %v1698
      %v2059 = vpack.c.b16 %v1707, %v1703
      %v2060 = vpack.c.b16 %v1708, %v1704
      %v2061 = vpack.c.b16 %v1709, %v1705
      %v2062 = vpack.c.b16 %v1710, %v1706
      %v2063 = vpack.c.b16 %v1715, %v1711
      %v2064 = vpack.c.b16 %v1716, %v1712
      %v2065 = vpack.c.b16 %v1717, %v1713
      %v2066 = vpack.c.b16 %v1718, %v1714
      %v2067 = vpack.c.b16 %v1723, %v1719
      %v2068 = vpack.c.b16 %v1724, %v1720
      %v2069 = vpack.c.b16 %v1725, %v1721
      %v2070 = vpack.c.b16 %v1726, %v1722
      %v2071 = vpack.c.b16 %v1731, %v1727
      %v2072 = vpack.c.b16 %v1732, %v1728
      %v2073 = vpack.c.b16 %v1733, %v1729
      %v2074 = vpack.c.b16 %v1734, %v1730
      %v2075 = vpack.c.b16 %v1739, %v1735
      %v2076 = vpack.c.b16 %v1740, %v1736
      %v2077 = vpack.c.b16 %v1741, %v1737
      %v2078 = vpack.c.b16 %v1742, %v1738
      %v2079 = vpack.c.b16 %v1747, %v1743
      %v2080 = vpack.c.b16 %v1748, %v1744
      %v2081 = vpack.c.b16 %v1749, %v1745
      %v2082 = vpack.c.b16 %v1750, %v1746
      %v2083 = vpack.c.b16 %v1755, %v1751
      %v2084 = vpack.c.b16 %v1756, %v1752
      %v2085 = vpack.c.b16 %v1757, %v1753
      %v2086 = vpack.c.b16 %v1758, %v1754
      %v2087 = vpack.c.b16 %v1763, %v1759
      %v2088 = vpack.c.b16 %v1764, %v1760
      %v2089 = vpack.c.b16 %v1765, %v1761
      %v2090 = vpack.c.b16 %v1766, %v1762
      %v2091 = vpack.c.b16 %v1771, %v1767
      %v2092 = vpack.c.b16 %v1772, %v1768
      %v2093 = vpack.c.b16 %v1773, %v1769
      %v2094 = vpack.c.b16 %v1774, %v1770
      %v2095 = vpack.c.b16 %v1779, %v1775
      %v2096 = vpack.c.b16 %v1780, %v1776
      %v2097 = vpack.c.b16 %v1781, %v1777
      %v2098 = vpack.c.b16 %v1782, %v1778
      %v2099 = vpack.c.b16 %v1787, %v1783
      %v2100 = vpack.c.b16 %v1788, %v1784
      %v2101 = vpack.c.b16 %v1789, %v1785
      %v2102 = vpack.c.b16 %v1790, %v1786
      %v2103 = vpack.c.b16 %v1795, %v1791
      %v2104 = vpack.c.b16 %v1796, %v1792
      %v2105 = vpack.c.b16 %v1797, %v1793
      %v2106 = vpack.c.b16 %v1798, %v1794
      %v2107 = vpack.c.b16 %v1803, %v1799
      %v2108 = vpack.c.b16 %v1804, %v1800
      %v2109 = vpack.c.b16 %v1805, %v1801
      %v2110 = vpack.c.b16 %v1806, %v1802
      %v2111 = vpack.c.b16 %v1811, %v1807
      %v2112 = vpack.c.b16 %v1812, %v1808
      %v2113 = vpack.c.b16 %v1813, %v1809
      %v2114 = vpack.c.b16 %v1814, %v1810
      %v2115 = vpack.c.b16 %v1819, %v1815
      %v2116 = vpack.c.b16 %v1820, %v1816
      %v2117 = vpack.c.b16 %v1821, %v1817
      %v2118 = vpack.c.b16 %v1822, %v1818
      %v2119 = vpack.c.b16 %v1827, %v1823
      %v2120 = vpack.c.b16 %v1828, %v1824
      %v2121 = vpack.c.b16 %v1829, %v1825
      %v2122 = vpack.c.b16 %v1830, %v1826
      %v2123 = vpack.c.b16 %v1835, %v1831
      %v2124 = vpack.c.b16 %v1836, %v1832
      %v2125 = vpack.c.b16 %v1837, %v1833
      %v2126 = vpack.c.b16 %v1838, %v1834
      %v2127 = vpack.c.b16 %v1843, %v1839
      %v2128 = vpack.c.b16 %v1844, %v1840
      %v2129 = vpack.c.b16 %v1845, %v1841
      %v2130 = vpack.c.b16 %v1846, %v1842
      %v2131 = vpack.c.b16 %v1851, %v1847
      %v2132 = vpack.c.b16 %v1852, %v1848
      %v2133 = vpack.c.b16 %v1853, %v1849
      %v2134 = vpack.c.b16 %v1854, %v1850
      %v2135 = vpack.c.b16 %v1859, %v1855
      %v2136 = vpack.c.b16 %v1860, %v1856
      %v2137 = vpack.c.b16 %v1861, %v1857
      %v2138 = vpack.c.b16 %v1862, %v1858
      %v2139 = vpack.c.b16 %v1867, %v1863
      %v2140 = vpack.c.b16 %v1868, %v1864
      %v2141 = vpack.c.b16 %v1869, %v1865
      %v2142 = vpack.c.b16 %v1870, %v1866
      %v2143 = vpack.c.b16 %v1875, %v1871
      %v2144 = vpack.c.b16 %v1876, %v1872
      %v2145 = vpack.c.b16 %v1877, %v1873
      %v2146 = vpack.c.b16 %v1878, %v1874
      %v2147 = vpack.c.b16 %v1883, %v1879
      %v2148 = vpack.c.b16 %v1884, %v1880
      %v2149 = vpack.c.b16 %v1885, %v1881
      %v2150 = vpack.c.b16 %v1886, %v1882
      %v2151 = vpack.c.b16 %v1891, %v1887
      %v2152 = vpack.c.b16 %v1892, %v1888
      %v2153 = vpack.c.b16 %v1893, %v1889
      %v2154 = vpack.c.b16 %v1894, %v1890
      %v2155 = vpack.c.b16 %v1899, %v1895
      %v2156 = vpack.c.b16 %v1900, %v1896
      %v2157 = vpack.c.b16 %v1901, %v1897
      %v2158 = vpack.c.b16 %v1902, %v1898
      %v2159 = vpack.c.b16 %v1907, %v1903
      %v2160 = vpack.c.b16 %v1908, %v1904
      %v2161 = vpack.c.b16 %v1909, %v1905
      %v2162 = vpack.c.b16 %v1910, %v1906
      %v2163 = vpack.c.b16 %v1915, %v1911
      %v2164 = vpack.c.b16 %v1916, %v1912
      %v2165 = vpack.c.b16 %v1917, %v1913
      %v2166 = vpack.c.b16 %v1918, %v1914
      %v2167 = vpack.c.b16 %v1923, %v1919
      %v2168 = vpack.c.b16 %v1924, %v1920
      %v2169 = vpack.c.b16 %v1925, %v1921
      %v2170 = vpack.c.b16 %v1926, %v1922
      %v2171 = vpack.c.b16 %v1931, %v1927
      %v2172 = vpack.c.b16 %v1932, %v1928
      %v2173 = vpack.c.b16 %v1933, %v1929
      %v2174 = vpack.c.b16 %v1934, %v1930
      %v2175 = vpack.c.b16 %v1939, %v1935
      %v2176 = vpack.c.b16 %v1940, %v1936
      %v2177 = vpack.c.b16 %v1941, %v1937
      %v2178 = vpack.c.b16 %v1942, %v1938
      %v2179 = vpack.c.b16 %v1947, %v1943
      %v2180 = vpack.c.b16 %v1948, %v1944
      %v2181 = vpack.c.b16 %v1949, %v1945
      %v2182 = vpack.c.b16 %v1950, %v1946
      %v2183 = vpack.c.b16 %v1955, %v1951
      %v2184 = vpack.c.b16 %v1956, %v1952
      %v2185 = vpack.c.b16 %v1957, %v1953
      %v2186 = vpack.c.b16 %v1958, %v1954
      %v2187 = vpack.c.b16 %v1963, %v1959
      %v2188 = vpack.c.b16 %v1964, %v1960
      %v2189 = vpack.c.b16 %v1965, %v1961
      %v2190 = vpack.c.b16 %v1966, %v1962
      %2415 = vmatprep.subr.bf16.mxu0 %v1996
      %2416 = vmatpush1.bf16.msra.mxu0 %v1995
      %2417 = vmatprep.subr.bf16.mxu0 %v1992
      %2418 = vmatpush1.bf16.msra.mxu0 %v1991
      %2419 = vmatprep.subr.bf16.mxu0 %v1988
      %2420 = vmatpush1.bf16.msra.mxu0 %v1987
      %2421 = vmatprep.subr.bf16.mxu0 %v1984
      %2422 = vmatpush1.bf16.msra.mxu0 %v1983
      %2423 = vmatprep.subr.bf16.mxu0 %v1980
      %2424 = vmatpush1.bf16.msra.mxu0 %v1979
      %2425 = vmatprep.subr.bf16.mxu0 %v1976
      %2426 = vmatpush1.bf16.msra.mxu0 %v1975
      %2427 = vmatprep.subr.bf16.mxu0 %v1972
      %2428 = vmatpush1.bf16.msra.mxu0 %v1971
      %2429 = vmatprep.subr.bf16.mxu0 %v1968
      %2430 = vmatpush1.bf16.msra.mxu0 %v1967
      %2431 = vmatprep.subr.bf16.mxu0 %v2028
      %2432 = vmatpush2.bf16.msra.mxu0 %v2027
      %2433 = vmatprep.subr.bf16.mxu0 %v2024
      %2434 = vmatpush2.bf16.msra.mxu0 %v2023
      %2435 = vmatprep.subr.bf16.mxu0 %v2020
      %2436 = vmatpush2.bf16.msra.mxu0 %v2019
      %2437 = vmatprep.subr.bf16.mxu0 %v2016
      %2438 = vmatpush2.bf16.msra.mxu0 %v2015
      %2439 = vmatprep.subr.bf16.mxu0 %v2012
      %2440 = vmatpush2.bf16.msra.mxu0 %v2011
      %2441 = vmatprep.subr.bf16.mxu0 %v2008
      %2442 = vmatpush2.bf16.msra.mxu0 %v2007
      %2443 = vmatprep.subr.bf16.mxu0 %v2004
      %2444 = vmatpush2.bf16.msra.mxu0 %v2003
      %2445 = vmatprep.subr.bf16.mxu0 %v2000
      %2446 = vmatpush2.bf16.msra.mxu0 %v1999
      %2447 = vmatprep.mubr.bf16.mxu0 %v1072
      %2448 = vmatmul.mubr.bf16.gmra.mxu0 %v1071
      %v2449 = vpop.f32.mrf.mxu0
      %v2450 = vadd.f32 %v702, %v2449
      %v2451 = vpop.f32.mrf.mxu0
      %v2452 = vadd.f32 %v706, %v2451
      %v2453 = vpop.f32.mrf.mxu0
      %v2454 = vadd.f32 %v702, %v2453
      %v2455 = vpop.f32.mrf.mxu0
      %v2456 = vadd.f32 %v706, %v2455
      %2457 = vmatprep.mubr.bf16.mxu0 %v1079
      %2458 = vmatmul.mubr.bf16.gmra.mxu0 %v1078
      %v2459 = vpop.f32.mrf.mxu0
      %v2460 = vadd.f32 %v702, %v2459
      %v2461 = vpop.f32.mrf.mxu0
      %v2462 = vadd.f32 %v706, %v2461
      %v2463 = vpop.f32.mrf.mxu0
      %v2464 = vadd.f32 %v702, %v2463
      %v2465 = vpop.f32.mrf.mxu0
      %v2466 = vadd.f32 %v706, %v2465
      %2467 = vmatprep.mubr.bf16.mxu0 %v1086
      %2468 = vmatmul.mubr.bf16.gmra.mxu0 %v1085
      %v2469 = vpop.f32.mrf.mxu0
      %v2470 = vadd.f32 %v702, %v2469
      %v2471 = vpop.f32.mrf.mxu0
      %v2472 = vadd.f32 %v706, %v2471
      %v2473 = vpop.f32.mrf.mxu0
      %v2474 = vadd.f32 %v702, %v2473
      %v2475 = vpop.f32.mrf.mxu0
      %v2476 = vadd.f32 %v706, %v2475
      %2477 = vmatprep.mubr.bf16.mxu0 %v1093
      %2478 = vmatmul.mubr.bf16.gmra.mxu0 %v1092
      %v2479 = vpop.f32.mrf.mxu0
      %v2480 = vadd.f32 %v702, %v2479
      %v2481 = vpop.f32.mrf.mxu0
      %v2482 = vadd.f32 %v706, %v2481
      %v2483 = vpop.f32.mrf.mxu0
      %v2484 = vadd.f32 %v702, %v2483
      %v2485 = vpop.f32.mrf.mxu0
      %v2486 = vadd.f32 %v706, %v2485
      %2487 = vmatprep.mubr.bf16.mxu0 %v1100
      %2488 = vmatmul.mubr.bf16.gmra.mxu0 %v1099
      %v2489 = vpop.f32.mrf.mxu0
      %v2490 = vadd.f32 %v702, %v2489
      %v2491 = vpop.f32.mrf.mxu0
      %v2492 = vadd.f32 %v706, %v2491
      %v2493 = vpop.f32.mrf.mxu0
      %v2494 = vadd.f32 %v702, %v2493
      %v2495 = vpop.f32.mrf.mxu0
      %v2496 = vadd.f32 %v706, %v2495
      %2497 = vmatprep.mubr.bf16.mxu0 %v1107
      %2498 = vmatmul.mubr.bf16.gmra.mxu0 %v1106
      %v2499 = vpop.f32.mrf.mxu0
      %v2500 = vadd.f32 %v702, %v2499
      %v2501 = vpop.f32.mrf.mxu0
      %v2502 = vadd.f32 %v706, %v2501
      %v2503 = vpop.f32.mrf.mxu0
      %v2504 = vadd.f32 %v702, %v2503
      %v2505 = vpop.f32.mrf.mxu0
      %v2506 = vadd.f32 %v706, %v2505
      %2507 = vmatprep.mubr.bf16.mxu0 %v1114
      %2508 = vmatmul.mubr.bf16.gmra.mxu0 %v1113
      %v2509 = vpop.f32.mrf.mxu0
      %v2510 = vadd.f32 %v702, %v2509
      %v2511 = vpop.f32.mrf.mxu0
      %v2512 = vadd.f32 %v706, %v2511
      %v2513 = vpop.f32.mrf.mxu0
      %v2514 = vadd.f32 %v702, %v2513
      %v2515 = vpop.f32.mrf.mxu0
      %v2516 = vadd.f32 %v706, %v2515
      %2517 = vmatprep.mubr.bf16.mxu0 %v1121
      %2518 = vmatmul.mubr.bf16.gmra.mxu0 %v1120
      %v2519 = vpop.f32.mrf.mxu0
      %v2520 = vadd.f32 %v702, %v2519
      %v2521 = vpop.f32.mrf.mxu0
      %v2522 = vadd.f32 %v706, %v2521
      %v2523 = vpop.f32.mrf.mxu0
      %v2524 = vadd.f32 %v702, %v2523
      %v2525 = vpop.f32.mrf.mxu0
      %v2526 = vadd.f32 %v706, %v2525
      %2527 = vmatprep.mubr.bf16.mxu0 %v1128
      %2528 = vmatmul.mubr.bf16.gmra.mxu0 %v1127
      %v2529 = vpop.f32.mrf.mxu0
      %v2530 = vadd.f32 %v702, %v2529
      %v2531 = vpop.f32.mrf.mxu0
      %v2532 = vadd.f32 %v706, %v2531
      %v2533 = vpop.f32.mrf.mxu0
      %v2534 = vadd.f32 %v702, %v2533
      %v2535 = vpop.f32.mrf.mxu0
      %v2536 = vadd.f32 %v706, %v2535
      %2537 = vmatprep.mubr.bf16.mxu0 %v1135
      %2538 = vmatmul.mubr.bf16.gmra.mxu0 %v1134
      %v2539 = vpop.f32.mrf.mxu0
      %v2540 = vadd.f32 %v702, %v2539
      %v2541 = vpop.f32.mrf.mxu0
      %v2542 = vadd.f32 %v706, %v2541
      %v2543 = vpop.f32.mrf.mxu0
      %v2544 = vadd.f32 %v702, %v2543
      %v2545 = vpop.f32.mrf.mxu0
      %v2546 = vadd.f32 %v706, %v2545
      %2547 = vmatprep.mubr.bf16.mxu0 %v1142
      %2548 = vmatmul.mubr.bf16.gmra.mxu0 %v1141
      %v2549 = vpop.f32.mrf.mxu0
      %v2550 = vadd.f32 %v702, %v2549
      %v2551 = vpop.f32.mrf.mxu0
      %v2552 = vadd.f32 %v706, %v2551
      %v2553 = vpop.f32.mrf.mxu0
      %v2554 = vadd.f32 %v702, %v2553
      %v2555 = vpop.f32.mrf.mxu0
      %v2556 = vadd.f32 %v706, %v2555
      %2557 = vmatprep.mubr.bf16.mxu0 %v1149
      %2558 = vmatmul.mubr.bf16.gmra.mxu0 %v1148
      %v2559 = vpop.f32.mrf.mxu0
      %v2560 = vadd.f32 %v702, %v2559
      %v2561 = vpop.f32.mrf.mxu0
      %v2562 = vadd.f32 %v706, %v2561
      %v2563 = vpop.f32.mrf.mxu0
      %v2564 = vadd.f32 %v702, %v2563
      %v2565 = vpop.f32.mrf.mxu0
      %v2566 = vadd.f32 %v706, %v2565
      %2567 = vmatprep.mubr.bf16.mxu0 %v1156
      %2568 = vmatmul.mubr.bf16.gmra.mxu0 %v1155
      %v2569 = vpop.f32.mrf.mxu0
      %v2570 = vadd.f32 %v702, %v2569
      %v2571 = vpop.f32.mrf.mxu0
      %v2572 = vadd.f32 %v706, %v2571
      %v2573 = vpop.f32.mrf.mxu0
      %v2574 = vadd.f32 %v702, %v2573
      %v2575 = vpop.f32.mrf.mxu0
      %v2576 = vadd.f32 %v706, %v2575
      %2577 = vmatprep.mubr.bf16.mxu0 %v1163
      %2578 = vmatmul.mubr.bf16.gmra.mxu0 %v1162
      %v2579 = vpop.f32.mrf.mxu0
      %v2580 = vadd.f32 %v702, %v2579
      %v2581 = vpop.f32.mrf.mxu0
      %v2582 = vadd.f32 %v706, %v2581
      %v2583 = vpop.f32.mrf.mxu0
      %v2584 = vadd.f32 %v702, %v2583
      %v2585 = vpop.f32.mrf.mxu0
      %v2586 = vadd.f32 %v706, %v2585
      %2587 = vmatprep.mubr.bf16.mxu0 %v1170
      %2588 = vmatmul.mubr.bf16.gmra.mxu0 %v1169
      %v2589 = vpop.f32.mrf.mxu0
      %v2590 = vadd.f32 %v702, %v2589
      %v2591 = vpop.f32.mrf.mxu0
      %v2592 = vadd.f32 %v706, %v2591
      %v2593 = vpop.f32.mrf.mxu0
      %v2594 = vadd.f32 %v702, %v2593
      %v2595 = vpop.f32.mrf.mxu0
      %v2596 = vadd.f32 %v706, %v2595
      %2597 = vmatprep.mubr.bf16.mxu0 %v1177
      %2598 = vmatmul.mubr.bf16.gmra.mxu0 %v1176
      %v2599 = vpop.f32.mrf.mxu0
      %v2600 = vadd.f32 %v702, %v2599
      %v2601 = vpop.f32.mrf.mxu0
      %v2602 = vadd.f32 %v706, %v2601
      %v2603 = vpop.f32.mrf.mxu0
      %v2604 = vadd.f32 %v702, %v2603
      %v2605 = vpop.f32.mrf.mxu0
      %v2606 = vadd.f32 %v706, %v2605
      %2607 = vdwg.mxu0
      %2608 = vmatprep.subr.bf16.mxu0 %v2060
      %2609 = vmatpush1.bf16.msra.mxu0 %v2059
      %2610 = vmatprep.subr.bf16.mxu0 %v2056
      %2611 = vmatpush1.bf16.msra.mxu0 %v2055
      %2612 = vmatprep.subr.bf16.mxu0 %v2052
      %2613 = vmatpush1.bf16.msra.mxu0 %v2051
      %2614 = vmatprep.subr.bf16.mxu0 %v2048
      %2615 = vmatpush1.bf16.msra.mxu0 %v2047
      %2616 = vmatprep.subr.bf16.mxu0 %v2044
      %2617 = vmatpush1.bf16.msra.mxu0 %v2043
      %2618 = vmatprep.subr.bf16.mxu0 %v2040
      %2619 = vmatpush1.bf16.msra.mxu0 %v2039
      %2620 = vmatprep.subr.bf16.mxu0 %v2036
      %2621 = vmatpush1.bf16.msra.mxu0 %v2035
      %2622 = vmatprep.subr.bf16.mxu0 %v2032
      %2623 = vmatpush1.bf16.msra.mxu0 %v2031
      %2624 = vmatprep.subr.bf16.mxu0 %v2092
      %2625 = vmatpush2.bf16.msra.mxu0 %v2091
      %2626 = vmatprep.subr.bf16.mxu0 %v2088
      %2627 = vmatpush2.bf16.msra.mxu0 %v2087
      %2628 = vmatprep.subr.bf16.mxu0 %v2084
      %2629 = vmatpush2.bf16.msra.mxu0 %v2083
      %2630 = vmatprep.subr.bf16.mxu0 %v2080
      %2631 = vmatpush2.bf16.msra.mxu0 %v2079
      %2632 = vmatprep.subr.bf16.mxu0 %v2076
      %2633 = vmatpush2.bf16.msra.mxu0 %v2075
      %2634 = vmatprep.subr.bf16.mxu0 %v2072
      %2635 = vmatpush2.bf16.msra.mxu0 %v2071
      %2636 = vmatprep.subr.bf16.mxu0 %v2068
      %2637 = vmatpush2.bf16.msra.mxu0 %v2067
      %2638 = vmatprep.subr.bf16.mxu0 %v2064
      %2639 = vmatpush2.bf16.msra.mxu0 %v2063
      %2640 = vmatprep.mubr.bf16.mxu0 %v1074
      %2641 = vmatmul.mubr.bf16.gmra.mxu0 %v1073
      %v2642 = vpop.f32.mrf.mxu0
      %v2643 = vadd.f32 %v2450, %v2642
      %v2644 = vpop.f32.mrf.mxu0
      %v2645 = vadd.f32 %v2452, %v2644
      %v2646 = vpop.f32.mrf.mxu0
      %v2647 = vadd.f32 %v2454, %v2646
      %v2648 = vpop.f32.mrf.mxu0
      %v2649 = vadd.f32 %v2456, %v2648
      %2650 = vmatprep.mubr.bf16.mxu0 %v1081
      %2651 = vmatmul.mubr.bf16.gmra.mxu0 %v1080
      %v2652 = vpop.f32.mrf.mxu0
      %v2653 = vadd.f32 %v2460, %v2652
      %v2654 = vpop.f32.mrf.mxu0
      %v2655 = vadd.f32 %v2462, %v2654
      %v2656 = vpop.f32.mrf.mxu0
      %v2657 = vadd.f32 %v2464, %v2656
      %v2658 = vpop.f32.mrf.mxu0
      %v2659 = vadd.f32 %v2466, %v2658
      %2660 = vmatprep.mubr.bf16.mxu0 %v1088
      %2661 = vmatmul.mubr.bf16.gmra.mxu0 %v1087
      %v2662 = vpop.f32.mrf.mxu0
      %v2663 = vadd.f32 %v2470, %v2662
      %v2664 = vpop.f32.mrf.mxu0
      %v2665 = vadd.f32 %v2472, %v2664
      %v2666 = vpop.f32.mrf.mxu0
      %v2667 = vadd.f32 %v2474, %v2666
      %v2668 = vpop.f32.mrf.mxu0
      %v2669 = vadd.f32 %v2476, %v2668
      %2670 = vmatprep.mubr.bf16.mxu0 %v1095
      %2671 = vmatmul.mubr.bf16.gmra.mxu0 %v1094
      %v2672 = vpop.f32.mrf.mxu0
      %v2673 = vadd.f32 %v2480, %v2672
      %v2674 = vpop.f32.mrf.mxu0
      %v2675 = vadd.f32 %v2482, %v2674
      %v2676 = vpop.f32.mrf.mxu0
      %v2677 = vadd.f32 %v2484, %v2676
      %v2678 = vpop.f32.mrf.mxu0
      %v2679 = vadd.f32 %v2486, %v2678
      %2680 = vmatprep.mubr.bf16.mxu0 %v1102
      %2681 = vmatmul.mubr.bf16.gmra.mxu0 %v1101
      %v2682 = vpop.f32.mrf.mxu0
      %v2683 = vadd.f32 %v2490, %v2682
      %v2684 = vpop.f32.mrf.mxu0
      %v2685 = vadd.f32 %v2492, %v2684
      %v2686 = vpop.f32.mrf.mxu0
      %v2687 = vadd.f32 %v2494, %v2686
      %v2688 = vpop.f32.mrf.mxu0
      %v2689 = vadd.f32 %v2496, %v2688
      %2690 = vmatprep.mubr.bf16.mxu0 %v1109
      %2691 = vmatmul.mubr.bf16.gmra.mxu0 %v1108
      %v2692 = vpop.f32.mrf.mxu0
      %v2693 = vadd.f32 %v2500, %v2692
      %v2694 = vpop.f32.mrf.mxu0
      %v2695 = vadd.f32 %v2502, %v2694
      %v2696 = vpop.f32.mrf.mxu0
      %v2697 = vadd.f32 %v2504, %v2696
      %v2698 = vpop.f32.mrf.mxu0
      %v2699 = vadd.f32 %v2506, %v2698
      %2700 = vmatprep.mubr.bf16.mxu0 %v1116
      %2701 = vmatmul.mubr.bf16.gmra.mxu0 %v1115
      %v2702 = vpop.f32.mrf.mxu0
      %v2703 = vadd.f32 %v2510, %v2702
      %v2704 = vpop.f32.mrf.mxu0
      %v2705 = vadd.f32 %v2512, %v2704
      %v2706 = vpop.f32.mrf.mxu0
      %v2707 = vadd.f32 %v2514, %v2706
      %v2708 = vpop.f32.mrf.mxu0
      %v2709 = vadd.f32 %v2516, %v2708
      %2710 = vmatprep.mubr.bf16.mxu0 %v1123
      %2711 = vmatmul.mubr.bf16.gmra.mxu0 %v1122
      %v2712 = vpop.f32.mrf.mxu0
      %v2713 = vadd.f32 %v2520, %v2712
      %v2714 = vpop.f32.mrf.mxu0
      %v2715 = vadd.f32 %v2522, %v2714
      %v2716 = vpop.f32.mrf.mxu0
      %v2717 = vadd.f32 %v2524, %v2716
      %v2718 = vpop.f32.mrf.mxu0
      %v2719 = vadd.f32 %v2526, %v2718
      %2720 = vmatprep.mubr.bf16.mxu0 %v1130
      %2721 = vmatmul.mubr.bf16.gmra.mxu0 %v1129
      %v2722 = vpop.f32.mrf.mxu0
      %v2723 = vadd.f32 %v2530, %v2722
      %v2724 = vpop.f32.mrf.mxu0
      %v2725 = vadd.f32 %v2532, %v2724
      %v2726 = vpop.f32.mrf.mxu0
      %v2727 = vadd.f32 %v2534, %v2726
      %v2728 = vpop.f32.mrf.mxu0
      %v2729 = vadd.f32 %v2536, %v2728
      %2730 = vmatprep.mubr.bf16.mxu0 %v1137
      %2731 = vmatmul.mubr.bf16.gmra.mxu0 %v1136
      %v2732 = vpop.f32.mrf.mxu0
      %v2733 = vadd.f32 %v2540, %v2732
      %v2734 = vpop.f32.mrf.mxu0
      %v2735 = vadd.f32 %v2542, %v2734
      %v2736 = vpop.f32.mrf.mxu0
      %v2737 = vadd.f32 %v2544, %v2736
      %v2738 = vpop.f32.mrf.mxu0
      %v2739 = vadd.f32 %v2546, %v2738
      %2740 = vmatprep.mubr.bf16.mxu0 %v1144
      %2741 = vmatmul.mubr.bf16.gmra.mxu0 %v1143
      %v2742 = vpop.f32.mrf.mxu0
      %v2743 = vadd.f32 %v2550, %v2742
      %v2744 = vpop.f32.mrf.mxu0
      %v2745 = vadd.f32 %v2552, %v2744
      %v2746 = vpop.f32.mrf.mxu0
      %v2747 = vadd.f32 %v2554, %v2746
      %v2748 = vpop.f32.mrf.mxu0
      %v2749 = vadd.f32 %v2556, %v2748
      %2750 = vmatprep.mubr.bf16.mxu0 %v1151
      %2751 = vmatmul.mubr.bf16.gmra.mxu0 %v1150
      %v2752 = vpop.f32.mrf.mxu0
      %v2753 = vadd.f32 %v2560, %v2752
      %v2754 = vpop.f32.mrf.mxu0
      %v2755 = vadd.f32 %v2562, %v2754
      %v2756 = vpop.f32.mrf.mxu0
      %v2757 = vadd.f32 %v2564, %v2756
      %v2758 = vpop.f32.mrf.mxu0
      %v2759 = vadd.f32 %v2566, %v2758
      %2760 = vmatprep.mubr.bf16.mxu0 %v1158
      %2761 = vmatmul.mubr.bf16.gmra.mxu0 %v1157
      %v2762 = vpop.f32.mrf.mxu0
      %v2763 = vadd.f32 %v2570, %v2762
      %v2764 = vpop.f32.mrf.mxu0
      %v2765 = vadd.f32 %v2572, %v2764
      %v2766 = vpop.f32.mrf.mxu0
      %v2767 = vadd.f32 %v2574, %v2766
      %v2768 = vpop.f32.mrf.mxu0
      %v2769 = vadd.f32 %v2576, %v2768
      %2770 = vmatprep.mubr.bf16.mxu0 %v1165
      %2771 = vmatmul.mubr.bf16.gmra.mxu0 %v1164
      %v2772 = vpop.f32.mrf.mxu0
      %v2773 = vadd.f32 %v2580, %v2772
      %v2774 = vpop.f32.mrf.mxu0
      %v2775 = vadd.f32 %v2582, %v2774
      %v2776 = vpop.f32.mrf.mxu0
      %v2777 = vadd.f32 %v2584, %v2776
      %v2778 = vpop.f32.mrf.mxu0
      %v2779 = vadd.f32 %v2586, %v2778
      %2780 = vmatprep.mubr.bf16.mxu0 %v1172
      %2781 = vmatmul.mubr.bf16.gmra.mxu0 %v1171
      %v2782 = vpop.f32.mrf.mxu0
      %v2783 = vadd.f32 %v2590, %v2782
      %v2784 = vpop.f32.mrf.mxu0
      %v2785 = vadd.f32 %v2592, %v2784
      %v2786 = vpop.f32.mrf.mxu0
      %v2787 = vadd.f32 %v2594, %v2786
      %v2788 = vpop.f32.mrf.mxu0
      %v2789 = vadd.f32 %v2596, %v2788
      %2790 = vmatprep.mubr.bf16.mxu0 %v1179
      %2791 = vmatmul.mubr.bf16.gmra.mxu0 %v1178
      %v2792 = vpop.f32.mrf.mxu0
      %v2793 = vadd.f32 %v2600, %v2792
      %v2794 = vpop.f32.mrf.mxu0
      %v2795 = vadd.f32 %v2602, %v2794
      %v2796 = vpop.f32.mrf.mxu0
      %v2797 = vadd.f32 %v2604, %v2796
      %v2798 = vpop.f32.mrf.mxu0
      %v2799 = vadd.f32 %v2606, %v2798
      %2800 = vdwg.mxu0
      %2801 = vmatprep.subr.bf16.mxu0 %v2124
      %2802 = vmatpush1.bf16.msra.mxu0 %v2123
      %2803 = vmatprep.subr.bf16.mxu0 %v2120
      %2804 = vmatpush1.bf16.msra.mxu0 %v2119
      %2805 = vmatprep.subr.bf16.mxu0 %v2116
      %2806 = vmatpush1.bf16.msra.mxu0 %v2115
      %2807 = vmatprep.subr.bf16.mxu0 %v2112
      %2808 = vmatpush1.bf16.msra.mxu0 %v2111
      %2809 = vmatprep.subr.bf16.mxu0 %v2108
      %2810 = vmatpush1.bf16.msra.mxu0 %v2107
      %2811 = vmatprep.subr.bf16.mxu0 %v2104
      %2812 = vmatpush1.bf16.msra.mxu0 %v2103
      %2813 = vmatprep.subr.bf16.mxu0 %v2100
      %2814 = vmatpush1.bf16.msra.mxu0 %v2099
      %2815 = vmatprep.subr.bf16.mxu0 %v2096
      %2816 = vmatpush1.bf16.msra.mxu0 %v2095
      %2817 = vmatprep.subr.bf16.mxu0 %v2156
      %2818 = vmatpush2.bf16.msra.mxu0 %v2155
      %2819 = vmatprep.subr.bf16.mxu0 %v2152
      %2820 = vmatpush2.bf16.msra.mxu0 %v2151
      %2821 = vmatprep.subr.bf16.mxu0 %v2148
      %2822 = vmatpush2.bf16.msra.mxu0 %v2147
      %2823 = vmatprep.subr.bf16.mxu0 %v2144
      %2824 = vmatpush2.bf16.msra.mxu0 %v2143
      %2825 = vmatprep.subr.bf16.mxu0 %v2140
      %2826 = vmatpush2.bf16.msra.mxu0 %v2139
      %2827 = vmatprep.subr.bf16.mxu0 %v2136
      %2828 = vmatpush2.bf16.msra.mxu0 %v2135
      %2829 = vmatprep.subr.bf16.mxu0 %v2132
      %2830 = vmatpush2.bf16.msra.mxu0 %v2131
      %2831 = vmatprep.subr.bf16.mxu0 %v2128
      %2832 = vmatpush2.bf16.msra.mxu0 %v2127
      %2833 = vmatprep.mubr.bf16.mxu0 %v1076
      %2834 = vmatmul.mubr.bf16.gmra.mxu0 %v1075
      %v2835 = vpop.f32.mrf.mxu0
      %v2836 = vadd.f32 %v2643, %v2835
      %v2837 = vpop.f32.mrf.mxu0
      %v2838 = vadd.f32 %v2645, %v2837
      %v2839 = vpop.f32.mrf.mxu0
      %v2840 = vadd.f32 %v2647, %v2839
      %v2841 = vpop.f32.mrf.mxu0
      %v2842 = vadd.f32 %v2649, %v2841
      %2843 = vmatprep.mubr.bf16.mxu0 %v1083
      %2844 = vmatmul.mubr.bf16.gmra.mxu0 %v1082
      %v2845 = vpop.f32.mrf.mxu0
      %v2846 = vadd.f32 %v2653, %v2845
      %v2847 = vpop.f32.mrf.mxu0
      %v2848 = vadd.f32 %v2655, %v2847
      %v2849 = vpop.f32.mrf.mxu0
      %v2850 = vadd.f32 %v2657, %v2849
      %v2851 = vpop.f32.mrf.mxu0
      %v2852 = vadd.f32 %v2659, %v2851
      %2853 = vmatprep.mubr.bf16.mxu0 %v1090
      %2854 = vmatmul.mubr.bf16.gmra.mxu0 %v1089
      %v2855 = vpop.f32.mrf.mxu0
      %v2856 = vadd.f32 %v2663, %v2855
      %v2857 = vpop.f32.mrf.mxu0
      %v2858 = vadd.f32 %v2665, %v2857
      %v2859 = vpop.f32.mrf.mxu0
      %v2860 = vadd.f32 %v2667, %v2859
      %v2861 = vpop.f32.mrf.mxu0
      %v2862 = vadd.f32 %v2669, %v2861
      %2863 = vmatprep.mubr.bf16.mxu0 %v1097
      %2864 = vmatmul.mubr.bf16.gmra.mxu0 %v1096
      %v2865 = vpop.f32.mrf.mxu0
      %v2866 = vadd.f32 %v2673, %v2865
      %v2867 = vpop.f32.mrf.mxu0
      %v2868 = vadd.f32 %v2675, %v2867
      %v2869 = vpop.f32.mrf.mxu0
      %v2870 = vadd.f32 %v2677, %v2869
      %v2871 = vpop.f32.mrf.mxu0
      %v2872 = vadd.f32 %v2679, %v2871
      %2873 = vmatprep.mubr.bf16.mxu0 %v1104
      %2874 = vmatmul.mubr.bf16.gmra.mxu0 %v1103
      %v2875 = vpop.f32.mrf.mxu0
      %v2876 = vadd.f32 %v2683, %v2875
      %v2877 = vpop.f32.mrf.mxu0
      %v2878 = vadd.f32 %v2685, %v2877
      %v2879 = vpop.f32.mrf.mxu0
      %v2880 = vadd.f32 %v2687, %v2879
      %v2881 = vpop.f32.mrf.mxu0
      %v2882 = vadd.f32 %v2689, %v2881
      %2883 = vmatprep.mubr.bf16.mxu0 %v1111
      %2884 = vmatmul.mubr.bf16.gmra.mxu0 %v1110
      %v2885 = vpop.f32.mrf.mxu0
      %v2886 = vadd.f32 %v2693, %v2885
      %v2887 = vpop.f32.mrf.mxu0
      %v2888 = vadd.f32 %v2695, %v2887
      %v2889 = vpop.f32.mrf.mxu0
      %v2890 = vadd.f32 %v2697, %v2889
      %v2891 = vpop.f32.mrf.mxu0
      %v2892 = vadd.f32 %v2699, %v2891
      %2893 = vmatprep.mubr.bf16.mxu0 %v1118
      %2894 = vmatmul.mubr.bf16.gmra.mxu0 %v1117
      %v2895 = vpop.f32.mrf.mxu0
      %v2896 = vadd.f32 %v2703, %v2895
      %v2897 = vpop.f32.mrf.mxu0
      %v2898 = vadd.f32 %v2705, %v2897
      %v2899 = vpop.f32.mrf.mxu0
      %v2900 = vadd.f32 %v2707, %v2899
      %v2901 = vpop.f32.mrf.mxu0
      %v2902 = vadd.f32 %v2709, %v2901
      %2903 = vmatprep.mubr.bf16.mxu0 %v1125
      %2904 = vmatmul.mubr.bf16.gmra.mxu0 %v1124
      %v2905 = vpop.f32.mrf.mxu0
      %v2906 = vadd.f32 %v2713, %v2905
      %v2907 = vpop.f32.mrf.mxu0
      %v2908 = vadd.f32 %v2715, %v2907
      %v2909 = vpop.f32.mrf.mxu0
      %v2910 = vadd.f32 %v2717, %v2909
      %v2911 = vpop.f32.mrf.mxu0
      %v2912 = vadd.f32 %v2719, %v2911
      %2913 = vmatprep.mubr.bf16.mxu0 %v1132
      %2914 = vmatmul.mubr.bf16.gmra.mxu0 %v1131
      %v2915 = vpop.f32.mrf.mxu0
      %v2916 = vadd.f32 %v2723, %v2915
      %v2917 = vpop.f32.mrf.mxu0
      %v2918 = vadd.f32 %v2725, %v2917
      %v2919 = vpop.f32.mrf.mxu0
      %v2920 = vadd.f32 %v2727, %v2919
      %v2921 = vpop.f32.mrf.mxu0
      %v2922 = vadd.f32 %v2729, %v2921
      %2923 = vmatprep.mubr.bf16.mxu0 %v1139
      %2924 = vmatmul.mubr.bf16.gmra.mxu0 %v1138
      %v2925 = vpop.f32.mrf.mxu0
      %v2926 = vadd.f32 %v2733, %v2925
      %v2927 = vpop.f32.mrf.mxu0
      %v2928 = vadd.f32 %v2735, %v2927
      %v2929 = vpop.f32.mrf.mxu0
      %v2930 = vadd.f32 %v2737, %v2929
      %v2931 = vpop.f32.mrf.mxu0
      %v2932 = vadd.f32 %v2739, %v2931
      %2933 = vmatprep.mubr.bf16.mxu0 %v1146
      %2934 = vmatmul.mubr.bf16.gmra.mxu0 %v1145
      %v2935 = vpop.f32.mrf.mxu0
      %v2936 = vadd.f32 %v2743, %v2935
      %v2937 = vpop.f32.mrf.mxu0
      %v2938 = vadd.f32 %v2745, %v2937
      %v2939 = vpop.f32.mrf.mxu0
      %v2940 = vadd.f32 %v2747, %v2939
      %v2941 = vpop.f32.mrf.mxu0
      %v2942 = vadd.f32 %v2749, %v2941
      %2943 = vmatprep.mubr.bf16.mxu0 %v1153
      %2944 = vmatmul.mubr.bf16.gmra.mxu0 %v1152
      %v2945 = vpop.f32.mrf.mxu0
      %v2946 = vadd.f32 %v2753, %v2945
      %v2947 = vpop.f32.mrf.mxu0
      %v2948 = vadd.f32 %v2755, %v2947
      %v2949 = vpop.f32.mrf.mxu0
      %v2950 = vadd.f32 %v2757, %v2949
      %v2951 = vpop.f32.mrf.mxu0
      %v2952 = vadd.f32 %v2759, %v2951
      %2953 = vmatprep.mubr.bf16.mxu0 %v1160
      %2954 = vmatmul.mubr.bf16.gmra.mxu0 %v1159
      %v2955 = vpop.f32.mrf.mxu0
      %v2956 = vadd.f32 %v2763, %v2955
      %v2957 = vpop.f32.mrf.mxu0
      %v2958 = vadd.f32 %v2765, %v2957
      %v2959 = vpop.f32.mrf.mxu0
      %v2960 = vadd.f32 %v2767, %v2959
      %v2961 = vpop.f32.mrf.mxu0
      %v2962 = vadd.f32 %v2769, %v2961
      %2963 = vmatprep.mubr.bf16.mxu0 %v1167
      %2964 = vmatmul.mubr.bf16.gmra.mxu0 %v1166
      %v2965 = vpop.f32.mrf.mxu0
      %v2966 = vadd.f32 %v2773, %v2965
      %v2967 = vpop.f32.mrf.mxu0
      %v2968 = vadd.f32 %v2775, %v2967
      %v2969 = vpop.f32.mrf.mxu0
      %v2970 = vadd.f32 %v2777, %v2969
      %v2971 = vpop.f32.mrf.mxu0
      %v2972 = vadd.f32 %v2779, %v2971
      %2973 = vmatprep.mubr.bf16.mxu0 %v1174
      %2974 = vmatmul.mubr.bf16.gmra.mxu0 %v1173
      %v2975 = vpop.f32.mrf.mxu0
      %v2976 = vadd.f32 %v2783, %v2975
      %v2977 = vpop.f32.mrf.mxu0
      %v2978 = vadd.f32 %v2785, %v2977
      %v2979 = vpop.f32.mrf.mxu0
      %v2980 = vadd.f32 %v2787, %v2979
      %v2981 = vpop.f32.mrf.mxu0
      %v2982 = vadd.f32 %v2789, %v2981
      %2983 = vmatprep.mubr.bf16.mxu0 %v1181
      %2984 = vmatmul.mubr.bf16.gmra.mxu0 %v1180
      %v2985 = vpop.f32.mrf.mxu0
      %v2986 = vadd.f32 %v2793, %v2985
      %v2987 = vpop.f32.mrf.mxu0
      %v2988 = vadd.f32 %v2795, %v2987
      %v2989 = vpop.f32.mrf.mxu0
      %v2990 = vadd.f32 %v2797, %v2989
      %v2991 = vpop.f32.mrf.mxu0
      %v2992 = vadd.f32 %v2799, %v2991
      %2993 = vdwg.mxu0
      %2994 = vmatprep.subr.bf16.mxu0 %v2188
      %2995 = vmatpush1.bf16.msra.mxu0 %v2187
      %2996 = vmatprep.subr.bf16.mxu0 %v2184
      %2997 = vmatpush1.bf16.msra.mxu0 %v2183
      %2998 = vmatprep.subr.bf16.mxu0 %v2180
      %2999 = vmatpush1.bf16.msra.mxu0 %v2179
      %3000 = vmatprep.subr.bf16.mxu0 %v2176
      %3001 = vmatpush1.bf16.msra.mxu0 %v2175
      %3002 = vmatprep.subr.bf16.mxu0 %v2172
      %3003 = vmatpush1.bf16.msra.mxu0 %v2171
      %3004 = vmatprep.subr.bf16.mxu0 %v2168
      %3005 = vmatpush1.bf16.msra.mxu0 %v2167
      %3006 = vmatprep.subr.bf16.mxu0 %v2164
      %3007 = vmatpush1.bf16.msra.mxu0 %v2163
      %3008 = vmatprep.subr.bf16.mxu0 %v2160
      %3009 = vmatpush1.bf16.msra.mxu0 %v2159
      %3010 = vmatprep.subr.bf16.mxu0 0
      %3011 = vmatpush2.bf16.msra.mxu0 0
      %3012 = vmatprep.subr.bf16.mxu0 0
      %3013 = vmatpush2.bf16.msra.mxu0 0
      %3014 = vmatprep.subr.bf16.mxu0 0
      %3015 = vmatpush2.bf16.msra.mxu0 0
      %3016 = vmatprep.subr.bf16.mxu0 0
      %3017 = vmatpush2.bf16.msra.mxu0 0
      %3018 = vmatprep.subr.bf16.mxu0 0
      %3019 = vmatpush2.bf16.msra.mxu0 0
      %3020 = vmatprep.subr.bf16.mxu0 0
      %3021 = vmatpush2.bf16.msra.mxu0 0
      %3022 = vmatprep.subr.bf16.mxu0 0
      %3023 = vmatpush2.bf16.msra.mxu0 0
      %3024 = vmatprep.subr.bf16.mxu0 0
      %3025 = vmatpush2.bf16.msra.mxu0 0
      %3026 = vmatprep.mubr.bf16.mxu0 0
      %3027 = vmatmul.mubr.bf16.gmra.mxu0 %v1077
      %v3028 = vpop.f32.mrf.mxu0
      %v3029 = vadd.f32 %v2836, %v3028
      %v3030 = vpop.f32.mrf.mxu0
      %v3031 = vadd.f32 %v2838, %v3030
      %v3032 = vpop.f32.mrf.mxu0
      %v3033 = vadd.f32 %v2840, %v3032
      %v3034 = vpop.f32.mrf.mxu0
      %v3035 = vadd.f32 %v2842, %v3034
      %3036 = vmatprep.mubr.bf16.mxu0 0
      %3037 = vmatmul.mubr.bf16.gmra.mxu0 %v1084
      %v3038 = vpop.f32.mrf.mxu0
      %v3039 = vadd.f32 %v2846, %v3038
      %v3040 = vpop.f32.mrf.mxu0
      %v3041 = vadd.f32 %v2848, %v3040
      %v3042 = vpop.f32.mrf.mxu0
      %v3043 = vadd.f32 %v2850, %v3042
      %v3044 = vpop.f32.mrf.mxu0
      %v3045 = vadd.f32 %v2852, %v3044
      %3046 = vmatprep.mubr.bf16.mxu0 0
      %3047 = vmatmul.mubr.bf16.gmra.mxu0 %v1091
      %v3048 = vpop.f32.mrf.mxu0
      %v3049 = vadd.f32 %v2856, %v3048
      %v3050 = vpop.f32.mrf.mxu0
      %v3051 = vadd.f32 %v2858, %v3050
      %v3052 = vpop.f32.mrf.mxu0
      %v3053 = vadd.f32 %v2860, %v3052
      %v3054 = vpop.f32.mrf.mxu0
      %v3055 = vadd.f32 %v2862, %v3054
      %3056 = vmatprep.mubr.bf16.mxu0 0
      %3057 = vmatmul.mubr.bf16.gmra.mxu0 %v1098
      %v3058 = vpop.f32.mrf.mxu0
      %v3059 = vadd.f32 %v2866, %v3058
      %v3060 = vpop.f32.mrf.mxu0
      %v3061 = vadd.f32 %v2868, %v3060
      %v3062 = vpop.f32.mrf.mxu0
      %v3063 = vadd.f32 %v2870, %v3062
      %v3064 = vpop.f32.mrf.mxu0
      %v3065 = vadd.f32 %v2872, %v3064
      %3066 = vmatprep.mubr.bf16.mxu0 0
      %3067 = vmatmul.mubr.bf16.gmra.mxu0 %v1105
      %v3068 = vpop.f32.mrf.mxu0
      %v3069 = vadd.f32 %v2876, %v3068
      %v3070 = vpop.f32.mrf.mxu0
      %v3071 = vadd.f32 %v2878, %v3070
      %v3072 = vpop.f32.mrf.mxu0
      %v3073 = vadd.f32 %v2880, %v3072
      %v3074 = vpop.f32.mrf.mxu0
      %v3075 = vadd.f32 %v2882, %v3074
      %3076 = vmatprep.mubr.bf16.mxu0 0
      %3077 = vmatmul.mubr.bf16.gmra.mxu0 %v1112
      %v3078 = vpop.f32.mrf.mxu0
      %v3079 = vadd.f32 %v2886, %v3078
      %v3080 = vpop.f32.mrf.mxu0
      %v3081 = vadd.f32 %v2888, %v3080
      %v3082 = vpop.f32.mrf.mxu0
      %v3083 = vadd.f32 %v2890, %v3082
      %v3084 = vpop.f32.mrf.mxu0
      %v3085 = vadd.f32 %v2892, %v3084
      %3086 = vmatprep.mubr.bf16.mxu0 0
      %3087 = vmatmul.mubr.bf16.gmra.mxu0 %v1119
      %v3088 = vpop.f32.mrf.mxu0
      %v3089 = vadd.f32 %v2896, %v3088
      %v3090 = vpop.f32.mrf.mxu0
      %v3091 = vadd.f32 %v2898, %v3090
      %v3092 = vpop.f32.mrf.mxu0
      %v3093 = vadd.f32 %v2900, %v3092
      %v3094 = vpop.f32.mrf.mxu0
      %v3095 = vadd.f32 %v2902, %v3094
      %3096 = vmatprep.mubr.bf16.mxu0 0
      %3097 = vmatmul.mubr.bf16.gmra.mxu0 %v1126
      %v3098 = vpop.f32.mrf.mxu0
      %v3099 = vadd.f32 %v2906, %v3098
      %v3100 = vpop.f32.mrf.mxu0
      %v3101 = vadd.f32 %v2908, %v3100
      %v3102 = vpop.f32.mrf.mxu0
      %v3103 = vadd.f32 %v2910, %v3102
      %v3104 = vpop.f32.mrf.mxu0
      %v3105 = vadd.f32 %v2912, %v3104
      %3106 = vmatprep.mubr.bf16.mxu0 0
      %3107 = vmatmul.mubr.bf16.gmra.mxu0 %v1133
      %v3108 = vpop.f32.mrf.mxu0
      %v3109 = vadd.f32 %v2916, %v3108
      %v3110 = vpop.f32.mrf.mxu0
      %v3111 = vadd.f32 %v2918, %v3110
      %v3112 = vpop.f32.mrf.mxu0
      %v3113 = vadd.f32 %v2920, %v3112
      %v3114 = vpop.f32.mrf.mxu0
      %v3115 = vadd.f32 %v2922, %v3114
      %3116 = vmatprep.mubr.bf16.mxu0 0
      %3117 = vmatmul.mubr.bf16.gmra.mxu0 %v1140
      %v3118 = vpop.f32.mrf.mxu0
      %v3119 = vadd.f32 %v2926, %v3118
      %v3120 = vpop.f32.mrf.mxu0
      %v3121 = vadd.f32 %v2928, %v3120
      %v3122 = vpop.f32.mrf.mxu0
      %v3123 = vadd.f32 %v2930, %v3122
      %v3124 = vpop.f32.mrf.mxu0
      %v3125 = vadd.f32 %v2932, %v3124
      %3126 = vmatprep.mubr.bf16.mxu0 0
      %3127 = vmatmul.mubr.bf16.gmra.mxu0 %v1147
      %v3128 = vpop.f32.mrf.mxu0
      %v3129 = vadd.f32 %v2936, %v3128
      %v3130 = vpop.f32.mrf.mxu0
      %v3131 = vadd.f32 %v2938, %v3130
      %v3132 = vpop.f32.mrf.mxu0
      %v3133 = vadd.f32 %v2940, %v3132
      %v3134 = vpop.f32.mrf.mxu0
      %v3135 = vadd.f32 %v2942, %v3134
      %3136 = vmatprep.mubr.bf16.mxu0 0
      %3137 = vmatmul.mubr.bf16.gmra.mxu0 %v1154
      %v3138 = vpop.f32.mrf.mxu0
      %v3139 = vadd.f32 %v2946, %v3138
      %v3140 = vpop.f32.mrf.mxu0
      %v3141 = vadd.f32 %v2948, %v3140
      %v3142 = vpop.f32.mrf.mxu0
      %v3143 = vadd.f32 %v2950, %v3142
      %v3144 = vpop.f32.mrf.mxu0
      %v3145 = vadd.f32 %v2952, %v3144
      %3146 = vmatprep.mubr.bf16.mxu0 0
      %3147 = vmatmul.mubr.bf16.gmra.mxu0 %v1161
      %v3148 = vpop.f32.mrf.mxu0
      %v3149 = vadd.f32 %v2956, %v3148
      %v3150 = vpop.f32.mrf.mxu0
      %v3151 = vadd.f32 %v2958, %v3150
      %v3152 = vpop.f32.mrf.mxu0
      %v3153 = vadd.f32 %v2960, %v3152
      %v3154 = vpop.f32.mrf.mxu0
      %v3155 = vadd.f32 %v2962, %v3154
      %3156 = vmatprep.mubr.bf16.mxu0 0
      %3157 = vmatmul.mubr.bf16.gmra.mxu0 %v1168
      %v3158 = vpop.f32.mrf.mxu0
      %v3159 = vadd.f32 %v2966, %v3158
      %v3160 = vpop.f32.mrf.mxu0
      %v3161 = vadd.f32 %v2968, %v3160
      %v3162 = vpop.f32.mrf.mxu0
      %v3163 = vadd.f32 %v2970, %v3162
      %v3164 = vpop.f32.mrf.mxu0
      %v3165 = vadd.f32 %v2972, %v3164
      %3166 = vmatprep.mubr.bf16.mxu0 0
      %3167 = vmatmul.mubr.bf16.gmra.mxu0 %v1175
      %v3168 = vpop.f32.mrf.mxu0
      %v3169 = vadd.f32 %v2976, %v3168
      %v3170 = vpop.f32.mrf.mxu0
      %v3171 = vadd.f32 %v2978, %v3170
      %v3172 = vpop.f32.mrf.mxu0
      %v3173 = vadd.f32 %v2980, %v3172
      %v3174 = vpop.f32.mrf.mxu0
      %v3175 = vadd.f32 %v2982, %v3174
      %3176 = vmatprep.mubr.bf16.mxu0 0
      %3177 = vmatmul.mubr.bf16.gmra.mxu0 %v1182
      %v3178 = vpop.f32.mrf.mxu0
      %v3179 = vadd.f32 %v2986, %v3178
      %v3180 = vpop.f32.mrf.mxu0
      %v3181 = vadd.f32 %v2988, %v3180
      %v3182 = vpop.f32.mrf.mxu0
      %v3183 = vadd.f32 %v2990, %v3182
      %v3184 = vpop.f32.mrf.mxu0
      %v3185 = vadd.f32 %v2992, %v3184
      %3186 = vdwg.mxu0
      %3187 = vmatprep.subr.bf16.mxu0 %v1998
      %3188 = vmatpush1.bf16.msra.mxu0 %v1997
      %3189 = vmatprep.subr.bf16.mxu0 %v1994
      %3190 = vmatpush1.bf16.msra.mxu0 %v1993
      %3191 = vmatprep.subr.bf16.mxu0 %v1990
      %3192 = vmatpush1.bf16.msra.mxu0 %v1989
      %3193 = vmatprep.subr.bf16.mxu0 %v1986
      %3194 = vmatpush1.bf16.msra.mxu0 %v1985
      %3195 = vmatprep.subr.bf16.mxu0 %v1982
      %3196 = vmatpush1.bf16.msra.mxu0 %v1981
      %3197 = vmatprep.subr.bf16.mxu0 %v1978
      %3198 = vmatpush1.bf16.msra.mxu0 %v1977
      %3199 = vmatprep.subr.bf16.mxu0 %v1974
      %3200 = vmatpush1.bf16.msra.mxu0 %v1973
      %3201 = vmatprep.subr.bf16.mxu0 %v1970
      %3202 = vmatpush1.bf16.msra.mxu0 %v1969
      %3203 = vmatprep.subr.bf16.mxu0 %v2030
      %3204 = vmatpush2.bf16.msra.mxu0 %v2029
      %3205 = vmatprep.subr.bf16.mxu0 %v2026
      %3206 = vmatpush2.bf16.msra.mxu0 %v2025
      %3207 = vmatprep.subr.bf16.mxu0 %v2022
      %3208 = vmatpush2.bf16.msra.mxu0 %v2021
      %3209 = vmatprep.subr.bf16.mxu0 %v2018
      %3210 = vmatpush2.bf16.msra.mxu0 %v2017
      %3211 = vmatprep.subr.bf16.mxu0 %v2014
      %3212 = vmatpush2.bf16.msra.mxu0 %v2013
      %3213 = vmatprep.subr.bf16.mxu0 %v2010
      %3214 = vmatpush2.bf16.msra.mxu0 %v2009
      %3215 = vmatprep.subr.bf16.mxu0 %v2006
      %3216 = vmatpush2.bf16.msra.mxu0 %v2005
      %3217 = vmatprep.subr.bf16.mxu0 %v2002
      %3218 = vmatpush2.bf16.msra.mxu0 %v2001
      %3219 = vmatprep.mubr.bf16.mxu0 %v1072
      %3220 = vmatmul.mubr.bf16.gmra.mxu0 %v1071
      %v3221 = vpop.f32.mrf.mxu0
      %v3222 = vadd.f32 %v710, %v3221
      %v3223 = vpop.f32.mrf.mxu0
      %v3224 = vadd.f32 %v714, %v3223
      %v3225 = vpop.f32.mrf.mxu0
      %v3226 = vadd.f32 %v710, %v3225
      %v3227 = vpop.f32.mrf.mxu0
      %v3228 = vadd.f32 %v714, %v3227
      %3229 = vmatprep.mubr.bf16.mxu0 %v1079
      %3230 = vmatmul.mubr.bf16.gmra.mxu0 %v1078
      %v3231 = vpop.f32.mrf.mxu0
      %v3232 = vadd.f32 %v710, %v3231
      %v3233 = vpop.f32.mrf.mxu0
      %v3234 = vadd.f32 %v714, %v3233
      %v3235 = vpop.f32.mrf.mxu0
      %v3236 = vadd.f32 %v710, %v3235
      %v3237 = vpop.f32.mrf.mxu0
      %v3238 = vadd.f32 %v714, %v3237
      %3239 = vmatprep.mubr.bf16.mxu0 %v1086
      %3240 = vmatmul.mubr.bf16.gmra.mxu0 %v1085
      %v3241 = vpop.f32.mrf.mxu0
      %v3242 = vadd.f32 %v710, %v3241
      %v3243 = vpop.f32.mrf.mxu0
      %v3244 = vadd.f32 %v714, %v3243
      %v3245 = vpop.f32.mrf.mxu0
      %v3246 = vadd.f32 %v710, %v3245
      %v3247 = vpop.f32.mrf.mxu0
      %v3248 = vadd.f32 %v714, %v3247
      %3249 = vmatprep.mubr.bf16.mxu0 %v1093
      %3250 = vmatmul.mubr.bf16.gmra.mxu0 %v1092
      %v3251 = vpop.f32.mrf.mxu0
      %v3252 = vadd.f32 %v710, %v3251
      %v3253 = vpop.f32.mrf.mxu0
      %v3254 = vadd.f32 %v714, %v3253
      %v3255 = vpop.f32.mrf.mxu0
      %v3256 = vadd.f32 %v710, %v3255
      %v3257 = vpop.f32.mrf.mxu0
      %v3258 = vadd.f32 %v714, %v3257
      %3259 = vmatprep.mubr.bf16.mxu0 %v1100
      %3260 = vmatmul.mubr.bf16.gmra.mxu0 %v1099
      %v3261 = vpop.f32.mrf.mxu0
      %v3262 = vadd.f32 %v710, %v3261
      %v3263 = vpop.f32.mrf.mxu0
      %v3264 = vadd.f32 %v714, %v3263
      %v3265 = vpop.f32.mrf.mxu0
      %v3266 = vadd.f32 %v710, %v3265
      %v3267 = vpop.f32.mrf.mxu0
      %v3268 = vadd.f32 %v714, %v3267
      %3269 = vmatprep.mubr.bf16.mxu0 %v1107
      %3270 = vmatmul.mubr.bf16.gmra.mxu0 %v1106
      %v3271 = vpop.f32.mrf.mxu0
      %v3272 = vadd.f32 %v710, %v3271
      %v3273 = vpop.f32.mrf.mxu0
      %v3274 = vadd.f32 %v714, %v3273
      %v3275 = vpop.f32.mrf.mxu0
      %v3276 = vadd.f32 %v710, %v3275
      %v3277 = vpop.f32.mrf.mxu0
      %v3278 = vadd.f32 %v714, %v3277
      %3279 = vmatprep.mubr.bf16.mxu0 %v1114
      %3280 = vmatmul.mubr.bf16.gmra.mxu0 %v1113
      %v3281 = vpop.f32.mrf.mxu0
      %v3282 = vadd.f32 %v710, %v3281
      %v3283 = vpop.f32.mrf.mxu0
      %v3284 = vadd.f32 %v714, %v3283
      %v3285 = vpop.f32.mrf.mxu0
      %v3286 = vadd.f32 %v710, %v3285
      %v3287 = vpop.f32.mrf.mxu0
      %v3288 = vadd.f32 %v714, %v3287
      %3289 = vmatprep.mubr.bf16.mxu0 %v1121
      %3290 = vmatmul.mubr.bf16.gmra.mxu0 %v1120
      %v3291 = vpop.f32.mrf.mxu0
      %v3292 = vadd.f32 %v710, %v3291
      %v3293 = vpop.f32.mrf.mxu0
      %v3294 = vadd.f32 %v714, %v3293
      %v3295 = vpop.f32.mrf.mxu0
      %v3296 = vadd.f32 %v710, %v3295
      %v3297 = vpop.f32.mrf.mxu0
      %v3298 = vadd.f32 %v714, %v3297
      %3299 = vmatprep.mubr.bf16.mxu0 %v1128
      %3300 = vmatmul.mubr.bf16.gmra.mxu0 %v1127
      %v3301 = vpop.f32.mrf.mxu0
      %v3302 = vadd.f32 %v710, %v3301
      %v3303 = vpop.f32.mrf.mxu0
      %v3304 = vadd.f32 %v714, %v3303
      %v3305 = vpop.f32.mrf.mxu0
      %v3306 = vadd.f32 %v710, %v3305
      %v3307 = vpop.f32.mrf.mxu0
      %v3308 = vadd.f32 %v714, %v3307
      %3309 = vmatprep.mubr.bf16.mxu0 %v1135
      %3310 = vmatmul.mubr.bf16.gmra.mxu0 %v1134
      %v3311 = vpop.f32.mrf.mxu0
      %v3312 = vadd.f32 %v710, %v3311
      %v3313 = vpop.f32.mrf.mxu0
      %v3314 = vadd.f32 %v714, %v3313
      %v3315 = vpop.f32.mrf.mxu0
      %v3316 = vadd.f32 %v710, %v3315
      %v3317 = vpop.f32.mrf.mxu0
      %v3318 = vadd.f32 %v714, %v3317
      %3319 = vmatprep.mubr.bf16.mxu0 %v1142
      %3320 = vmatmul.mubr.bf16.gmra.mxu0 %v1141
      %v3321 = vpop.f32.mrf.mxu0
      %v3322 = vadd.f32 %v710, %v3321
      %v3323 = vpop.f32.mrf.mxu0
      %v3324 = vadd.f32 %v714, %v3323
      %v3325 = vpop.f32.mrf.mxu0
      %v3326 = vadd.f32 %v710, %v3325
      %v3327 = vpop.f32.mrf.mxu0
      %v3328 = vadd.f32 %v714, %v3327
      %3329 = vmatprep.mubr.bf16.mxu0 %v1149
      %3330 = vmatmul.mubr.bf16.gmra.mxu0 %v1148
      %v3331 = vpop.f32.mrf.mxu0
      %v3332 = vadd.f32 %v710, %v3331
      %v3333 = vpop.f32.mrf.mxu0
      %v3334 = vadd.f32 %v714, %v3333
      %v3335 = vpop.f32.mrf.mxu0
      %v3336 = vadd.f32 %v710, %v3335
      %v3337 = vpop.f32.mrf.mxu0
      %v3338 = vadd.f32 %v714, %v3337
      %3339 = vmatprep.mubr.bf16.mxu0 %v1156
      %3340 = vmatmul.mubr.bf16.gmra.mxu0 %v1155
      %v3341 = vpop.f32.mrf.mxu0
      %v3342 = vadd.f32 %v710, %v3341
      %v3343 = vpop.f32.mrf.mxu0
      %v3344 = vadd.f32 %v714, %v3343
      %v3345 = vpop.f32.mrf.mxu0
      %v3346 = vadd.f32 %v710, %v3345
      %v3347 = vpop.f32.mrf.mxu0
      %v3348 = vadd.f32 %v714, %v3347
      %3349 = vmatprep.mubr.bf16.mxu0 %v1163
      %3350 = vmatmul.mubr.bf16.gmra.mxu0 %v1162
      %v3351 = vpop.f32.mrf.mxu0
      %v3352 = vadd.f32 %v710, %v3351
      %v3353 = vpop.f32.mrf.mxu0
      %v3354 = vadd.f32 %v714, %v3353
      %v3355 = vpop.f32.mrf.mxu0
      %v3356 = vadd.f32 %v710, %v3355
      %v3357 = vpop.f32.mrf.mxu0
      %v3358 = vadd.f32 %v714, %v3357
      %3359 = vmatprep.mubr.bf16.mxu0 %v1170
      %3360 = vmatmul.mubr.bf16.gmra.mxu0 %v1169
      %v3361 = vpop.f32.mrf.mxu0
      %v3362 = vadd.f32 %v710, %v3361
      %v3363 = vpop.f32.mrf.mxu0
      %v3364 = vadd.f32 %v714, %v3363
      %v3365 = vpop.f32.mrf.mxu0
      %v3366 = vadd.f32 %v710, %v3365
      %v3367 = vpop.f32.mrf.mxu0
      %v3368 = vadd.f32 %v714, %v3367
      %3369 = vmatprep.mubr.bf16.mxu0 %v1177
      %3370 = vmatmul.mubr.bf16.gmra.mxu0 %v1176
      %v3371 = vpop.f32.mrf.mxu0
      %v3372 = vadd.f32 %v710, %v3371
      %v3373 = vpop.f32.mrf.mxu0
      %v3374 = vadd.f32 %v714, %v3373
      %v3375 = vpop.f32.mrf.mxu0
      %v3376 = vadd.f32 %v710, %v3375
      %v3377 = vpop.f32.mrf.mxu0
      %v3378 = vadd.f32 %v714, %v3377
      %3379 = vdwg.mxu0
      %3380 = vmatprep.subr.bf16.mxu0 %v2062
      %3381 = vmatpush1.bf16.msra.mxu0 %v2061
      %3382 = vmatprep.subr.bf16.mxu0 %v2058
      %3383 = vmatpush1.bf16.msra.mxu0 %v2057
      %3384 = vmatprep.subr.bf16.mxu0 %v2054
      %3385 = vmatpush1.bf16.msra.mxu0 %v2053
      %3386 = vmatprep.subr.bf16.mxu0 %v2050
      %3387 = vmatpush1.bf16.msra.mxu0 %v2049
      %3388 = vmatprep.subr.bf16.mxu0 %v2046
      %3389 = vmatpush1.bf16.msra.mxu0 %v2045
      %3390 = vmatprep.subr.bf16.mxu0 %v2042
      %3391 = vmatpush1.bf16.msra.mxu0 %v2041
      %3392 = vmatprep.subr.bf16.mxu0 %v2038
      %3393 = vmatpush1.bf16.msra.mxu0 %v2037
      %3394 = vmatprep.subr.bf16.mxu0 %v2034
      %3395 = vmatpush1.bf16.msra.mxu0 %v2033
      %3396 = vmatprep.subr.bf16.mxu0 %v2094
      %3397 = vmatpush2.bf16.msra.mxu0 %v2093
      %3398 = vmatprep.subr.bf16.mxu0 %v2090
      %3399 = vmatpush2.bf16.msra.mxu0 %v2089
      %3400 = vmatprep.subr.bf16.mxu0 %v2086
      %3401 = vmatpush2.bf16.msra.mxu0 %v2085
      %3402 = vmatprep.subr.bf16.mxu0 %v2082
      %3403 = vmatpush2.bf16.msra.mxu0 %v2081
      %3404 = vmatprep.subr.bf16.mxu0 %v2078
      %3405 = vmatpush2.bf16.msra.mxu0 %v2077
      %3406 = vmatprep.subr.bf16.mxu0 %v2074
      %3407 = vmatpush2.bf16.msra.mxu0 %v2073
      %3408 = vmatprep.subr.bf16.mxu0 %v2070
      %3409 = vmatpush2.bf16.msra.mxu0 %v2069
      %3410 = vmatprep.subr.bf16.mxu0 %v2066
      %3411 = vmatpush2.bf16.msra.mxu0 %v2065
      %3412 = vmatprep.mubr.bf16.mxu0 %v1074
      %3413 = vmatmul.mubr.bf16.gmra.mxu0 %v1073
      %v3414 = vpop.f32.mrf.mxu0
      %v3415 = vadd.f32 %v3222, %v3414
      %v3416 = vpop.f32.mrf.mxu0
      %v3417 = vadd.f32 %v3224, %v3416
      %v3418 = vpop.f32.mrf.mxu0
      %v3419 = vadd.f32 %v3226, %v3418
      %v3420 = vpop.f32.mrf.mxu0
      %v3421 = vadd.f32 %v3228, %v3420
      %3422 = vmatprep.mubr.bf16.mxu0 %v1081
      %3423 = vmatmul.mubr.bf16.gmra.mxu0 %v1080
      %v3424 = vpop.f32.mrf.mxu0
      %v3425 = vadd.f32 %v3232, %v3424
      %v3426 = vpop.f32.mrf.mxu0
      %v3427 = vadd.f32 %v3234, %v3426
      %v3428 = vpop.f32.mrf.mxu0
      %v3429 = vadd.f32 %v3236, %v3428
      %v3430 = vpop.f32.mrf.mxu0
      %v3431 = vadd.f32 %v3238, %v3430
      %3432 = vmatprep.mubr.bf16.mxu0 %v1088
      %3433 = vmatmul.mubr.bf16.gmra.mxu0 %v1087
      %v3434 = vpop.f32.mrf.mxu0
      %v3435 = vadd.f32 %v3242, %v3434
      %v3436 = vpop.f32.mrf.mxu0
      %v3437 = vadd.f32 %v3244, %v3436
      %v3438 = vpop.f32.mrf.mxu0
      %v3439 = vadd.f32 %v3246, %v3438
      %v3440 = vpop.f32.mrf.mxu0
      %v3441 = vadd.f32 %v3248, %v3440
      %3442 = vmatprep.mubr.bf16.mxu0 %v1095
      %3443 = vmatmul.mubr.bf16.gmra.mxu0 %v1094
      %v3444 = vpop.f32.mrf.mxu0
      %v3445 = vadd.f32 %v3252, %v3444
      %v3446 = vpop.f32.mrf.mxu0
      %v3447 = vadd.f32 %v3254, %v3446
      %v3448 = vpop.f32.mrf.mxu0
      %v3449 = vadd.f32 %v3256, %v3448
      %v3450 = vpop.f32.mrf.mxu0
      %v3451 = vadd.f32 %v3258, %v3450
      %3452 = vmatprep.mubr.bf16.mxu0 %v1102
      %3453 = vmatmul.mubr.bf16.gmra.mxu0 %v1101
      %v3454 = vpop.f32.mrf.mxu0
      %v3455 = vadd.f32 %v3262, %v3454
      %v3456 = vpop.f32.mrf.mxu0
      %v3457 = vadd.f32 %v3264, %v3456
      %v3458 = vpop.f32.mrf.mxu0
      %v3459 = vadd.f32 %v3266, %v3458
      %v3460 = vpop.f32.mrf.mxu0
      %v3461 = vadd.f32 %v3268, %v3460
      %3462 = vmatprep.mubr.bf16.mxu0 %v1109
      %3463 = vmatmul.mubr.bf16.gmra.mxu0 %v1108
      %v3464 = vpop.f32.mrf.mxu0
      %v3465 = vadd.f32 %v3272, %v3464
      %v3466 = vpop.f32.mrf.mxu0
      %v3467 = vadd.f32 %v3274, %v3466
      %v3468 = vpop.f32.mrf.mxu0
      %v3469 = vadd.f32 %v3276, %v3468
      %v3470 = vpop.f32.mrf.mxu0
      %v3471 = vadd.f32 %v3278, %v3470
      %3472 = vmatprep.mubr.bf16.mxu0 %v1116
      %3473 = vmatmul.mubr.bf16.gmra.mxu0 %v1115
      %v3474 = vpop.f32.mrf.mxu0
      %v3475 = vadd.f32 %v3282, %v3474
      %v3476 = vpop.f32.mrf.mxu0
      %v3477 = vadd.f32 %v3284, %v3476
      %v3478 = vpop.f32.mrf.mxu0
      %v3479 = vadd.f32 %v3286, %v3478
      %v3480 = vpop.f32.mrf.mxu0
      %v3481 = vadd.f32 %v3288, %v3480
      %3482 = vmatprep.mubr.bf16.mxu0 %v1123
      %3483 = vmatmul.mubr.bf16.gmra.mxu0 %v1122
      %v3484 = vpop.f32.mrf.mxu0
      %v3485 = vadd.f32 %v3292, %v3484
      %v3486 = vpop.f32.mrf.mxu0
      %v3487 = vadd.f32 %v3294, %v3486
      %v3488 = vpop.f32.mrf.mxu0
      %v3489 = vadd.f32 %v3296, %v3488
      %v3490 = vpop.f32.mrf.mxu0
      %v3491 = vadd.f32 %v3298, %v3490
      %3492 = vmatprep.mubr.bf16.mxu0 %v1130
      %3493 = vmatmul.mubr.bf16.gmra.mxu0 %v1129
      %v3494 = vpop.f32.mrf.mxu0
      %v3495 = vadd.f32 %v3302, %v3494
      %v3496 = vpop.f32.mrf.mxu0
      %v3497 = vadd.f32 %v3304, %v3496
      %v3498 = vpop.f32.mrf.mxu0
      %v3499 = vadd.f32 %v3306, %v3498
      %v3500 = vpop.f32.mrf.mxu0
      %v3501 = vadd.f32 %v3308, %v3500
      %3502 = vmatprep.mubr.bf16.mxu0 %v1137
      %3503 = vmatmul.mubr.bf16.gmra.mxu0 %v1136
      %v3504 = vpop.f32.mrf.mxu0
      %v3505 = vadd.f32 %v3312, %v3504
      %v3506 = vpop.f32.mrf.mxu0
      %v3507 = vadd.f32 %v3314, %v3506
      %v3508 = vpop.f32.mrf.mxu0
      %v3509 = vadd.f32 %v3316, %v3508
      %v3510 = vpop.f32.mrf.mxu0
      %v3511 = vadd.f32 %v3318, %v3510
      %3512 = vmatprep.mubr.bf16.mxu0 %v1144
      %3513 = vmatmul.mubr.bf16.gmra.mxu0 %v1143
      %v3514 = vpop.f32.mrf.mxu0
      %v3515 = vadd.f32 %v3322, %v3514
      %v3516 = vpop.f32.mrf.mxu0
      %v3517 = vadd.f32 %v3324, %v3516
      %v3518 = vpop.f32.mrf.mxu0
      %v3519 = vadd.f32 %v3326, %v3518
      %v3520 = vpop.f32.mrf.mxu0
      %v3521 = vadd.f32 %v3328, %v3520
      %3522 = vmatprep.mubr.bf16.mxu0 %v1151
      %3523 = vmatmul.mubr.bf16.gmra.mxu0 %v1150
      %v3524 = vpop.f32.mrf.mxu0
      %v3525 = vadd.f32 %v3332, %v3524
      %v3526 = vpop.f32.mrf.mxu0
      %v3527 = vadd.f32 %v3334, %v3526
      %v3528 = vpop.f32.mrf.mxu0
      %v3529 = vadd.f32 %v3336, %v3528
      %v3530 = vpop.f32.mrf.mxu0
      %v3531 = vadd.f32 %v3338, %v3530
      %3532 = vmatprep.mubr.bf16.mxu0 %v1158
      %3533 = vmatmul.mubr.bf16.gmra.mxu0 %v1157
      %v3534 = vpop.f32.mrf.mxu0
      %v3535 = vadd.f32 %v3342, %v3534
      %v3536 = vpop.f32.mrf.mxu0
      %v3537 = vadd.f32 %v3344, %v3536
      %v3538 = vpop.f32.mrf.mxu0
      %v3539 = vadd.f32 %v3346, %v3538
      %v3540 = vpop.f32.mrf.mxu0
      %v3541 = vadd.f32 %v3348, %v3540
      %3542 = vmatprep.mubr.bf16.mxu0 %v1165
      %3543 = vmatmul.mubr.bf16.gmra.mxu0 %v1164
      %v3544 = vpop.f32.mrf.mxu0
      %v3545 = vadd.f32 %v3352, %v3544
      %v3546 = vpop.f32.mrf.mxu0
      %v3547 = vadd.f32 %v3354, %v3546
      %v3548 = vpop.f32.mrf.mxu0
      %v3549 = vadd.f32 %v3356, %v3548
      %v3550 = vpop.f32.mrf.mxu0
      %v3551 = vadd.f32 %v3358, %v3550
      %3552 = vmatprep.mubr.bf16.mxu0 %v1172
      %3553 = vmatmul.mubr.bf16.gmra.mxu0 %v1171
      %v3554 = vpop.f32.mrf.mxu0
      %v3555 = vadd.f32 %v3362, %v3554
      %v3556 = vpop.f32.mrf.mxu0
      %v3557 = vadd.f32 %v3364, %v3556
      %v3558 = vpop.f32.mrf.mxu0
      %v3559 = vadd.f32 %v3366, %v3558
      %v3560 = vpop.f32.mrf.mxu0
      %v3561 = vadd.f32 %v3368, %v3560
      %3562 = vmatprep.mubr.bf16.mxu0 %v1179
      %3563 = vmatmul.mubr.bf16.gmra.mxu0 %v1178
      %v3564 = vpop.f32.mrf.mxu0
      %v3565 = vadd.f32 %v3372, %v3564
      %v3566 = vpop.f32.mrf.mxu0
      %v3567 = vadd.f32 %v3374, %v3566
      %v3568 = vpop.f32.mrf.mxu0
      %v3569 = vadd.f32 %v3376, %v3568
      %v3570 = vpop.f32.mrf.mxu0
      %v3571 = vadd.f32 %v3378, %v3570
      %3572 = vdwg.mxu0
      %3573 = vmatprep.subr.bf16.mxu0 %v2126
      %3574 = vmatpush1.bf16.msra.mxu0 %v2125
      %3575 = vmatprep.subr.bf16.mxu0 %v2122
      %3576 = vmatpush1.bf16.msra.mxu0 %v2121
      %3577 = vmatprep.subr.bf16.mxu0 %v2118
      %3578 = vmatpush1.bf16.msra.mxu0 %v2117
      %3579 = vmatprep.subr.bf16.mxu0 %v2114
      %3580 = vmatpush1.bf16.msra.mxu0 %v2113
      %3581 = vmatprep.subr.bf16.mxu0 %v2110
      %3582 = vmatpush1.bf16.msra.mxu0 %v2109
      %3583 = vmatprep.subr.bf16.mxu0 %v2106
      %3584 = vmatpush1.bf16.msra.mxu0 %v2105
      %3585 = vmatprep.subr.bf16.mxu0 %v2102
      %3586 = vmatpush1.bf16.msra.mxu0 %v2101
      %3587 = vmatprep.subr.bf16.mxu0 %v2098
      %3588 = vmatpush1.bf16.msra.mxu0 %v2097
      %3589 = vmatprep.subr.bf16.mxu0 %v2158
      %3590 = vmatpush2.bf16.msra.mxu0 %v2157
      %3591 = vmatprep.subr.bf16.mxu0 %v2154
      %3592 = vmatpush2.bf16.msra.mxu0 %v2153
      %3593 = vmatprep.subr.bf16.mxu0 %v2150
      %3594 = vmatpush2.bf16.msra.mxu0 %v2149
      %3595 = vmatprep.subr.bf16.mxu0 %v2146
      %3596 = vmatpush2.bf16.msra.mxu0 %v2145
      %3597 = vmatprep.subr.bf16.mxu0 %v2142
      %3598 = vmatpush2.bf16.msra.mxu0 %v2141
      %3599 = vmatprep.subr.bf16.mxu0 %v2138
      %3600 = vmatpush2.bf16.msra.mxu0 %v2137
      %3601 = vmatprep.subr.bf16.mxu0 %v2134
      %3602 = vmatpush2.bf16.msra.mxu0 %v2133
      %3603 = vmatprep.subr.bf16.mxu0 %v2130
      %3604 = vmatpush2.bf16.msra.mxu0 %v2129
      %3605 = vmatprep.mubr.bf16.mxu0 %v1076
      %3606 = vmatmul.mubr.bf16.gmra.mxu0 %v1075
      %v3607 = vpop.f32.mrf.mxu0
      %v3608 = vadd.f32 %v3415, %v3607
      %v3609 = vpop.f32.mrf.mxu0
      %v3610 = vadd.f32 %v3417, %v3609
      %v3611 = vpop.f32.mrf.mxu0
      %v3612 = vadd.f32 %v3419, %v3611
      %v3613 = vpop.f32.mrf.mxu0
      %v3614 = vadd.f32 %v3421, %v3613
      %3615 = vmatprep.mubr.bf16.mxu0 %v1083
      %3616 = vmatmul.mubr.bf16.gmra.mxu0 %v1082
      %v3617 = vpop.f32.mrf.mxu0
      %v3618 = vadd.f32 %v3425, %v3617
      %v3619 = vpop.f32.mrf.mxu0
      %v3620 = vadd.f32 %v3427, %v3619
      %v3621 = vpop.f32.mrf.mxu0
      %v3622 = vadd.f32 %v3429, %v3621
      %v3623 = vpop.f32.mrf.mxu0
      %v3624 = vadd.f32 %v3431, %v3623
      %3625 = vmatprep.mubr.bf16.mxu0 %v1090
      %3626 = vmatmul.mubr.bf16.gmra.mxu0 %v1089
      %v3627 = vpop.f32.mrf.mxu0
      %v3628 = vadd.f32 %v3435, %v3627
      %v3629 = vpop.f32.mrf.mxu0
      %v3630 = vadd.f32 %v3437, %v3629
      %v3631 = vpop.f32.mrf.mxu0
      %v3632 = vadd.f32 %v3439, %v3631
      %v3633 = vpop.f32.mrf.mxu0
      %v3634 = vadd.f32 %v3441, %v3633
      %3635 = vmatprep.mubr.bf16.mxu0 %v1097
      %3636 = vmatmul.mubr.bf16.gmra.mxu0 %v1096
      %v3637 = vpop.f32.mrf.mxu0
      %v3638 = vadd.f32 %v3445, %v3637
      %v3639 = vpop.f32.mrf.mxu0
      %v3640 = vadd.f32 %v3447, %v3639
      %v3641 = vpop.f32.mrf.mxu0
      %v3642 = vadd.f32 %v3449, %v3641
      %v3643 = vpop.f32.mrf.mxu0
      %v3644 = vadd.f32 %v3451, %v3643
      %3645 = vmatprep.mubr.bf16.mxu0 %v1104
      %3646 = vmatmul.mubr.bf16.gmra.mxu0 %v1103
      %v3647 = vpop.f32.mrf.mxu0
      %v3648 = vadd.f32 %v3455, %v3647
      %v3649 = vpop.f32.mrf.mxu0
      %v3650 = vadd.f32 %v3457, %v3649
      %v3651 = vpop.f32.mrf.mxu0
      %v3652 = vadd.f32 %v3459, %v3651
      %v3653 = vpop.f32.mrf.mxu0
      %v3654 = vadd.f32 %v3461, %v3653
      %3655 = vmatprep.mubr.bf16.mxu0 %v1111
      %3656 = vmatmul.mubr.bf16.gmra.mxu0 %v1110
      %v3657 = vpop.f32.mrf.mxu0
      %v3658 = vadd.f32 %v3465, %v3657
      %v3659 = vpop.f32.mrf.mxu0
      %v3660 = vadd.f32 %v3467, %v3659
      %v3661 = vpop.f32.mrf.mxu0
      %v3662 = vadd.f32 %v3469, %v3661
      %v3663 = vpop.f32.mrf.mxu0
      %v3664 = vadd.f32 %v3471, %v3663
      %3665 = vmatprep.mubr.bf16.mxu0 %v1118
      %3666 = vmatmul.mubr.bf16.gmra.mxu0 %v1117
      %v3667 = vpop.f32.mrf.mxu0
      %v3668 = vadd.f32 %v3475, %v3667
      %v3669 = vpop.f32.mrf.mxu0
      %v3670 = vadd.f32 %v3477, %v3669
      %v3671 = vpop.f32.mrf.mxu0
      %v3672 = vadd.f32 %v3479, %v3671
      %v3673 = vpop.f32.mrf.mxu0
      %v3674 = vadd.f32 %v3481, %v3673
      %3675 = vmatprep.mubr.bf16.mxu0 %v1125
      %3676 = vmatmul.mubr.bf16.gmra.mxu0 %v1124
      %v3677 = vpop.f32.mrf.mxu0
      %v3678 = vadd.f32 %v3485, %v3677
      %v3679 = vpop.f32.mrf.mxu0
      %v3680 = vadd.f32 %v3487, %v3679
      %v3681 = vpop.f32.mrf.mxu0
      %v3682 = vadd.f32 %v3489, %v3681
      %v3683 = vpop.f32.mrf.mxu0
      %v3684 = vadd.f32 %v3491, %v3683
      %3685 = vmatprep.mubr.bf16.mxu0 %v1132
      %3686 = vmatmul.mubr.bf16.gmra.mxu0 %v1131
      %v3687 = vpop.f32.mrf.mxu0
      %v3688 = vadd.f32 %v3495, %v3687
      %v3689 = vpop.f32.mrf.mxu0
      %v3690 = vadd.f32 %v3497, %v3689
      %v3691 = vpop.f32.mrf.mxu0
      %v3692 = vadd.f32 %v3499, %v3691
      %v3693 = vpop.f32.mrf.mxu0
      %v3694 = vadd.f32 %v3501, %v3693
      %3695 = vmatprep.mubr.bf16.mxu0 %v1139
      %3696 = vmatmul.mubr.bf16.gmra.mxu0 %v1138
      %v3697 = vpop.f32.mrf.mxu0
      %v3698 = vadd.f32 %v3505, %v3697
      %v3699 = vpop.f32.mrf.mxu0
      %v3700 = vadd.f32 %v3507, %v3699
      %v3701 = vpop.f32.mrf.mxu0
      %v3702 = vadd.f32 %v3509, %v3701
      %v3703 = vpop.f32.mrf.mxu0
      %v3704 = vadd.f32 %v3511, %v3703
      %3705 = vmatprep.mubr.bf16.mxu0 %v1146
      %3706 = vmatmul.mubr.bf16.gmra.mxu0 %v1145
      %v3707 = vpop.f32.mrf.mxu0
      %v3708 = vadd.f32 %v3515, %v3707
      %v3709 = vpop.f32.mrf.mxu0
      %v3710 = vadd.f32 %v3517, %v3709
      %v3711 = vpop.f32.mrf.mxu0
      %v3712 = vadd.f32 %v3519, %v3711
      %v3713 = vpop.f32.mrf.mxu0
      %v3714 = vadd.f32 %v3521, %v3713
      %3715 = vmatprep.mubr.bf16.mxu0 %v1153
      %3716 = vmatmul.mubr.bf16.gmra.mxu0 %v1152
      %v3717 = vpop.f32.mrf.mxu0
      %v3718 = vadd.f32 %v3525, %v3717
      %v3719 = vpop.f32.mrf.mxu0
      %v3720 = vadd.f32 %v3527, %v3719
      %v3721 = vpop.f32.mrf.mxu0
      %v3722 = vadd.f32 %v3529, %v3721
      %v3723 = vpop.f32.mrf.mxu0
      %v3724 = vadd.f32 %v3531, %v3723
      %3725 = vmatprep.mubr.bf16.mxu0 %v1160
      %3726 = vmatmul.mubr.bf16.gmra.mxu0 %v1159
      %v3727 = vpop.f32.mrf.mxu0
      %v3728 = vadd.f32 %v3535, %v3727
      %v3729 = vpop.f32.mrf.mxu0
      %v3730 = vadd.f32 %v3537, %v3729
      %v3731 = vpop.f32.mrf.mxu0
      %v3732 = vadd.f32 %v3539, %v3731
      %v3733 = vpop.f32.mrf.mxu0
      %v3734 = vadd.f32 %v3541, %v3733
      %3735 = vmatprep.mubr.bf16.mxu0 %v1167
      %3736 = vmatmul.mubr.bf16.gmra.mxu0 %v1166
      %v3737 = vpop.f32.mrf.mxu0
      %v3738 = vadd.f32 %v3545, %v3737
      %v3739 = vpop.f32.mrf.mxu0
      %v3740 = vadd.f32 %v3547, %v3739
      %v3741 = vpop.f32.mrf.mxu0
      %v3742 = vadd.f32 %v3549, %v3741
      %v3743 = vpop.f32.mrf.mxu0
      %v3744 = vadd.f32 %v3551, %v3743
      %3745 = vmatprep.mubr.bf16.mxu0 %v1174
      %3746 = vmatmul.mubr.bf16.gmra.mxu0 %v1173
      %v3747 = vpop.f32.mrf.mxu0
      %v3748 = vadd.f32 %v3555, %v3747
      %v3749 = vpop.f32.mrf.mxu0
      %v3750 = vadd.f32 %v3557, %v3749
      %v3751 = vpop.f32.mrf.mxu0
      %v3752 = vadd.f32 %v3559, %v3751
      %v3753 = vpop.f32.mrf.mxu0
      %v3754 = vadd.f32 %v3561, %v3753
      %3755 = vmatprep.mubr.bf16.mxu0 %v1181
      %3756 = vmatmul.mubr.bf16.gmra.mxu0 %v1180
      %v3757 = vpop.f32.mrf.mxu0
      %v3758 = vadd.f32 %v3565, %v3757
      %v3759 = vpop.f32.mrf.mxu0
      %v3760 = vadd.f32 %v3567, %v3759
      %v3761 = vpop.f32.mrf.mxu0
      %v3762 = vadd.f32 %v3569, %v3761
      %v3763 = vpop.f32.mrf.mxu0
      %v3764 = vadd.f32 %v3571, %v3763
      %3765 = vdwg.mxu0
      %3766 = vmatprep.subr.bf16.mxu0 %v2190
      %3767 = vmatpush1.bf16.msra.mxu0 %v2189
      %3768 = vmatprep.subr.bf16.mxu0 %v2186
      %3769 = vmatpush1.bf16.msra.mxu0 %v2185
      %3770 = vmatprep.subr.bf16.mxu0 %v2182
      %3771 = vmatpush1.bf16.msra.mxu0 %v2181
      %3772 = vmatprep.subr.bf16.mxu0 %v2178
      %3773 = vmatpush1.bf16.msra.mxu0 %v2177
      %3774 = vmatprep.subr.bf16.mxu0 %v2174
      %3775 = vmatpush1.bf16.msra.mxu0 %v2173
      %3776 = vmatprep.subr.bf16.mxu0 %v2170
      %3777 = vmatpush1.bf16.msra.mxu0 %v2169
      %3778 = vmatprep.subr.bf16.mxu0 %v2166
      %3779 = vmatpush1.bf16.msra.mxu0 %v2165
      %3780 = vmatprep.subr.bf16.mxu0 %v2162
      %3781 = vmatpush1.bf16.msra.mxu0 %v2161
      %3782 = vmatprep.subr.bf16.mxu0 0
      %3783 = vmatpush2.bf16.msra.mxu0 0
      %3784 = vmatprep.subr.bf16.mxu0 0
      %3785 = vmatpush2.bf16.msra.mxu0 0
      %3786 = vmatprep.subr.bf16.mxu0 0
      %3787 = vmatpush2.bf16.msra.mxu0 0
      %3788 = vmatprep.subr.bf16.mxu0 0
      %3789 = vmatpush2.bf16.msra.mxu0 0
      %3790 = vmatprep.subr.bf16.mxu0 0
      %3791 = vmatpush2.bf16.msra.mxu0 0
      %3792 = vmatprep.subr.bf16.mxu0 0
      %3793 = vmatpush2.bf16.msra.mxu0 0
      %3794 = vmatprep.subr.bf16.mxu0 0
      %3795 = vmatpush2.bf16.msra.mxu0 0
      %3796 = vmatprep.subr.bf16.mxu0 0
      %3797 = vmatpush2.bf16.msra.mxu0 0
      %3798 = vmatprep.mubr.bf16.mxu0 0
      %3799 = vmatmul.mubr.bf16.gmra.mxu0 %v1077
      %v3800 = vpop.f32.mrf.mxu0
      %v3801 = vadd.f32 %v3608, %v3800
      %v3802 = vpop.f32.mrf.mxu0
      %v3803 = vadd.f32 %v3610, %v3802
      %v3804 = vpop.f32.mrf.mxu0
      %v3805 = vadd.f32 %v3612, %v3804
      %v3806 = vpop.f32.mrf.mxu0
      %v3807 = vadd.f32 %v3614, %v3806
      %3808 = vmatprep.mubr.bf16.mxu0 0
      %3809 = vmatmul.mubr.bf16.gmra.mxu0 %v1084
      %v3810 = vpop.f32.mrf.mxu0
      %v3811 = vadd.f32 %v3618, %v3810
      %v3812 = vpop.f32.mrf.mxu0
      %v3813 = vadd.f32 %v3620, %v3812
      %v3814 = vpop.f32.mrf.mxu0
      %v3815 = vadd.f32 %v3622, %v3814
      %v3816 = vpop.f32.mrf.mxu0
      %v3817 = vadd.f32 %v3624, %v3816
      %3818 = vmatprep.mubr.bf16.mxu0 0
      %3819 = vmatmul.mubr.bf16.gmra.mxu0 %v1091
      %v3820 = vpop.f32.mrf.mxu0
      %v3821 = vadd.f32 %v3628, %v3820
      %v3822 = vpop.f32.mrf.mxu0
      %v3823 = vadd.f32 %v3630, %v3822
      %v3824 = vpop.f32.mrf.mxu0
      %v3825 = vadd.f32 %v3632, %v3824
      %v3826 = vpop.f32.mrf.mxu0
      %v3827 = vadd.f32 %v3634, %v3826
      %3828 = vmatprep.mubr.bf16.mxu0 0
      %3829 = vmatmul.mubr.bf16.gmra.mxu0 %v1098
      %v3830 = vpop.f32.mrf.mxu0
      %v3831 = vadd.f32 %v3638, %v3830
      %v3832 = vpop.f32.mrf.mxu0
      %v3833 = vadd.f32 %v3640, %v3832
      %v3834 = vpop.f32.mrf.mxu0
      %v3835 = vadd.f32 %v3642, %v3834
      %v3836 = vpop.f32.mrf.mxu0
      %v3837 = vadd.f32 %v3644, %v3836
      %3838 = vmatprep.mubr.bf16.mxu0 0
      %3839 = vmatmul.mubr.bf16.gmra.mxu0 %v1105
      %v3840 = vpop.f32.mrf.mxu0
      %v3841 = vadd.f32 %v3648, %v3840
      %v3842 = vpop.f32.mrf.mxu0
      %v3843 = vadd.f32 %v3650, %v3842
      %v3844 = vpop.f32.mrf.mxu0
      %v3845 = vadd.f32 %v3652, %v3844
      %v3846 = vpop.f32.mrf.mxu0
      %v3847 = vadd.f32 %v3654, %v3846
      %3848 = vmatprep.mubr.bf16.mxu0 0
      %3849 = vmatmul.mubr.bf16.gmra.mxu0 %v1112
      %v3850 = vpop.f32.mrf.mxu0
      %v3851 = vadd.f32 %v3658, %v3850
      %v3852 = vpop.f32.mrf.mxu0
      %v3853 = vadd.f32 %v3660, %v3852
      %v3854 = vpop.f32.mrf.mxu0
      %v3855 = vadd.f32 %v3662, %v3854
      %v3856 = vpop.f32.mrf.mxu0
      %v3857 = vadd.f32 %v3664, %v3856
      %3858 = vmatprep.mubr.bf16.mxu0 0
      %3859 = vmatmul.mubr.bf16.gmra.mxu0 %v1119
      %v3860 = vpop.f32.mrf.mxu0
      %v3861 = vadd.f32 %v3668, %v3860
      %v3862 = vpop.f32.mrf.mxu0
      %v3863 = vadd.f32 %v3670, %v3862
      %v3864 = vpop.f32.mrf.mxu0
      %v3865 = vadd.f32 %v3672, %v3864
      %v3866 = vpop.f32.mrf.mxu0
      %v3867 = vadd.f32 %v3674, %v3866
      %3868 = vmatprep.mubr.bf16.mxu0 0
      %3869 = vmatmul.mubr.bf16.gmra.mxu0 %v1126
      %v3870 = vpop.f32.mrf.mxu0
      %v3871 = vadd.f32 %v3678, %v3870
      %v3872 = vpop.f32.mrf.mxu0
      %v3873 = vadd.f32 %v3680, %v3872
      %v3874 = vpop.f32.mrf.mxu0
      %v3875 = vadd.f32 %v3682, %v3874
      %v3876 = vpop.f32.mrf.mxu0
      %v3877 = vadd.f32 %v3684, %v3876
      %3878 = vmatprep.mubr.bf16.mxu0 0
      %3879 = vmatmul.mubr.bf16.gmra.mxu0 %v1133
      %v3880 = vpop.f32.mrf.mxu0
      %v3881 = vadd.f32 %v3688, %v3880
      %v3882 = vpop.f32.mrf.mxu0
      %v3883 = vadd.f32 %v3690, %v3882
      %v3884 = vpop.f32.mrf.mxu0
      %v3885 = vadd.f32 %v3692, %v3884
      %v3886 = vpop.f32.mrf.mxu0
      %v3887 = vadd.f32 %v3694, %v3886
      %3888 = vmatprep.mubr.bf16.mxu0 0
      %3889 = vmatmul.mubr.bf16.gmra.mxu0 %v1140
      %v3890 = vpop.f32.mrf.mxu0
      %v3891 = vadd.f32 %v3698, %v3890
      %v3892 = vpop.f32.mrf.mxu0
      %v3893 = vadd.f32 %v3700, %v3892
      %v3894 = vpop.f32.mrf.mxu0
      %v3895 = vadd.f32 %v3702, %v3894
      %v3896 = vpop.f32.mrf.mxu0
      %v3897 = vadd.f32 %v3704, %v3896
      %3898 = vmatprep.mubr.bf16.mxu0 0
      %3899 = vmatmul.mubr.bf16.gmra.mxu0 %v1147
      %v3900 = vpop.f32.mrf.mxu0
      %v3901 = vadd.f32 %v3708, %v3900
      %v3902 = vpop.f32.mrf.mxu0
      %v3903 = vadd.f32 %v3710, %v3902
      %v3904 = vpop.f32.mrf.mxu0
      %v3905 = vadd.f32 %v3712, %v3904
      %v3906 = vpop.f32.mrf.mxu0
      %v3907 = vadd.f32 %v3714, %v3906
      %3908 = vmatprep.mubr.bf16.mxu0 0
      %3909 = vmatmul.mubr.bf16.gmra.mxu0 %v1154
      %v3910 = vpop.f32.mrf.mxu0
      %v3911 = vadd.f32 %v3718, %v3910
      %v3912 = vpop.f32.mrf.mxu0
      %v3913 = vadd.f32 %v3720, %v3912
      %v3914 = vpop.f32.mrf.mxu0
      %v3915 = vadd.f32 %v3722, %v3914
      %v3916 = vpop.f32.mrf.mxu0
      %v3917 = vadd.f32 %v3724, %v3916
      %3918 = vmatprep.mubr.bf16.mxu0 0
      %3919 = vmatmul.mubr.bf16.gmra.mxu0 %v1161
      %v3920 = vpop.f32.mrf.mxu0
      %v3921 = vadd.f32 %v3728, %v3920
      %v3922 = vpop.f32.mrf.mxu0
      %v3923 = vadd.f32 %v3730, %v3922
      %v3924 = vpop.f32.mrf.mxu0
      %v3925 = vadd.f32 %v3732, %v3924
      %v3926 = vpop.f32.mrf.mxu0
      %v3927 = vadd.f32 %v3734, %v3926
      %3928 = vmatprep.mubr.bf16.mxu0 0
      %3929 = vmatmul.mubr.bf16.gmra.mxu0 %v1168
      %v3930 = vpop.f32.mrf.mxu0
      %v3931 = vadd.f32 %v3738, %v3930
      %v3932 = vpop.f32.mrf.mxu0
      %v3933 = vadd.f32 %v3740, %v3932
      %v3934 = vpop.f32.mrf.mxu0
      %v3935 = vadd.f32 %v3742, %v3934
      %v3936 = vpop.f32.mrf.mxu0
      %v3937 = vadd.f32 %v3744, %v3936
      %3938 = vmatprep.mubr.bf16.mxu0 0
      %3939 = vmatmul.mubr.bf16.gmra.mxu0 %v1175
      %v3940 = vpop.f32.mrf.mxu0
      %v3941 = vadd.f32 %v3748, %v3940
      %v3942 = vpop.f32.mrf.mxu0
      %v3943 = vadd.f32 %v3750, %v3942
      %v3944 = vpop.f32.mrf.mxu0
      %v3945 = vadd.f32 %v3752, %v3944
      %v3946 = vpop.f32.mrf.mxu0
      %v3947 = vadd.f32 %v3754, %v3946
      %3948 = vmatprep.mubr.bf16.mxu0 0
      %3949 = vmatmul.mubr.bf16.gmra.mxu0 %v1182
      %v3950 = vpop.f32.mrf.mxu0
      %v3951 = vadd.f32 %v3758, %v3950
      %v3952 = vpop.f32.mrf.mxu0
      %v3953 = vadd.f32 %v3760, %v3952
      %v3954 = vpop.f32.mrf.mxu0
      %v3955 = vadd.f32 %v3762, %v3954
      %v3956 = vpop.f32.mrf.mxu0
      %v3957 = vadd.f32 %v3764, %v3956
      %3958 = vdwg.mxu0
      %v3959 = vmax.f32 %v3029, 0.0
      %v3960 = vmax.f32 %v3031, 0.0
      %v3961 = vmax.f32 %v3801, 0.0
      %v3962 = vmax.f32 %v3803, 0.0
      %v3963 = vmax.f32 %v3033, 0.0
      %v3964 = vmax.f32 %v3035, 0.0
      %v3965 = vmax.f32 %v3805, 0.0
      %v3966 = vmax.f32 %v3807, 0.0
      %v3967 = vmax.f32 %v3039, 0.0
      %v3968 = vmax.f32 %v3041, 0.0
      %v3969 = vmax.f32 %v3811, 0.0
      %v3970 = vmax.f32 %v3813, 0.0
      %v3971 = vmax.f32 %v3043, 0.0
      %v3972 = vmax.f32 %v3045, 0.0
      %v3973 = vmax.f32 %v3815, 0.0
      %v3974 = vmax.f32 %v3817, 0.0
      %v3975 = vmax.f32 %v3049, 0.0
      %v3976 = vmax.f32 %v3051, 0.0
      %v3977 = vmax.f32 %v3821, 0.0
      %v3978 = vmax.f32 %v3823, 0.0
      %v3979 = vmax.f32 %v3053, 0.0
      %v3980 = vmax.f32 %v3055, 0.0
      %v3981 = vmax.f32 %v3825, 0.0
      %v3982 = vmax.f32 %v3827, 0.0
      %v3983 = vmax.f32 %v3059, 0.0
      %v3984 = vmax.f32 %v3061, 0.0
      %v3985 = vmax.f32 %v3831, 0.0
      %v3986 = vmax.f32 %v3833, 0.0
      %v3987 = vmax.f32 %v3063, 0.0
      %v3988 = vmax.f32 %v3065, 0.0
      %v3989 = vmax.f32 %v3835, 0.0
      %v3990 = vmax.f32 %v3837, 0.0
      %v3991 = vmax.f32 %v3069, 0.0
      %v3992 = vmax.f32 %v3071, 0.0
      %v3993 = vmax.f32 %v3841, 0.0
      %v3994 = vmax.f32 %v3843, 0.0
      %v3995 = vmax.f32 %v3073, 0.0
      %v3996 = vmax.f32 %v3075, 0.0
      %v3997 = vmax.f32 %v3845, 0.0
      %v3998 = vmax.f32 %v3847, 0.0
      %v3999 = vmax.f32 %v3079, 0.0
      %v4000 = vmax.f32 %v3081, 0.0
      %v4001 = vmax.f32 %v3851, 0.0
      %v4002 = vmax.f32 %v3853, 0.0
      %v4003 = vmax.f32 %v3083, 0.0
      %v4004 = vmax.f32 %v3085, 0.0
      %v4005 = vmax.f32 %v3855, 0.0
      %v4006 = vmax.f32 %v3857, 0.0
      %v4007 = vmax.f32 %v3089, 0.0
      %v4008 = vmax.f32 %v3091, 0.0
      %v4009 = vmax.f32 %v3861, 0.0
      %v4010 = vmax.f32 %v3863, 0.0
      %v4011 = vmax.f32 %v3093, 0.0
      %v4012 = vmax.f32 %v3095, 0.0
      %v4013 = vmax.f32 %v3865, 0.0
      %v4014 = vmax.f32 %v3867, 0.0
      %v4015 = vmax.f32 %v3099, 0.0
      %v4016 = vmax.f32 %v3101, 0.0
      %v4017 = vmax.f32 %v3871, 0.0
      %v4018 = vmax.f32 %v3873, 0.0
      %v4019 = vmax.f32 %v3103, 0.0
      %v4020 = vmax.f32 %v3105, 0.0
      %v4021 = vmax.f32 %v3875, 0.0
      %v4022 = vmax.f32 %v3877, 0.0
      %v4023 = vmax.f32 %v3109, 0.0
      %v4024 = vmax.f32 %v3111, 0.0
      %v4025 = vmax.f32 %v3881, 0.0
      %v4026 = vmax.f32 %v3883, 0.0
      %v4027 = vmax.f32 %v3113, 0.0
      %v4028 = vmax.f32 %v3115, 0.0
      %v4029 = vmax.f32 %v3885, 0.0
      %v4030 = vmax.f32 %v3887, 0.0
      %v4031 = vmax.f32 %v3119, 0.0
      %v4032 = vmax.f32 %v3121, 0.0
      %v4033 = vmax.f32 %v3891, 0.0
      %v4034 = vmax.f32 %v3893, 0.0
      %v4035 = vmax.f32 %v3123, 0.0
      %v4036 = vmax.f32 %v3125, 0.0
      %v4037 = vmax.f32 %v3895, 0.0
      %v4038 = vmax.f32 %v3897, 0.0
      %v4039 = vmax.f32 %v3129, 0.0
      %v4040 = vmax.f32 %v3131, 0.0
      %v4041 = vmax.f32 %v3901, 0.0
      %v4042 = vmax.f32 %v3903, 0.0
      %v4043 = vmax.f32 %v3133, 0.0
      %v4044 = vmax.f32 %v3135, 0.0
      %v4045 = vmax.f32 %v3905, 0.0
      %v4046 = vmax.f32 %v3907, 0.0
      %v4047 = vmax.f32 %v3139, 0.0
      %v4048 = vmax.f32 %v3141, 0.0
      %v4049 = vmax.f32 %v3911, 0.0
      %v4050 = vmax.f32 %v3913, 0.0
      %v4051 = vmax.f32 %v3143, 0.0
      %v4052 = vmax.f32 %v3145, 0.0
      %v4053 = vmax.f32 %v3915, 0.0
      %v4054 = vmax.f32 %v3917, 0.0
      %v4055 = vmax.f32 %v3149, 0.0
      %v4056 = vmax.f32 %v3151, 0.0
      %v4057 = vmax.f32 %v3921, 0.0
      %v4058 = vmax.f32 %v3923, 0.0
      %v4059 = vmax.f32 %v3153, 0.0
      %v4060 = vmax.f32 %v3155, 0.0
      %v4061 = vmax.f32 %v3925, 0.0
      %v4062 = vmax.f32 %v3927, 0.0
      %v4063 = vmax.f32 %v3159, 0.0
      %v4064 = vmax.f32 %v3161, 0.0
      %v4065 = vmax.f32 %v3931, 0.0
      %v4066 = vmax.f32 %v3933, 0.0
      %v4067 = vmax.f32 %v3163, 0.0
      %v4068 = vmax.f32 %v3165, 0.0
      %v4069 = vmax.f32 %v3935, 0.0
      %v4070 = vmax.f32 %v3937, 0.0
      %v4071 = vmax.f32 %v3169, 0.0
      %v4072 = vmax.f32 %v3171, 0.0
      %v4073 = vmax.f32 %v3941, 0.0
      %v4074 = vmax.f32 %v3943, 0.0
      %v4075 = vmax.f32 %v3173, 0.0
      %v4076 = vmax.f32 %v3175, 0.0
      %v4077 = vmax.f32 %v3945, 0.0
      %v4078 = vmax.f32 %v3947, 0.0
      %v4079 = vmax.f32 %v3179, 0.0
      %v4080 = vmax.f32 %v3181, 0.0
      %v4081 = vmax.f32 %v3951, 0.0
      %v4082 = vmax.f32 %v3953, 0.0
      %v4083 = vmax.f32 %v3183, 0.0
      %v4084 = vmax.f32 %v3185, 0.0
      %v4085 = vmax.f32 %v3955, 0.0
      %v4086 = vmax.f32 %v3957, 0.0
      %v4087 = vpack.c.bf16 %v3963, %v3959
      %v4088 = vpack.c.bf16 %v3964, %v3960
      %v4089 = vpack.c.bf16 %v3965, %v3961
      %v4090 = vpack.c.bf16 %v3966, %v3962
      %v4091 = vpack.c.bf16 %v3971, %v3967
      %v4092 = vpack.c.bf16 %v3972, %v3968
      %v4093 = vpack.c.bf16 %v3973, %v3969
      %v4094 = vpack.c.bf16 %v3974, %v3970
      %v4095 = vpack.c.bf16 %v3979, %v3975
      %v4096 = vpack.c.bf16 %v3980, %v3976
      %v4097 = vpack.c.bf16 %v3981, %v3977
      %v4098 = vpack.c.bf16 %v3982, %v3978
      %v4099 = vpack.c.bf16 %v3987, %v3983
      %v4100 = vpack.c.bf16 %v3988, %v3984
      %v4101 = vpack.c.bf16 %v3989, %v3985
      %v4102 = vpack.c.bf16 %v3990, %v3986
      %v4103 = vpack.c.bf16 %v3995, %v3991
      %v4104 = vpack.c.bf16 %v3996, %v3992
      %v4105 = vpack.c.bf16 %v3997, %v3993
      %v4106 = vpack.c.bf16 %v3998, %v3994
      %v4107 = vpack.c.bf16 %v4003, %v3999
      %v4108 = vpack.c.bf16 %v4004, %v4000
      %v4109 = vpack.c.bf16 %v4005, %v4001
      %v4110 = vpack.c.bf16 %v4006, %v4002
      %v4111 = vpack.c.bf16 %v4011, %v4007
      %v4112 = vpack.c.bf16 %v4012, %v4008
      %v4113 = vpack.c.bf16 %v4013, %v4009
      %v4114 = vpack.c.bf16 %v4014, %v4010
      %v4115 = vpack.c.bf16 %v4019, %v4015
      %v4116 = vpack.c.bf16 %v4020, %v4016
      %v4117 = vpack.c.bf16 %v4021, %v4017
      %v4118 = vpack.c.bf16 %v4022, %v4018
      %v4119 = vpack.c.bf16 %v4027, %v4023
      %v4120 = vpack.c.bf16 %v4028, %v4024
      %v4121 = vpack.c.bf16 %v4029, %v4025
      %v4122 = vpack.c.bf16 %v4030, %v4026
      %v4123 = vpack.c.bf16 %v4035, %v4031
      %v4124 = vpack.c.bf16 %v4036, %v4032
      %v4125 = vpack.c.bf16 %v4037, %v4033
      %v4126 = vpack.c.bf16 %v4038, %v4034
      %v4127 = vpack.c.bf16 %v4043, %v4039
      %v4128 = vpack.c.bf16 %v4044, %v4040
      %v4129 = vpack.c.bf16 %v4045, %v4041
      %v4130 = vpack.c.bf16 %v4046, %v4042
      %v4131 = vpack.c.bf16 %v4051, %v4047
      %v4132 = vpack.c.bf16 %v4052, %v4048
      %v4133 = vpack.c.bf16 %v4053, %v4049
      %v4134 = vpack.c.bf16 %v4054, %v4050
      %v4135 = vpack.c.bf16 %v4059, %v4055
      %v4136 = vpack.c.bf16 %v4060, %v4056
      %v4137 = vpack.c.bf16 %v4061, %v4057
      %v4138 = vpack.c.bf16 %v4062, %v4058
      %v4139 = vpack.c.bf16 %v4067, %v4063
      %v4140 = vpack.c.bf16 %v4068, %v4064
      %v4141 = vpack.c.bf16 %v4069, %v4065
      %v4142 = vpack.c.bf16 %v4070, %v4066
      %v4143 = vpack.c.bf16 %v4075, %v4071
      %v4144 = vpack.c.bf16 %v4076, %v4072
      %v4145 = vpack.c.bf16 %v4077, %v4073
      %v4146 = vpack.c.bf16 %v4078, %v4074
      %v4147 = vpack.c.bf16 %v4083, %v4079
      %v4148 = vpack.c.bf16 %v4084, %v4080
      %v4149 = vpack.c.bf16 %v4085, %v4081
      %v4150 = vpack.c.bf16 %v4086, %v4082
      %v4151 = vld [vmem:[%s3] sm:$0xf]
      %v4152 = vld [vmem:[%s3 + $0x4] sm:$0xf]
      %v4153 = vld [vmem:[%s3 + $0x8] sm:$0xf]
      %v4154 = vld [vmem:[%s3 + $0xc] sm:$0xf]
      %v4155 = vld [vmem:[%s3 + $0x10] sm:$0xf]
      %v4156 = vld [vmem:[%s3 + $0x14] sm:$0xf]
      %v4157 = vld [vmem:[%s3 + $0x18] sm:$0xf]
      %v4158 = vld [vmem:[%s3 + $0x1c] sm:$0xf]
      %v4159 = vld [vmem:[%s3 + $0x20] sm:$0xf]
      %v4160 = vld [vmem:[%s3 + $0x24] sm:$0xf]
      %v4161 = vld [vmem:[%s3 + $0x28] sm:$0xf]
      %v4162 = vld [vmem:[%s3 + $0x2c] sm:$0xf]
      %v4163 = vld [vmem:[%s3 + $0x30] sm:$0xf]
      %v4164 = vld [vmem:[%s3 + $0x34] sm:$0xf]
      %v4165 = vld [vmem:[%s3 + $0x38] sm:$0xf]
      %v4166 = vld [vmem:[%s3 + $0x3c] sm:$0xf]
      %v4167 = vld [vmem:[%s3 + $0x40] sm:$0xf]
      %v4168 = vld [vmem:[%s3 + $0x44] sm:$0xf]
      %v4169 = vld [vmem:[%s3 + $0x48] sm:$0xf]
      %v4170 = vld [vmem:[%s3 + $0x4c] sm:$0xf]
      %v4171 = vld [vmem:[%s3 + $0x50] sm:$0xf]
      %v4172 = vld [vmem:[%s3 + $0x54] sm:$0xf]
      %v4173 = vld [vmem:[%s3 + $0x58] sm:$0xf]
      %v4174 = vld [vmem:[%s3 + $0x5c] sm:$0xf]
      %v4175 = vld [vmem:[%s3 + $0x60] sm:$0xf]
      %v4176 = vld [vmem:[%s3 + $0x64] sm:$0xf]
      %v4177 = vld [vmem:[%s3 + $0x68] sm:$0xf]
      %v4178 = vld [vmem:[%s3 + $0x6c] sm:$0xf]
      %v4179 = vld [vmem:[%s3 + $0x70] sm:$0xf]
      %v4180 = vld [vmem:[%s3 + $0x74] sm:$0xf]
      %v4181 = vld [vmem:[%s3 + $0x78] sm:$0xf]
      %v4182 = vld [vmem:[%s3 + $0x7c] sm:$0xf]
      %v4183 = vld [vmem:[%s3 + $0x80] sm:$0xf]
      %v4184 = vld [vmem:[%s3 + $0x84] sm:$0xf]
      %v4185 = vld [vmem:[%s3 + $0x88] sm:$0xf]
      %v4186 = vld [vmem:[%s3 + $0x8c] sm:$0xf]
      %v4187 = vld [vmem:[%s3 + $0x90] sm:$0xf]
      %v4188 = vld [vmem:[%s3 + $0x94] sm:$0xf]
      %v4189 = vld [vmem:[%s3 + $0x98] sm:$0xf]
      %v4190 = vld [vmem:[%s3 + $0x9c] sm:$0xf]
      %v4191 = vld [vmem:[%s3 + $0xa0] sm:$0xf]
      %v4192 = vld [vmem:[%s3 + $0xa4] sm:$0xf]
      %v4193 = vld [vmem:[%s3 + $0xa8] sm:$0xf]
      %v4194 = vld [vmem:[%s3 + $0xac] sm:$0xf]
      %v4195 = vld [vmem:[%s3 + $0xb0] sm:$0xf]
      %v4196 = vld [vmem:[%s3 + $0xb4] sm:$0xf]
      %v4197 = vld [vmem:[%s3 + $0xb8] sm:$0xf]
      %v4198 = vld [vmem:[%s3 + $0xbc] sm:$0xf]
      %v4199 = vld [vmem:[%s3 + $0xc0] sm:$0xf]
      %v4200 = vld [vmem:[%s3 + $0xc4] sm:$0xf]
      %v4201 = vld [vmem:[%s3 + $0xc8] sm:$0xf]
      %v4202 = vld [vmem:[%s3 + $0xcc] sm:$0xf]
      %v4203 = vld [vmem:[%s3 + $0xd0] sm:$0xf]
      %v4204 = vld [vmem:[%s3 + $0xd4] sm:$0xf]
      %v4205 = vld [vmem:[%s3 + $0xd8] sm:$0xf]
      %v4206 = vld [vmem:[%s3 + $0xdc] sm:$0xf]
      %v4207 = vld [vmem:[%s3 + $0xe0] sm:$0xf]
      %v4208 = vld [vmem:[%s3 + $0xe4] sm:$0xf]
      %v4209 = vld [vmem:[%s3 + $0xe8] sm:$0xf]
      %v4210 = vld [vmem:[%s3 + $0xec] sm:$0xf]
      %v4211 = vld [vmem:[%s3 + $0xf0] sm:$0xf]
      %v4212 = vld [vmem:[%s3 + $0xf4] sm:$0xf]
      %v4213 = vld [vmem:[%s3 + $0xf8] sm:$0xf]
      %v4214 = vld [vmem:[%s3 + $0xfc] sm:$0xf]
      %v4216 = vlaneseq
      %v4217 = vshrl.u32 %v4216, 7
      %v4218 = vsub.s32 0, %v4217
      %v4219 = vrot.slane %v471, %v4218
      %v4285 = vunpack.c.l.b16 %v4151
      %v4286 = vunpack.c.l.b16 %v4152
      %v4287 = vunpack.c.l.b16 %v4153
      %v4288 = vunpack.c.l.b16 %v4154
      %v4289 = vunpack.c.l.b16 %v4155
      %v4290 = vunpack.c.l.b16 %v4156
      %v4291 = vunpack.c.l.b16 %v4157
      %v4292 = vunpack.c.l.b16 %v4158
      %v4293 = vunpack.c.l.b16 %v4159
      %v4294 = vunpack.c.l.b16 %v4160
      %v4295 = vunpack.c.l.b16 %v4161
      %v4296 = vunpack.c.l.b16 %v4162
      %v4297 = vunpack.c.l.b16 %v4163
      %v4298 = vunpack.c.l.b16 %v4164
      %v4299 = vunpack.c.l.b16 %v4165
      %v4300 = vunpack.c.l.b16 %v4166
      %v4301 = vunpack.c.l.b16 %v4167
      %v4302 = vunpack.c.l.b16 %v4168
      %v4303 = vunpack.c.l.b16 %v4169
      %v4304 = vunpack.c.l.b16 %v4170
      %v4305 = vunpack.c.l.b16 %v4171
      %v4306 = vunpack.c.l.b16 %v4172
      %v4307 = vunpack.c.l.b16 %v4173
      %v4308 = vunpack.c.l.b16 %v4174
      %v4309 = vunpack.c.l.b16 %v4175
      %v4310 = vunpack.c.l.b16 %v4176
      %v4311 = vunpack.c.l.b16 %v4177
      %v4312 = vunpack.c.l.b16 %v4178
      %v4313 = vunpack.c.l.b16 %v4179
      %v4314 = vunpack.c.l.b16 %v4180
      %v4315 = vunpack.c.l.b16 %v4181
      %v4316 = vunpack.c.l.b16 %v4182
      %v4317 = vunpack.c.l.b16 %v4183
      %v4318 = vunpack.c.l.b16 %v4184
      %v4319 = vunpack.c.l.b16 %v4185
      %v4320 = vunpack.c.l.b16 %v4186
      %v4321 = vunpack.c.l.b16 %v4187
      %v4322 = vunpack.c.l.b16 %v4188
      %v4323 = vunpack.c.l.b16 %v4189
      %v4324 = vunpack.c.l.b16 %v4190
      %v4325 = vunpack.c.l.b16 %v4191
      %v4326 = vunpack.c.l.b16 %v4192
      %v4327 = vunpack.c.l.b16 %v4193
      %v4328 = vunpack.c.l.b16 %v4194
      %v4329 = vunpack.c.l.b16 %v4195
      %v4330 = vunpack.c.l.b16 %v4196
      %v4331 = vunpack.c.l.b16 %v4197
      %v4332 = vunpack.c.l.b16 %v4198
      %v4333 = vunpack.c.l.b16 %v4199
      %v4334 = vunpack.c.l.b16 %v4200
      %v4335 = vunpack.c.l.b16 %v4201
      %v4336 = vunpack.c.l.b16 %v4202
      %v4337 = vunpack.c.l.b16 %v4203
      %v4338 = vunpack.c.l.b16 %v4204
      %v4339 = vunpack.c.l.b16 %v4205
      %v4340 = vunpack.c.l.b16 %v4206
      %v4341 = vunpack.c.l.b16 %v4207
      %v4342 = vunpack.c.l.b16 %v4208
      %v4343 = vunpack.c.l.b16 %v4209
      %v4344 = vunpack.c.l.b16 %v4210
      %v4345 = vunpack.c.l.b16 %v4211
      %v4346 = vunpack.c.l.b16 %v4212
      %v4347 = vunpack.c.l.b16 %v4213
      %v4348 = vunpack.c.l.b16 %v4214
      %v4349 = vpack.c.b16 %v4286, %v4285
      %v4350 = vpack.c.b16 %v4288, %v4287
      %v4351 = vpack.c.b16 %v4290, %v4289
      %v4352 = vpack.c.b16 %v4292, %v4291
      %v4353 = vpack.c.b16 %v4294, %v4293
      %v4354 = vpack.c.b16 %v4296, %v4295
      %v4355 = vpack.c.b16 %v4298, %v4297
      %v4356 = vpack.c.b16 %v4300, %v4299
      %v4357 = vpack.c.b16 %v4302, %v4301
      %v4358 = vpack.c.b16 %v4304, %v4303
      %v4359 = vpack.c.b16 %v4306, %v4305
      %v4360 = vpack.c.b16 %v4308, %v4307
      %v4361 = vpack.c.b16 %v4310, %v4309
      %v4362 = vpack.c.b16 %v4312, %v4311
      %v4363 = vpack.c.b16 %v4314, %v4313
      %v4364 = vpack.c.b16 %v4316, %v4315
      %v4365 = vpack.c.b16 %v4318, %v4317
      %v4366 = vpack.c.b16 %v4320, %v4319
      %v4367 = vpack.c.b16 %v4322, %v4321
      %v4368 = vpack.c.b16 %v4324, %v4323
      %v4369 = vpack.c.b16 %v4326, %v4325
      %v4370 = vpack.c.b16 %v4328, %v4327
      %v4371 = vpack.c.b16 %v4330, %v4329
      %v4372 = vpack.c.b16 %v4332, %v4331
      %v4373 = vpack.c.b16 %v4334, %v4333
      %v4374 = vpack.c.b16 %v4336, %v4335
      %v4375 = vpack.c.b16 %v4338, %v4337
      %v4376 = vpack.c.b16 %v4340, %v4339
      %v4377 = vpack.c.b16 %v4342, %v4341
      %v4378 = vpack.c.b16 %v4344, %v4343
      %v4379 = vpack.c.b16 %v4346, %v4345
      %v4380 = vpack.c.b16 %v4348, %v4347
      %4413 = vmatprep.subr.bf16.mxu0 0
      %4414 = vmatpush1.bf16.msra.mxu0 %v4356
      %4415 = vmatprep.subr.bf16.mxu0 0
      %4416 = vmatpush1.bf16.msra.mxu0 %v4355
      %4417 = vmatprep.subr.bf16.mxu0 0
      %4418 = vmatpush1.bf16.msra.mxu0 %v4354
      %4419 = vmatprep.subr.bf16.mxu0 0
      %4420 = vmatpush1.bf16.msra.mxu0 %v4353
      %4421 = vmatprep.subr.bf16.mxu0 0
      %4422 = vmatpush1.bf16.msra.mxu0 %v4352
      %4423 = vmatprep.subr.bf16.mxu0 0
      %4424 = vmatpush1.bf16.msra.mxu0 %v4351
      %4425 = vmatprep.subr.bf16.mxu0 0
      %4426 = vmatpush1.bf16.msra.mxu0 %v4350
      %4427 = vmatprep.subr.bf16.mxu0 0
      %4428 = vmatpush1.bf16.msra.mxu0 %v4349
      %4429 = vmatprep.subr.bf16.mxu0 0
      %4430 = vmatpush2.bf16.msra.mxu0 %v4364
      %4431 = vmatprep.subr.bf16.mxu0 0
      %4432 = vmatpush2.bf16.msra.mxu0 %v4363
      %4433 = vmatprep.subr.bf16.mxu0 0
      %4434 = vmatpush2.bf16.msra.mxu0 %v4362
      %4435 = vmatprep.subr.bf16.mxu0 0
      %4436 = vmatpush2.bf16.msra.mxu0 %v4361
      %4437 = vmatprep.subr.bf16.mxu0 0
      %4438 = vmatpush2.bf16.msra.mxu0 %v4360
      %4439 = vmatprep.subr.bf16.mxu0 0
      %4440 = vmatpush2.bf16.msra.mxu0 %v4359
      %4441 = vmatprep.subr.bf16.mxu0 0
      %4442 = vmatpush2.bf16.msra.mxu0 %v4358
      %4443 = vmatprep.subr.bf16.mxu0 0
      %4444 = vmatpush2.bf16.msra.mxu0 %v4357
      %4445 = vmatprep.mubr.bf16.mxu0 %v4088
      %4446 = vmatmul.mubr.bf16.gmra.mxu0 %v4087
      %v4447 = vpop.f32.mrf.mxu0
      %v4448 = vadd.f32 %v4219, %v4447
      %v4449 = vpop.f32.mrf.mxu0
      %v4450 = vpop.f32.mrf.mxu0
      %v4451 = vadd.f32 %v4219, %v4450
      %v4452 = vpop.f32.mrf.mxu0
      %4453 = vmatprep.mubr.bf16.mxu0 %v4092
      %4454 = vmatmul.mubr.bf16.gmra.mxu0 %v4091
      %v4455 = vpop.f32.mrf.mxu0
      %v4456 = vadd.f32 %v4219, %v4455
      %v4457 = vpop.f32.mrf.mxu0
      %v4458 = vpop.f32.mrf.mxu0
      %v4459 = vadd.f32 %v4219, %v4458
      %v4460 = vpop.f32.mrf.mxu0
      %4461 = vmatprep.mubr.bf16.mxu0 %v4096
      %4462 = vmatmul.mubr.bf16.gmra.mxu0 %v4095
      %v4463 = vpop.f32.mrf.mxu0
      %v4464 = vadd.f32 %v4219, %v4463
      %v4465 = vpop.f32.mrf.mxu0
      %v4466 = vpop.f32.mrf.mxu0
      %v4467 = vadd.f32 %v4219, %v4466
      %v4468 = vpop.f32.mrf.mxu0
      %4469 = vmatprep.mubr.bf16.mxu0 %v4100
      %4470 = vmatmul.mubr.bf16.gmra.mxu0 %v4099
      %v4471 = vpop.f32.mrf.mxu0
      %v4472 = vadd.f32 %v4219, %v4471
      %v4473 = vpop.f32.mrf.mxu0
      %v4474 = vpop.f32.mrf.mxu0
      %v4475 = vadd.f32 %v4219, %v4474
      %v4476 = vpop.f32.mrf.mxu0
      %4477 = vmatprep.mubr.bf16.mxu0 %v4104
      %4478 = vmatmul.mubr.bf16.gmra.mxu0 %v4103
      %v4479 = vpop.f32.mrf.mxu0
      %v4480 = vadd.f32 %v4219, %v4479
      %v4481 = vpop.f32.mrf.mxu0
      %v4482 = vpop.f32.mrf.mxu0
      %v4483 = vadd.f32 %v4219, %v4482
      %v4484 = vpop.f32.mrf.mxu0
      %4485 = vmatprep.mubr.bf16.mxu0 %v4108
      %4486 = vmatmul.mubr.bf16.gmra.mxu0 %v4107
      %v4487 = vpop.f32.mrf.mxu0
      %v4488 = vadd.f32 %v4219, %v4487
      %v4489 = vpop.f32.mrf.mxu0
      %v4490 = vpop.f32.mrf.mxu0
      %v4491 = vadd.f32 %v4219, %v4490
      %v4492 = vpop.f32.mrf.mxu0
      %4493 = vmatprep.mubr.bf16.mxu0 %v4112
      %4494 = vmatmul.mubr.bf16.gmra.mxu0 %v4111
      %v4495 = vpop.f32.mrf.mxu0
      %v4496 = vadd.f32 %v4219, %v4495
      %v4497 = vpop.f32.mrf.mxu0
      %v4498 = vpop.f32.mrf.mxu0
      %v4499 = vadd.f32 %v4219, %v4498
      %v4500 = vpop.f32.mrf.mxu0
      %4501 = vmatprep.mubr.bf16.mxu0 %v4116
      %4502 = vmatmul.mubr.bf16.gmra.mxu0 %v4115
      %v4503 = vpop.f32.mrf.mxu0
      %v4504 = vadd.f32 %v4219, %v4503
      %v4505 = vpop.f32.mrf.mxu0
      %v4506 = vpop.f32.mrf.mxu0
      %v4507 = vadd.f32 %v4219, %v4506
      %v4508 = vpop.f32.mrf.mxu0
      %4509 = vmatprep.mubr.bf16.mxu0 %v4120
      %4510 = vmatmul.mubr.bf16.gmra.mxu0 %v4119
      %v4511 = vpop.f32.mrf.mxu0
      %v4512 = vadd.f32 %v4219, %v4511
      %v4513 = vpop.f32.mrf.mxu0
      %v4514 = vpop.f32.mrf.mxu0
      %v4515 = vadd.f32 %v4219, %v4514
      %v4516 = vpop.f32.mrf.mxu0
      %4517 = vmatprep.mubr.bf16.mxu0 %v4124
      %4518 = vmatmul.mubr.bf16.gmra.mxu0 %v4123
      %v4519 = vpop.f32.mrf.mxu0
      %v4520 = vadd.f32 %v4219, %v4519
      %v4521 = vpop.f32.mrf.mxu0
      %v4522 = vpop.f32.mrf.mxu0
      %v4523 = vadd.f32 %v4219, %v4522
      %v4524 = vpop.f32.mrf.mxu0
      %4525 = vmatprep.mubr.bf16.mxu0 %v4128
      %4526 = vmatmul.mubr.bf16.gmra.mxu0 %v4127
      %v4527 = vpop.f32.mrf.mxu0
      %v4528 = vadd.f32 %v4219, %v4527
      %v4529 = vpop.f32.mrf.mxu0
      %v4530 = vpop.f32.mrf.mxu0
      %v4531 = vadd.f32 %v4219, %v4530
      %v4532 = vpop.f32.mrf.mxu0
      %4533 = vmatprep.mubr.bf16.mxu0 %v4132
      %4534 = vmatmul.mubr.bf16.gmra.mxu0 %v4131
      %v4535 = vpop.f32.mrf.mxu0
      %v4536 = vadd.f32 %v4219, %v4535
      %v4537 = vpop.f32.mrf.mxu0
      %v4538 = vpop.f32.mrf.mxu0
      %v4539 = vadd.f32 %v4219, %v4538
      %v4540 = vpop.f32.mrf.mxu0
      %4541 = vmatprep.mubr.bf16.mxu0 %v4136
      %4542 = vmatmul.mubr.bf16.gmra.mxu0 %v4135
      %v4543 = vpop.f32.mrf.mxu0
      %v4544 = vadd.f32 %v4219, %v4543
      %v4545 = vpop.f32.mrf.mxu0
      %v4546 = vpop.f32.mrf.mxu0
      %v4547 = vadd.f32 %v4219, %v4546
      %v4548 = vpop.f32.mrf.mxu0
      %4549 = vmatprep.mubr.bf16.mxu0 %v4140
      %4550 = vmatmul.mubr.bf16.gmra.mxu0 %v4139
      %v4551 = vpop.f32.mrf.mxu0
      %v4552 = vadd.f32 %v4219, %v4551
      %v4553 = vpop.f32.mrf.mxu0
      %v4554 = vpop.f32.mrf.mxu0
      %v4555 = vadd.f32 %v4219, %v4554
      %v4556 = vpop.f32.mrf.mxu0
      %4557 = vmatprep.mubr.bf16.mxu0 %v4144
      %4558 = vmatmul.mubr.bf16.gmra.mxu0 %v4143
      %v4559 = vpop.f32.mrf.mxu0
      %v4560 = vadd.f32 %v4219, %v4559
      %v4561 = vpop.f32.mrf.mxu0
      %v4562 = vpop.f32.mrf.mxu0
      %v4563 = vadd.f32 %v4219, %v4562
      %v4564 = vpop.f32.mrf.mxu0
      %4565 = vmatprep.mubr.bf16.mxu0 %v4148
      %4566 = vmatmul.mubr.bf16.gmra.mxu0 %v4147
      %v4567 = vpop.f32.mrf.mxu0
      %v4568 = vadd.f32 %v4219, %v4567
      %v4569 = vpop.f32.mrf.mxu0
      %v4570 = vpop.f32.mrf.mxu0
      %v4571 = vadd.f32 %v4219, %v4570
      %v4572 = vpop.f32.mrf.mxu0
      %4573 = vdwg.mxu0
      %4574 = vmatprep.subr.bf16.mxu0 0
      %4575 = vmatpush1.bf16.msra.mxu0 %v4372
      %4576 = vmatprep.subr.bf16.mxu0 0
      %4577 = vmatpush1.bf16.msra.mxu0 %v4371
      %4578 = vmatprep.subr.bf16.mxu0 0
      %4579 = vmatpush1.bf16.msra.mxu0 %v4370
      %4580 = vmatprep.subr.bf16.mxu0 0
      %4581 = vmatpush1.bf16.msra.mxu0 %v4369
      %4582 = vmatprep.subr.bf16.mxu0 0
      %4583 = vmatpush1.bf16.msra.mxu0 %v4368
      %4584 = vmatprep.subr.bf16.mxu0 0
      %4585 = vmatpush1.bf16.msra.mxu0 %v4367
      %4586 = vmatprep.subr.bf16.mxu0 0
      %4587 = vmatpush1.bf16.msra.mxu0 %v4366
      %4588 = vmatprep.subr.bf16.mxu0 0
      %4589 = vmatpush1.bf16.msra.mxu0 %v4365
      %4590 = vmatprep.subr.bf16.mxu0 0
      %4591 = vmatpush2.bf16.msra.mxu0 %v4380
      %4592 = vmatprep.subr.bf16.mxu0 0
      %4593 = vmatpush2.bf16.msra.mxu0 %v4379
      %4594 = vmatprep.subr.bf16.mxu0 0
      %4595 = vmatpush2.bf16.msra.mxu0 %v4378
      %4596 = vmatprep.subr.bf16.mxu0 0
      %4597 = vmatpush2.bf16.msra.mxu0 %v4377
      %4598 = vmatprep.subr.bf16.mxu0 0
      %4599 = vmatpush2.bf16.msra.mxu0 %v4376
      %4600 = vmatprep.subr.bf16.mxu0 0
      %4601 = vmatpush2.bf16.msra.mxu0 %v4375
      %4602 = vmatprep.subr.bf16.mxu0 0
      %4603 = vmatpush2.bf16.msra.mxu0 %v4374
      %4604 = vmatprep.subr.bf16.mxu0 0
      %4605 = vmatpush2.bf16.msra.mxu0 %v4373
      %4606 = vmatprep.mubr.bf16.mxu0 %v4090
      %4607 = vmatmul.mubr.bf16.gmra.mxu0 %v4089
      %v4608 = vpop.f32.mrf.mxu0
      %v4609 = vadd.f32 %v4448, %v4608
      %v4610 = vpop.f32.mrf.mxu0
      %v4611 = vpop.f32.mrf.mxu0
      %v4612 = vadd.f32 %v4451, %v4611
      %v4613 = vpop.f32.mrf.mxu0
      %4614 = vmatprep.mubr.bf16.mxu0 %v4094
      %4615 = vmatmul.mubr.bf16.gmra.mxu0 %v4093
      %v4616 = vpop.f32.mrf.mxu0
      %v4617 = vadd.f32 %v4456, %v4616
      %v4618 = vpop.f32.mrf.mxu0
      %v4619 = vpop.f32.mrf.mxu0
      %v4620 = vadd.f32 %v4459, %v4619
      %v4621 = vpop.f32.mrf.mxu0
      %4622 = vmatprep.mubr.bf16.mxu0 %v4098
      %4623 = vmatmul.mubr.bf16.gmra.mxu0 %v4097
      %v4624 = vpop.f32.mrf.mxu0
      %v4625 = vadd.f32 %v4464, %v4624
      %v4626 = vpop.f32.mrf.mxu0
      %v4627 = vpop.f32.mrf.mxu0
      %v4628 = vadd.f32 %v4467, %v4627
      %v4629 = vpop.f32.mrf.mxu0
      %4630 = vmatprep.mubr.bf16.mxu0 %v4102
      %4631 = vmatmul.mubr.bf16.gmra.mxu0 %v4101
      %v4632 = vpop.f32.mrf.mxu0
      %v4633 = vadd.f32 %v4472, %v4632
      %v4634 = vpop.f32.mrf.mxu0
      %v4635 = vpop.f32.mrf.mxu0
      %v4636 = vadd.f32 %v4475, %v4635
      %v4637 = vpop.f32.mrf.mxu0
      %4638 = vmatprep.mubr.bf16.mxu0 %v4106
      %4639 = vmatmul.mubr.bf16.gmra.mxu0 %v4105
      %v4640 = vpop.f32.mrf.mxu0
      %v4641 = vadd.f32 %v4480, %v4640
      %v4642 = vpop.f32.mrf.mxu0
      %v4643 = vpop.f32.mrf.mxu0
      %v4644 = vadd.f32 %v4483, %v4643
      %v4645 = vpop.f32.mrf.mxu0
      %4646 = vmatprep.mubr.bf16.mxu0 %v4110
      %4647 = vmatmul.mubr.bf16.gmra.mxu0 %v4109
      %v4648 = vpop.f32.mrf.mxu0
      %v4649 = vadd.f32 %v4488, %v4648
      %v4650 = vpop.f32.mrf.mxu0
      %v4651 = vpop.f32.mrf.mxu0
      %v4652 = vadd.f32 %v4491, %v4651
      %v4653 = vpop.f32.mrf.mxu0
      %4654 = vmatprep.mubr.bf16.mxu0 %v4114
      %4655 = vmatmul.mubr.bf16.gmra.mxu0 %v4113
      %v4656 = vpop.f32.mrf.mxu0
      %v4657 = vadd.f32 %v4496, %v4656
      %v4658 = vpop.f32.mrf.mxu0
      %v4659 = vpop.f32.mrf.mxu0
      %v4660 = vadd.f32 %v4499, %v4659
      %v4661 = vpop.f32.mrf.mxu0
      %4662 = vmatprep.mubr.bf16.mxu0 %v4118
      %4663 = vmatmul.mubr.bf16.gmra.mxu0 %v4117
      %v4664 = vpop.f32.mrf.mxu0
      %v4665 = vadd.f32 %v4504, %v4664
      %v4666 = vpop.f32.mrf.mxu0
      %v4667 = vpop.f32.mrf.mxu0
      %v4668 = vadd.f32 %v4507, %v4667
      %v4669 = vpop.f32.mrf.mxu0
      %4670 = vmatprep.mubr.bf16.mxu0 %v4122
      %4671 = vmatmul.mubr.bf16.gmra.mxu0 %v4121
      %v4672 = vpop.f32.mrf.mxu0
      %v4673 = vadd.f32 %v4512, %v4672
      %v4674 = vpop.f32.mrf.mxu0
      %v4675 = vpop.f32.mrf.mxu0
      %v4676 = vadd.f32 %v4515, %v4675
      %v4677 = vpop.f32.mrf.mxu0
      %4678 = vmatprep.mubr.bf16.mxu0 %v4126
      %4679 = vmatmul.mubr.bf16.gmra.mxu0 %v4125
      %v4680 = vpop.f32.mrf.mxu0
      %v4681 = vadd.f32 %v4520, %v4680
      %v4682 = vpop.f32.mrf.mxu0
      %v4683 = vpop.f32.mrf.mxu0
      %v4684 = vadd.f32 %v4523, %v4683
      %v4685 = vpop.f32.mrf.mxu0
      %4686 = vmatprep.mubr.bf16.mxu0 %v4130
      %4687 = vmatmul.mubr.bf16.gmra.mxu0 %v4129
      %v4688 = vpop.f32.mrf.mxu0
      %v4689 = vadd.f32 %v4528, %v4688
      %v4690 = vpop.f32.mrf.mxu0
      %v4691 = vpop.f32.mrf.mxu0
      %v4692 = vadd.f32 %v4531, %v4691
      %v4693 = vpop.f32.mrf.mxu0
      %4694 = vmatprep.mubr.bf16.mxu0 %v4134
      %4695 = vmatmul.mubr.bf16.gmra.mxu0 %v4133
      %v4696 = vpop.f32.mrf.mxu0
      %v4697 = vadd.f32 %v4536, %v4696
      %v4698 = vpop.f32.mrf.mxu0
      %v4699 = vpop.f32.mrf.mxu0
      %v4700 = vadd.f32 %v4539, %v4699
      %v4701 = vpop.f32.mrf.mxu0
      %4702 = vmatprep.mubr.bf16.mxu0 %v4138
      %4703 = vmatmul.mubr.bf16.gmra.mxu0 %v4137
      %v4704 = vpop.f32.mrf.mxu0
      %v4705 = vadd.f32 %v4544, %v4704
      %v4706 = vpop.f32.mrf.mxu0
      %v4707 = vpop.f32.mrf.mxu0
      %v4708 = vadd.f32 %v4547, %v4707
      %v4709 = vpop.f32.mrf.mxu0
      %4710 = vmatprep.mubr.bf16.mxu0 %v4142
      %4711 = vmatmul.mubr.bf16.gmra.mxu0 %v4141
      %v4712 = vpop.f32.mrf.mxu0
      %v4713 = vadd.f32 %v4552, %v4712
      %v4714 = vpop.f32.mrf.mxu0
      %v4715 = vpop.f32.mrf.mxu0
      %v4716 = vadd.f32 %v4555, %v4715
      %v4717 = vpop.f32.mrf.mxu0
      %4718 = vmatprep.mubr.bf16.mxu0 %v4146
      %4719 = vmatmul.mubr.bf16.gmra.mxu0 %v4145
      %v4720 = vpop.f32.mrf.mxu0
      %v4721 = vadd.f32 %v4560, %v4720
      %v4722 = vpop.f32.mrf.mxu0
      %v4723 = vpop.f32.mrf.mxu0
      %v4724 = vadd.f32 %v4563, %v4723
      %v4725 = vpop.f32.mrf.mxu0
      %4726 = vmatprep.mubr.bf16.mxu0 %v4150
      %4727 = vmatmul.mubr.bf16.gmra.mxu0 %v4149
      %v4728 = vpop.f32.mrf.mxu0
      %v4729 = vadd.f32 %v4568, %v4728
      %v4730 = vpop.f32.mrf.mxu0
      %v4731 = vpop.f32.mrf.mxu0
      %v4732 = vadd.f32 %v4571, %v4731
      %v4733 = vpop.f32.mrf.mxu0
      %4734 = vdwg.mxu0
      %v4735 = vpack.c.bf16 %v4612, %v4609
      %v4736 = vpack.c.bf16 %v4620, %v4617
      %v4737 = vpack.c.bf16 %v4628, %v4625
      %v4738 = vpack.c.bf16 %v4636, %v4633
      %v4739 = vpack.c.bf16 %v4644, %v4641
      %v4740 = vpack.c.bf16 %v4652, %v4649
      %v4741 = vpack.c.bf16 %v4660, %v4657
      %v4742 = vpack.c.bf16 %v4668, %v4665
      %v4743 = vpack.c.bf16 %v4676, %v4673
      %v4744 = vpack.c.bf16 %v4684, %v4681
      %v4745 = vpack.c.bf16 %v4692, %v4689
      %v4746 = vpack.c.bf16 %v4700, %v4697
      %v4747 = vpack.c.bf16 %v4708, %v4705
      %v4748 = vpack.c.bf16 %v4716, %v4713
      %v4749 = vpack.c.bf16 %v4724, %v4721
      %v4750 = vpack.c.bf16 %v4732, %v4729
      %v4751 = vld [vmem:[%s5] sm:$0xff]
      %v4752 = vld [vmem:[%s5 + $0x8] sm:$0xff]
      %v4753 = vld [vmem:[%s5 + $0x10] sm:$0xff]
      %v4754 = vld [vmem:[%s5 + $0x18] sm:$0xff]
      %v4755 = vld [vmem:[%s5 + $0x20] sm:$0xff]
      %v4756 = vld [vmem:[%s5 + $0x28] sm:$0xff]
      %v4757 = vld [vmem:[%s5 + $0x30] sm:$0xff]
      %v4758 = vld [vmem:[%s5 + $0x38] sm:$0xff]
      %v4759 = vld [vmem:[%s5 + $0x40] sm:$0xff]
      %v4760 = vld [vmem:[%s5 + $0x48] sm:$0xff]
      %v4761 = vld [vmem:[%s5 + $0x50] sm:$0xff]
      %v4762 = vld [vmem:[%s5 + $0x58] sm:$0xff]
      %v4763 = vld [vmem:[%s5 + $0x60] sm:$0xff]
      %v4764 = vld [vmem:[%s5 + $0x68] sm:$0xff]
      %v4765 = vld [vmem:[%s5 + $0x70] sm:$0xff]
      %v4766 = vld [vmem:[%s5 + $0x78] sm:$0xff]
      %v4767 = vld [vmem:[%s5 + $0x80] sm:$0xff]
      %v4768 = vld [vmem:[%s5 + $0x88] sm:$0xff]
      %v4769 = vld [vmem:[%s5 + $0x90] sm:$0xff]
      %v4770 = vld [vmem:[%s5 + $0x98] sm:$0xff]
      %v4771 = vld [vmem:[%s5 + $0xa0] sm:$0xff]
      %v4772 = vld [vmem:[%s5 + $0xa8] sm:$0xff]
      %v4773 = vld [vmem:[%s5 + $0xb0] sm:$0xff]
      %v4774 = vld [vmem:[%s5 + $0xb8] sm:$0xff]
      %v4775 = vld [vmem:[%s5 + $0xc0] sm:$0xff]
      %v4776 = vld [vmem:[%s5 + $0xc8] sm:$0xff]
      %v4777 = vld [vmem:[%s5 + $0xd0] sm:$0xff]
      %v4778 = vld [vmem:[%s5 + $0xd8] sm:$0xff]
      %v4779 = vld [vmem:[%s5 + $0xe0] sm:$0xff]
      %v4780 = vld [vmem:[%s5 + $0xe8] sm:$0xff]
      %v4781 = vld [vmem:[%s5 + $0xf0] sm:$0xff]
      %v4782 = vld [vmem:[%s5 + $0xf8] sm:$0xff]
      %v4784 = vlaneseq
      %v4785 = vshrl.u32 %v4784, 7
      %v4786 = vsub.s32 0, %v4785
      %v4787 = vrot.slane %v472, %v4786
      %v4788 = vlaneseq
      %v4789 = vshrl.u32 %v4788, 7
      %v4790 = vsub.s32 1, %v4789
      %v4791 = vrot.slane %v472, %v4790
      %v4792 = vlaneseq
      %v4793 = vshrl.u32 %v4792, 7
      %v4794 = vsub.s32 2, %v4793
      %v4795 = vrot.slane %v472, %v4794
      %v4796 = vlaneseq
      %v4797 = vshrl.u32 %v4796, 7
      %v4798 = vsub.s32 3, %v4797
      %v4799 = vrot.slane %v472, %v4798
      %v4836 = vunpack.c.l.b16 %v4751
      %v4837 = vunpack.c.h.b16 %v4751
      %v4838 = vunpack.c.l.b16 %v4752
      %v4839 = vunpack.c.h.b16 %v4752
      %v4840 = vunpack.c.l.b16 %v4753
      %v4841 = vunpack.c.h.b16 %v4753
      %v4842 = vunpack.c.l.b16 %v4754
      %v4843 = vunpack.c.h.b16 %v4754
      %v4844 = vunpack.c.l.b16 %v4755
      %v4845 = vunpack.c.h.b16 %v4755
      %v4846 = vunpack.c.l.b16 %v4756
      %v4847 = vunpack.c.h.b16 %v4756
      %v4848 = vunpack.c.l.b16 %v4757
      %v4849 = vunpack.c.h.b16 %v4757
      %v4850 = vunpack.c.l.b16 %v4758
      %v4851 = vunpack.c.h.b16 %v4758
      %v4852 = vunpack.c.l.b16 %v4759
      %v4853 = vunpack.c.h.b16 %v4759
      %v4854 = vunpack.c.l.b16 %v4760
      %v4855 = vunpack.c.h.b16 %v4760
      %v4856 = vunpack.c.l.b16 %v4761
      %v4857 = vunpack.c.h.b16 %v4761
      %v4858 = vunpack.c.l.b16 %v4762
      %v4859 = vunpack.c.h.b16 %v4762
      %v4860 = vunpack.c.l.b16 %v4763
      %v4861 = vunpack.c.h.b16 %v4763
      %v4862 = vunpack.c.l.b16 %v4764
      %v4863 = vunpack.c.h.b16 %v4764
      %v4864 = vunpack.c.l.b16 %v4765
      %v4865 = vunpack.c.h.b16 %v4765
      %v4866 = vunpack.c.l.b16 %v4766
      %v4867 = vunpack.c.h.b16 %v4766
      %v4868 = vunpack.c.l.b16 %v4767
      %v4869 = vunpack.c.h.b16 %v4767
      %v4870 = vunpack.c.l.b16 %v4768
      %v4871 = vunpack.c.h.b16 %v4768
      %v4872 = vunpack.c.l.b16 %v4769
      %v4873 = vunpack.c.h.b16 %v4769
      %v4874 = vunpack.c.l.b16 %v4770
      %v4875 = vunpack.c.h.b16 %v4770
      %v4876 = vunpack.c.l.b16 %v4771
      %v4877 = vunpack.c.h.b16 %v4771
      %v4878 = vunpack.c.l.b16 %v4772
      %v4879 = vunpack.c.h.b16 %v4772
      %v4880 = vunpack.c.l.b16 %v4773
      %v4881 = vunpack.c.h.b16 %v4773
      %v4882 = vunpack.c.l.b16 %v4774
      %v4883 = vunpack.c.h.b16 %v4774
      %v4884 = vunpack.c.l.b16 %v4775
      %v4885 = vunpack.c.h.b16 %v4775
      %v4886 = vunpack.c.l.b16 %v4776
      %v4887 = vunpack.c.h.b16 %v4776
      %v4888 = vunpack.c.l.b16 %v4777
      %v4889 = vunpack.c.h.b16 %v4777
      %v4890 = vunpack.c.l.b16 %v4778
      %v4891 = vunpack.c.h.b16 %v4778
      %v4892 = vunpack.c.l.b16 %v4779
      %v4893 = vunpack.c.h.b16 %v4779
      %v4894 = vunpack.c.l.b16 %v4780
      %v4895 = vunpack.c.h.b16 %v4780
      %v4896 = vunpack.c.l.b16 %v4781
      %v4897 = vunpack.c.h.b16 %v4781
      %v4898 = vunpack.c.l.b16 %v4782
      %v4899 = vunpack.c.h.b16 %v4782
      %v4900 = vpack.c.b16 %v4840, %v4836
      %v4901 = vpack.c.b16 %v4841, %v4837
      %v4902 = vpack.c.b16 %v4842, %v4838
      %v4903 = vpack.c.b16 %v4843, %v4839
      %v4904 = vpack.c.b16 %v4848, %v4844
      %v4905 = vpack.c.b16 %v4849, %v4845
      %v4906 = vpack.c.b16 %v4850, %v4846
      %v4907 = vpack.c.b16 %v4851, %v4847
      %v4908 = vpack.c.b16 %v4856, %v4852
      %v4909 = vpack.c.b16 %v4857, %v4853
      %v4910 = vpack.c.b16 %v4858, %v4854
      %v4911 = vpack.c.b16 %v4859, %v4855
      %v4912 = vpack.c.b16 %v4864, %v4860
      %v4913 = vpack.c.b16 %v4865, %v4861
      %v4914 = vpack.c.b16 %v4866, %v4862
      %v4915 = vpack.c.b16 %v4867, %v4863
      %v4916 = vpack.c.b16 %v4872, %v4868
      %v4917 = vpack.c.b16 %v4873, %v4869
      %v4918 = vpack.c.b16 %v4874, %v4870
      %v4919 = vpack.c.b16 %v4875, %v4871
      %v4920 = vpack.c.b16 %v4880, %v4876
      %v4921 = vpack.c.b16 %v4881, %v4877
      %v4922 = vpack.c.b16 %v4882, %v4878
      %v4923 = vpack.c.b16 %v4883, %v4879
      %v4924 = vpack.c.b16 %v4888, %v4884
      %v4925 = vpack.c.b16 %v4889, %v4885
      %v4926 = vpack.c.b16 %v4890, %v4886
      %v4927 = vpack.c.b16 %v4891, %v4887
      %v4928 = vpack.c.b16 %v4896, %v4892
      %v4929 = vpack.c.b16 %v4897, %v4893
      %v4930 = vpack.c.b16 %v4898, %v4894
      %v4931 = vpack.c.b16 %v4899, %v4895
      %4964 = vmatprep.subr.bf16.mxu0 %v4929
      %4965 = vmatpush1.bf16.msra.mxu0 %v4928
      %4966 = vmatprep.subr.bf16.mxu0 %v4925
      %4967 = vmatpush1.bf16.msra.mxu0 %v4924
      %4968 = vmatprep.subr.bf16.mxu0 %v4921
      %4969 = vmatpush1.bf16.msra.mxu0 %v4920
      %4970 = vmatprep.subr.bf16.mxu0 %v4917
      %4971 = vmatpush1.bf16.msra.mxu0 %v4916
      %4972 = vmatprep.subr.bf16.mxu0 %v4913
      %4973 = vmatpush1.bf16.msra.mxu0 %v4912
      %4974 = vmatprep.subr.bf16.mxu0 %v4909
      %4975 = vmatpush1.bf16.msra.mxu0 %v4908
      %4976 = vmatprep.subr.bf16.mxu0 %v4905
      %4977 = vmatpush1.bf16.msra.mxu0 %v4904
      %4978 = vmatprep.subr.bf16.mxu0 %v4901
      %4979 = vmatpush1.bf16.msra.mxu0 %v4900
      %4980 = vmatprep.subr.bf16.mxu0 0
      %4981 = vmatpush2.bf16.msra.mxu0 0
      %4982 = vmatprep.subr.bf16.mxu0 0
      %4983 = vmatpush2.bf16.msra.mxu0 0
      %4984 = vmatprep.subr.bf16.mxu0 0
      %4985 = vmatpush2.bf16.msra.mxu0 0
      %4986 = vmatprep.subr.bf16.mxu0 0
      %4987 = vmatpush2.bf16.msra.mxu0 0
      %4988 = vmatprep.subr.bf16.mxu0 0
      %4989 = vmatpush2.bf16.msra.mxu0 0
      %4990 = vmatprep.subr.bf16.mxu0 0
      %4991 = vmatpush2.bf16.msra.mxu0 0
      %4992 = vmatprep.subr.bf16.mxu0 0
      %4993 = vmatpush2.bf16.msra.mxu0 0
      %4994 = vmatprep.subr.bf16.mxu0 0
      %4995 = vmatpush2.bf16.msra.mxu0 0
      %4996 = vmatprep.mubr.bf16.mxu0 0
      %4997 = vmatmul.mubr.bf16.gmra.mxu0 %v4735
      %v4998 = vpop.f32.mrf.mxu0
      %v4999 = vadd.f32 %v4787, %v4998
      %v5000 = vpop.f32.mrf.mxu0
      %v5001 = vadd.f32 %v4791, %v5000
      %v5002 = vpop.f32.mrf.mxu0
      %v5003 = vadd.f32 %v4787, %v5002
      %v5004 = vpop.f32.mrf.mxu0
      %v5005 = vadd.f32 %v4791, %v5004
      %5006 = vmatprep.mubr.bf16.mxu0 0
      %5007 = vmatmul.mubr.bf16.gmra.mxu0 %v4736
      %v5008 = vpop.f32.mrf.mxu0
      %v5009 = vadd.f32 %v4787, %v5008
      %v5010 = vpop.f32.mrf.mxu0
      %v5011 = vadd.f32 %v4791, %v5010
      %v5012 = vpop.f32.mrf.mxu0
      %v5013 = vadd.f32 %v4787, %v5012
      %v5014 = vpop.f32.mrf.mxu0
      %v5015 = vadd.f32 %v4791, %v5014
      %5016 = vmatprep.mubr.bf16.mxu0 0
      %5017 = vmatmul.mubr.bf16.gmra.mxu0 %v4737
      %v5018 = vpop.f32.mrf.mxu0
      %v5019 = vadd.f32 %v4787, %v5018
      %v5020 = vpop.f32.mrf.mxu0
      %v5021 = vadd.f32 %v4791, %v5020
      %v5022 = vpop.f32.mrf.mxu0
      %v5023 = vadd.f32 %v4787, %v5022
      %v5024 = vpop.f32.mrf.mxu0
      %v5025 = vadd.f32 %v4791, %v5024
      %5026 = vmatprep.mubr.bf16.mxu0 0
      %5027 = vmatmul.mubr.bf16.gmra.mxu0 %v4738
      %v5028 = vpop.f32.mrf.mxu0
      %v5029 = vadd.f32 %v4787, %v5028
      %v5030 = vpop.f32.mrf.mxu0
      %v5031 = vadd.f32 %v4791, %v5030
      %v5032 = vpop.f32.mrf.mxu0
      %v5033 = vadd.f32 %v4787, %v5032
      %v5034 = vpop.f32.mrf.mxu0
      %v5035 = vadd.f32 %v4791, %v5034
      %5036 = vmatprep.mubr.bf16.mxu0 0
      %5037 = vmatmul.mubr.bf16.gmra.mxu0 %v4739
      %v5038 = vpop.f32.mrf.mxu0
      %v5039 = vadd.f32 %v4787, %v5038
      %v5040 = vpop.f32.mrf.mxu0
      %v5041 = vadd.f32 %v4791, %v5040
      %v5042 = vpop.f32.mrf.mxu0
      %v5043 = vadd.f32 %v4787, %v5042
      %v5044 = vpop.f32.mrf.mxu0
      %v5045 = vadd.f32 %v4791, %v5044
      %5046 = vmatprep.mubr.bf16.mxu0 0
      %5047 = vmatmul.mubr.bf16.gmra.mxu0 %v4740
      %v5048 = vpop.f32.mrf.mxu0
      %v5049 = vadd.f32 %v4787, %v5048
      %v5050 = vpop.f32.mrf.mxu0
      %v5051 = vadd.f32 %v4791, %v5050
      %v5052 = vpop.f32.mrf.mxu0
      %v5053 = vadd.f32 %v4787, %v5052
      %v5054 = vpop.f32.mrf.mxu0
      %v5055 = vadd.f32 %v4791, %v5054
      %5056 = vmatprep.mubr.bf16.mxu0 0
      %5057 = vmatmul.mubr.bf16.gmra.mxu0 %v4741
      %v5058 = vpop.f32.mrf.mxu0
      %v5059 = vadd.f32 %v4787, %v5058
      %v5060 = vpop.f32.mrf.mxu0
      %v5061 = vadd.f32 %v4791, %v5060
      %v5062 = vpop.f32.mrf.mxu0
      %v5063 = vadd.f32 %v4787, %v5062
      %v5064 = vpop.f32.mrf.mxu0
      %v5065 = vadd.f32 %v4791, %v5064
      %5066 = vmatprep.mubr.bf16.mxu0 0
      %5067 = vmatmul.mubr.bf16.gmra.mxu0 %v4742
      %v5068 = vpop.f32.mrf.mxu0
      %v5069 = vadd.f32 %v4787, %v5068
      %v5070 = vpop.f32.mrf.mxu0
      %v5071 = vadd.f32 %v4791, %v5070
      %v5072 = vpop.f32.mrf.mxu0
      %v5073 = vadd.f32 %v4787, %v5072
      %v5074 = vpop.f32.mrf.mxu0
      %v5075 = vadd.f32 %v4791, %v5074
      %5076 = vmatprep.mubr.bf16.mxu0 0
      %5077 = vmatmul.mubr.bf16.gmra.mxu0 %v4743
      %v5078 = vpop.f32.mrf.mxu0
      %v5079 = vadd.f32 %v4787, %v5078
      %v5080 = vpop.f32.mrf.mxu0
      %v5081 = vadd.f32 %v4791, %v5080
      %v5082 = vpop.f32.mrf.mxu0
      %v5083 = vadd.f32 %v4787, %v5082
      %v5084 = vpop.f32.mrf.mxu0
      %v5085 = vadd.f32 %v4791, %v5084
      %5086 = vmatprep.mubr.bf16.mxu0 0
      %5087 = vmatmul.mubr.bf16.gmra.mxu0 %v4744
      %v5088 = vpop.f32.mrf.mxu0
      %v5089 = vadd.f32 %v4787, %v5088
      %v5090 = vpop.f32.mrf.mxu0
      %v5091 = vadd.f32 %v4791, %v5090
      %v5092 = vpop.f32.mrf.mxu0
      %v5093 = vadd.f32 %v4787, %v5092
      %v5094 = vpop.f32.mrf.mxu0
      %v5095 = vadd.f32 %v4791, %v5094
      %5096 = vmatprep.mubr.bf16.mxu0 0
      %5097 = vmatmul.mubr.bf16.gmra.mxu0 %v4745
      %v5098 = vpop.f32.mrf.mxu0
      %v5099 = vadd.f32 %v4787, %v5098
      %v5100 = vpop.f32.mrf.mxu0
      %v5101 = vadd.f32 %v4791, %v5100
      %v5102 = vpop.f32.mrf.mxu0
      %v5103 = vadd.f32 %v4787, %v5102
      %v5104 = vpop.f32.mrf.mxu0
      %v5105 = vadd.f32 %v4791, %v5104
      %5106 = vmatprep.mubr.bf16.mxu0 0
      %5107 = vmatmul.mubr.bf16.gmra.mxu0 %v4746
      %v5108 = vpop.f32.mrf.mxu0
      %v5109 = vadd.f32 %v4787, %v5108
      %v5110 = vpop.f32.mrf.mxu0
      %v5111 = vadd.f32 %v4791, %v5110
      %v5112 = vpop.f32.mrf.mxu0
      %v5113 = vadd.f32 %v4787, %v5112
      %v5114 = vpop.f32.mrf.mxu0
      %v5115 = vadd.f32 %v4791, %v5114
      %5116 = vmatprep.mubr.bf16.mxu0 0
      %5117 = vmatmul.mubr.bf16.gmra.mxu0 %v4747
      %v5118 = vpop.f32.mrf.mxu0
      %v5119 = vadd.f32 %v4787, %v5118
      %v5120 = vpop.f32.mrf.mxu0
      %v5121 = vadd.f32 %v4791, %v5120
      %v5122 = vpop.f32.mrf.mxu0
      %v5123 = vadd.f32 %v4787, %v5122
      %v5124 = vpop.f32.mrf.mxu0
      %v5125 = vadd.f32 %v4791, %v5124
      %5126 = vmatprep.mubr.bf16.mxu0 0
      %5127 = vmatmul.mubr.bf16.gmra.mxu0 %v4748
      %v5128 = vpop.f32.mrf.mxu0
      %v5129 = vadd.f32 %v4787, %v5128
      %v5130 = vpop.f32.mrf.mxu0
      %v5131 = vadd.f32 %v4791, %v5130
      %v5132 = vpop.f32.mrf.mxu0
      %v5133 = vadd.f32 %v4787, %v5132
      %v5134 = vpop.f32.mrf.mxu0
      %v5135 = vadd.f32 %v4791, %v5134
      %5136 = vmatprep.mubr.bf16.mxu0 0
      %5137 = vmatmul.mubr.bf16.gmra.mxu0 %v4749
      %v5138 = vpop.f32.mrf.mxu0
      %v5139 = vadd.f32 %v4787, %v5138
      %v5140 = vpop.f32.mrf.mxu0
      %v5141 = vadd.f32 %v4791, %v5140
      %v5142 = vpop.f32.mrf.mxu0
      %v5143 = vadd.f32 %v4787, %v5142
      %v5144 = vpop.f32.mrf.mxu0
      %v5145 = vadd.f32 %v4791, %v5144
      %5146 = vmatprep.mubr.bf16.mxu0 0
      %5147 = vmatmul.mubr.bf16.gmra.mxu0 %v4750
      %v5148 = vpop.f32.mrf.mxu0
      %v5149 = vadd.f32 %v4787, %v5148
      %v5150 = vpop.f32.mrf.mxu0
      %v5151 = vadd.f32 %v4791, %v5150
      %v5152 = vpop.f32.mrf.mxu0
      %v5153 = vadd.f32 %v4787, %v5152
      %v5154 = vpop.f32.mrf.mxu0
      %v5155 = vadd.f32 %v4791, %v5154
      %5156 = vdwg.mxu0
      %5157 = vmatprep.subr.bf16.mxu0 %v4931
      %5158 = vmatpush1.bf16.msra.mxu0 %v4930
      %5159 = vmatprep.subr.bf16.mxu0 %v4927
      %5160 = vmatpush1.bf16.msra.mxu0 %v4926
      %5161 = vmatprep.subr.bf16.mxu0 %v4923
      %5162 = vmatpush1.bf16.msra.mxu0 %v4922
      %5163 = vmatprep.subr.bf16.mxu0 %v4919
      %5164 = vmatpush1.bf16.msra.mxu0 %v4918
      %5165 = vmatprep.subr.bf16.mxu0 %v4915
      %5166 = vmatpush1.bf16.msra.mxu0 %v4914
      %5167 = vmatprep.subr.bf16.mxu0 %v4911
      %5168 = vmatpush1.bf16.msra.mxu0 %v4910
      %5169 = vmatprep.subr.bf16.mxu0 %v4907
      %5170 = vmatpush1.bf16.msra.mxu0 %v4906
      %5171 = vmatprep.subr.bf16.mxu0 %v4903
      %5172 = vmatpush1.bf16.msra.mxu0 %v4902
      %5173 = vmatprep.subr.bf16.mxu0 0
      %5174 = vmatpush2.bf16.msra.mxu0 0
      %5175 = vmatprep.subr.bf16.mxu0 0
      %5176 = vmatpush2.bf16.msra.mxu0 0
      %5177 = vmatprep.subr.bf16.mxu0 0
      %5178 = vmatpush2.bf16.msra.mxu0 0
      %5179 = vmatprep.subr.bf16.mxu0 0
      %5180 = vmatpush2.bf16.msra.mxu0 0
      %5181 = vmatprep.subr.bf16.mxu0 0
      %5182 = vmatpush2.bf16.msra.mxu0 0
      %5183 = vmatprep.subr.bf16.mxu0 0
      %5184 = vmatpush2.bf16.msra.mxu0 0
      %5185 = vmatprep.subr.bf16.mxu0 0
      %5186 = vmatpush2.bf16.msra.mxu0 0
      %5187 = vmatprep.subr.bf16.mxu0 0
      %5188 = vmatpush2.bf16.msra.mxu0 0
      %5189 = vmatprep.mubr.bf16.mxu0 0
      %5190 = vmatmul.mubr.bf16.gmra.mxu0 %v4735
      %v5191 = vpop.f32.mrf.mxu0
      %v5192 = vadd.f32 %v4795, %v5191
      %v5193 = vpop.f32.mrf.mxu0
      %v5194 = vadd.f32 %v4799, %v5193
      %v5195 = vpop.f32.mrf.mxu0
      %v5196 = vadd.f32 %v4795, %v5195
      %v5197 = vpop.f32.mrf.mxu0
      %v5198 = vadd.f32 %v4799, %v5197
      %5199 = vmatprep.mubr.bf16.mxu0 0
      %5200 = vmatmul.mubr.bf16.gmra.mxu0 %v4736
      %v5201 = vpop.f32.mrf.mxu0
      %v5202 = vadd.f32 %v4795, %v5201
      %v5203 = vpop.f32.mrf.mxu0
      %v5204 = vadd.f32 %v4799, %v5203
      %v5205 = vpop.f32.mrf.mxu0
      %v5206 = vadd.f32 %v4795, %v5205
      %v5207 = vpop.f32.mrf.mxu0
      %v5208 = vadd.f32 %v4799, %v5207
      %5209 = vmatprep.mubr.bf16.mxu0 0
      %5210 = vmatmul.mubr.bf16.gmra.mxu0 %v4737
      %v5211 = vpop.f32.mrf.mxu0
      %v5212 = vadd.f32 %v4795, %v5211
      %v5213 = vpop.f32.mrf.mxu0
      %v5214 = vadd.f32 %v4799, %v5213
      %v5215 = vpop.f32.mrf.mxu0
      %v5216 = vadd.f32 %v4795, %v5215
      %v5217 = vpop.f32.mrf.mxu0
      %v5218 = vadd.f32 %v4799, %v5217
      %5219 = vmatprep.mubr.bf16.mxu0 0
      %5220 = vmatmul.mubr.bf16.gmra.mxu0 %v4738
      %v5221 = vpop.f32.mrf.mxu0
      %v5222 = vadd.f32 %v4795, %v5221
      %v5223 = vpop.f32.mrf.mxu0
      %v5224 = vadd.f32 %v4799, %v5223
      %v5225 = vpop.f32.mrf.mxu0
      %v5226 = vadd.f32 %v4795, %v5225
      %v5227 = vpop.f32.mrf.mxu0
      %v5228 = vadd.f32 %v4799, %v5227
      %5229 = vmatprep.mubr.bf16.mxu0 0
      %5230 = vmatmul.mubr.bf16.gmra.mxu0 %v4739
      %v5231 = vpop.f32.mrf.mxu0
      %v5232 = vadd.f32 %v4795, %v5231
      %v5233 = vpop.f32.mrf.mxu0
      %v5234 = vadd.f32 %v4799, %v5233
      %v5235 = vpop.f32.mrf.mxu0
      %v5236 = vadd.f32 %v4795, %v5235
      %v5237 = vpop.f32.mrf.mxu0
      %v5238 = vadd.f32 %v4799, %v5237
      %5239 = vmatprep.mubr.bf16.mxu0 0
      %5240 = vmatmul.mubr.bf16.gmra.mxu0 %v4740
      %v5241 = vpop.f32.mrf.mxu0
      %v5242 = vadd.f32 %v4795, %v5241
      %v5243 = vpop.f32.mrf.mxu0
      %v5244 = vadd.f32 %v4799, %v5243
      %v5245 = vpop.f32.mrf.mxu0
      %v5246 = vadd.f32 %v4795, %v5245
      %v5247 = vpop.f32.mrf.mxu0
      %v5248 = vadd.f32 %v4799, %v5247
      %5249 = vmatprep.mubr.bf16.mxu0 0
      %5250 = vmatmul.mubr.bf16.gmra.mxu0 %v4741
      %v5251 = vpop.f32.mrf.mxu0
      %v5252 = vadd.f32 %v4795, %v5251
      %v5253 = vpop.f32.mrf.mxu0
      %v5254 = vadd.f32 %v4799, %v5253
      %v5255 = vpop.f32.mrf.mxu0
      %v5256 = vadd.f32 %v4795, %v5255
      %v5257 = vpop.f32.mrf.mxu0
      %v5258 = vadd.f32 %v4799, %v5257
      %5259 = vmatprep.mubr.bf16.mxu0 0
      %5260 = vmatmul.mubr.bf16.gmra.mxu0 %v4742
      %v5261 = vpop.f32.mrf.mxu0
      %v5262 = vadd.f32 %v4795, %v5261
      %v5263 = vpop.f32.mrf.mxu0
      %v5264 = vadd.f32 %v4799, %v5263
      %v5265 = vpop.f32.mrf.mxu0
      %v5266 = vadd.f32 %v4795, %v5265
      %v5267 = vpop.f32.mrf.mxu0
      %v5268 = vadd.f32 %v4799, %v5267
      %5269 = vmatprep.mubr.bf16.mxu0 0
      %5270 = vmatmul.mubr.bf16.gmra.mxu0 %v4743
      %v5271 = vpop.f32.mrf.mxu0
      %v5272 = vadd.f32 %v4795, %v5271
      %v5273 = vpop.f32.mrf.mxu0
      %v5274 = vadd.f32 %v4799, %v5273
      %v5275 = vpop.f32.mrf.mxu0
      %v5276 = vadd.f32 %v4795, %v5275
      %v5277 = vpop.f32.mrf.mxu0
      %v5278 = vadd.f32 %v4799, %v5277
      %5279 = vmatprep.mubr.bf16.mxu0 0
      %5280 = vmatmul.mubr.bf16.gmra.mxu0 %v4744
      %v5281 = vpop.f32.mrf.mxu0
      %v5282 = vadd.f32 %v4795, %v5281
      %v5283 = vpop.f32.mrf.mxu0
      %v5284 = vadd.f32 %v4799, %v5283
      %v5285 = vpop.f32.mrf.mxu0
      %v5286 = vadd.f32 %v4795, %v5285
      %v5287 = vpop.f32.mrf.mxu0
      %v5288 = vadd.f32 %v4799, %v5287
      %5289 = vmatprep.mubr.bf16.mxu0 0
      %5290 = vmatmul.mubr.bf16.gmra.mxu0 %v4745
      %v5291 = vpop.f32.mrf.mxu0
      %v5292 = vadd.f32 %v4795, %v5291
      %v5293 = vpop.f32.mrf.mxu0
      %v5294 = vadd.f32 %v4799, %v5293
      %v5295 = vpop.f32.mrf.mxu0
      %v5296 = vadd.f32 %v4795, %v5295
      %v5297 = vpop.f32.mrf.mxu0
      %v5298 = vadd.f32 %v4799, %v5297
      %5299 = vmatprep.mubr.bf16.mxu0 0
      %5300 = vmatmul.mubr.bf16.gmra.mxu0 %v4746
      %v5301 = vpop.f32.mrf.mxu0
      %v5302 = vadd.f32 %v4795, %v5301
      %v5303 = vpop.f32.mrf.mxu0
      %v5304 = vadd.f32 %v4799, %v5303
      %v5305 = vpop.f32.mrf.mxu0
      %v5306 = vadd.f32 %v4795, %v5305
      %v5307 = vpop.f32.mrf.mxu0
      %v5308 = vadd.f32 %v4799, %v5307
      %5309 = vmatprep.mubr.bf16.mxu0 0
      %5310 = vmatmul.mubr.bf16.gmra.mxu0 %v4747
      %v5311 = vpop.f32.mrf.mxu0
      %v5312 = vadd.f32 %v4795, %v5311
      %v5313 = vpop.f32.mrf.mxu0
      %v5314 = vadd.f32 %v4799, %v5313
      %v5315 = vpop.f32.mrf.mxu0
      %v5316 = vadd.f32 %v4795, %v5315
      %v5317 = vpop.f32.mrf.mxu0
      %v5318 = vadd.f32 %v4799, %v5317
      %5319 = vmatprep.mubr.bf16.mxu0 0
      %5320 = vmatmul.mubr.bf16.gmra.mxu0 %v4748
      %v5321 = vpop.f32.mrf.mxu0
      %v5322 = vadd.f32 %v4795, %v5321
      %v5323 = vpop.f32.mrf.mxu0
      %v5324 = vadd.f32 %v4799, %v5323
      %v5325 = vpop.f32.mrf.mxu0
      %v5326 = vadd.f32 %v4795, %v5325
      %v5327 = vpop.f32.mrf.mxu0
      %v5328 = vadd.f32 %v4799, %v5327
      %5329 = vmatprep.mubr.bf16.mxu0 0
      %5330 = vmatmul.mubr.bf16.gmra.mxu0 %v4749
      %v5331 = vpop.f32.mrf.mxu0
      %v5332 = vadd.f32 %v4795, %v5331
      %v5333 = vpop.f32.mrf.mxu0
      %v5334 = vadd.f32 %v4799, %v5333
      %v5335 = vpop.f32.mrf.mxu0
      %v5336 = vadd.f32 %v4795, %v5335
      %v5337 = vpop.f32.mrf.mxu0
      %v5338 = vadd.f32 %v4799, %v5337
      %5339 = vmatprep.mubr.bf16.mxu0 0
      %5340 = vmatmul.mubr.bf16.gmra.mxu0 %v4750
      %v5341 = vpop.f32.mrf.mxu0
      %v5342 = vadd.f32 %v4795, %v5341
      %v5343 = vpop.f32.mrf.mxu0
      %v5344 = vadd.f32 %v4799, %v5343
      %v5345 = vpop.f32.mrf.mxu0
      %v5346 = vadd.f32 %v4795, %v5345
      %v5347 = vpop.f32.mrf.mxu0
      %v5348 = vadd.f32 %v4799, %v5347
      %5349 = vdwg.mxu0
      %v5350 = vmax.f32 %v4999, 0.0
      %v5351 = vmax.f32 %v5001, 0.0
      %v5352 = vmax.f32 %v5192, 0.0
      %v5353 = vmax.f32 %v5194, 0.0
      %v5354 = vmax.f32 %v5003, 0.0
      %v5355 = vmax.f32 %v5005, 0.0
      %v5356 = vmax.f32 %v5196, 0.0
      %v5357 = vmax.f32 %v5198, 0.0
      %v5358 = vmax.f32 %v5009, 0.0
      %v5359 = vmax.f32 %v5011, 0.0
      %v5360 = vmax.f32 %v5202, 0.0
      %v5361 = vmax.f32 %v5204, 0.0
      %v5362 = vmax.f32 %v5013, 0.0
      %v5363 = vmax.f32 %v5015, 0.0
      %v5364 = vmax.f32 %v5206, 0.0
      %v5365 = vmax.f32 %v5208, 0.0
      %v5366 = vmax.f32 %v5019, 0.0
      %v5367 = vmax.f32 %v5021, 0.0
      %v5368 = vmax.f32 %v5212, 0.0
      %v5369 = vmax.f32 %v5214, 0.0
      %v5370 = vmax.f32 %v5023, 0.0
      %v5371 = vmax.f32 %v5025, 0.0
      %v5372 = vmax.f32 %v5216, 0.0
      %v5373 = vmax.f32 %v5218, 0.0
      %v5374 = vmax.f32 %v5029, 0.0
      %v5375 = vmax.f32 %v5031, 0.0
      %v5376 = vmax.f32 %v5222, 0.0
      %v5377 = vmax.f32 %v5224, 0.0
      %v5378 = vmax.f32 %v5033, 0.0
      %v5379 = vmax.f32 %v5035, 0.0
      %v5380 = vmax.f32 %v5226, 0.0
      %v5381 = vmax.f32 %v5228, 0.0
      %v5382 = vmax.f32 %v5039, 0.0
      %v5383 = vmax.f32 %v5041, 0.0
      %v5384 = vmax.f32 %v5232, 0.0
      %v5385 = vmax.f32 %v5234, 0.0
      %v5386 = vmax.f32 %v5043, 0.0
      %v5387 = vmax.f32 %v5045, 0.0
      %v5388 = vmax.f32 %v5236, 0.0
      %v5389 = vmax.f32 %v5238, 0.0
      %v5390 = vmax.f32 %v5049, 0.0
      %v5391 = vmax.f32 %v5051, 0.0
      %v5392 = vmax.f32 %v5242, 0.0
      %v5393 = vmax.f32 %v5244, 0.0
      %v5394 = vmax.f32 %v5053, 0.0
      %v5395 = vmax.f32 %v5055, 0.0
      %v5396 = vmax.f32 %v5246, 0.0
      %v5397 = vmax.f32 %v5248, 0.0
      %v5398 = vmax.f32 %v5059, 0.0
      %v5399 = vmax.f32 %v5061, 0.0
      %v5400 = vmax.f32 %v5252, 0.0
      %v5401 = vmax.f32 %v5254, 0.0
      %v5402 = vmax.f32 %v5063, 0.0
      %v5403 = vmax.f32 %v5065, 0.0
      %v5404 = vmax.f32 %v5256, 0.0
      %v5405 = vmax.f32 %v5258, 0.0
      %v5406 = vmax.f32 %v5069, 0.0
      %v5407 = vmax.f32 %v5071, 0.0
      %v5408 = vmax.f32 %v5262, 0.0
      %v5409 = vmax.f32 %v5264, 0.0
      %v5410 = vmax.f32 %v5073, 0.0
      %v5411 = vmax.f32 %v5075, 0.0
      %v5412 = vmax.f32 %v5266, 0.0
      %v5413 = vmax.f32 %v5268, 0.0
      %v5414 = vmax.f32 %v5079, 0.0
      %v5415 = vmax.f32 %v5081, 0.0
      %v5416 = vmax.f32 %v5272, 0.0
      %v5417 = vmax.f32 %v5274, 0.0
      %v5418 = vmax.f32 %v5083, 0.0
      %v5419 = vmax.f32 %v5085, 0.0
      %v5420 = vmax.f32 %v5276, 0.0
      %v5421 = vmax.f32 %v5278, 0.0
      %v5422 = vmax.f32 %v5089, 0.0
      %v5423 = vmax.f32 %v5091, 0.0
      %v5424 = vmax.f32 %v5282, 0.0
      %v5425 = vmax.f32 %v5284, 0.0
      %v5426 = vmax.f32 %v5093, 0.0
      %v5427 = vmax.f32 %v5095, 0.0
      %v5428 = vmax.f32 %v5286, 0.0
      %v5429 = vmax.f32 %v5288, 0.0
      %v5430 = vmax.f32 %v5099, 0.0
      %v5431 = vmax.f32 %v5101, 0.0
      %v5432 = vmax.f32 %v5292, 0.0
      %v5433 = vmax.f32 %v5294, 0.0
      %v5434 = vmax.f32 %v5103, 0.0
      %v5435 = vmax.f32 %v5105, 0.0
      %v5436 = vmax.f32 %v5296, 0.0
      %v5437 = vmax.f32 %v5298, 0.0
      %v5438 = vmax.f32 %v5109, 0.0
      %v5439 = vmax.f32 %v5111, 0.0
      %v5440 = vmax.f32 %v5302, 0.0
      %v5441 = vmax.f32 %v5304, 0.0
      %v5442 = vmax.f32 %v5113, 0.0
      %v5443 = vmax.f32 %v5115, 0.0
      %v5444 = vmax.f32 %v5306, 0.0
      %v5445 = vmax.f32 %v5308, 0.0
      %v5446 = vmax.f32 %v5119, 0.0
      %v5447 = vmax.f32 %v5121, 0.0
      %v5448 = vmax.f32 %v5312, 0.0
      %v5449 = vmax.f32 %v5314, 0.0
      %v5450 = vmax.f32 %v5123, 0.0
      %v5451 = vmax.f32 %v5125, 0.0
      %v5452 = vmax.f32 %v5316, 0.0
      %v5453 = vmax.f32 %v5318, 0.0
      %v5454 = vmax.f32 %v5129, 0.0
      %v5455 = vmax.f32 %v5131, 0.0
      %v5456 = vmax.f32 %v5322, 0.0
      %v5457 = vmax.f32 %v5324, 0.0
      %v5458 = vmax.f32 %v5133, 0.0
      %v5459 = vmax.f32 %v5135, 0.0
      %v5460 = vmax.f32 %v5326, 0.0
      %v5461 = vmax.f32 %v5328, 0.0
      %v5462 = vmax.f32 %v5139, 0.0
      %v5463 = vmax.f32 %v5141, 0.0
      %v5464 = vmax.f32 %v5332, 0.0
      %v5465 = vmax.f32 %v5334, 0.0
      %v5466 = vmax.f32 %v5143, 0.0
      %v5467 = vmax.f32 %v5145, 0.0
      %v5468 = vmax.f32 %v5336, 0.0
      %v5469 = vmax.f32 %v5338, 0.0
      %v5470 = vmax.f32 %v5149, 0.0
      %v5471 = vmax.f32 %v5151, 0.0
      %v5472 = vmax.f32 %v5342, 0.0
      %v5473 = vmax.f32 %v5344, 0.0
      %v5474 = vmax.f32 %v5153, 0.0
      %v5475 = vmax.f32 %v5155, 0.0
      %v5476 = vmax.f32 %v5346, 0.0
      %v5477 = vmax.f32 %v5348, 0.0
      %v5478 = vpack.c.bf16 %v5354, %v5350
      %v5479 = vpack.c.bf16 %v5355, %v5351
      %v5480 = vpack.c.bf16 %v5356, %v5352
      %v5481 = vpack.c.bf16 %v5357, %v5353
      %v5482 = vpack.c.bf16 %v5362, %v5358
      %v5483 = vpack.c.bf16 %v5363, %v5359
      %v5484 = vpack.c.bf16 %v5364, %v5360
      %v5485 = vpack.c.bf16 %v5365, %v5361
      %v5486 = vpack.c.bf16 %v5370, %v5366
      %v5487 = vpack.c.bf16 %v5371, %v5367
      %v5488 = vpack.c.bf16 %v5372, %v5368
      %v5489 = vpack.c.bf16 %v5373, %v5369
      %v5490 = vpack.c.bf16 %v5378, %v5374
      %v5491 = vpack.c.bf16 %v5379, %v5375
      %v5492 = vpack.c.bf16 %v5380, %v5376
      %v5493 = vpack.c.bf16 %v5381, %v5377
      %v5494 = vpack.c.bf16 %v5386, %v5382
      %v5495 = vpack.c.bf16 %v5387, %v5383
      %v5496 = vpack.c.bf16 %v5388, %v5384
      %v5497 = vpack.c.bf16 %v5389, %v5385
      %v5498 = vpack.c.bf16 %v5394, %v5390
      %v5499 = vpack.c.bf16 %v5395, %v5391
      %v5500 = vpack.c.bf16 %v5396, %v5392
      %v5501 = vpack.c.bf16 %v5397, %v5393
      %v5502 = vpack.c.bf16 %v5402, %v5398
      %v5503 = vpack.c.bf16 %v5403, %v5399
      %v5504 = vpack.c.bf16 %v5404, %v5400
      %v5505 = vpack.c.bf16 %v5405, %v5401
      %v5506 = vpack.c.bf16 %v5410, %v5406
      %v5507 = vpack.c.bf16 %v5411, %v5407
      %v5508 = vpack.c.bf16 %v5412, %v5408
      %v5509 = vpack.c.bf16 %v5413, %v5409
      %v5510 = vpack.c.bf16 %v5418, %v5414
      %v5511 = vpack.c.bf16 %v5419, %v5415
      %v5512 = vpack.c.bf16 %v5420, %v5416
      %v5513 = vpack.c.bf16 %v5421, %v5417
      %v5514 = vpack.c.bf16 %v5426, %v5422
      %v5515 = vpack.c.bf16 %v5427, %v5423
      %v5516 = vpack.c.bf16 %v5428, %v5424
      %v5517 = vpack.c.bf16 %v5429, %v5425
      %v5518 = vpack.c.bf16 %v5434, %v5430
      %v5519 = vpack.c.bf16 %v5435, %v5431
      %v5520 = vpack.c.bf16 %v5436, %v5432
      %v5521 = vpack.c.bf16 %v5437, %v5433
      %v5522 = vpack.c.bf16 %v5442, %v5438
      %v5523 = vpack.c.bf16 %v5443, %v5439
      %v5524 = vpack.c.bf16 %v5444, %v5440
      %v5525 = vpack.c.bf16 %v5445, %v5441
      %v5526 = vpack.c.bf16 %v5450, %v5446
      %v5527 = vpack.c.bf16 %v5451, %v5447
      %v5528 = vpack.c.bf16 %v5452, %v5448
      %v5529 = vpack.c.bf16 %v5453, %v5449
      %v5530 = vpack.c.bf16 %v5458, %v5454
      %v5531 = vpack.c.bf16 %v5459, %v5455
      %v5532 = vpack.c.bf16 %v5460, %v5456
      %v5533 = vpack.c.bf16 %v5461, %v5457
      %v5534 = vpack.c.bf16 %v5466, %v5462
      %v5535 = vpack.c.bf16 %v5467, %v5463
      %v5536 = vpack.c.bf16 %v5468, %v5464
      %v5537 = vpack.c.bf16 %v5469, %v5465
      %v5538 = vpack.c.bf16 %v5474, %v5470
      %v5539 = vpack.c.bf16 %v5475, %v5471
      %v5540 = vpack.c.bf16 %v5476, %v5472
      %v5541 = vpack.c.bf16 %v5477, %v5473
      %v5542 = vld [vmem:[%s7] sm:$0xff]
      %v5543 = vld [vmem:[%s7 + $0x8] sm:$0xff]
      %v5544 = vld [vmem:[%s7 + $0x10] sm:$0xff]
      %v5545 = vld [vmem:[%s7 + $0x18] sm:$0xf]
      %v5546 = vld [vmem:[%s7 + $0x1c] sm:$0xff]
      %v5547 = vld [vmem:[%s7 + $0x24] sm:$0xff]
      %v5548 = vld [vmem:[%s7 + $0x2c] sm:$0xff]
      %v5549 = vld [vmem:[%s7 + $0x34] sm:$0xf]
      %v5550 = vld [vmem:[%s7 + $0x38] sm:$0xff]
      %v5551 = vld [vmem:[%s7 + $0x40] sm:$0xff]
      %v5552 = vld [vmem:[%s7 + $0x48] sm:$0xff]
      %v5553 = vld [vmem:[%s7 + $0x50] sm:$0xf]
      %v5554 = vld [vmem:[%s7 + $0x54] sm:$0xff]
      %v5555 = vld [vmem:[%s7 + $0x5c] sm:$0xff]
      %v5556 = vld [vmem:[%s7 + $0x64] sm:$0xff]
      %v5557 = vld [vmem:[%s7 + $0x6c] sm:$0xf]
      %v5558 = vld [vmem:[%s7 + $0x70] sm:$0xff]
      %v5559 = vld [vmem:[%s7 + $0x78] sm:$0xff]
      %v5560 = vld [vmem:[%s7 + $0x80] sm:$0xff]
      %v5561 = vld [vmem:[%s7 + $0x88] sm:$0xf]
      %v5562 = vld [vmem:[%s7 + $0x8c] sm:$0xff]
      %v5563 = vld [vmem:[%s7 + $0x94] sm:$0xff]
      %v5564 = vld [vmem:[%s7 + $0x9c] sm:$0xff]
      %v5565 = vld [vmem:[%s7 + $0xa4] sm:$0xf]
      %v5566 = vld [vmem:[%s7 + $0xa8] sm:$0xff]
      %v5567 = vld [vmem:[%s7 + $0xb0] sm:$0xff]
      %v5568 = vld [vmem:[%s7 + $0xb8] sm:$0xff]
      %v5569 = vld [vmem:[%s7 + $0xc0] sm:$0xf]
      %v5570 = vld [vmem:[%s7 + $0xc4] sm:$0xff]
      %v5571 = vld [vmem:[%s7 + $0xcc] sm:$0xff]
      %v5572 = vld [vmem:[%s7 + $0xd4] sm:$0xff]
      %v5573 = vld [vmem:[%s7 + $0xdc] sm:$0xf]
      %v5574 = vld [vmem:[%s7 + $0xe0] sm:$0xff]
      %v5575 = vld [vmem:[%s7 + $0xe8] sm:$0xff]
      %v5576 = vld [vmem:[%s7 + $0xf0] sm:$0xff]
      %v5577 = vld [vmem:[%s7 + $0xf8] sm:$0xf]
      %v5578 = vld [vmem:[%s7 + $0xfc] sm:$0xff]
      %v5579 = vld [vmem:[%s7 + $0x104] sm:$0xff]
      %v5580 = vld [vmem:[%s7 + $0x10c] sm:$0xff]
      %v5581 = vld [vmem:[%s7 + $0x114] sm:$0xf]
      %v5582 = vld [vmem:[%s7 + $0x118] sm:$0xff]
      %v5583 = vld [vmem:[%s7 + $0x120] sm:$0xff]
      %v5584 = vld [vmem:[%s7 + $0x128] sm:$0xff]
      %v5585 = vld [vmem:[%s7 + $0x130] sm:$0xf]
      %v5586 = vld [vmem:[%s7 + $0x134] sm:$0xff]
      %v5587 = vld [vmem:[%s7 + $0x13c] sm:$0xff]
      %v5588 = vld [vmem:[%s7 + $0x144] sm:$0xff]
      %v5589 = vld [vmem:[%s7 + $0x14c] sm:$0xf]
      %v5590 = vld [vmem:[%s7 + $0x150] sm:$0xff]
      %v5591 = vld [vmem:[%s7 + $0x158] sm:$0xff]
      %v5592 = vld [vmem:[%s7 + $0x160] sm:$0xff]
      %v5593 = vld [vmem:[%s7 + $0x168] sm:$0xf]
      %v5594 = vld [vmem:[%s7 + $0x16c] sm:$0xff]
      %v5595 = vld [vmem:[%s7 + $0x174] sm:$0xff]
      %v5596 = vld [vmem:[%s7 + $0x17c] sm:$0xff]
      %v5597 = vld [vmem:[%s7 + $0x184] sm:$0xf]
      %v5598 = vld [vmem:[%s7 + $0x188] sm:$0xff]
      %v5599 = vld [vmem:[%s7 + $0x190] sm:$0xff]
      %v5600 = vld [vmem:[%s7 + $0x198] sm:$0xff]
      %v5601 = vld [vmem:[%s7 + $0x1a0] sm:$0xf]
      %v5602 = vld [vmem:[%s7 + $0x1a4] sm:$0xff]
      %v5603 = vld [vmem:[%s7 + $0x1ac] sm:$0xff]
      %v5604 = vld [vmem:[%s7 + $0x1b4] sm:$0xff]
      %v5605 = vld [vmem:[%s7 + $0x1bc] sm:$0xf]
      %v5606 = vld [vmem:[%s7 + $0x1c0] sm:$0xff]
      %v5607 = vld [vmem:[%s7 + $0x1c8] sm:$0xff]
      %v5608 = vld [vmem:[%s7 + $0x1d0] sm:$0xff]
      %v5609 = vld [vmem:[%s7 + $0x1d8] sm:$0xf]
      %v5610 = vld [vmem:[%s7 + $0x1dc] sm:$0xff]
      %v5611 = vld [vmem:[%s7 + $0x1e4] sm:$0xff]
      %v5612 = vld [vmem:[%s7 + $0x1ec] sm:$0xff]
      %v5613 = vld [vmem:[%s7 + $0x1f4] sm:$0xf]
      %v5614 = vld [vmem:[%s7 + $0x1f8] sm:$0xff]
      %v5615 = vld [vmem:[%s7 + $0x200] sm:$0xff]
      %v5616 = vld [vmem:[%s7 + $0x208] sm:$0xff]
      %v5617 = vld [vmem:[%s7 + $0x210] sm:$0xf]
      %v5618 = vld [vmem:[%s7 + $0x214] sm:$0xff]
      %v5619 = vld [vmem:[%s7 + $0x21c] sm:$0xff]
      %v5620 = vld [vmem:[%s7 + $0x224] sm:$0xff]
      %v5621 = vld [vmem:[%s7 + $0x22c] sm:$0xf]
      %v5622 = vld [vmem:[%s7 + $0x230] sm:$0xff]
      %v5623 = vld [vmem:[%s7 + $0x238] sm:$0xff]
      %v5624 = vld [vmem:[%s7 + $0x240] sm:$0xff]
      %v5625 = vld [vmem:[%s7 + $0x248] sm:$0xf]
      %v5626 = vld [vmem:[%s7 + $0x24c] sm:$0xff]
      %v5627 = vld [vmem:[%s7 + $0x254] sm:$0xff]
      %v5628 = vld [vmem:[%s7 + $0x25c] sm:$0xff]
      %v5629 = vld [vmem:[%s7 + $0x264] sm:$0xf]
      %v5630 = vld [vmem:[%s7 + $0x268] sm:$0xff]
      %v5631 = vld [vmem:[%s7 + $0x270] sm:$0xff]
      %v5632 = vld [vmem:[%s7 + $0x278] sm:$0xff]
      %v5633 = vld [vmem:[%s7 + $0x280] sm:$0xf]
      %v5634 = vld [vmem:[%s7 + $0x284] sm:$0xff]
      %v5635 = vld [vmem:[%s7 + $0x28c] sm:$0xff]
      %v5636 = vld [vmem:[%s7 + $0x294] sm:$0xff]
      %v5637 = vld [vmem:[%s7 + $0x29c] sm:$0xf]
      %v5638 = vld [vmem:[%s7 + $0x2a0] sm:$0xff]
      %v5639 = vld [vmem:[%s7 + $0x2a8] sm:$0xff]
      %v5640 = vld [vmem:[%s7 + $0x2b0] sm:$0xff]
      %v5641 = vld [vmem:[%s7 + $0x2b8] sm:$0xf]
      %v5642 = vld [vmem:[%s7 + $0x2bc] sm:$0xff]
      %v5643 = vld [vmem:[%s7 + $0x2c4] sm:$0xff]
      %v5644 = vld [vmem:[%s7 + $0x2cc] sm:$0xff]
      %v5645 = vld [vmem:[%s7 + $0x2d4] sm:$0xf]
      %v5646 = vld [vmem:[%s7 + $0x2d8] sm:$0xff]
      %v5647 = vld [vmem:[%s7 + $0x2e0] sm:$0xff]
      %v5648 = vld [vmem:[%s7 + $0x2e8] sm:$0xff]
      %v5649 = vld [vmem:[%s7 + $0x2f0] sm:$0xf]
      %v5650 = vld [vmem:[%s7 + $0x2f4] sm:$0xff]
      %v5651 = vld [vmem:[%s7 + $0x2fc] sm:$0xff]
      %v5652 = vld [vmem:[%s7 + $0x304] sm:$0xff]
      %v5653 = vld [vmem:[%s7 + $0x30c] sm:$0xf]
      %v5654 = vld [vmem:[%s7 + $0x310] sm:$0xff]
      %v5655 = vld [vmem:[%s7 + $0x318] sm:$0xff]
      %v5656 = vld [vmem:[%s7 + $0x320] sm:$0xff]
      %v5657 = vld [vmem:[%s7 + $0x328] sm:$0xf]
      %v5658 = vld [vmem:[%s7 + $0x32c] sm:$0xff]
      %v5659 = vld [vmem:[%s7 + $0x334] sm:$0xff]
      %v5660 = vld [vmem:[%s7 + $0x33c] sm:$0xff]
      %v5661 = vld [vmem:[%s7 + $0x344] sm:$0xf]
      %v5662 = vld [vmem:[%s7 + $0x348] sm:$0xff]
      %v5663 = vld [vmem:[%s7 + $0x350] sm:$0xff]
      %v5664 = vld [vmem:[%s7 + $0x358] sm:$0xff]
      %v5665 = vld [vmem:[%s7 + $0x360] sm:$0xf]
      %v5666 = vld [vmem:[%s7 + $0x364] sm:$0xff]
      %v5667 = vld [vmem:[%s7 + $0x36c] sm:$0xff]
      %v5668 = vld [vmem:[%s7 + $0x374] sm:$0xff]
      %v5669 = vld [vmem:[%s7 + $0x37c] sm:$0xf]
      %v5670 = vld [vmem:[%s7 + $0x380] sm:$0xff]
      %v5671 = vld [vmem:[%s7 + $0x388] sm:$0xff]
      %v5672 = vld [vmem:[%s7 + $0x390] sm:$0xff]
      %v5673 = vld [vmem:[%s7 + $0x398] sm:$0xf]
      %v5674 = vld [vmem:[%s7 + $0x39c] sm:$0xff]
      %v5675 = vld [vmem:[%s7 + $0x3a4] sm:$0xff]
      %v5676 = vld [vmem:[%s7 + $0x3ac] sm:$0xff]
      %v5677 = vld [vmem:[%s7 + $0x3b4] sm:$0xf]
      %v5678 = vld [vmem:[%s7 + $0x3b8] sm:$0xff]
      %v5679 = vld [vmem:[%s7 + $0x3c0] sm:$0xff]
      %v5680 = vld [vmem:[%s7 + $0x3c8] sm:$0xff]
      %v5681 = vld [vmem:[%s7 + $0x3d0] sm:$0xf]
      %v5682 = vld [vmem:[%s7 + $0x3d4] sm:$0xff]
      %v5683 = vld [vmem:[%s7 + $0x3dc] sm:$0xff]
      %v5684 = vld [vmem:[%s7 + $0x3e4] sm:$0xff]
      %v5685 = vld [vmem:[%s7 + $0x3ec] sm:$0xf]
      %v5686 = vld [vmem:[%s7 + $0x3f0] sm:$0xff]
      %v5687 = vld [vmem:[%s7 + $0x3f8] sm:$0xff]
      %v5688 = vld [vmem:[%s7 + $0x400] sm:$0xff]
      %v5689 = vld [vmem:[%s7 + $0x408] sm:$0xf]
      %v5690 = vld [vmem:[%s7 + $0x40c] sm:$0xff]
      %v5691 = vld [vmem:[%s7 + $0x414] sm:$0xff]
      %v5692 = vld [vmem:[%s7 + $0x41c] sm:$0xff]
      %v5693 = vld [vmem:[%s7 + $0x424] sm:$0xf]
      %v5694 = vld [vmem:[%s7 + $0x428] sm:$0xff]
      %v5695 = vld [vmem:[%s7 + $0x430] sm:$0xff]
      %v5696 = vld [vmem:[%s7 + $0x438] sm:$0xff]
      %v5697 = vld [vmem:[%s7 + $0x440] sm:$0xf]
      %v5698 = vld [vmem:[%s7 + $0x444] sm:$0xff]
      %v5699 = vld [vmem:[%s7 + $0x44c] sm:$0xff]
      %v5700 = vld [vmem:[%s7 + $0x454] sm:$0xff]
      %v5701 = vld [vmem:[%s7 + $0x45c] sm:$0xf]
      %v5702 = vld [vmem:[%s7 + $0x460] sm:$0xff]
      %v5703 = vld [vmem:[%s7 + $0x468] sm:$0xff]
      %v5704 = vld [vmem:[%s7 + $0x470] sm:$0xff]
      %v5705 = vld [vmem:[%s7 + $0x478] sm:$0xf]
      %v5706 = vld [vmem:[%s7 + $0x47c] sm:$0xff]
      %v5707 = vld [vmem:[%s7 + $0x484] sm:$0xff]
      %v5708 = vld [vmem:[%s7 + $0x48c] sm:$0xff]
      %v5709 = vld [vmem:[%s7 + $0x494] sm:$0xf]
      %v5710 = vld [vmem:[%s7 + $0x498] sm:$0xff]
      %v5711 = vld [vmem:[%s7 + $0x4a0] sm:$0xff]
      %v5712 = vld [vmem:[%s7 + $0x4a8] sm:$0xff]
      %v5713 = vld [vmem:[%s7 + $0x4b0] sm:$0xf]
      %v5714 = vld [vmem:[%s7 + $0x4b4] sm:$0xff]
      %v5715 = vld [vmem:[%s7 + $0x4bc] sm:$0xff]
      %v5716 = vld [vmem:[%s7 + $0x4c4] sm:$0xff]
      %v5717 = vld [vmem:[%s7 + $0x4cc] sm:$0xf]
      %v5718 = vld [vmem:[%s7 + $0x4d0] sm:$0xff]
      %v5719 = vld [vmem:[%s7 + $0x4d8] sm:$0xff]
      %v5720 = vld [vmem:[%s7 + $0x4e0] sm:$0xff]
      %v5721 = vld [vmem:[%s7 + $0x4e8] sm:$0xf]
      %v5722 = vld [vmem:[%s7 + $0x4ec] sm:$0xff]
      %v5723 = vld [vmem:[%s7 + $0x4f4] sm:$0xff]
      %v5724 = vld [vmem:[%s7 + $0x4fc] sm:$0xff]
      %v5725 = vld [vmem:[%s7 + $0x504] sm:$0xf]
      %v5726 = vld [vmem:[%s7 + $0x508] sm:$0xff]
      %v5727 = vld [vmem:[%s7 + $0x510] sm:$0xff]
      %v5728 = vld [vmem:[%s7 + $0x518] sm:$0xff]
      %v5729 = vld [vmem:[%s7 + $0x520] sm:$0xf]
      %v5730 = vld [vmem:[%s7 + $0x524] sm:$0xff]
      %v5731 = vld [vmem:[%s7 + $0x52c] sm:$0xff]
      %v5732 = vld [vmem:[%s7 + $0x534] sm:$0xff]
      %v5733 = vld [vmem:[%s7 + $0x53c] sm:$0xf]
      %v5734 = vld [vmem:[%s7 + $0x540] sm:$0xff]
      %v5735 = vld [vmem:[%s7 + $0x548] sm:$0xff]
      %v5736 = vld [vmem:[%s7 + $0x550] sm:$0xff]
      %v5737 = vld [vmem:[%s7 + $0x558] sm:$0xf]
      %v5738 = vld [vmem:[%s7 + $0x55c] sm:$0xff]
      %v5739 = vld [vmem:[%s7 + $0x564] sm:$0xff]
      %v5740 = vld [vmem:[%s7 + $0x56c] sm:$0xff]
      %v5741 = vld [vmem:[%s7 + $0x574] sm:$0xf]
      %v5742 = vld [vmem:[%s7 + $0x578] sm:$0xff]
      %v5743 = vld [vmem:[%s7 + $0x580] sm:$0xff]
      %v5744 = vld [vmem:[%s7 + $0x588] sm:$0xff]
      %v5745 = vld [vmem:[%s7 + $0x590] sm:$0xf]
      %v5746 = vld [vmem:[%s7 + $0x594] sm:$0xff]
      %v5747 = vld [vmem:[%s7 + $0x59c] sm:$0xff]
      %v5748 = vld [vmem:[%s7 + $0x5a4] sm:$0xff]
      %v5749 = vld [vmem:[%s7 + $0x5ac] sm:$0xf]
      %v5750 = vld [vmem:[%s7 + $0x5b0] sm:$0xff]
      %v5751 = vld [vmem:[%s7 + $0x5b8] sm:$0xff]
      %v5752 = vld [vmem:[%s7 + $0x5c0] sm:$0xff]
      %v5753 = vld [vmem:[%s7 + $0x5c8] sm:$0xf]
      %v5754 = vld [vmem:[%s7 + $0x5cc] sm:$0xff]
      %v5755 = vld [vmem:[%s7 + $0x5d4] sm:$0xff]
      %v5756 = vld [vmem:[%s7 + $0x5dc] sm:$0xff]
      %v5757 = vld [vmem:[%s7 + $0x5e4] sm:$0xf]
      %v5758 = vld [vmem:[%s7 + $0x5e8] sm:$0xff]
      %v5759 = vld [vmem:[%s7 + $0x5f0] sm:$0xff]
      %v5760 = vld [vmem:[%s7 + $0x5f8] sm:$0xff]
      %v5761 = vld [vmem:[%s7 + $0x600] sm:$0xf]
      %v5762 = vld [vmem:[%s7 + $0x604] sm:$0xff]
      %v5763 = vld [vmem:[%s7 + $0x60c] sm:$0xff]
      %v5764 = vld [vmem:[%s7 + $0x614] sm:$0xff]
      %v5765 = vld [vmem:[%s7 + $0x61c] sm:$0xf]
      %v5766 = vld [vmem:[%s7 + $0x620] sm:$0xff]
      %v5767 = vld [vmem:[%s7 + $0x628] sm:$0xff]
      %v5768 = vld [vmem:[%s7 + $0x630] sm:$0xff]
      %v5769 = vld [vmem:[%s7 + $0x638] sm:$0xf]
      %v5770 = vld [vmem:[%s7 + $0x63c] sm:$0xff]
      %v5771 = vld [vmem:[%s7 + $0x644] sm:$0xff]
      %v5772 = vld [vmem:[%s7 + $0x64c] sm:$0xff]
      %v5773 = vld [vmem:[%s7 + $0x654] sm:$0xf]
      %v5774 = vld [vmem:[%s7 + $0x658] sm:$0xff]
      %v5775 = vld [vmem:[%s7 + $0x660] sm:$0xff]
      %v5776 = vld [vmem:[%s7 + $0x668] sm:$0xff]
      %v5777 = vld [vmem:[%s7 + $0x670] sm:$0xf]
      %v5778 = vld [vmem:[%s7 + $0x674] sm:$0xff]
      %v5779 = vld [vmem:[%s7 + $0x67c] sm:$0xff]
      %v5780 = vld [vmem:[%s7 + $0x684] sm:$0xff]
      %v5781 = vld [vmem:[%s7 + $0x68c] sm:$0xf]
      %v5782 = vld [vmem:[%s7 + $0x690] sm:$0xff]
      %v5783 = vld [vmem:[%s7 + $0x698] sm:$0xff]
      %v5784 = vld [vmem:[%s7 + $0x6a0] sm:$0xff]
      %v5785 = vld [vmem:[%s7 + $0x6a8] sm:$0xf]
      %v5786 = vld [vmem:[%s7 + $0x6ac] sm:$0xff]
      %v5787 = vld [vmem:[%s7 + $0x6b4] sm:$0xff]
      %v5788 = vld [vmem:[%s7 + $0x6bc] sm:$0xff]
      %v5789 = vld [vmem:[%s7 + $0x6c4] sm:$0xf]
      %v5790 = vld [vmem:[%s7 + $0x6c8] sm:$0xff]
      %v5791 = vld [vmem:[%s7 + $0x6d0] sm:$0xff]
      %v5792 = vld [vmem:[%s7 + $0x6d8] sm:$0xff]
      %v5793 = vld [vmem:[%s7 + $0x6e0] sm:$0xf]
      %v5794 = vld [vmem:[%s7 + $0x6e4] sm:$0xff]
      %v5795 = vld [vmem:[%s7 + $0x6ec] sm:$0xff]
      %v5796 = vld [vmem:[%s7 + $0x6f4] sm:$0xff]
      %v5797 = vld [vmem:[%s7 + $0x6fc] sm:$0xf]
      %v5799 = vlaneseq
      %v5800 = vshrl.u32 %v5799, 7
      %v5801 = vsub.s32 0, %v5800
      %v5802 = vrot.slane %v473, %v5801
      %v5803 = vlaneseq
      %v5804 = vshrl.u32 %v5803, 7
      %v5805 = vsub.s32 1, %v5804
      %v5806 = vrot.slane %v473, %v5805
      %v5807 = vlaneseq
      %v5808 = vshrl.u32 %v5807, 7
      %v5809 = vsub.s32 2, %v5808
      %v5810 = vrot.slane %v473, %v5809
      %v5811 = vlaneseq
      %v5812 = vshrl.u32 %v5811, 7
      %v5813 = vsub.s32 3, %v5812
      %v5814 = vrot.slane %v473, %v5813
      %v5815 = vlaneseq
      %v5816 = vshrl.u32 %v5815, 7
      %v5817 = vsub.s32 4, %v5816
      %v5818 = vrot.slane %v473, %v5817
      %v5819 = vlaneseq
      %v5820 = vshrl.u32 %v5819, 7
      %v5821 = vsub.s32 5, %v5820
      %v5822 = vrot.slane %v473, %v5821
      %v5823 = vlaneseq
      %v5824 = vshrl.u32 %v5823, 7
      %v5825 = vsub.s32 6, %v5824
      %v5826 = vrot.slane %v473, %v5825
      %v6090 = vunpack.c.l.b16 %v5542
      %v6091 = vunpack.c.h.b16 %v5542
      %v6092 = vunpack.c.l.b16 %v5543
      %v6093 = vunpack.c.h.b16 %v5543
      %v6094 = vunpack.c.l.b16 %v5544
      %v6095 = vunpack.c.h.b16 %v5544
      %v6096 = vunpack.c.l.b16 %v5545
      %v6097 = vunpack.c.l.b16 %v5546
      %v6098 = vunpack.c.h.b16 %v5546
      %v6099 = vunpack.c.l.b16 %v5547
      %v6100 = vunpack.c.h.b16 %v5547
      %v6101 = vunpack.c.l.b16 %v5548
      %v6102 = vunpack.c.h.b16 %v5548
      %v6103 = vunpack.c.l.b16 %v5549
      %v6104 = vunpack.c.l.b16 %v5550
      %v6105 = vunpack.c.h.b16 %v5550
      %v6106 = vunpack.c.l.b16 %v5551
      %v6107 = vunpack.c.h.b16 %v5551
      %v6108 = vunpack.c.l.b16 %v5552
      %v6109 = vunpack.c.h.b16 %v5552
      %v6110 = vunpack.c.l.b16 %v5553
      %v6111 = vunpack.c.l.b16 %v5554
      %v6112 = vunpack.c.h.b16 %v5554
      %v6113 = vunpack.c.l.b16 %v5555
      %v6114 = vunpack.c.h.b16 %v5555
      %v6115 = vunpack.c.l.b16 %v5556
      %v6116 = vunpack.c.h.b16 %v5556
      %v6117 = vunpack.c.l.b16 %v5557
      %v6118 = vunpack.c.l.b16 %v5558
      %v6119 = vunpack.c.h.b16 %v5558
      %v6120 = vunpack.c.l.b16 %v5559
      %v6121 = vunpack.c.h.b16 %v5559
      %v6122 = vunpack.c.l.b16 %v5560
      %v6123 = vunpack.c.h.b16 %v5560
      %v6124 = vunpack.c.l.b16 %v5561
      %v6125 = vunpack.c.l.b16 %v5562
      %v6126 = vunpack.c.h.b16 %v5562
      %v6127 = vunpack.c.l.b16 %v5563
      %v6128 = vunpack.c.h.b16 %v5563
      %v6129 = vunpack.c.l.b16 %v5564
      %v6130 = vunpack.c.h.b16 %v5564
      %v6131 = vunpack.c.l.b16 %v5565
      %v6132 = vunpack.c.l.b16 %v5566
      %v6133 = vunpack.c.h.b16 %v5566
      %v6134 = vunpack.c.l.b16 %v5567
      %v6135 = vunpack.c.h.b16 %v5567
      %v6136 = vunpack.c.l.b16 %v5568
      %v6137 = vunpack.c.h.b16 %v5568
      %v6138 = vunpack.c.l.b16 %v5569
      %v6139 = vunpack.c.l.b16 %v5570
      %v6140 = vunpack.c.h.b16 %v5570
      %v6141 = vunpack.c.l.b16 %v5571
      %v6142 = vunpack.c.h.b16 %v5571
      %v6143 = vunpack.c.l.b16 %v5572
      %v6144 = vunpack.c.h.b16 %v5572
      %v6145 = vunpack.c.l.b16 %v5573
      %v6146 = vunpack.c.l.b16 %v5574
      %v6147 = vunpack.c.h.b16 %v5574
      %v6148 = vunpack.c.l.b16 %v5575
      %v6149 = vunpack.c.h.b16 %v5575
      %v6150 = vunpack.c.l.b16 %v5576
      %v6151 = vunpack.c.h.b16 %v5576
      %v6152 = vunpack.c.l.b16 %v5577
      %v6153 = vunpack.c.l.b16 %v5578
      %v6154 = vunpack.c.h.b16 %v5578
      %v6155 = vunpack.c.l.b16 %v5579
      %v6156 = vunpack.c.h.b16 %v5579
      %v6157 = vunpack.c.l.b16 %v5580
      %v6158 = vunpack.c.h.b16 %v5580
      %v6159 = vunpack.c.l.b16 %v5581
      %v6160 = vunpack.c.l.b16 %v5582
      %v6161 = vunpack.c.h.b16 %v5582
      %v6162 = vunpack.c.l.b16 %v5583
      %v6163 = vunpack.c.h.b16 %v5583
      %v6164 = vunpack.c.l.b16 %v5584
      %v6165 = vunpack.c.h.b16 %v5584
      %v6166 = vunpack.c.l.b16 %v5585
      %v6167 = vunpack.c.l.b16 %v5586
      %v6168 = vunpack.c.h.b16 %v5586
      %v6169 = vunpack.c.l.b16 %v5587
      %v6170 = vunpack.c.h.b16 %v5587
      %v6171 = vunpack.c.l.b16 %v5588
      %v6172 = vunpack.c.h.b16 %v5588
      %v6173 = vunpack.c.l.b16 %v5589
      %v6174 = vunpack.c.l.b16 %v5590
      %v6175 = vunpack.c.h.b16 %v5590
      %v6176 = vunpack.c.l.b16 %v5591
      %v6177 = vunpack.c.h.b16 %v5591
      %v6178 = vunpack.c.l.b16 %v5592
      %v6179 = vunpack.c.h.b16 %v5592
      %v6180 = vunpack.c.l.b16 %v5593
      %v6181 = vunpack.c.l.b16 %v5594
      %v6182 = vunpack.c.h.b16 %v5594
      %v6183 = vunpack.c.l.b16 %v5595
      %v6184 = vunpack.c.h.b16 %v5595
      %v6185 = vunpack.c.l.b16 %v5596
      %v6186 = vunpack.c.h.b16 %v5596
      %v6187 = vunpack.c.l.b16 %v5597
      %v6188 = vunpack.c.l.b16 %v5598
      %v6189 = vunpack.c.h.b16 %v5598
      %v6190 = vunpack.c.l.b16 %v5599
      %v6191 = vunpack.c.h.b16 %v5599
      %v6192 = vunpack.c.l.b16 %v5600
      %v6193 = vunpack.c.h.b16 %v5600
      %v6194 = vunpack.c.l.b16 %v5601
      %v6195 = vunpack.c.l.b16 %v5602
      %v6196 = vunpack.c.h.b16 %v5602
      %v6197 = vunpack.c.l.b16 %v5603
      %v6198 = vunpack.c.h.b16 %v5603
      %v6199 = vunpack.c.l.b16 %v5604
      %v6200 = vunpack.c.h.b16 %v5604
      %v6201 = vunpack.c.l.b16 %v5605
      %v6202 = vunpack.c.l.b16 %v5606
      %v6203 = vunpack.c.h.b16 %v5606
      %v6204 = vunpack.c.l.b16 %v5607
      %v6205 = vunpack.c.h.b16 %v5607
      %v6206 = vunpack.c.l.b16 %v5608
      %v6207 = vunpack.c.h.b16 %v5608
      %v6208 = vunpack.c.l.b16 %v5609
      %v6209 = vunpack.c.l.b16 %v5610
      %v6210 = vunpack.c.h.b16 %v5610
      %v6211 = vunpack.c.l.b16 %v5611
      %v6212 = vunpack.c.h.b16 %v5611
      %v6213 = vunpack.c.l.b16 %v5612
      %v6214 = vunpack.c.h.b16 %v5612
      %v6215 = vunpack.c.l.b16 %v5613
      %v6216 = vunpack.c.l.b16 %v5614
      %v6217 = vunpack.c.h.b16 %v5614
      %v6218 = vunpack.c.l.b16 %v5615
      %v6219 = vunpack.c.h.b16 %v5615
      %v6220 = vunpack.c.l.b16 %v5616
      %v6221 = vunpack.c.h.b16 %v5616
      %v6222 = vunpack.c.l.b16 %v5617
      %v6223 = vunpack.c.l.b16 %v5618
      %v6224 = vunpack.c.h.b16 %v5618
      %v6225 = vunpack.c.l.b16 %v5619
      %v6226 = vunpack.c.h.b16 %v5619
      %v6227 = vunpack.c.l.b16 %v5620
      %v6228 = vunpack.c.h.b16 %v5620
      %v6229 = vunpack.c.l.b16 %v5621
      %v6230 = vunpack.c.l.b16 %v5622
      %v6231 = vunpack.c.h.b16 %v5622
      %v6232 = vunpack.c.l.b16 %v5623
      %v6233 = vunpack.c.h.b16 %v5623
      %v6234 = vunpack.c.l.b16 %v5624
      %v6235 = vunpack.c.h.b16 %v5624
      %v6236 = vunpack.c.l.b16 %v5625
      %v6237 = vunpack.c.l.b16 %v5626
      %v6238 = vunpack.c.h.b16 %v5626
      %v6239 = vunpack.c.l.b16 %v5627
      %v6240 = vunpack.c.h.b16 %v5627
      %v6241 = vunpack.c.l.b16 %v5628
      %v6242 = vunpack.c.h.b16 %v5628
      %v6243 = vunpack.c.l.b16 %v5629
      %v6244 = vunpack.c.l.b16 %v5630
      %v6245 = vunpack.c.h.b16 %v5630
      %v6246 = vunpack.c.l.b16 %v5631
      %v6247 = vunpack.c.h.b16 %v5631
      %v6248 = vunpack.c.l.b16 %v5632
      %v6249 = vunpack.c.h.b16 %v5632
      %v6250 = vunpack.c.l.b16 %v5633
      %v6251 = vunpack.c.l.b16 %v5634
      %v6252 = vunpack.c.h.b16 %v5634
      %v6253 = vunpack.c.l.b16 %v5635
      %v6254 = vunpack.c.h.b16 %v5635
      %v6255 = vunpack.c.l.b16 %v5636
      %v6256 = vunpack.c.h.b16 %v5636
      %v6257 = vunpack.c.l.b16 %v5637
      %v6258 = vunpack.c.l.b16 %v5638
      %v6259 = vunpack.c.h.b16 %v5638
      %v6260 = vunpack.c.l.b16 %v5639
      %v6261 = vunpack.c.h.b16 %v5639
      %v6262 = vunpack.c.l.b16 %v5640
      %v6263 = vunpack.c.h.b16 %v5640
      %v6264 = vunpack.c.l.b16 %v5641
      %v6265 = vunpack.c.l.b16 %v5642
      %v6266 = vunpack.c.h.b16 %v5642
      %v6267 = vunpack.c.l.b16 %v5643
      %v6268 = vunpack.c.h.b16 %v5643
      %v6269 = vunpack.c.l.b16 %v5644
      %v6270 = vunpack.c.h.b16 %v5644
      %v6271 = vunpack.c.l.b16 %v5645
      %v6272 = vunpack.c.l.b16 %v5646
      %v6273 = vunpack.c.h.b16 %v5646
      %v6274 = vunpack.c.l.b16 %v5647
      %v6275 = vunpack.c.h.b16 %v5647
      %v6276 = vunpack.c.l.b16 %v5648
      %v6277 = vunpack.c.h.b16 %v5648
      %v6278 = vunpack.c.l.b16 %v5649
      %v6279 = vunpack.c.l.b16 %v5650
      %v6280 = vunpack.c.h.b16 %v5650
      %v6281 = vunpack.c.l.b16 %v5651
      %v6282 = vunpack.c.h.b16 %v5651
      %v6283 = vunpack.c.l.b16 %v5652
      %v6284 = vunpack.c.h.b16 %v5652
      %v6285 = vunpack.c.l.b16 %v5653
      %v6286 = vunpack.c.l.b16 %v5654
      %v6287 = vunpack.c.h.b16 %v5654
      %v6288 = vunpack.c.l.b16 %v5655
      %v6289 = vunpack.c.h.b16 %v5655
      %v6290 = vunpack.c.l.b16 %v5656
      %v6291 = vunpack.c.h.b16 %v5656
      %v6292 = vunpack.c.l.b16 %v5657
      %v6293 = vunpack.c.l.b16 %v5658
      %v6294 = vunpack.c.h.b16 %v5658
      %v6295 = vunpack.c.l.b16 %v5659
      %v6296 = vunpack.c.h.b16 %v5659
      %v6297 = vunpack.c.l.b16 %v5660
      %v6298 = vunpack.c.h.b16 %v5660
      %v6299 = vunpack.c.l.b16 %v5661
      %v6300 = vunpack.c.l.b16 %v5662
      %v6301 = vunpack.c.h.b16 %v5662
      %v6302 = vunpack.c.l.b16 %v5663
      %v6303 = vunpack.c.h.b16 %v5663
      %v6304 = vunpack.c.l.b16 %v5664
      %v6305 = vunpack.c.h.b16 %v5664
      %v6306 = vunpack.c.l.b16 %v5665
      %v6307 = vunpack.c.l.b16 %v5666
      %v6308 = vunpack.c.h.b16 %v5666
      %v6309 = vunpack.c.l.b16 %v5667
      %v6310 = vunpack.c.h.b16 %v5667
      %v6311 = vunpack.c.l.b16 %v5668
      %v6312 = vunpack.c.h.b16 %v5668
      %v6313 = vunpack.c.l.b16 %v5669
      %v6314 = vunpack.c.l.b16 %v5670
      %v6315 = vunpack.c.h.b16 %v5670
      %v6316 = vunpack.c.l.b16 %v5671
      %v6317 = vunpack.c.h.b16 %v5671
      %v6318 = vunpack.c.l.b16 %v5672
      %v6319 = vunpack.c.h.b16 %v5672
      %v6320 = vunpack.c.l.b16 %v5673
      %v6321 = vunpack.c.l.b16 %v5674
      %v6322 = vunpack.c.h.b16 %v5674
      %v6323 = vunpack.c.l.b16 %v5675
      %v6324 = vunpack.c.h.b16 %v5675
      %v6325 = vunpack.c.l.b16 %v5676
      %v6326 = vunpack.c.h.b16 %v5676
      %v6327 = vunpack.c.l.b16 %v5677
      %v6328 = vunpack.c.l.b16 %v5678
      %v6329 = vunpack.c.h.b16 %v5678
      %v6330 = vunpack.c.l.b16 %v5679
      %v6331 = vunpack.c.h.b16 %v5679
      %v6332 = vunpack.c.l.b16 %v5680
      %v6333 = vunpack.c.h.b16 %v5680
      %v6334 = vunpack.c.l.b16 %v5681
      %v6335 = vunpack.c.l.b16 %v5682
      %v6336 = vunpack.c.h.b16 %v5682
      %v6337 = vunpack.c.l.b16 %v5683
      %v6338 = vunpack.c.h.b16 %v5683
      %v6339 = vunpack.c.l.b16 %v5684
      %v6340 = vunpack.c.h.b16 %v5684
      %v6341 = vunpack.c.l.b16 %v5685
      %v6342 = vunpack.c.l.b16 %v5686
      %v6343 = vunpack.c.h.b16 %v5686
      %v6344 = vunpack.c.l.b16 %v5687
      %v6345 = vunpack.c.h.b16 %v5687
      %v6346 = vunpack.c.l.b16 %v5688
      %v6347 = vunpack.c.h.b16 %v5688
      %v6348 = vunpack.c.l.b16 %v5689
      %v6349 = vunpack.c.l.b16 %v5690
      %v6350 = vunpack.c.h.b16 %v5690
      %v6351 = vunpack.c.l.b16 %v5691
      %v6352 = vunpack.c.h.b16 %v5691
      %v6353 = vunpack.c.l.b16 %v5692
      %v6354 = vunpack.c.h.b16 %v5692
      %v6355 = vunpack.c.l.b16 %v5693
      %v6356 = vunpack.c.l.b16 %v5694
      %v6357 = vunpack.c.h.b16 %v5694
      %v6358 = vunpack.c.l.b16 %v5695
      %v6359 = vunpack.c.h.b16 %v5695
      %v6360 = vunpack.c.l.b16 %v5696
      %v6361 = vunpack.c.h.b16 %v5696
      %v6362 = vunpack.c.l.b16 %v5697
      %v6363 = vunpack.c.l.b16 %v5698
      %v6364 = vunpack.c.h.b16 %v5698
      %v6365 = vunpack.c.l.b16 %v5699
      %v6366 = vunpack.c.h.b16 %v5699
      %v6367 = vunpack.c.l.b16 %v5700
      %v6368 = vunpack.c.h.b16 %v5700
      %v6369 = vunpack.c.l.b16 %v5701
      %v6370 = vunpack.c.l.b16 %v5702
      %v6371 = vunpack.c.h.b16 %v5702
      %v6372 = vunpack.c.l.b16 %v5703
      %v6373 = vunpack.c.h.b16 %v5703
      %v6374 = vunpack.c.l.b16 %v5704
      %v6375 = vunpack.c.h.b16 %v5704
      %v6376 = vunpack.c.l.b16 %v5705
      %v6377 = vunpack.c.l.b16 %v5706
      %v6378 = vunpack.c.h.b16 %v5706
      %v6379 = vunpack.c.l.b16 %v5707
      %v6380 = vunpack.c.h.b16 %v5707
      %v6381 = vunpack.c.l.b16 %v5708
      %v6382 = vunpack.c.h.b16 %v5708
      %v6383 = vunpack.c.l.b16 %v5709
      %v6384 = vunpack.c.l.b16 %v5710
      %v6385 = vunpack.c.h.b16 %v5710
      %v6386 = vunpack.c.l.b16 %v5711
      %v6387 = vunpack.c.h.b16 %v5711
      %v6388 = vunpack.c.l.b16 %v5712
      %v6389 = vunpack.c.h.b16 %v5712
      %v6390 = vunpack.c.l.b16 %v5713
      %v6391 = vunpack.c.l.b16 %v5714
      %v6392 = vunpack.c.h.b16 %v5714
      %v6393 = vunpack.c.l.b16 %v5715
      %v6394 = vunpack.c.h.b16 %v5715
      %v6395 = vunpack.c.l.b16 %v5716
      %v6396 = vunpack.c.h.b16 %v5716
      %v6397 = vunpack.c.l.b16 %v5717
      %v6398 = vunpack.c.l.b16 %v5718
      %v6399 = vunpack.c.h.b16 %v5718
      %v6400 = vunpack.c.l.b16 %v5719
      %v6401 = vunpack.c.h.b16 %v5719
      %v6402 = vunpack.c.l.b16 %v5720
      %v6403 = vunpack.c.h.b16 %v5720
      %v6404 = vunpack.c.l.b16 %v5721
      %v6405 = vunpack.c.l.b16 %v5722
      %v6406 = vunpack.c.h.b16 %v5722
      %v6407 = vunpack.c.l.b16 %v5723
      %v6408 = vunpack.c.h.b16 %v5723
      %v6409 = vunpack.c.l.b16 %v5724
      %v6410 = vunpack.c.h.b16 %v5724
      %v6411 = vunpack.c.l.b16 %v5725
      %v6412 = vunpack.c.l.b16 %v5726
      %v6413 = vunpack.c.h.b16 %v5726
      %v6414 = vunpack.c.l.b16 %v5727
      %v6415 = vunpack.c.h.b16 %v5727
      %v6416 = vunpack.c.l.b16 %v5728
      %v6417 = vunpack.c.h.b16 %v5728
      %v6418 = vunpack.c.l.b16 %v5729
      %v6419 = vunpack.c.l.b16 %v5730
      %v6420 = vunpack.c.h.b16 %v5730
      %v6421 = vunpack.c.l.b16 %v5731
      %v6422 = vunpack.c.h.b16 %v5731
      %v6423 = vunpack.c.l.b16 %v5732
      %v6424 = vunpack.c.h.b16 %v5732
      %v6425 = vunpack.c.l.b16 %v5733
      %v6426 = vunpack.c.l.b16 %v5734
      %v6427 = vunpack.c.h.b16 %v5734
      %v6428 = vunpack.c.l.b16 %v5735
      %v6429 = vunpack.c.h.b16 %v5735
      %v6430 = vunpack.c.l.b16 %v5736
      %v6431 = vunpack.c.h.b16 %v5736
      %v6432 = vunpack.c.l.b16 %v5737
      %v6433 = vunpack.c.l.b16 %v5738
      %v6434 = vunpack.c.h.b16 %v5738
      %v6435 = vunpack.c.l.b16 %v5739
      %v6436 = vunpack.c.h.b16 %v5739
      %v6437 = vunpack.c.l.b16 %v5740
      %v6438 = vunpack.c.h.b16 %v5740
      %v6439 = vunpack.c.l.b16 %v5741
      %v6440 = vunpack.c.l.b16 %v5742
      %v6441 = vunpack.c.h.b16 %v5742
      %v6442 = vunpack.c.l.b16 %v5743
      %v6443 = vunpack.c.h.b16 %v5743
      %v6444 = vunpack.c.l.b16 %v5744
      %v6445 = vunpack.c.h.b16 %v5744
      %v6446 = vunpack.c.l.b16 %v5745
      %v6447 = vunpack.c.l.b16 %v5746
      %v6448 = vunpack.c.h.b16 %v5746
      %v6449 = vunpack.c.l.b16 %v5747
      %v6450 = vunpack.c.h.b16 %v5747
      %v6451 = vunpack.c.l.b16 %v5748
      %v6452 = vunpack.c.h.b16 %v5748
      %v6453 = vunpack.c.l.b16 %v5749
      %v6454 = vunpack.c.l.b16 %v5750
      %v6455 = vunpack.c.h.b16 %v5750
      %v6456 = vunpack.c.l.b16 %v5751
      %v6457 = vunpack.c.h.b16 %v5751
      %v6458 = vunpack.c.l.b16 %v5752
      %v6459 = vunpack.c.h.b16 %v5752
      %v6460 = vunpack.c.l.b16 %v5753
      %v6461 = vunpack.c.l.b16 %v5754
      %v6462 = vunpack.c.h.b16 %v5754
      %v6463 = vunpack.c.l.b16 %v5755
      %v6464 = vunpack.c.h.b16 %v5755
      %v6465 = vunpack.c.l.b16 %v5756
      %v6466 = vunpack.c.h.b16 %v5756
      %v6467 = vunpack.c.l.b16 %v5757
      %v6468 = vunpack.c.l.b16 %v5758
      %v6469 = vunpack.c.h.b16 %v5758
      %v6470 = vunpack.c.l.b16 %v5759
      %v6471 = vunpack.c.h.b16 %v5759
      %v6472 = vunpack.c.l.b16 %v5760
      %v6473 = vunpack.c.h.b16 %v5760
      %v6474 = vunpack.c.l.b16 %v5761
      %v6475 = vunpack.c.l.b16 %v5762
      %v6476 = vunpack.c.h.b16 %v5762
      %v6477 = vunpack.c.l.b16 %v5763
      %v6478 = vunpack.c.h.b16 %v5763
      %v6479 = vunpack.c.l.b16 %v5764
      %v6480 = vunpack.c.h.b16 %v5764
      %v6481 = vunpack.c.l.b16 %v5765
      %v6482 = vunpack.c.l.b16 %v5766
      %v6483 = vunpack.c.h.b16 %v5766
      %v6484 = vunpack.c.l.b16 %v5767
      %v6485 = vunpack.c.h.b16 %v5767
      %v6486 = vunpack.c.l.b16 %v5768
      %v6487 = vunpack.c.h.b16 %v5768
      %v6488 = vunpack.c.l.b16 %v5769
      %v6489 = vunpack.c.l.b16 %v5770
      %v6490 = vunpack.c.h.b16 %v5770
      %v6491 = vunpack.c.l.b16 %v5771
      %v6492 = vunpack.c.h.b16 %v5771
      %v6493 = vunpack.c.l.b16 %v5772
      %v6494 = vunpack.c.h.b16 %v5772
      %v6495 = vunpack.c.l.b16 %v5773
      %v6496 = vunpack.c.l.b16 %v5774
      %v6497 = vunpack.c.h.b16 %v5774
      %v6498 = vunpack.c.l.b16 %v5775
      %v6499 = vunpack.c.h.b16 %v5775
      %v6500 = vunpack.c.l.b16 %v5776
      %v6501 = vunpack.c.h.b16 %v5776
      %v6502 = vunpack.c.l.b16 %v5777
      %v6503 = vunpack.c.l.b16 %v5778
      %v6504 = vunpack.c.h.b16 %v5778
      %v6505 = vunpack.c.l.b16 %v5779
      %v6506 = vunpack.c.h.b16 %v5779
      %v6507 = vunpack.c.l.b16 %v5780
      %v6508 = vunpack.c.h.b16 %v5780
      %v6509 = vunpack.c.l.b16 %v5781
      %v6510 = vunpack.c.l.b16 %v5782
      %v6511 = vunpack.c.h.b16 %v5782
      %v6512 = vunpack.c.l.b16 %v5783
      %v6513 = vunpack.c.h.b16 %v5783
      %v6514 = vunpack.c.l.b16 %v5784
      %v6515 = vunpack.c.h.b16 %v5784
      %v6516 = vunpack.c.l.b16 %v5785
      %v6517 = vunpack.c.l.b16 %v5786
      %v6518 = vunpack.c.h.b16 %v5786
      %v6519 = vunpack.c.l.b16 %v5787
      %v6520 = vunpack.c.h.b16 %v5787
      %v6521 = vunpack.c.l.b16 %v5788
      %v6522 = vunpack.c.h.b16 %v5788
      %v6523 = vunpack.c.l.b16 %v5789
      %v6524 = vunpack.c.l.b16 %v5790
      %v6525 = vunpack.c.h.b16 %v5790
      %v6526 = vunpack.c.l.b16 %v5791
      %v6527 = vunpack.c.h.b16 %v5791
      %v6528 = vunpack.c.l.b16 %v5792
      %v6529 = vunpack.c.h.b16 %v5792
      %v6530 = vunpack.c.l.b16 %v5793
      %v6531 = vunpack.c.l.b16 %v5794
      %v6532 = vunpack.c.h.b16 %v5794
      %v6533 = vunpack.c.l.b16 %v5795
      %v6534 = vunpack.c.h.b16 %v5795
      %v6535 = vunpack.c.l.b16 %v5796
      %v6536 = vunpack.c.h.b16 %v5796
      %v6537 = vunpack.c.l.b16 %v5797
      %v6538 = vpack.c.b16 %v6097, %v6090
      %v6539 = vpack.c.b16 %v6098, %v6091
      %v6540 = vpack.c.b16 %v6099, %v6092
      %v6541 = vpack.c.b16 %v6100, %v6093
      %v6542 = vpack.c.b16 %v6101, %v6094
      %v6543 = vpack.c.b16 %v6102, %v6095
      %v6544 = vpack.c.b16 %v6103, %v6096
      %v6545 = vpack.c.b16 %v6111, %v6104
      %v6546 = vpack.c.b16 %v6112, %v6105
      %v6547 = vpack.c.b16 %v6113, %v6106
      %v6548 = vpack.c.b16 %v6114, %v6107
      %v6549 = vpack.c.b16 %v6115, %v6108
      %v6550 = vpack.c.b16 %v6116, %v6109
      %v6551 = vpack.c.b16 %v6117, %v6110
      %v6552 = vpack.c.b16 %v6125, %v6118
      %v6553 = vpack.c.b16 %v6126, %v6119
      %v6554 = vpack.c.b16 %v6127, %v6120
      %v6555 = vpack.c.b16 %v6128, %v6121
      %v6556 = vpack.c.b16 %v6129, %v6122
      %v6557 = vpack.c.b16 %v6130, %v6123
      %v6558 = vpack.c.b16 %v6131, %v6124
      %v6559 = vpack.c.b16 %v6139, %v6132
      %v6560 = vpack.c.b16 %v6140, %v6133
      %v6561 = vpack.c.b16 %v6141, %v6134
      %v6562 = vpack.c.b16 %v6142, %v6135
      %v6563 = vpack.c.b16 %v6143, %v6136
      %v6564 = vpack.c.b16 %v6144, %v6137
      %v6565 = vpack.c.b16 %v6145, %v6138
      %v6566 = vpack.c.b16 %v6153, %v6146
      %v6567 = vpack.c.b16 %v6154, %v6147
      %v6568 = vpack.c.b16 %v6155, %v6148
      %v6569 = vpack.c.b16 %v6156, %v6149
      %v6570 = vpack.c.b16 %v6157, %v6150
      %v6571 = vpack.c.b16 %v6158, %v6151
      %v6572 = vpack.c.b16 %v6159, %v6152
      %v6573 = vpack.c.b16 %v6167, %v6160
      %v6574 = vpack.c.b16 %v6168, %v6161
      %v6575 = vpack.c.b16 %v6169, %v6162
      %v6576 = vpack.c.b16 %v6170, %v6163
      %v6577 = vpack.c.b16 %v6171, %v6164
      %v6578 = vpack.c.b16 %v6172, %v6165
      %v6579 = vpack.c.b16 %v6173, %v6166
      %v6580 = vpack.c.b16 %v6181, %v6174
      %v6581 = vpack.c.b16 %v6182, %v6175
      %v6582 = vpack.c.b16 %v6183, %v6176
      %v6583 = vpack.c.b16 %v6184, %v6177
      %v6584 = vpack.c.b16 %v6185, %v6178
      %v6585 = vpack.c.b16 %v6186, %v6179
      %v6586 = vpack.c.b16 %v6187, %v6180
      %v6587 = vpack.c.b16 %v6195, %v6188
      %v6588 = vpack.c.b16 %v6196, %v6189
      %v6589 = vpack.c.b16 %v6197, %v6190
      %v6590 = vpack.c.b16 %v6198, %v6191
      %v6591 = vpack.c.b16 %v6199, %v6192
      %v6592 = vpack.c.b16 %v6200, %v6193
      %v6593 = vpack.c.b16 %v6201, %v6194
      %v6594 = vpack.c.b16 %v6209, %v6202
      %v6595 = vpack.c.b16 %v6210, %v6203
      %v6596 = vpack.c.b16 %v6211, %v6204
      %v6597 = vpack.c.b16 %v6212, %v6205
      %v6598 = vpack.c.b16 %v6213, %v6206
      %v6599 = vpack.c.b16 %v6214, %v6207
      %v6600 = vpack.c.b16 %v6215, %v6208
      %v6601 = vpack.c.b16 %v6223, %v6216
      %v6602 = vpack.c.b16 %v6224, %v6217
      %v6603 = vpack.c.b16 %v6225, %v6218
      %v6604 = vpack.c.b16 %v6226, %v6219
      %v6605 = vpack.c.b16 %v6227, %v6220
      %v6606 = vpack.c.b16 %v6228, %v6221
      %v6607 = vpack.c.b16 %v6229, %v6222
      %v6608 = vpack.c.b16 %v6237, %v6230
      %v6609 = vpack.c.b16 %v6238, %v6231
      %v6610 = vpack.c.b16 %v6239, %v6232
      %v6611 = vpack.c.b16 %v6240, %v6233
      %v6612 = vpack.c.b16 %v6241, %v6234
      %v6613 = vpack.c.b16 %v6242, %v6235
      %v6614 = vpack.c.b16 %v6243, %v6236
      %v6615 = vpack.c.b16 %v6251, %v6244
      %v6616 = vpack.c.b16 %v6252, %v6245
      %v6617 = vpack.c.b16 %v6253, %v6246
      %v6618 = vpack.c.b16 %v6254, %v6247
      %v6619 = vpack.c.b16 %v6255, %v6248
      %v6620 = vpack.c.b16 %v6256, %v6249
      %v6621 = vpack.c.b16 %v6257, %v6250
      %v6622 = vpack.c.b16 %v6265, %v6258
      %v6623 = vpack.c.b16 %v6266, %v6259
      %v6624 = vpack.c.b16 %v6267, %v6260
      %v6625 = vpack.c.b16 %v6268, %v6261
      %v6626 = vpack.c.b16 %v6269, %v6262
      %v6627 = vpack.c.b16 %v6270, %v6263
      %v6628 = vpack.c.b16 %v6271, %v6264
      %v6629 = vpack.c.b16 %v6279, %v6272
      %v6630 = vpack.c.b16 %v6280, %v6273
      %v6631 = vpack.c.b16 %v6281, %v6274
      %v6632 = vpack.c.b16 %v6282, %v6275
      %v6633 = vpack.c.b16 %v6283, %v6276
      %v6634 = vpack.c.b16 %v6284, %v6277
      %v6635 = vpack.c.b16 %v6285, %v6278
      %v6636 = vpack.c.b16 %v6293, %v6286
      %v6637 = vpack.c.b16 %v6294, %v6287
      %v6638 = vpack.c.b16 %v6295, %v6288
      %v6639 = vpack.c.b16 %v6296, %v6289
      %v6640 = vpack.c.b16 %v6297, %v6290
      %v6641 = vpack.c.b16 %v6298, %v6291
      %v6642 = vpack.c.b16 %v6299, %v6292
      %v6643 = vpack.c.b16 %v6307, %v6300
      %v6644 = vpack.c.b16 %v6308, %v6301
      %v6645 = vpack.c.b16 %v6309, %v6302
      %v6646 = vpack.c.b16 %v6310, %v6303
      %v6647 = vpack.c.b16 %v6311, %v6304
      %v6648 = vpack.c.b16 %v6312, %v6305
      %v6649 = vpack.c.b16 %v6313, %v6306
      %v6650 = vpack.c.b16 %v6321, %v6314
      %v6651 = vpack.c.b16 %v6322, %v6315
      %v6652 = vpack.c.b16 %v6323, %v6316
      %v6653 = vpack.c.b16 %v6324, %v6317
      %v6654 = vpack.c.b16 %v6325, %v6318
      %v6655 = vpack.c.b16 %v6326, %v6319
      %v6656 = vpack.c.b16 %v6327, %v6320
      %v6657 = vpack.c.b16 %v6335, %v6328
      %v6658 = vpack.c.b16 %v6336, %v6329
      %v6659 = vpack.c.b16 %v6337, %v6330
      %v6660 = vpack.c.b16 %v6338, %v6331
      %v6661 = vpack.c.b16 %v6339, %v6332
      %v6662 = vpack.c.b16 %v6340, %v6333
      %v6663 = vpack.c.b16 %v6341, %v6334
      %v6664 = vpack.c.b16 %v6349, %v6342
      %v6665 = vpack.c.b16 %v6350, %v6343
      %v6666 = vpack.c.b16 %v6351, %v6344
      %v6667 = vpack.c.b16 %v6352, %v6345
      %v6668 = vpack.c.b16 %v6353, %v6346
      %v6669 = vpack.c.b16 %v6354, %v6347
      %v6670 = vpack.c.b16 %v6355, %v6348
      %v6671 = vpack.c.b16 %v6363, %v6356
      %v6672 = vpack.c.b16 %v6364, %v6357
      %v6673 = vpack.c.b16 %v6365, %v6358
      %v6674 = vpack.c.b16 %v6366, %v6359
      %v6675 = vpack.c.b16 %v6367, %v6360
      %v6676 = vpack.c.b16 %v6368, %v6361
      %v6677 = vpack.c.b16 %v6369, %v6362
      %v6678 = vpack.c.b16 %v6377, %v6370
      %v6679 = vpack.c.b16 %v6378, %v6371
      %v6680 = vpack.c.b16 %v6379, %v6372
      %v6681 = vpack.c.b16 %v6380, %v6373
      %v6682 = vpack.c.b16 %v6381, %v6374
      %v6683 = vpack.c.b16 %v6382, %v6375
      %v6684 = vpack.c.b16 %v6383, %v6376
      %v6685 = vpack.c.b16 %v6391, %v6384
      %v6686 = vpack.c.b16 %v6392, %v6385
      %v6687 = vpack.c.b16 %v6393, %v6386
      %v6688 = vpack.c.b16 %v6394, %v6387
      %v6689 = vpack.c.b16 %v6395, %v6388
      %v6690 = vpack.c.b16 %v6396, %v6389
      %v6691 = vpack.c.b16 %v6397, %v6390
      %v6692 = vpack.c.b16 %v6405, %v6398
      %v6693 = vpack.c.b16 %v6406, %v6399
      %v6694 = vpack.c.b16 %v6407, %v6400
      %v6695 = vpack.c.b16 %v6408, %v6401
      %v6696 = vpack.c.b16 %v6409, %v6402
      %v6697 = vpack.c.b16 %v6410, %v6403
      %v6698 = vpack.c.b16 %v6411, %v6404
      %v6699 = vpack.c.b16 %v6419, %v6412
      %v6700 = vpack.c.b16 %v6420, %v6413
      %v6701 = vpack.c.b16 %v6421, %v6414
      %v6702 = vpack.c.b16 %v6422, %v6415
      %v6703 = vpack.c.b16 %v6423, %v6416
      %v6704 = vpack.c.b16 %v6424, %v6417
      %v6705 = vpack.c.b16 %v6425, %v6418
      %v6706 = vpack.c.b16 %v6433, %v6426
      %v6707 = vpack.c.b16 %v6434, %v6427
      %v6708 = vpack.c.b16 %v6435, %v6428
      %v6709 = vpack.c.b16 %v6436, %v6429
      %v6710 = vpack.c.b16 %v6437, %v6430
      %v6711 = vpack.c.b16 %v6438, %v6431
      %v6712 = vpack.c.b16 %v6439, %v6432
      %v6713 = vpack.c.b16 %v6447, %v6440
      %v6714 = vpack.c.b16 %v6448, %v6441
      %v6715 = vpack.c.b16 %v6449, %v6442
      %v6716 = vpack.c.b16 %v6450, %v6443
      %v6717 = vpack.c.b16 %v6451, %v6444
      %v6718 = vpack.c.b16 %v6452, %v6445
      %v6719 = vpack.c.b16 %v6453, %v6446
      %v6720 = vpack.c.b16 %v6461, %v6454
      %v6721 = vpack.c.b16 %v6462, %v6455
      %v6722 = vpack.c.b16 %v6463, %v6456
      %v6723 = vpack.c.b16 %v6464, %v6457
      %v6724 = vpack.c.b16 %v6465, %v6458
      %v6725 = vpack.c.b16 %v6466, %v6459
      %v6726 = vpack.c.b16 %v6467, %v6460
      %v6727 = vpack.c.b16 %v6475, %v6468
      %v6728 = vpack.c.b16 %v6476, %v6469
      %v6729 = vpack.c.b16 %v6477, %v6470
      %v6730 = vpack.c.b16 %v6478, %v6471
      %v6731 = vpack.c.b16 %v6479, %v6472
      %v6732 = vpack.c.b16 %v6480, %v6473
      %v6733 = vpack.c.b16 %v6481, %v6474
      %v6734 = vpack.c.b16 %v6489, %v6482
      %v6735 = vpack.c.b16 %v6490, %v6483
      %v6736 = vpack.c.b16 %v6491, %v6484
      %v6737 = vpack.c.b16 %v6492, %v6485
      %v6738 = vpack.c.b16 %v6493, %v6486
      %v6739 = vpack.c.b16 %v6494, %v6487
      %v6740 = vpack.c.b16 %v6495, %v6488
      %v6741 = vpack.c.b16 %v6503, %v6496
      %v6742 = vpack.c.b16 %v6504, %v6497
      %v6743 = vpack.c.b16 %v6505, %v6498
      %v6744 = vpack.c.b16 %v6506, %v6499
      %v6745 = vpack.c.b16 %v6507, %v6500
      %v6746 = vpack.c.b16 %v6508, %v6501
      %v6747 = vpack.c.b16 %v6509, %v6502
      %v6748 = vpack.c.b16 %v6517, %v6510
      %v6749 = vpack.c.b16 %v6518, %v6511
      %v6750 = vpack.c.b16 %v6519, %v6512
      %v6751 = vpack.c.b16 %v6520, %v6513
      %v6752 = vpack.c.b16 %v6521, %v6514
      %v6753 = vpack.c.b16 %v6522, %v6515
      %v6754 = vpack.c.b16 %v6523, %v6516
      %v6755 = vpack.c.b16 %v6531, %v6524
      %v6756 = vpack.c.b16 %v6532, %v6525
      %v6757 = vpack.c.b16 %v6533, %v6526
      %v6758 = vpack.c.b16 %v6534, %v6527
      %v6759 = vpack.c.b16 %v6535, %v6528
      %v6760 = vpack.c.b16 %v6536, %v6529
      %v6761 = vpack.c.b16 %v6537, %v6530
      %6986 = vmatprep.subr.bf16.mxu0 %v6588
      %6987 = vmatpush1.bf16.msra.mxu0 %v6587
      %6988 = vmatprep.subr.bf16.mxu0 %v6581
      %6989 = vmatpush1.bf16.msra.mxu0 %v6580
      %6990 = vmatprep.subr.bf16.mxu0 %v6574
      %6991 = vmatpush1.bf16.msra.mxu0 %v6573
      %6992 = vmatprep.subr.bf16.mxu0 %v6567
      %6993 = vmatpush1.bf16.msra.mxu0 %v6566
      %6994 = vmatprep.subr.bf16.mxu0 %v6560
      %6995 = vmatpush1.bf16.msra.mxu0 %v6559
      %6996 = vmatprep.subr.bf16.mxu0 %v6553
      %6997 = vmatpush1.bf16.msra.mxu0 %v6552
      %6998 = vmatprep.subr.bf16.mxu0 %v6546
      %6999 = vmatpush1.bf16.msra.mxu0 %v6545
      %7000 = vmatprep.subr.bf16.mxu0 %v6539
      %7001 = vmatpush1.bf16.msra.mxu0 %v6538
      %7002 = vmatprep.subr.bf16.mxu0 %v6644
      %7003 = vmatpush2.bf16.msra.mxu0 %v6643
      %7004 = vmatprep.subr.bf16.mxu0 %v6637
      %7005 = vmatpush2.bf16.msra.mxu0 %v6636
      %7006 = vmatprep.subr.bf16.mxu0 %v6630
      %7007 = vmatpush2.bf16.msra.mxu0 %v6629
      %7008 = vmatprep.subr.bf16.mxu0 %v6623
      %7009 = vmatpush2.bf16.msra.mxu0 %v6622
      %7010 = vmatprep.subr.bf16.mxu0 %v6616
      %7011 = vmatpush2.bf16.msra.mxu0 %v6615
      %7012 = vmatprep.subr.bf16.mxu0 %v6609
      %7013 = vmatpush2.bf16.msra.mxu0 %v6608
      %7014 = vmatprep.subr.bf16.mxu0 %v6602
      %7015 = vmatpush2.bf16.msra.mxu0 %v6601
      %7016 = vmatprep.subr.bf16.mxu0 %v6595
      %7017 = vmatpush2.bf16.msra.mxu0 %v6594
      %7018 = vmatprep.mubr.bf16.mxu0 %v5479
      %7019 = vmatmul.mubr.bf16.gmra.mxu0 %v5478
      %v7020 = vpop.f32.mrf.mxu0
      %v7021 = vadd.f32 %v5802, %v7020
      %v7022 = vpop.f32.mrf.mxu0
      %v7023 = vadd.f32 %v5806, %v7022
      %v7024 = vpop.f32.mrf.mxu0
      %v7025 = vadd.f32 %v5802, %v7024
      %v7026 = vpop.f32.mrf.mxu0
      %v7027 = vadd.f32 %v5806, %v7026
      %7028 = vmatprep.mubr.bf16.mxu0 %v5483
      %7029 = vmatmul.mubr.bf16.gmra.mxu0 %v5482
      %v7030 = vpop.f32.mrf.mxu0
      %v7031 = vadd.f32 %v5802, %v7030
      %v7032 = vpop.f32.mrf.mxu0
      %v7033 = vadd.f32 %v5806, %v7032
      %v7034 = vpop.f32.mrf.mxu0
      %v7035 = vadd.f32 %v5802, %v7034
      %v7036 = vpop.f32.mrf.mxu0
      %v7037 = vadd.f32 %v5806, %v7036
      %7038 = vmatprep.mubr.bf16.mxu0 %v5487
      %7039 = vmatmul.mubr.bf16.gmra.mxu0 %v5486
      %v7040 = vpop.f32.mrf.mxu0
      %v7041 = vadd.f32 %v5802, %v7040
      %v7042 = vpop.f32.mrf.mxu0
      %v7043 = vadd.f32 %v5806, %v7042
      %v7044 = vpop.f32.mrf.mxu0
      %v7045 = vadd.f32 %v5802, %v7044
      %v7046 = vpop.f32.mrf.mxu0
      %v7047 = vadd.f32 %v5806, %v7046
      %7048 = vmatprep.mubr.bf16.mxu0 %v5491
      %7049 = vmatmul.mubr.bf16.gmra.mxu0 %v5490
      %v7050 = vpop.f32.mrf.mxu0
      %v7051 = vadd.f32 %v5802, %v7050
      %v7052 = vpop.f32.mrf.mxu0
      %v7053 = vadd.f32 %v5806, %v7052
      %v7054 = vpop.f32.mrf.mxu0
      %v7055 = vadd.f32 %v5802, %v7054
      %v7056 = vpop.f32.mrf.mxu0
      %v7057 = vadd.f32 %v5806, %v7056
      %7058 = vmatprep.mubr.bf16.mxu0 %v5495
      %7059 = vmatmul.mubr.bf16.gmra.mxu0 %v5494
      %v7060 = vpop.f32.mrf.mxu0
      %v7061 = vadd.f32 %v5802, %v7060
      %v7062 = vpop.f32.mrf.mxu0
      %v7063 = vadd.f32 %v5806, %v7062
      %v7064 = vpop.f32.mrf.mxu0
      %v7065 = vadd.f32 %v5802, %v7064
      %v7066 = vpop.f32.mrf.mxu0
      %v7067 = vadd.f32 %v5806, %v7066
      %7068 = vmatprep.mubr.bf16.mxu0 %v5499
      %7069 = vmatmul.mubr.bf16.gmra.mxu0 %v5498
      %v7070 = vpop.f32.mrf.mxu0
      %v7071 = vadd.f32 %v5802, %v7070
      %v7072 = vpop.f32.mrf.mxu0
      %v7073 = vadd.f32 %v5806, %v7072
      %v7074 = vpop.f32.mrf.mxu0
      %v7075 = vadd.f32 %v5802, %v7074
      %v7076 = vpop.f32.mrf.mxu0
      %v7077 = vadd.f32 %v5806, %v7076
      %7078 = vmatprep.mubr.bf16.mxu0 %v5503
      %7079 = vmatmul.mubr.bf16.gmra.mxu0 %v5502
      %v7080 = vpop.f32.mrf.mxu0
      %v7081 = vadd.f32 %v5802, %v7080
      %v7082 = vpop.f32.mrf.mxu0
      %v7083 = vadd.f32 %v5806, %v7082
      %v7084 = vpop.f32.mrf.mxu0
      %v7085 = vadd.f32 %v5802, %v7084
      %v7086 = vpop.f32.mrf.mxu0
      %v7087 = vadd.f32 %v5806, %v7086
      %7088 = vmatprep.mubr.bf16.mxu0 %v5507
      %7089 = vmatmul.mubr.bf16.gmra.mxu0 %v5506
      %v7090 = vpop.f32.mrf.mxu0
      %v7091 = vadd.f32 %v5802, %v7090
      %v7092 = vpop.f32.mrf.mxu0
      %v7093 = vadd.f32 %v5806, %v7092
      %v7094 = vpop.f32.mrf.mxu0
      %v7095 = vadd.f32 %v5802, %v7094
      %v7096 = vpop.f32.mrf.mxu0
      %v7097 = vadd.f32 %v5806, %v7096
      %7098 = vmatprep.mubr.bf16.mxu0 %v5511
      %7099 = vmatmul.mubr.bf16.gmra.mxu0 %v5510
      %v7100 = vpop.f32.mrf.mxu0
      %v7101 = vadd.f32 %v5802, %v7100
      %v7102 = vpop.f32.mrf.mxu0
      %v7103 = vadd.f32 %v5806, %v7102
      %v7104 = vpop.f32.mrf.mxu0
      %v7105 = vadd.f32 %v5802, %v7104
      %v7106 = vpop.f32.mrf.mxu0
      %v7107 = vadd.f32 %v5806, %v7106
      %7108 = vmatprep.mubr.bf16.mxu0 %v5515
      %7109 = vmatmul.mubr.bf16.gmra.mxu0 %v5514
      %v7110 = vpop.f32.mrf.mxu0
      %v7111 = vadd.f32 %v5802, %v7110
      %v7112 = vpop.f32.mrf.mxu0
      %v7113 = vadd.f32 %v5806, %v7112
      %v7114 = vpop.f32.mrf.mxu0
      %v7115 = vadd.f32 %v5802, %v7114
      %v7116 = vpop.f32.mrf.mxu0
      %v7117 = vadd.f32 %v5806, %v7116
      %7118 = vmatprep.mubr.bf16.mxu0 %v5519
      %7119 = vmatmul.mubr.bf16.gmra.mxu0 %v5518
      %v7120 = vpop.f32.mrf.mxu0
      %v7121 = vadd.f32 %v5802, %v7120
      %v7122 = vpop.f32.mrf.mxu0
      %v7123 = vadd.f32 %v5806, %v7122
      %v7124 = vpop.f32.mrf.mxu0
      %v7125 = vadd.f32 %v5802, %v7124
      %v7126 = vpop.f32.mrf.mxu0
      %v7127 = vadd.f32 %v5806, %v7126
      %7128 = vmatprep.mubr.bf16.mxu0 %v5523
      %7129 = vmatmul.mubr.bf16.gmra.mxu0 %v5522
      %v7130 = vpop.f32.mrf.mxu0
      %v7131 = vadd.f32 %v5802, %v7130
      %v7132 = vpop.f32.mrf.mxu0
      %v7133 = vadd.f32 %v5806, %v7132
      %v7134 = vpop.f32.mrf.mxu0
      %v7135 = vadd.f32 %v5802, %v7134
      %v7136 = vpop.f32.mrf.mxu0
      %v7137 = vadd.f32 %v5806, %v7136
      %7138 = vmatprep.mubr.bf16.mxu0 %v5527
      %7139 = vmatmul.mubr.bf16.gmra.mxu0 %v5526
      %v7140 = vpop.f32.mrf.mxu0
      %v7141 = vadd.f32 %v5802, %v7140
      %v7142 = vpop.f32.mrf.mxu0
      %v7143 = vadd.f32 %v5806, %v7142
      %v7144 = vpop.f32.mrf.mxu0
      %v7145 = vadd.f32 %v5802, %v7144
      %v7146 = vpop.f32.mrf.mxu0
      %v7147 = vadd.f32 %v5806, %v7146
      %7148 = vmatprep.mubr.bf16.mxu0 %v5531
      %7149 = vmatmul.mubr.bf16.gmra.mxu0 %v5530
      %v7150 = vpop.f32.mrf.mxu0
      %v7151 = vadd.f32 %v5802, %v7150
      %v7152 = vpop.f32.mrf.mxu0
      %v7153 = vadd.f32 %v5806, %v7152
      %v7154 = vpop.f32.mrf.mxu0
      %v7155 = vadd.f32 %v5802, %v7154
      %v7156 = vpop.f32.mrf.mxu0
      %v7157 = vadd.f32 %v5806, %v7156
      %7158 = vmatprep.mubr.bf16.mxu0 %v5535
      %7159 = vmatmul.mubr.bf16.gmra.mxu0 %v5534
      %v7160 = vpop.f32.mrf.mxu0
      %v7161 = vadd.f32 %v5802, %v7160
      %v7162 = vpop.f32.mrf.mxu0
      %v7163 = vadd.f32 %v5806, %v7162
      %v7164 = vpop.f32.mrf.mxu0
      %v7165 = vadd.f32 %v5802, %v7164
      %v7166 = vpop.f32.mrf.mxu0
      %v7167 = vadd.f32 %v5806, %v7166
      %7168 = vmatprep.mubr.bf16.mxu0 %v5539
      %7169 = vmatmul.mubr.bf16.gmra.mxu0 %v5538
      %v7170 = vpop.f32.mrf.mxu0
      %v7171 = vadd.f32 %v5802, %v7170
      %v7172 = vpop.f32.mrf.mxu0
      %v7173 = vadd.f32 %v5806, %v7172
      %v7174 = vpop.f32.mrf.mxu0
      %v7175 = vadd.f32 %v5802, %v7174
      %v7176 = vpop.f32.mrf.mxu0
      %v7177 = vadd.f32 %v5806, %v7176
      %7178 = vdwg.mxu0
      %7179 = vmatprep.subr.bf16.mxu0 %v6700
      %7180 = vmatpush1.bf16.msra.mxu0 %v6699
      %7181 = vmatprep.subr.bf16.mxu0 %v6693
      %7182 = vmatpush1.bf16.msra.mxu0 %v6692
      %7183 = vmatprep.subr.bf16.mxu0 %v6686
      %7184 = vmatpush1.bf16.msra.mxu0 %v6685
      %7185 = vmatprep.subr.bf16.mxu0 %v6679
      %7186 = vmatpush1.bf16.msra.mxu0 %v6678
      %7187 = vmatprep.subr.bf16.mxu0 %v6672
      %7188 = vmatpush1.bf16.msra.mxu0 %v6671
      %7189 = vmatprep.subr.bf16.mxu0 %v6665
      %7190 = vmatpush1.bf16.msra.mxu0 %v6664
      %7191 = vmatprep.subr.bf16.mxu0 %v6658
      %7192 = vmatpush1.bf16.msra.mxu0 %v6657
      %7193 = vmatprep.subr.bf16.mxu0 %v6651
      %7194 = vmatpush1.bf16.msra.mxu0 %v6650
      %7195 = vmatprep.subr.bf16.mxu0 %v6756
      %7196 = vmatpush2.bf16.msra.mxu0 %v6755
      %7197 = vmatprep.subr.bf16.mxu0 %v6749
      %7198 = vmatpush2.bf16.msra.mxu0 %v6748
      %7199 = vmatprep.subr.bf16.mxu0 %v6742
      %7200 = vmatpush2.bf16.msra.mxu0 %v6741
      %7201 = vmatprep.subr.bf16.mxu0 %v6735
      %7202 = vmatpush2.bf16.msra.mxu0 %v6734
      %7203 = vmatprep.subr.bf16.mxu0 %v6728
      %7204 = vmatpush2.bf16.msra.mxu0 %v6727
      %7205 = vmatprep.subr.bf16.mxu0 %v6721
      %7206 = vmatpush2.bf16.msra.mxu0 %v6720
      %7207 = vmatprep.subr.bf16.mxu0 %v6714
      %7208 = vmatpush2.bf16.msra.mxu0 %v6713
      %7209 = vmatprep.subr.bf16.mxu0 %v6707
      %7210 = vmatpush2.bf16.msra.mxu0 %v6706
      %7211 = vmatprep.mubr.bf16.mxu0 %v5481
      %7212 = vmatmul.mubr.bf16.gmra.mxu0 %v5480
      %v7213 = vpop.f32.mrf.mxu0
      %v7214 = vadd.f32 %v7021, %v7213
      %v7215 = vpop.f32.mrf.mxu0
      %v7216 = vadd.f32 %v7023, %v7215
      %v7217 = vpop.f32.mrf.mxu0
      %v7218 = vadd.f32 %v7025, %v7217
      %v7219 = vpop.f32.mrf.mxu0
      %v7220 = vadd.f32 %v7027, %v7219
      %7221 = vmatprep.mubr.bf16.mxu0 %v5485
      %7222 = vmatmul.mubr.bf16.gmra.mxu0 %v5484
      %v7223 = vpop.f32.mrf.mxu0
      %v7224 = vadd.f32 %v7031, %v7223
      %v7225 = vpop.f32.mrf.mxu0
      %v7226 = vadd.f32 %v7033, %v7225
      %v7227 = vpop.f32.mrf.mxu0
      %v7228 = vadd.f32 %v7035, %v7227
      %v7229 = vpop.f32.mrf.mxu0
      %v7230 = vadd.f32 %v7037, %v7229
      %7231 = vmatprep.mubr.bf16.mxu0 %v5489
      %7232 = vmatmul.mubr.bf16.gmra.mxu0 %v5488
      %v7233 = vpop.f32.mrf.mxu0
      %v7234 = vadd.f32 %v7041, %v7233
      %v7235 = vpop.f32.mrf.mxu0
      %v7236 = vadd.f32 %v7043, %v7235
      %v7237 = vpop.f32.mrf.mxu0
      %v7238 = vadd.f32 %v7045, %v7237
      %v7239 = vpop.f32.mrf.mxu0
      %v7240 = vadd.f32 %v7047, %v7239
      %7241 = vmatprep.mubr.bf16.mxu0 %v5493
      %7242 = vmatmul.mubr.bf16.gmra.mxu0 %v5492
      %v7243 = vpop.f32.mrf.mxu0
      %v7244 = vadd.f32 %v7051, %v7243
      %v7245 = vpop.f32.mrf.mxu0
      %v7246 = vadd.f32 %v7053, %v7245
      %v7247 = vpop.f32.mrf.mxu0
      %v7248 = vadd.f32 %v7055, %v7247
      %v7249 = vpop.f32.mrf.mxu0
      %v7250 = vadd.f32 %v7057, %v7249
      %7251 = vmatprep.mubr.bf16.mxu0 %v5497
      %7252 = vmatmul.mubr.bf16.gmra.mxu0 %v5496
      %v7253 = vpop.f32.mrf.mxu0
      %v7254 = vadd.f32 %v7061, %v7253
      %v7255 = vpop.f32.mrf.mxu0
      %v7256 = vadd.f32 %v7063, %v7255
      %v7257 = vpop.f32.mrf.mxu0
      %v7258 = vadd.f32 %v7065, %v7257
      %v7259 = vpop.f32.mrf.mxu0
      %v7260 = vadd.f32 %v7067, %v7259
      %7261 = vmatprep.mubr.bf16.mxu0 %v5501
      %7262 = vmatmul.mubr.bf16.gmra.mxu0 %v5500
      %v7263 = vpop.f32.mrf.mxu0
      %v7264 = vadd.f32 %v7071, %v7263
      %v7265 = vpop.f32.mrf.mxu0
      %v7266 = vadd.f32 %v7073, %v7265
      %v7267 = vpop.f32.mrf.mxu0
      %v7268 = vadd.f32 %v7075, %v7267
      %v7269 = vpop.f32.mrf.mxu0
      %v7270 = vadd.f32 %v7077, %v7269
      %7271 = vmatprep.mubr.bf16.mxu0 %v5505
      %7272 = vmatmul.mubr.bf16.gmra.mxu0 %v5504
      %v7273 = vpop.f32.mrf.mxu0
      %v7274 = vadd.f32 %v7081, %v7273
      %v7275 = vpop.f32.mrf.mxu0
      %v7276 = vadd.f32 %v7083, %v7275
      %v7277 = vpop.f32.mrf.mxu0
      %v7278 = vadd.f32 %v7085, %v7277
      %v7279 = vpop.f32.mrf.mxu0
      %v7280 = vadd.f32 %v7087, %v7279
      %7281 = vmatprep.mubr.bf16.mxu0 %v5509
      %7282 = vmatmul.mubr.bf16.gmra.mxu0 %v5508
      %v7283 = vpop.f32.mrf.mxu0
      %v7284 = vadd.f32 %v7091, %v7283
      %v7285 = vpop.f32.mrf.mxu0
      %v7286 = vadd.f32 %v7093, %v7285
      %v7287 = vpop.f32.mrf.mxu0
      %v7288 = vadd.f32 %v7095, %v7287
      %v7289 = vpop.f32.mrf.mxu0
      %v7290 = vadd.f32 %v7097, %v7289
      %7291 = vmatprep.mubr.bf16.mxu0 %v5513
      %7292 = vmatmul.mubr.bf16.gmra.mxu0 %v5512
      %v7293 = vpop.f32.mrf.mxu0
      %v7294 = vadd.f32 %v7101, %v7293
      %v7295 = vpop.f32.mrf.mxu0
      %v7296 = vadd.f32 %v7103, %v7295
      %v7297 = vpop.f32.mrf.mxu0
      %v7298 = vadd.f32 %v7105, %v7297
      %v7299 = vpop.f32.mrf.mxu0
      %v7300 = vadd.f32 %v7107, %v7299
      %7301 = vmatprep.mubr.bf16.mxu0 %v5517
      %7302 = vmatmul.mubr.bf16.gmra.mxu0 %v5516
      %v7303 = vpop.f32.mrf.mxu0
      %v7304 = vadd.f32 %v7111, %v7303
      %v7305 = vpop.f32.mrf.mxu0
      %v7306 = vadd.f32 %v7113, %v7305
      %v7307 = vpop.f32.mrf.mxu0
      %v7308 = vadd.f32 %v7115, %v7307
      %v7309 = vpop.f32.mrf.mxu0
      %v7310 = vadd.f32 %v7117, %v7309
      %7311 = vmatprep.mubr.bf16.mxu0 %v5521
      %7312 = vmatmul.mubr.bf16.gmra.mxu0 %v5520
      %v7313 = vpop.f32.mrf.mxu0
      %v7314 = vadd.f32 %v7121, %v7313
      %v7315 = vpop.f32.mrf.mxu0
      %v7316 = vadd.f32 %v7123, %v7315
      %v7317 = vpop.f32.mrf.mxu0
      %v7318 = vadd.f32 %v7125, %v7317
      %v7319 = vpop.f32.mrf.mxu0
      %v7320 = vadd.f32 %v7127, %v7319
      %7321 = vmatprep.mubr.bf16.mxu0 %v5525
      %7322 = vmatmul.mubr.bf16.gmra.mxu0 %v5524
      %v7323 = vpop.f32.mrf.mxu0
      %v7324 = vadd.f32 %v7131, %v7323
      %v7325 = vpop.f32.mrf.mxu0
      %v7326 = vadd.f32 %v7133, %v7325
      %v7327 = vpop.f32.mrf.mxu0
      %v7328 = vadd.f32 %v7135, %v7327
      %v7329 = vpop.f32.mrf.mxu0
      %v7330 = vadd.f32 %v7137, %v7329
      %7331 = vmatprep.mubr.bf16.mxu0 %v5529
      %7332 = vmatmul.mubr.bf16.gmra.mxu0 %v5528
      %v7333 = vpop.f32.mrf.mxu0
      %v7334 = vadd.f32 %v7141, %v7333
      %v7335 = vpop.f32.mrf.mxu0
      %v7336 = vadd.f32 %v7143, %v7335
      %v7337 = vpop.f32.mrf.mxu0
      %v7338 = vadd.f32 %v7145, %v7337
      %v7339 = vpop.f32.mrf.mxu0
      %v7340 = vadd.f32 %v7147, %v7339
      %7341 = vmatprep.mubr.bf16.mxu0 %v5533
      %7342 = vmatmul.mubr.bf16.gmra.mxu0 %v5532
      %v7343 = vpop.f32.mrf.mxu0
      %v7344 = vadd.f32 %v7151, %v7343
      %v7345 = vpop.f32.mrf.mxu0
      %v7346 = vadd.f32 %v7153, %v7345
      %v7347 = vpop.f32.mrf.mxu0
      %v7348 = vadd.f32 %v7155, %v7347
      %v7349 = vpop.f32.mrf.mxu0
      %v7350 = vadd.f32 %v7157, %v7349
      %7351 = vmatprep.mubr.bf16.mxu0 %v5537
      %7352 = vmatmul.mubr.bf16.gmra.mxu0 %v5536
      %v7353 = vpop.f32.mrf.mxu0
      %v7354 = vadd.f32 %v7161, %v7353
      %v7355 = vpop.f32.mrf.mxu0
      %v7356 = vadd.f32 %v7163, %v7355
      %v7357 = vpop.f32.mrf.mxu0
      %v7358 = vadd.f32 %v7165, %v7357
      %v7359 = vpop.f32.mrf.mxu0
      %v7360 = vadd.f32 %v7167, %v7359
      %7361 = vmatprep.mubr.bf16.mxu0 %v5541
      %7362 = vmatmul.mubr.bf16.gmra.mxu0 %v5540
      %v7363 = vpop.f32.mrf.mxu0
      %v7364 = vadd.f32 %v7171, %v7363
      %v7365 = vpop.f32.mrf.mxu0
      %v7366 = vadd.f32 %v7173, %v7365
      %v7367 = vpop.f32.mrf.mxu0
      %v7368 = vadd.f32 %v7175, %v7367
      %v7369 = vpop.f32.mrf.mxu0
      %v7370 = vadd.f32 %v7177, %v7369
      %7371 = vdwg.mxu0
      %7372 = vmatprep.subr.bf16.mxu0 %v6590
      %7373 = vmatpush1.bf16.msra.mxu0 %v6589
      %7374 = vmatprep.subr.bf16.mxu0 %v6583
      %7375 = vmatpush1.bf16.msra.mxu0 %v6582
      %7376 = vmatprep.subr.bf16.mxu0 %v6576
      %7377 = vmatpush1.bf16.msra.mxu0 %v6575
      %7378 = vmatprep.subr.bf16.mxu0 %v6569
      %7379 = vmatpush1.bf16.msra.mxu0 %v6568
      %7380 = vmatprep.subr.bf16.mxu0 %v6562
      %7381 = vmatpush1.bf16.msra.mxu0 %v6561
      %7382 = vmatprep.subr.bf16.mxu0 %v6555
      %7383 = vmatpush1.bf16.msra.mxu0 %v6554
      %7384 = vmatprep.subr.bf16.mxu0 %v6548
      %7385 = vmatpush1.bf16.msra.mxu0 %v6547
      %7386 = vmatprep.subr.bf16.mxu0 %v6541
      %7387 = vmatpush1.bf16.msra.mxu0 %v6540
      %7388 = vmatprep.subr.bf16.mxu0 %v6646
      %7389 = vmatpush2.bf16.msra.mxu0 %v6645
      %7390 = vmatprep.subr.bf16.mxu0 %v6639
      %7391 = vmatpush2.bf16.msra.mxu0 %v6638
      %7392 = vmatprep.subr.bf16.mxu0 %v6632
      %7393 = vmatpush2.bf16.msra.mxu0 %v6631
      %7394 = vmatprep.subr.bf16.mxu0 %v6625
      %7395 = vmatpush2.bf16.msra.mxu0 %v6624
      %7396 = vmatprep.subr.bf16.mxu0 %v6618
      %7397 = vmatpush2.bf16.msra.mxu0 %v6617
      %7398 = vmatprep.subr.bf16.mxu0 %v6611
      %7399 = vmatpush2.bf16.msra.mxu0 %v6610
      %7400 = vmatprep.subr.bf16.mxu0 %v6604
      %7401 = vmatpush2.bf16.msra.mxu0 %v6603
      %7402 = vmatprep.subr.bf16.mxu0 %v6597
      %7403 = vmatpush2.bf16.msra.mxu0 %v6596
      %7404 = vmatprep.mubr.bf16.mxu0 %v5479
      %7405 = vmatmul.mubr.bf16.gmra.mxu0 %v5478
      %v7406 = vpop.f32.mrf.mxu0
      %v7407 = vadd.f32 %v5810, %v7406
      %v7408 = vpop.f32.mrf.mxu0
      %v7409 = vadd.f32 %v5814, %v7408
      %v7410 = vpop.f32.mrf.mxu0
      %v7411 = vadd.f32 %v5810, %v7410
      %v7412 = vpop.f32.mrf.mxu0
      %v7413 = vadd.f32 %v5814, %v7412
      %7414 = vmatprep.mubr.bf16.mxu0 %v5483
      %7415 = vmatmul.mubr.bf16.gmra.mxu0 %v5482
      %v7416 = vpop.f32.mrf.mxu0
      %v7417 = vadd.f32 %v5810, %v7416
      %v7418 = vpop.f32.mrf.mxu0
      %v7419 = vadd.f32 %v5814, %v7418
      %v7420 = vpop.f32.mrf.mxu0
      %v7421 = vadd.f32 %v5810, %v7420
      %v7422 = vpop.f32.mrf.mxu0
      %v7423 = vadd.f32 %v5814, %v7422
      %7424 = vmatprep.mubr.bf16.mxu0 %v5487
      %7425 = vmatmul.mubr.bf16.gmra.mxu0 %v5486
      %v7426 = vpop.f32.mrf.mxu0
      %v7427 = vadd.f32 %v5810, %v7426
      %v7428 = vpop.f32.mrf.mxu0
      %v7429 = vadd.f32 %v5814, %v7428
      %v7430 = vpop.f32.mrf.mxu0
      %v7431 = vadd.f32 %v5810, %v7430
      %v7432 = vpop.f32.mrf.mxu0
      %v7433 = vadd.f32 %v5814, %v7432
      %7434 = vmatprep.mubr.bf16.mxu0 %v5491
      %7435 = vmatmul.mubr.bf16.gmra.mxu0 %v5490
      %v7436 = vpop.f32.mrf.mxu0
      %v7437 = vadd.f32 %v5810, %v7436
      %v7438 = vpop.f32.mrf.mxu0
      %v7439 = vadd.f32 %v5814, %v7438
      %v7440 = vpop.f32.mrf.mxu0
      %v7441 = vadd.f32 %v5810, %v7440
      %v7442 = vpop.f32.mrf.mxu0
      %v7443 = vadd.f32 %v5814, %v7442
      %7444 = vmatprep.mubr.bf16.mxu0 %v5495
      %7445 = vmatmul.mubr.bf16.gmra.mxu0 %v5494
      %v7446 = vpop.f32.mrf.mxu0
      %v7447 = vadd.f32 %v5810, %v7446
      %v7448 = vpop.f32.mrf.mxu0
      %v7449 = vadd.f32 %v5814, %v7448
      %v7450 = vpop.f32.mrf.mxu0
      %v7451 = vadd.f32 %v5810, %v7450
      %v7452 = vpop.f32.mrf.mxu0
      %v7453 = vadd.f32 %v5814, %v7452
      %7454 = vmatprep.mubr.bf16.mxu0 %v5499
      %7455 = vmatmul.mubr.bf16.gmra.mxu0 %v5498
      %v7456 = vpop.f32.mrf.mxu0
      %v7457 = vadd.f32 %v5810, %v7456
      %v7458 = vpop.f32.mrf.mxu0
      %v7459 = vadd.f32 %v5814, %v7458
      %v7460 = vpop.f32.mrf.mxu0
      %v7461 = vadd.f32 %v5810, %v7460
      %v7462 = vpop.f32.mrf.mxu0
      %v7463 = vadd.f32 %v5814, %v7462
      %7464 = vmatprep.mubr.bf16.mxu0 %v5503
      %7465 = vmatmul.mubr.bf16.gmra.mxu0 %v5502
      %v7466 = vpop.f32.mrf.mxu0
      %v7467 = vadd.f32 %v5810, %v7466
      %v7468 = vpop.f32.mrf.mxu0
      %v7469 = vadd.f32 %v5814, %v7468
      %v7470 = vpop.f32.mrf.mxu0
      %v7471 = vadd.f32 %v5810, %v7470
      %v7472 = vpop.f32.mrf.mxu0
      %v7473 = vadd.f32 %v5814, %v7472
      %7474 = vmatprep.mubr.bf16.mxu0 %v5507
      %7475 = vmatmul.mubr.bf16.gmra.mxu0 %v5506
      %v7476 = vpop.f32.mrf.mxu0
      %v7477 = vadd.f32 %v5810, %v7476
      %v7478 = vpop.f32.mrf.mxu0
      %v7479 = vadd.f32 %v5814, %v7478
      %v7480 = vpop.f32.mrf.mxu0
      %v7481 = vadd.f32 %v5810, %v7480
      %v7482 = vpop.f32.mrf.mxu0
      %v7483 = vadd.f32 %v5814, %v7482
      %7484 = vmatprep.mubr.bf16.mxu0 %v5511
      %7485 = vmatmul.mubr.bf16.gmra.mxu0 %v5510
      %v7486 = vpop.f32.mrf.mxu0
      %v7487 = vadd.f32 %v5810, %v7486
      %v7488 = vpop.f32.mrf.mxu0
      %v7489 = vadd.f32 %v5814, %v7488
      %v7490 = vpop.f32.mrf.mxu0
      %v7491 = vadd.f32 %v5810, %v7490
      %v7492 = vpop.f32.mrf.mxu0
      %v7493 = vadd.f32 %v5814, %v7492
      %7494 = vmatprep.mubr.bf16.mxu0 %v5515
      %7495 = vmatmul.mubr.bf16.gmra.mxu0 %v5514
      %v7496 = vpop.f32.mrf.mxu0
      %v7497 = vadd.f32 %v5810, %v7496
      %v7498 = vpop.f32.mrf.mxu0
      %v7499 = vadd.f32 %v5814, %v7498
      %v7500 = vpop.f32.mrf.mxu0
      %v7501 = vadd.f32 %v5810, %v7500
      %v7502 = vpop.f32.mrf.mxu0
      %v7503 = vadd.f32 %v5814, %v7502
      %7504 = vmatprep.mubr.bf16.mxu0 %v5519
      %7505 = vmatmul.mubr.bf16.gmra.mxu0 %v5518
      %v7506 = vpop.f32.mrf.mxu0
      %v7507 = vadd.f32 %v5810, %v7506
      %v7508 = vpop.f32.mrf.mxu0
      %v7509 = vadd.f32 %v5814, %v7508
      %v7510 = vpop.f32.mrf.mxu0
      %v7511 = vadd.f32 %v5810, %v7510
      %v7512 = vpop.f32.mrf.mxu0
      %v7513 = vadd.f32 %v5814, %v7512
      %7514 = vmatprep.mubr.bf16.mxu0 %v5523
      %7515 = vmatmul.mubr.bf16.gmra.mxu0 %v5522
      %v7516 = vpop.f32.mrf.mxu0
      %v7517 = vadd.f32 %v5810, %v7516
      %v7518 = vpop.f32.mrf.mxu0
      %v7519 = vadd.f32 %v5814, %v7518
      %v7520 = vpop.f32.mrf.mxu0
      %v7521 = vadd.f32 %v5810, %v7520
      %v7522 = vpop.f32.mrf.mxu0
      %v7523 = vadd.f32 %v5814, %v7522
      %7524 = vmatprep.mubr.bf16.mxu0 %v5527
      %7525 = vmatmul.mubr.bf16.gmra.mxu0 %v5526
      %v7526 = vpop.f32.mrf.mxu0
      %v7527 = vadd.f32 %v5810, %v7526
      %v7528 = vpop.f32.mrf.mxu0
      %v7529 = vadd.f32 %v5814, %v7528
      %v7530 = vpop.f32.mrf.mxu0
      %v7531 = vadd.f32 %v5810, %v7530
      %v7532 = vpop.f32.mrf.mxu0
      %v7533 = vadd.f32 %v5814, %v7532
      %7534 = vmatprep.mubr.bf16.mxu0 %v5531
      %7535 = vmatmul.mubr.bf16.gmra.mxu0 %v5530
      %v7536 = vpop.f32.mrf.mxu0
      %v7537 = vadd.f32 %v5810, %v7536
      %v7538 = vpop.f32.mrf.mxu0
      %v7539 = vadd.f32 %v5814, %v7538
      %v7540 = vpop.f32.mrf.mxu0
      %v7541 = vadd.f32 %v5810, %v7540
      %v7542 = vpop.f32.mrf.mxu0
      %v7543 = vadd.f32 %v5814, %v7542
      %7544 = vmatprep.mubr.bf16.mxu0 %v5535
      %7545 = vmatmul.mubr.bf16.gmra.mxu0 %v5534
      %v7546 = vpop.f32.mrf.mxu0
      %v7547 = vadd.f32 %v5810, %v7546
      %v7548 = vpop.f32.mrf.mxu0
      %v7549 = vadd.f32 %v5814, %v7548
      %v7550 = vpop.f32.mrf.mxu0
      %v7551 = vadd.f32 %v5810, %v7550
      %v7552 = vpop.f32.mrf.mxu0
      %v7553 = vadd.f32 %v5814, %v7552
      %7554 = vmatprep.mubr.bf16.mxu0 %v5539
      %7555 = vmatmul.mubr.bf16.gmra.mxu0 %v5538
      %v7556 = vpop.f32.mrf.mxu0
      %v7557 = vadd.f32 %v5810, %v7556
      %v7558 = vpop.f32.mrf.mxu0
      %v7559 = vadd.f32 %v5814, %v7558
      %v7560 = vpop.f32.mrf.mxu0
      %v7561 = vadd.f32 %v5810, %v7560
      %v7562 = vpop.f32.mrf.mxu0
      %v7563 = vadd.f32 %v5814, %v7562
      %7564 = vdwg.mxu0
      %7565 = vmatprep.subr.bf16.mxu0 %v6702
      %7566 = vmatpush1.bf16.msra.mxu0 %v6701
      %7567 = vmatprep.subr.bf16.mxu0 %v6695
      %7568 = vmatpush1.bf16.msra.mxu0 %v6694
      %7569 = vmatprep.subr.bf16.mxu0 %v6688
      %7570 = vmatpush1.bf16.msra.mxu0 %v6687
      %7571 = vmatprep.subr.bf16.mxu0 %v6681
      %7572 = vmatpush1.bf16.msra.mxu0 %v6680
      %7573 = vmatprep.subr.bf16.mxu0 %v6674
      %7574 = vmatpush1.bf16.msra.mxu0 %v6673
      %7575 = vmatprep.subr.bf16.mxu0 %v6667
      %7576 = vmatpush1.bf16.msra.mxu0 %v6666
      %7577 = vmatprep.subr.bf16.mxu0 %v6660
      %7578 = vmatpush1.bf16.msra.mxu0 %v6659
      %7579 = vmatprep.subr.bf16.mxu0 %v6653
      %7580 = vmatpush1.bf16.msra.mxu0 %v6652
      %7581 = vmatprep.subr.bf16.mxu0 %v6758
      %7582 = vmatpush2.bf16.msra.mxu0 %v6757
      %7583 = vmatprep.subr.bf16.mxu0 %v6751
      %7584 = vmatpush2.bf16.msra.mxu0 %v6750
      %7585 = vmatprep.subr.bf16.mxu0 %v6744
      %7586 = vmatpush2.bf16.msra.mxu0 %v6743
      %7587 = vmatprep.subr.bf16.mxu0 %v6737
      %7588 = vmatpush2.bf16.msra.mxu0 %v6736
      %7589 = vmatprep.subr.bf16.mxu0 %v6730
      %7590 = vmatpush2.bf16.msra.mxu0 %v6729
      %7591 = vmatprep.subr.bf16.mxu0 %v6723
      %7592 = vmatpush2.bf16.msra.mxu0 %v6722
      %7593 = vmatprep.subr.bf16.mxu0 %v6716
      %7594 = vmatpush2.bf16.msra.mxu0 %v6715
      %7595 = vmatprep.subr.bf16.mxu0 %v6709
      %7596 = vmatpush2.bf16.msra.mxu0 %v6708
      %7597 = vmatprep.mubr.bf16.mxu0 %v5481
      %7598 = vmatmul.mubr.bf16.gmra.mxu0 %v5480
      %v7599 = vpop.f32.mrf.mxu0
      %v7600 = vadd.f32 %v7407, %v7599
      %v7601 = vpop.f32.mrf.mxu0
      %v7602 = vadd.f32 %v7409, %v7601
      %v7603 = vpop.f32.mrf.mxu0
      %v7604 = vadd.f32 %v7411, %v7603
      %v7605 = vpop.f32.mrf.mxu0
      %v7606 = vadd.f32 %v7413, %v7605
      %7607 = vmatprep.mubr.bf16.mxu0 %v5485
      %7608 = vmatmul.mubr.bf16.gmra.mxu0 %v5484
      %v7609 = vpop.f32.mrf.mxu0
      %v7610 = vadd.f32 %v7417, %v7609
      %v7611 = vpop.f32.mrf.mxu0
      %v7612 = vadd.f32 %v7419, %v7611
      %v7613 = vpop.f32.mrf.mxu0
      %v7614 = vadd.f32 %v7421, %v7613
      %v7615 = vpop.f32.mrf.mxu0
      %v7616 = vadd.f32 %v7423, %v7615
      %7617 = vmatprep.mubr.bf16.mxu0 %v5489
      %7618 = vmatmul.mubr.bf16.gmra.mxu0 %v5488
      %v7619 = vpop.f32.mrf.mxu0
      %v7620 = vadd.f32 %v7427, %v7619
      %v7621 = vpop.f32.mrf.mxu0
      %v7622 = vadd.f32 %v7429, %v7621
      %v7623 = vpop.f32.mrf.mxu0
      %v7624 = vadd.f32 %v7431, %v7623
      %v7625 = vpop.f32.mrf.mxu0
      %v7626 = vadd.f32 %v7433, %v7625
      %7627 = vmatprep.mubr.bf16.mxu0 %v5493
      %7628 = vmatmul.mubr.bf16.gmra.mxu0 %v5492
      %v7629 = vpop.f32.mrf.mxu0
      %v7630 = vadd.f32 %v7437, %v7629
      %v7631 = vpop.f32.mrf.mxu0
      %v7632 = vadd.f32 %v7439, %v7631
      %v7633 = vpop.f32.mrf.mxu0
      %v7634 = vadd.f32 %v7441, %v7633
      %v7635 = vpop.f32.mrf.mxu0
      %v7636 = vadd.f32 %v7443, %v7635
      %7637 = vmatprep.mubr.bf16.mxu0 %v5497
      %7638 = vmatmul.mubr.bf16.gmra.mxu0 %v5496
      %v7639 = vpop.f32.mrf.mxu0
      %v7640 = vadd.f32 %v7447, %v7639
      %v7641 = vpop.f32.mrf.mxu0
      %v7642 = vadd.f32 %v7449, %v7641
      %v7643 = vpop.f32.mrf.mxu0
      %v7644 = vadd.f32 %v7451, %v7643
      %v7645 = vpop.f32.mrf.mxu0
      %v7646 = vadd.f32 %v7453, %v7645
      %7647 = vmatprep.mubr.bf16.mxu0 %v5501
      %7648 = vmatmul.mubr.bf16.gmra.mxu0 %v5500
      %v7649 = vpop.f32.mrf.mxu0
      %v7650 = vadd.f32 %v7457, %v7649
      %v7651 = vpop.f32.mrf.mxu0
      %v7652 = vadd.f32 %v7459, %v7651
      %v7653 = vpop.f32.mrf.mxu0
      %v7654 = vadd.f32 %v7461, %v7653
      %v7655 = vpop.f32.mrf.mxu0
      %v7656 = vadd.f32 %v7463, %v7655
      %7657 = vmatprep.mubr.bf16.mxu0 %v5505
      %7658 = vmatmul.mubr.bf16.gmra.mxu0 %v5504
      %v7659 = vpop.f32.mrf.mxu0
      %v7660 = vadd.f32 %v7467, %v7659
      %v7661 = vpop.f32.mrf.mxu0
      %v7662 = vadd.f32 %v7469, %v7661
      %v7663 = vpop.f32.mrf.mxu0
      %v7664 = vadd.f32 %v7471, %v7663
      %v7665 = vpop.f32.mrf.mxu0
      %v7666 = vadd.f32 %v7473, %v7665
      %7667 = vmatprep.mubr.bf16.mxu0 %v5509
      %7668 = vmatmul.mubr.bf16.gmra.mxu0 %v5508
      %v7669 = vpop.f32.mrf.mxu0
      %v7670 = vadd.f32 %v7477, %v7669
      %v7671 = vpop.f32.mrf.mxu0
      %v7672 = vadd.f32 %v7479, %v7671
      %v7673 = vpop.f32.mrf.mxu0
      %v7674 = vadd.f32 %v7481, %v7673
      %v7675 = vpop.f32.mrf.mxu0
      %v7676 = vadd.f32 %v7483, %v7675
      %7677 = vmatprep.mubr.bf16.mxu0 %v5513
      %7678 = vmatmul.mubr.bf16.gmra.mxu0 %v5512
      %v7679 = vpop.f32.mrf.mxu0
      %v7680 = vadd.f32 %v7487, %v7679
      %v7681 = vpop.f32.mrf.mxu0
      %v7682 = vadd.f32 %v7489, %v7681
      %v7683 = vpop.f32.mrf.mxu0
      %v7684 = vadd.f32 %v7491, %v7683
      %v7685 = vpop.f32.mrf.mxu0
      %v7686 = vadd.f32 %v7493, %v7685
      %7687 = vmatprep.mubr.bf16.mxu0 %v5517
      %7688 = vmatmul.mubr.bf16.gmra.mxu0 %v5516
      %v7689 = vpop.f32.mrf.mxu0
      %v7690 = vadd.f32 %v7497, %v7689
      %v7691 = vpop.f32.mrf.mxu0
      %v7692 = vadd.f32 %v7499, %v7691
      %v7693 = vpop.f32.mrf.mxu0
      %v7694 = vadd.f32 %v7501, %v7693
      %v7695 = vpop.f32.mrf.mxu0
      %v7696 = vadd.f32 %v7503, %v7695
      %7697 = vmatprep.mubr.bf16.mxu0 %v5521
      %7698 = vmatmul.mubr.bf16.gmra.mxu0 %v5520
      %v7699 = vpop.f32.mrf.mxu0
      %v7700 = vadd.f32 %v7507, %v7699
      %v7701 = vpop.f32.mrf.mxu0
      %v7702 = vadd.f32 %v7509, %v7701
      %v7703 = vpop.f32.mrf.mxu0
      %v7704 = vadd.f32 %v7511, %v7703
      %v7705 = vpop.f32.mrf.mxu0
      %v7706 = vadd.f32 %v7513, %v7705
      %7707 = vmatprep.mubr.bf16.mxu0 %v5525
      %7708 = vmatmul.mubr.bf16.gmra.mxu0 %v5524
      %v7709 = vpop.f32.mrf.mxu0
      %v7710 = vadd.f32 %v7517, %v7709
      %v7711 = vpop.f32.mrf.mxu0
      %v7712 = vadd.f32 %v7519, %v7711
      %v7713 = vpop.f32.mrf.mxu0
      %v7714 = vadd.f32 %v7521, %v7713
      %v7715 = vpop.f32.mrf.mxu0
      %v7716 = vadd.f32 %v7523, %v7715
      %7717 = vmatprep.mubr.bf16.mxu0 %v5529
      %7718 = vmatmul.mubr.bf16.gmra.mxu0 %v5528
      %v7719 = vpop.f32.mrf.mxu0
      %v7720 = vadd.f32 %v7527, %v7719
      %v7721 = vpop.f32.mrf.mxu0
      %v7722 = vadd.f32 %v7529, %v7721
      %v7723 = vpop.f32.mrf.mxu0
      %v7724 = vadd.f32 %v7531, %v7723
      %v7725 = vpop.f32.mrf.mxu0
      %v7726 = vadd.f32 %v7533, %v7725
      %7727 = vmatprep.mubr.bf16.mxu0 %v5533
      %7728 = vmatmul.mubr.bf16.gmra.mxu0 %v5532
      %v7729 = vpop.f32.mrf.mxu0
      %v7730 = vadd.f32 %v7537, %v7729
      %v7731 = vpop.f32.mrf.mxu0
      %v7732 = vadd.f32 %v7539, %v7731
      %v7733 = vpop.f32.mrf.mxu0
      %v7734 = vadd.f32 %v7541, %v7733
      %v7735 = vpop.f32.mrf.mxu0
      %v7736 = vadd.f32 %v7543, %v7735
      %7737 = vmatprep.mubr.bf16.mxu0 %v5537
      %7738 = vmatmul.mubr.bf16.gmra.mxu0 %v5536
      %v7739 = vpop.f32.mrf.mxu0
      %v7740 = vadd.f32 %v7547, %v7739
      %v7741 = vpop.f32.mrf.mxu0
      %v7742 = vadd.f32 %v7549, %v7741
      %v7743 = vpop.f32.mrf.mxu0
      %v7744 = vadd.f32 %v7551, %v7743
      %v7745 = vpop.f32.mrf.mxu0
      %v7746 = vadd.f32 %v7553, %v7745
      %7747 = vmatprep.mubr.bf16.mxu0 %v5541
      %7748 = vmatmul.mubr.bf16.gmra.mxu0 %v5540
      %v7749 = vpop.f32.mrf.mxu0
      %v7750 = vadd.f32 %v7557, %v7749
      %v7751 = vpop.f32.mrf.mxu0
      %v7752 = vadd.f32 %v7559, %v7751
      %v7753 = vpop.f32.mrf.mxu0
      %v7754 = vadd.f32 %v7561, %v7753
      %v7755 = vpop.f32.mrf.mxu0
      %v7756 = vadd.f32 %v7563, %v7755
      %7757 = vdwg.mxu0
      %7758 = vmatprep.subr.bf16.mxu0 %v6592
      %7759 = vmatpush1.bf16.msra.mxu0 %v6591
      %7760 = vmatprep.subr.bf16.mxu0 %v6585
      %7761 = vmatpush1.bf16.msra.mxu0 %v6584
      %7762 = vmatprep.subr.bf16.mxu0 %v6578
      %7763 = vmatpush1.bf16.msra.mxu0 %v6577
      %7764 = vmatprep.subr.bf16.mxu0 %v6571
      %7765 = vmatpush1.bf16.msra.mxu0 %v6570
      %7766 = vmatprep.subr.bf16.mxu0 %v6564
      %7767 = vmatpush1.bf16.msra.mxu0 %v6563
      %7768 = vmatprep.subr.bf16.mxu0 %v6557
      %7769 = vmatpush1.bf16.msra.mxu0 %v6556
      %7770 = vmatprep.subr.bf16.mxu0 %v6550
      %7771 = vmatpush1.bf16.msra.mxu0 %v6549
      %7772 = vmatprep.subr.bf16.mxu0 %v6543
      %7773 = vmatpush1.bf16.msra.mxu0 %v6542
      %7774 = vmatprep.subr.bf16.mxu0 %v6648
      %7775 = vmatpush2.bf16.msra.mxu0 %v6647
      %7776 = vmatprep.subr.bf16.mxu0 %v6641
      %7777 = vmatpush2.bf16.msra.mxu0 %v6640
      %7778 = vmatprep.subr.bf16.mxu0 %v6634
      %7779 = vmatpush2.bf16.msra.mxu0 %v6633
      %7780 = vmatprep.subr.bf16.mxu0 %v6627
      %7781 = vmatpush2.bf16.msra.mxu0 %v6626
      %7782 = vmatprep.subr.bf16.mxu0 %v6620
      %7783 = vmatpush2.bf16.msra.mxu0 %v6619
      %7784 = vmatprep.subr.bf16.mxu0 %v6613
      %7785 = vmatpush2.bf16.msra.mxu0 %v6612
      %7786 = vmatprep.subr.bf16.mxu0 %v6606
      %7787 = vmatpush2.bf16.msra.mxu0 %v6605
      %7788 = vmatprep.subr.bf16.mxu0 %v6599
      %7789 = vmatpush2.bf16.msra.mxu0 %v6598
      %7790 = vmatprep.mubr.bf16.mxu0 %v5479
      %7791 = vmatmul.mubr.bf16.gmra.mxu0 %v5478
      %v7792 = vpop.f32.mrf.mxu0
      %v7793 = vadd.f32 %v5818, %v7792
      %v7794 = vpop.f32.mrf.mxu0
      %v7795 = vadd.f32 %v5822, %v7794
      %v7796 = vpop.f32.mrf.mxu0
      %v7797 = vadd.f32 %v5818, %v7796
      %v7798 = vpop.f32.mrf.mxu0
      %v7799 = vadd.f32 %v5822, %v7798
      %7800 = vmatprep.mubr.bf16.mxu0 %v5483
      %7801 = vmatmul.mubr.bf16.gmra.mxu0 %v5482
      %v7802 = vpop.f32.mrf.mxu0
      %v7803 = vadd.f32 %v5818, %v7802
      %v7804 = vpop.f32.mrf.mxu0
      %v7805 = vadd.f32 %v5822, %v7804
      %v7806 = vpop.f32.mrf.mxu0
      %v7807 = vadd.f32 %v5818, %v7806
      %v7808 = vpop.f32.mrf.mxu0
      %v7809 = vadd.f32 %v5822, %v7808
      %7810 = vmatprep.mubr.bf16.mxu0 %v5487
      %7811 = vmatmul.mubr.bf16.gmra.mxu0 %v5486
      %v7812 = vpop.f32.mrf.mxu0
      %v7813 = vadd.f32 %v5818, %v7812
      %v7814 = vpop.f32.mrf.mxu0
      %v7815 = vadd.f32 %v5822, %v7814
      %v7816 = vpop.f32.mrf.mxu0
      %v7817 = vadd.f32 %v5818, %v7816
      %v7818 = vpop.f32.mrf.mxu0
      %v7819 = vadd.f32 %v5822, %v7818
      %7820 = vmatprep.mubr.bf16.mxu0 %v5491
      %7821 = vmatmul.mubr.bf16.gmra.mxu0 %v5490
      %v7822 = vpop.f32.mrf.mxu0
      %v7823 = vadd.f32 %v5818, %v7822
      %v7824 = vpop.f32.mrf.mxu0
      %v7825 = vadd.f32 %v5822, %v7824
      %v7826 = vpop.f32.mrf.mxu0
      %v7827 = vadd.f32 %v5818, %v7826
      %v7828 = vpop.f32.mrf.mxu0
      %v7829 = vadd.f32 %v5822, %v7828
      %7830 = vmatprep.mubr.bf16.mxu0 %v5495
      %7831 = vmatmul.mubr.bf16.gmra.mxu0 %v5494
      %v7832 = vpop.f32.mrf.mxu0
      %v7833 = vadd.f32 %v5818, %v7832
      %v7834 = vpop.f32.mrf.mxu0
      %v7835 = vadd.f32 %v5822, %v7834
      %v7836 = vpop.f32.mrf.mxu0
      %v7837 = vadd.f32 %v5818, %v7836
      %v7838 = vpop.f32.mrf.mxu0
      %v7839 = vadd.f32 %v5822, %v7838
      %7840 = vmatprep.mubr.bf16.mxu0 %v5499
      %7841 = vmatmul.mubr.bf16.gmra.mxu0 %v5498
      %v7842 = vpop.f32.mrf.mxu0
      %v7843 = vadd.f32 %v5818, %v7842
      %v7844 = vpop.f32.mrf.mxu0
      %v7845 = vadd.f32 %v5822, %v7844
      %v7846 = vpop.f32.mrf.mxu0
      %v7847 = vadd.f32 %v5818, %v7846
      %v7848 = vpop.f32.mrf.mxu0
      %v7849 = vadd.f32 %v5822, %v7848
      %7850 = vmatprep.mubr.bf16.mxu0 %v5503
      %7851 = vmatmul.mubr.bf16.gmra.mxu0 %v5502
      %v7852 = vpop.f32.mrf.mxu0
      %v7853 = vadd.f32 %v5818, %v7852
      %v7854 = vpop.f32.mrf.mxu0
      %v7855 = vadd.f32 %v5822, %v7854
      %v7856 = vpop.f32.mrf.mxu0
      %v7857 = vadd.f32 %v5818, %v7856
      %v7858 = vpop.f32.mrf.mxu0
      %v7859 = vadd.f32 %v5822, %v7858
      %7860 = vmatprep.mubr.bf16.mxu0 %v5507
      %7861 = vmatmul.mubr.bf16.gmra.mxu0 %v5506
      %v7862 = vpop.f32.mrf.mxu0
      %v7863 = vadd.f32 %v5818, %v7862
      %v7864 = vpop.f32.mrf.mxu0
      %v7865 = vadd.f32 %v5822, %v7864
      %v7866 = vpop.f32.mrf.mxu0
      %v7867 = vadd.f32 %v5818, %v7866
      %v7868 = vpop.f32.mrf.mxu0
      %v7869 = vadd.f32 %v5822, %v7868
      %7870 = vmatprep.mubr.bf16.mxu0 %v5511
      %7871 = vmatmul.mubr.bf16.gmra.mxu0 %v5510
      %v7872 = vpop.f32.mrf.mxu0
      %v7873 = vadd.f32 %v5818, %v7872
      %v7874 = vpop.f32.mrf.mxu0
      %v7875 = vadd.f32 %v5822, %v7874
      %v7876 = vpop.f32.mrf.mxu0
      %v7877 = vadd.f32 %v5818, %v7876
      %v7878 = vpop.f32.mrf.mxu0
      %v7879 = vadd.f32 %v5822, %v7878
      %7880 = vmatprep.mubr.bf16.mxu0 %v5515
      %7881 = vmatmul.mubr.bf16.gmra.mxu0 %v5514
      %v7882 = vpop.f32.mrf.mxu0
      %v7883 = vadd.f32 %v5818, %v7882
      %v7884 = vpop.f32.mrf.mxu0
      %v7885 = vadd.f32 %v5822, %v7884
      %v7886 = vpop.f32.mrf.mxu0
      %v7887 = vadd.f32 %v5818, %v7886
      %v7888 = vpop.f32.mrf.mxu0
      %v7889 = vadd.f32 %v5822, %v7888
      %7890 = vmatprep.mubr.bf16.mxu0 %v5519
      %7891 = vmatmul.mubr.bf16.gmra.mxu0 %v5518
      %v7892 = vpop.f32.mrf.mxu0
      %v7893 = vadd.f32 %v5818, %v7892
      %v7894 = vpop.f32.mrf.mxu0
      %v7895 = vadd.f32 %v5822, %v7894
      %v7896 = vpop.f32.mrf.mxu0
      %v7897 = vadd.f32 %v5818, %v7896
      %v7898 = vpop.f32.mrf.mxu0
      %v7899 = vadd.f32 %v5822, %v7898
      %7900 = vmatprep.mubr.bf16.mxu0 %v5523
      %7901 = vmatmul.mubr.bf16.gmra.mxu0 %v5522
      %v7902 = vpop.f32.mrf.mxu0
      %v7903 = vadd.f32 %v5818, %v7902
      %v7904 = vpop.f32.mrf.mxu0
      %v7905 = vadd.f32 %v5822, %v7904
      %v7906 = vpop.f32.mrf.mxu0
      %v7907 = vadd.f32 %v5818, %v7906
      %v7908 = vpop.f32.mrf.mxu0
      %v7909 = vadd.f32 %v5822, %v7908
      %7910 = vmatprep.mubr.bf16.mxu0 %v5527
      %7911 = vmatmul.mubr.bf16.gmra.mxu0 %v5526
      %v7912 = vpop.f32.mrf.mxu0
      %v7913 = vadd.f32 %v5818, %v7912
      %v7914 = vpop.f32.mrf.mxu0
      %v7915 = vadd.f32 %v5822, %v7914
      %v7916 = vpop.f32.mrf.mxu0
      %v7917 = vadd.f32 %v5818, %v7916
      %v7918 = vpop.f32.mrf.mxu0
      %v7919 = vadd.f32 %v5822, %v7918
      %7920 = vmatprep.mubr.bf16.mxu0 %v5531
      %7921 = vmatmul.mubr.bf16.gmra.mxu0 %v5530
      %v7922 = vpop.f32.mrf.mxu0
      %v7923 = vadd.f32 %v5818, %v7922
      %v7924 = vpop.f32.mrf.mxu0
      %v7925 = vadd.f32 %v5822, %v7924
      %v7926 = vpop.f32.mrf.mxu0
      %v7927 = vadd.f32 %v5818, %v7926
      %v7928 = vpop.f32.mrf.mxu0
      %v7929 = vadd.f32 %v5822, %v7928
      %7930 = vmatprep.mubr.bf16.mxu0 %v5535
      %7931 = vmatmul.mubr.bf16.gmra.mxu0 %v5534
      %v7932 = vpop.f32.mrf.mxu0
      %v7933 = vadd.f32 %v5818, %v7932
      %v7934 = vpop.f32.mrf.mxu0
      %v7935 = vadd.f32 %v5822, %v7934
      %v7936 = vpop.f32.mrf.mxu0
      %v7937 = vadd.f32 %v5818, %v7936
      %v7938 = vpop.f32.mrf.mxu0
      %v7939 = vadd.f32 %v5822, %v7938
      %7940 = vmatprep.mubr.bf16.mxu0 %v5539
      %7941 = vmatmul.mubr.bf16.gmra.mxu0 %v5538
      %v7942 = vpop.f32.mrf.mxu0
      %v7943 = vadd.f32 %v5818, %v7942
      %v7944 = vpop.f32.mrf.mxu0
      %v7945 = vadd.f32 %v5822, %v7944
      %v7946 = vpop.f32.mrf.mxu0
      %v7947 = vadd.f32 %v5818, %v7946
      %v7948 = vpop.f32.mrf.mxu0
      %v7949 = vadd.f32 %v5822, %v7948
      %7950 = vdwg.mxu0
      %7951 = vmatprep.subr.bf16.mxu0 %v6704
      %7952 = vmatpush1.bf16.msra.mxu0 %v6703
      %7953 = vmatprep.subr.bf16.mxu0 %v6697
      %7954 = vmatpush1.bf16.msra.mxu0 %v6696
      %7955 = vmatprep.subr.bf16.mxu0 %v6690
      %7956 = vmatpush1.bf16.msra.mxu0 %v6689
      %7957 = vmatprep.subr.bf16.mxu0 %v6683
      %7958 = vmatpush1.bf16.msra.mxu0 %v6682
      %7959 = vmatprep.subr.bf16.mxu0 %v6676
      %7960 = vmatpush1.bf16.msra.mxu0 %v6675
      %7961 = vmatprep.subr.bf16.mxu0 %v6669
      %7962 = vmatpush1.bf16.msra.mxu0 %v6668
      %7963 = vmatprep.subr.bf16.mxu0 %v6662
      %7964 = vmatpush1.bf16.msra.mxu0 %v6661
      %7965 = vmatprep.subr.bf16.mxu0 %v6655
      %7966 = vmatpush1.bf16.msra.mxu0 %v6654
      %7967 = vmatprep.subr.bf16.mxu0 %v6760
      %7968 = vmatpush2.bf16.msra.mxu0 %v6759
      %7969 = vmatprep.subr.bf16.mxu0 %v6753
      %7970 = vmatpush2.bf16.msra.mxu0 %v6752
      %7971 = vmatprep.subr.bf16.mxu0 %v6746
      %7972 = vmatpush2.bf16.msra.mxu0 %v6745
      %7973 = vmatprep.subr.bf16.mxu0 %v6739
      %7974 = vmatpush2.bf16.msra.mxu0 %v6738
      %7975 = vmatprep.subr.bf16.mxu0 %v6732
      %7976 = vmatpush2.bf16.msra.mxu0 %v6731
      %7977 = vmatprep.subr.bf16.mxu0 %v6725
      %7978 = vmatpush2.bf16.msra.mxu0 %v6724
      %7979 = vmatprep.subr.bf16.mxu0 %v6718
      %7980 = vmatpush2.bf16.msra.mxu0 %v6717
      %7981 = vmatprep.subr.bf16.mxu0 %v6711
      %7982 = vmatpush2.bf16.msra.mxu0 %v6710
      %7983 = vmatprep.mubr.bf16.mxu0 %v5481
      %7984 = vmatmul.mubr.bf16.gmra.mxu0 %v5480
      %v7985 = vpop.f32.mrf.mxu0
      %v7986 = vadd.f32 %v7793, %v7985
      %v7987 = vpop.f32.mrf.mxu0
      %v7988 = vadd.f32 %v7795, %v7987
      %v7989 = vpop.f32.mrf.mxu0
      %v7990 = vadd.f32 %v7797, %v7989
      %v7991 = vpop.f32.mrf.mxu0
      %v7992 = vadd.f32 %v7799, %v7991
      %7993 = vmatprep.mubr.bf16.mxu0 %v5485
      %7994 = vmatmul.mubr.bf16.gmra.mxu0 %v5484
      %v7995 = vpop.f32.mrf.mxu0
      %v7996 = vadd.f32 %v7803, %v7995
      %v7997 = vpop.f32.mrf.mxu0
      %v7998 = vadd.f32 %v7805, %v7997
      %v7999 = vpop.f32.mrf.mxu0
      %v8000 = vadd.f32 %v7807, %v7999
      %v8001 = vpop.f32.mrf.mxu0
      %v8002 = vadd.f32 %v7809, %v8001
      %8003 = vmatprep.mubr.bf16.mxu0 %v5489
      %8004 = vmatmul.mubr.bf16.gmra.mxu0 %v5488
      %v8005 = vpop.f32.mrf.mxu0
      %v8006 = vadd.f32 %v7813, %v8005
      %v8007 = vpop.f32.mrf.mxu0
      %v8008 = vadd.f32 %v7815, %v8007
      %v8009 = vpop.f32.mrf.mxu0
      %v8010 = vadd.f32 %v7817, %v8009
      %v8011 = vpop.f32.mrf.mxu0
      %v8012 = vadd.f32 %v7819, %v8011
      %8013 = vmatprep.mubr.bf16.mxu0 %v5493
      %8014 = vmatmul.mubr.bf16.gmra.mxu0 %v5492
      %v8015 = vpop.f32.mrf.mxu0
      %v8016 = vadd.f32 %v7823, %v8015
      %v8017 = vpop.f32.mrf.mxu0
      %v8018 = vadd.f32 %v7825, %v8017
      %v8019 = vpop.f32.mrf.mxu0
      %v8020 = vadd.f32 %v7827, %v8019
      %v8021 = vpop.f32.mrf.mxu0
      %v8022 = vadd.f32 %v7829, %v8021
      %8023 = vmatprep.mubr.bf16.mxu0 %v5497
      %8024 = vmatmul.mubr.bf16.gmra.mxu0 %v5496
      %v8025 = vpop.f32.mrf.mxu0
      %v8026 = vadd.f32 %v7833, %v8025
      %v8027 = vpop.f32.mrf.mxu0
      %v8028 = vadd.f32 %v7835, %v8027
      %v8029 = vpop.f32.mrf.mxu0
      %v8030 = vadd.f32 %v7837, %v8029
      %v8031 = vpop.f32.mrf.mxu0
      %v8032 = vadd.f32 %v7839, %v8031
      %8033 = vmatprep.mubr.bf16.mxu0 %v5501
      %8034 = vmatmul.mubr.bf16.gmra.mxu0 %v5500
      %v8035 = vpop.f32.mrf.mxu0
      %v8036 = vadd.f32 %v7843, %v8035
      %v8037 = vpop.f32.mrf.mxu0
      %v8038 = vadd.f32 %v7845, %v8037
      %v8039 = vpop.f32.mrf.mxu0
      %v8040 = vadd.f32 %v7847, %v8039
      %v8041 = vpop.f32.mrf.mxu0
      %v8042 = vadd.f32 %v7849, %v8041
      %8043 = vmatprep.mubr.bf16.mxu0 %v5505
      %8044 = vmatmul.mubr.bf16.gmra.mxu0 %v5504
      %v8045 = vpop.f32.mrf.mxu0
      %v8046 = vadd.f32 %v7853, %v8045
      %v8047 = vpop.f32.mrf.mxu0
      %v8048 = vadd.f32 %v7855, %v8047
      %v8049 = vpop.f32.mrf.mxu0
      %v8050 = vadd.f32 %v7857, %v8049
      %v8051 = vpop.f32.mrf.mxu0
      %v8052 = vadd.f32 %v7859, %v8051
      %8053 = vmatprep.mubr.bf16.mxu0 %v5509
      %8054 = vmatmul.mubr.bf16.gmra.mxu0 %v5508
      %v8055 = vpop.f32.mrf.mxu0
      %v8056 = vadd.f32 %v7863, %v8055
      %v8057 = vpop.f32.mrf.mxu0
      %v8058 = vadd.f32 %v7865, %v8057
      %v8059 = vpop.f32.mrf.mxu0
      %v8060 = vadd.f32 %v7867, %v8059
      %v8061 = vpop.f32.mrf.mxu0
      %v8062 = vadd.f32 %v7869, %v8061
      %8063 = vmatprep.mubr.bf16.mxu0 %v5513
      %8064 = vmatmul.mubr.bf16.gmra.mxu0 %v5512
      %v8065 = vpop.f32.mrf.mxu0
      %v8066 = vadd.f32 %v7873, %v8065
      %v8067 = vpop.f32.mrf.mxu0
      %v8068 = vadd.f32 %v7875, %v8067
      %v8069 = vpop.f32.mrf.mxu0
      %v8070 = vadd.f32 %v7877, %v8069
      %v8071 = vpop.f32.mrf.mxu0
      %v8072 = vadd.f32 %v7879, %v8071
      %8073 = vmatprep.mubr.bf16.mxu0 %v5517
      %8074 = vmatmul.mubr.bf16.gmra.mxu0 %v5516
      %v8075 = vpop.f32.mrf.mxu0
      %v8076 = vadd.f32 %v7883, %v8075
      %v8077 = vpop.f32.mrf.mxu0
      %v8078 = vadd.f32 %v7885, %v8077
      %v8079 = vpop.f32.mrf.mxu0
      %v8080 = vadd.f32 %v7887, %v8079
      %v8081 = vpop.f32.mrf.mxu0
      %v8082 = vadd.f32 %v7889, %v8081
      %8083 = vmatprep.mubr.bf16.mxu0 %v5521
      %8084 = vmatmul.mubr.bf16.gmra.mxu0 %v5520
      %v8085 = vpop.f32.mrf.mxu0
      %v8086 = vadd.f32 %v7893, %v8085
      %v8087 = vpop.f32.mrf.mxu0
      %v8088 = vadd.f32 %v7895, %v8087
      %v8089 = vpop.f32.mrf.mxu0
      %v8090 = vadd.f32 %v7897, %v8089
      %v8091 = vpop.f32.mrf.mxu0
      %v8092 = vadd.f32 %v7899, %v8091
      %8093 = vmatprep.mubr.bf16.mxu0 %v5525
      %8094 = vmatmul.mubr.bf16.gmra.mxu0 %v5524
      %v8095 = vpop.f32.mrf.mxu0
      %v8096 = vadd.f32 %v7903, %v8095
      %v8097 = vpop.f32.mrf.mxu0
      %v8098 = vadd.f32 %v7905, %v8097
      %v8099 = vpop.f32.mrf.mxu0
      %v8100 = vadd.f32 %v7907, %v8099
      %v8101 = vpop.f32.mrf.mxu0
      %v8102 = vadd.f32 %v7909, %v8101
      %8103 = vmatprep.mubr.bf16.mxu0 %v5529
      %8104 = vmatmul.mubr.bf16.gmra.mxu0 %v5528
      %v8105 = vpop.f32.mrf.mxu0
      %v8106 = vadd.f32 %v7913, %v8105
      %v8107 = vpop.f32.mrf.mxu0
      %v8108 = vadd.f32 %v7915, %v8107
      %v8109 = vpop.f32.mrf.mxu0
      %v8110 = vadd.f32 %v7917, %v8109
      %v8111 = vpop.f32.mrf.mxu0
      %v8112 = vadd.f32 %v7919, %v8111
      %8113 = vmatprep.mubr.bf16.mxu0 %v5533
      %8114 = vmatmul.mubr.bf16.gmra.mxu0 %v5532
      %v8115 = vpop.f32.mrf.mxu0
      %v8116 = vadd.f32 %v7923, %v8115
      %v8117 = vpop.f32.mrf.mxu0
      %v8118 = vadd.f32 %v7925, %v8117
      %v8119 = vpop.f32.mrf.mxu0
      %v8120 = vadd.f32 %v7927, %v8119
      %v8121 = vpop.f32.mrf.mxu0
      %v8122 = vadd.f32 %v7929, %v8121
      %8123 = vmatprep.mubr.bf16.mxu0 %v5537
      %8124 = vmatmul.mubr.bf16.gmra.mxu0 %v5536
      %v8125 = vpop.f32.mrf.mxu0
      %v8126 = vadd.f32 %v7933, %v8125
      %v8127 = vpop.f32.mrf.mxu0
      %v8128 = vadd.f32 %v7935, %v8127
      %v8129 = vpop.f32.mrf.mxu0
      %v8130 = vadd.f32 %v7937, %v8129
      %v8131 = vpop.f32.mrf.mxu0
      %v8132 = vadd.f32 %v7939, %v8131
      %8133 = vmatprep.mubr.bf16.mxu0 %v5541
      %8134 = vmatmul.mubr.bf16.gmra.mxu0 %v5540
      %v8135 = vpop.f32.mrf.mxu0
      %v8136 = vadd.f32 %v7943, %v8135
      %v8137 = vpop.f32.mrf.mxu0
      %v8138 = vadd.f32 %v7945, %v8137
      %v8139 = vpop.f32.mrf.mxu0
      %v8140 = vadd.f32 %v7947, %v8139
      %v8141 = vpop.f32.mrf.mxu0
      %v8142 = vadd.f32 %v7949, %v8141
      %8143 = vdwg.mxu0
      %8144 = vmatprep.subr.bf16.mxu0 0
      %8145 = vmatpush1.bf16.msra.mxu0 %v6593
      %8146 = vmatprep.subr.bf16.mxu0 0
      %8147 = vmatpush1.bf16.msra.mxu0 %v6586
      %8148 = vmatprep.subr.bf16.mxu0 0
      %8149 = vmatpush1.bf16.msra.mxu0 %v6579
      %8150 = vmatprep.subr.bf16.mxu0 0
      %8151 = vmatpush1.bf16.msra.mxu0 %v6572
      %8152 = vmatprep.subr.bf16.mxu0 0
      %8153 = vmatpush1.bf16.msra.mxu0 %v6565
      %8154 = vmatprep.subr.bf16.mxu0 0
      %8155 = vmatpush1.bf16.msra.mxu0 %v6558
      %8156 = vmatprep.subr.bf16.mxu0 0
      %8157 = vmatpush1.bf16.msra.mxu0 %v6551
      %8158 = vmatprep.subr.bf16.mxu0 0
      %8159 = vmatpush1.bf16.msra.mxu0 %v6544
      %8160 = vmatprep.subr.bf16.mxu0 0
      %8161 = vmatpush2.bf16.msra.mxu0 %v6649
      %8162 = vmatprep.subr.bf16.mxu0 0
      %8163 = vmatpush2.bf16.msra.mxu0 %v6642
      %8164 = vmatprep.subr.bf16.mxu0 0
      %8165 = vmatpush2.bf16.msra.mxu0 %v6635
      %8166 = vmatprep.subr.bf16.mxu0 0
      %8167 = vmatpush2.bf16.msra.mxu0 %v6628
      %8168 = vmatprep.subr.bf16.mxu0 0
      %8169 = vmatpush2.bf16.msra.mxu0 %v6621
      %8170 = vmatprep.subr.bf16.mxu0 0
      %8171 = vmatpush2.bf16.msra.mxu0 %v6614
      %8172 = vmatprep.subr.bf16.mxu0 0
      %8173 = vmatpush2.bf16.msra.mxu0 %v6607
      %8174 = vmatprep.subr.bf16.mxu0 0
      %8175 = vmatpush2.bf16.msra.mxu0 %v6600
      %8176 = vmatprep.mubr.bf16.mxu0 %v5479
      %8177 = vmatmul.mubr.bf16.gmra.mxu0 %v5478
      %v8178 = vpop.f32.mrf.mxu0
      %v8179 = vadd.f32 %v5826, %v8178
      %v8180 = vpop.f32.mrf.mxu0
      %v8181 = vpop.f32.mrf.mxu0
      %v8182 = vadd.f32 %v5826, %v8181
      %v8183 = vpop.f32.mrf.mxu0
      %8184 = vmatprep.mubr.bf16.mxu0 %v5483
      %8185 = vmatmul.mubr.bf16.gmra.mxu0 %v5482
      %v8186 = vpop.f32.mrf.mxu0
      %v8187 = vadd.f32 %v5826, %v8186
      %v8188 = vpop.f32.mrf.mxu0
      %v8189 = vpop.f32.mrf.mxu0
      %v8190 = vadd.f32 %v5826, %v8189
      %v8191 = vpop.f32.mrf.mxu0
      %8192 = vmatprep.mubr.bf16.mxu0 %v5487
      %8193 = vmatmul.mubr.bf16.gmra.mxu0 %v5486
      %v8194 = vpop.f32.mrf.mxu0
      %v8195 = vadd.f32 %v5826, %v8194
      %v8196 = vpop.f32.mrf.mxu0
      %v8197 = vpop.f32.mrf.mxu0
      %v8198 = vadd.f32 %v5826, %v8197
      %v8199 = vpop.f32.mrf.mxu0
      %8200 = vmatprep.mubr.bf16.mxu0 %v5491
      %8201 = vmatmul.mubr.bf16.gmra.mxu0 %v5490
      %v8202 = vpop.f32.mrf.mxu0
      %v8203 = vadd.f32 %v5826, %v8202
      %v8204 = vpop.f32.mrf.mxu0
      %v8205 = vpop.f32.mrf.mxu0
      %v8206 = vadd.f32 %v5826, %v8205
      %v8207 = vpop.f32.mrf.mxu0
      %8208 = vmatprep.mubr.bf16.mxu0 %v5495
      %8209 = vmatmul.mubr.bf16.gmra.mxu0 %v5494
      %v8210 = vpop.f32.mrf.mxu0
      %v8211 = vadd.f32 %v5826, %v8210
      %v8212 = vpop.f32.mrf.mxu0
      %v8213 = vpop.f32.mrf.mxu0
      %v8214 = vadd.f32 %v5826, %v8213
      %v8215 = vpop.f32.mrf.mxu0
      %8216 = vmatprep.mubr.bf16.mxu0 %v5499
      %8217 = vmatmul.mubr.bf16.gmra.mxu0 %v5498
      %v8218 = vpop.f32.mrf.mxu0
      %v8219 = vadd.f32 %v5826, %v8218
      %v8220 = vpop.f32.mrf.mxu0
      %v8221 = vpop.f32.mrf.mxu0
      %v8222 = vadd.f32 %v5826, %v8221
      %v8223 = vpop.f32.mrf.mxu0
      %8224 = vmatprep.mubr.bf16.mxu0 %v5503
      %8225 = vmatmul.mubr.bf16.gmra.mxu0 %v5502
      %v8226 = vpop.f32.mrf.mxu0
      %v8227 = vadd.f32 %v5826, %v8226
      %v8228 = vpop.f32.mrf.mxu0
      %v8229 = vpop.f32.mrf.mxu0
      %v8230 = vadd.f32 %v5826, %v8229
      %v8231 = vpop.f32.mrf.mxu0
      %8232 = vmatprep.mubr.bf16.mxu0 %v5507
      %8233 = vmatmul.mubr.bf16.gmra.mxu0 %v5506
      %v8234 = vpop.f32.mrf.mxu0
      %v8235 = vadd.f32 %v5826, %v8234
      %v8236 = vpop.f32.mrf.mxu0
      %v8237 = vpop.f32.mrf.mxu0
      %v8238 = vadd.f32 %v5826, %v8237
      %v8239 = vpop.f32.mrf.mxu0
      %8240 = vmatprep.mubr.bf16.mxu0 %v5511
      %8241 = vmatmul.mubr.bf16.gmra.mxu0 %v5510
      %v8242 = vpop.f32.mrf.mxu0
      %v8243 = vadd.f32 %v5826, %v8242
      %v8244 = vpop.f32.mrf.mxu0
      %v8245 = vpop.f32.mrf.mxu0
      %v8246 = vadd.f32 %v5826, %v8245
      %v8247 = vpop.f32.mrf.mxu0
      %8248 = vmatprep.mubr.bf16.mxu0 %v5515
      %8249 = vmatmul.mubr.bf16.gmra.mxu0 %v5514
      %v8250 = vpop.f32.mrf.mxu0
      %v8251 = vadd.f32 %v5826, %v8250
      %v8252 = vpop.f32.mrf.mxu0
      %v8253 = vpop.f32.mrf.mxu0
      %v8254 = vadd.f32 %v5826, %v8253
      %v8255 = vpop.f32.mrf.mxu0
      %8256 = vmatprep.mubr.bf16.mxu0 %v5519
      %8257 = vmatmul.mubr.bf16.gmra.mxu0 %v5518
      %v8258 = vpop.f32.mrf.mxu0
      %v8259 = vadd.f32 %v5826, %v8258
      %v8260 = vpop.f32.mrf.mxu0
      %v8261 = vpop.f32.mrf.mxu0
      %v8262 = vadd.f32 %v5826, %v8261
      %v8263 = vpop.f32.mrf.mxu0
      %8264 = vmatprep.mubr.bf16.mxu0 %v5523
      %8265 = vmatmul.mubr.bf16.gmra.mxu0 %v5522
      %v8266 = vpop.f32.mrf.mxu0
      %v8267 = vadd.f32 %v5826, %v8266
      %v8268 = vpop.f32.mrf.mxu0
      %v8269 = vpop.f32.mrf.mxu0
      %v8270 = vadd.f32 %v5826, %v8269
      %v8271 = vpop.f32.mrf.mxu0
      %8272 = vmatprep.mubr.bf16.mxu0 %v5527
      %8273 = vmatmul.mubr.bf16.gmra.mxu0 %v5526
      %v8274 = vpop.f32.mrf.mxu0
      %v8275 = vadd.f32 %v5826, %v8274
      %v8276 = vpop.f32.mrf.mxu0
      %v8277 = vpop.f32.mrf.mxu0
      %v8278 = vadd.f32 %v5826, %v8277
      %v8279 = vpop.f32.mrf.mxu0
      %8280 = vmatprep.mubr.bf16.mxu0 %v5531
      %8281 = vmatmul.mubr.bf16.gmra.mxu0 %v5530
      %v8282 = vpop.f32.mrf.mxu0
      %v8283 = vadd.f32 %v5826, %v8282
      %v8284 = vpop.f32.mrf.mxu0
      %v8285 = vpop.f32.mrf.mxu0
      %v8286 = vadd.f32 %v5826, %v8285
      %v8287 = vpop.f32.mrf.mxu0
      %8288 = vmatprep.mubr.bf16.mxu0 %v5535
      %8289 = vmatmul.mubr.bf16.gmra.mxu0 %v5534
      %v8290 = vpop.f32.mrf.mxu0
      %v8291 = vadd.f32 %v5826, %v8290
      %v8292 = vpop.f32.mrf.mxu0
      %v8293 = vpop.f32.mrf.mxu0
      %v8294 = vadd.f32 %v5826, %v8293
      %v8295 = vpop.f32.mrf.mxu0
      %8296 = vmatprep.mubr.bf16.mxu0 %v5539
      %8297 = vmatmul.mubr.bf16.gmra.mxu0 %v5538
      %v8298 = vpop.f32.mrf.mxu0
      %v8299 = vadd.f32 %v5826, %v8298
      %v8300 = vpop.f32.mrf.mxu0
      %v8301 = vpop.f32.mrf.mxu0
      %v8302 = vadd.f32 %v5826, %v8301
      %v8303 = vpop.f32.mrf.mxu0
      %8304 = vdwg.mxu0
      %8305 = vmatprep.subr.bf16.mxu0 0
      %8306 = vmatpush1.bf16.msra.mxu0 %v6705
      %8307 = vmatprep.subr.bf16.mxu0 0
      %8308 = vmatpush1.bf16.msra.mxu0 %v6698
      %8309 = vmatprep.subr.bf16.mxu0 0
      %8310 = vmatpush1.bf16.msra.mxu0 %v6691
      %8311 = vmatprep.subr.bf16.mxu0 0
      %8312 = vmatpush1.bf16.msra.mxu0 %v6684
      %8313 = vmatprep.subr.bf16.mxu0 0
      %8314 = vmatpush1.bf16.msra.mxu0 %v6677
      %8315 = vmatprep.subr.bf16.mxu0 0
      %8316 = vmatpush1.bf16.msra.mxu0 %v6670
      %8317 = vmatprep.subr.bf16.mxu0 0
      %8318 = vmatpush1.bf16.msra.mxu0 %v6663
      %8319 = vmatprep.subr.bf16.mxu0 0
      %8320 = vmatpush1.bf16.msra.mxu0 %v6656
      %8321 = vmatprep.subr.bf16.mxu0 0
      %8322 = vmatpush2.bf16.msra.mxu0 %v6761
      %8323 = vmatprep.subr.bf16.mxu0 0
      %8324 = vmatpush2.bf16.msra.mxu0 %v6754
      %8325 = vmatprep.subr.bf16.mxu0 0
      %8326 = vmatpush2.bf16.msra.mxu0 %v6747
      %8327 = vmatprep.subr.bf16.mxu0 0
      %8328 = vmatpush2.bf16.msra.mxu0 %v6740
      %8329 = vmatprep.subr.bf16.mxu0 0
      %8330 = vmatpush2.bf16.msra.mxu0 %v6733
      %8331 = vmatprep.subr.bf16.mxu0 0
      %8332 = vmatpush2.bf16.msra.mxu0 %v6726
      %8333 = vmatprep.subr.bf16.mxu0 0
      %8334 = vmatpush2.bf16.msra.mxu0 %v6719
      %8335 = vmatprep.subr.bf16.mxu0 0
      %8336 = vmatpush2.bf16.msra.mxu0 %v6712
      %8337 = vmatprep.mubr.bf16.mxu0 %v5481
      %8338 = vmatmul.mubr.bf16.gmra.mxu0 %v5480
      %v8339 = vpop.f32.mrf.mxu0
      %v8340 = vadd.f32 %v8179, %v8339
      %v8341 = vpop.f32.mrf.mxu0
      %v8342 = vpop.f32.mrf.mxu0
      %v8343 = vadd.f32 %v8182, %v8342
      %v8344 = vpop.f32.mrf.mxu0
      %8345 = vmatprep.mubr.bf16.mxu0 %v5485
      %8346 = vmatmul.mubr.bf16.gmra.mxu0 %v5484
      %v8347 = vpop.f32.mrf.mxu0
      %v8348 = vadd.f32 %v8187, %v8347
      %v8349 = vpop.f32.mrf.mxu0
      %v8350 = vpop.f32.mrf.mxu0
      %v8351 = vadd.f32 %v8190, %v8350
      %v8352 = vpop.f32.mrf.mxu0
      %8353 = vmatprep.mubr.bf16.mxu0 %v5489
      %8354 = vmatmul.mubr.bf16.gmra.mxu0 %v5488
      %v8355 = vpop.f32.mrf.mxu0
      %v8356 = vadd.f32 %v8195, %v8355
      %v8357 = vpop.f32.mrf.mxu0
      %v8358 = vpop.f32.mrf.mxu0
      %v8359 = vadd.f32 %v8198, %v8358
      %v8360 = vpop.f32.mrf.mxu0
      %8361 = vmatprep.mubr.bf16.mxu0 %v5493
      %8362 = vmatmul.mubr.bf16.gmra.mxu0 %v5492
      %v8363 = vpop.f32.mrf.mxu0
      %v8364 = vadd.f32 %v8203, %v8363
      %v8365 = vpop.f32.mrf.mxu0
      %v8366 = vpop.f32.mrf.mxu0
      %v8367 = vadd.f32 %v8206, %v8366
      %v8368 = vpop.f32.mrf.mxu0
      %8369 = vmatprep.mubr.bf16.mxu0 %v5497
      %8370 = vmatmul.mubr.bf16.gmra.mxu0 %v5496
      %v8371 = vpop.f32.mrf.mxu0
      %v8372 = vadd.f32 %v8211, %v8371
      %v8373 = vpop.f32.mrf.mxu0
      %v8374 = vpop.f32.mrf.mxu0
      %v8375 = vadd.f32 %v8214, %v8374
      %v8376 = vpop.f32.mrf.mxu0
      %8377 = vmatprep.mubr.bf16.mxu0 %v5501
      %8378 = vmatmul.mubr.bf16.gmra.mxu0 %v5500
      %v8379 = vpop.f32.mrf.mxu0
      %v8380 = vadd.f32 %v8219, %v8379
      %v8381 = vpop.f32.mrf.mxu0
      %v8382 = vpop.f32.mrf.mxu0
      %v8383 = vadd.f32 %v8222, %v8382
      %v8384 = vpop.f32.mrf.mxu0
      %8385 = vmatprep.mubr.bf16.mxu0 %v5505
      %8386 = vmatmul.mubr.bf16.gmra.mxu0 %v5504
      %v8387 = vpop.f32.mrf.mxu0
      %v8388 = vadd.f32 %v8227, %v8387
      %v8389 = vpop.f32.mrf.mxu0
      %v8390 = vpop.f32.mrf.mxu0
      %v8391 = vadd.f32 %v8230, %v8390
      %v8392 = vpop.f32.mrf.mxu0
      %8393 = vmatprep.mubr.bf16.mxu0 %v5509
      %8394 = vmatmul.mubr.bf16.gmra.mxu0 %v5508
      %v8395 = vpop.f32.mrf.mxu0
      %v8396 = vadd.f32 %v8235, %v8395
      %v8397 = vpop.f32.mrf.mxu0
      %v8398 = vpop.f32.mrf.mxu0
      %v8399 = vadd.f32 %v8238, %v8398
      %v8400 = vpop.f32.mrf.mxu0
      %8401 = vmatprep.mubr.bf16.mxu0 %v5513
      %8402 = vmatmul.mubr.bf16.gmra.mxu0 %v5512
      %v8403 = vpop.f32.mrf.mxu0
      %v8404 = vadd.f32 %v8243, %v8403
      %v8405 = vpop.f32.mrf.mxu0
      %v8406 = vpop.f32.mrf.mxu0
      %v8407 = vadd.f32 %v8246, %v8406
      %v8408 = vpop.f32.mrf.mxu0
      %8409 = vmatprep.mubr.bf16.mxu0 %v5517
      %8410 = vmatmul.mubr.bf16.gmra.mxu0 %v5516
      %v8411 = vpop.f32.mrf.mxu0
      %v8412 = vadd.f32 %v8251, %v8411
      %v8413 = vpop.f32.mrf.mxu0
      %v8414 = vpop.f32.mrf.mxu0
      %v8415 = vadd.f32 %v8254, %v8414
      %v8416 = vpop.f32.mrf.mxu0
      %8417 = vmatprep.mubr.bf16.mxu0 %v5521
      %8418 = vmatmul.mubr.bf16.gmra.mxu0 %v5520
      %v8419 = vpop.f32.mrf.mxu0
      %v8420 = vadd.f32 %v8259, %v8419
      %v8421 = vpop.f32.mrf.mxu0
      %v8422 = vpop.f32.mrf.mxu0
      %v8423 = vadd.f32 %v8262, %v8422
      %v8424 = vpop.f32.mrf.mxu0
      %8425 = vmatprep.mubr.bf16.mxu0 %v5525
      %8426 = vmatmul.mubr.bf16.gmra.mxu0 %v5524
      %v8427 = vpop.f32.mrf.mxu0
      %v8428 = vadd.f32 %v8267, %v8427
      %v8429 = vpop.f32.mrf.mxu0
      %v8430 = vpop.f32.mrf.mxu0
      %v8431 = vadd.f32 %v8270, %v8430
      %v8432 = vpop.f32.mrf.mxu0
      %8433 = vmatprep.mubr.bf16.mxu0 %v5529
      %8434 = vmatmul.mubr.bf16.gmra.mxu0 %v5528
      %v8435 = vpop.f32.mrf.mxu0
      %v8436 = vadd.f32 %v8275, %v8435
      %v8437 = vpop.f32.mrf.mxu0
      %v8438 = vpop.f32.mrf.mxu0
      %v8439 = vadd.f32 %v8278, %v8438
      %v8440 = vpop.f32.mrf.mxu0
      %8441 = vmatprep.mubr.bf16.mxu0 %v5533
      %8442 = vmatmul.mubr.bf16.gmra.mxu0 %v5532
      %v8443 = vpop.f32.mrf.mxu0
      %v8444 = vadd.f32 %v8283, %v8443
      %v8445 = vpop.f32.mrf.mxu0
      %v8446 = vpop.f32.mrf.mxu0
      %v8447 = vadd.f32 %v8286, %v8446
      %v8448 = vpop.f32.mrf.mxu0
      %8449 = vmatprep.mubr.bf16.mxu0 %v5537
      %8450 = vmatmul.mubr.bf16.gmra.mxu0 %v5536
      %v8451 = vpop.f32.mrf.mxu0
      %v8452 = vadd.f32 %v8291, %v8451
      %v8453 = vpop.f32.mrf.mxu0
      %v8454 = vpop.f32.mrf.mxu0
      %v8455 = vadd.f32 %v8294, %v8454
      %v8456 = vpop.f32.mrf.mxu0
      %8457 = vmatprep.mubr.bf16.mxu0 %v5541
      %8458 = vmatmul.mubr.bf16.gmra.mxu0 %v5540
      %v8459 = vpop.f32.mrf.mxu0
      %v8460 = vadd.f32 %v8299, %v8459
      %v8461 = vpop.f32.mrf.mxu0
      %v8462 = vpop.f32.mrf.mxu0
      %v8463 = vadd.f32 %v8302, %v8462
      %v8464 = vpop.f32.mrf.mxu0
      %8465 = vdwg.mxu0
      %v8466 = vxor.u32 %v7214, 2147483648
      %v8467 = vxor.u32 %v7216, 2147483648
      %v8468 = vxor.u32 %v7600, 2147483648
      %v8469 = vxor.u32 %v7602, 2147483648
      %v8470 = vxor.u32 %v7986, 2147483648
      %v8471 = vxor.u32 %v7988, 2147483648
      %v8472 = vxor.u32 %v8340, 2147483648
      %v8473 = vxor.u32 %v7218, 2147483648
      %v8474 = vxor.u32 %v7220, 2147483648
      %v8475 = vxor.u32 %v7604, 2147483648
      %v8476 = vxor.u32 %v7606, 2147483648
      %v8477 = vxor.u32 %v7990, 2147483648
      %v8478 = vxor.u32 %v7992, 2147483648
      %v8479 = vxor.u32 %v8343, 2147483648
      %v8480 = vxor.u32 %v7224, 2147483648
      %v8481 = vxor.u32 %v7226, 2147483648
      %v8482 = vxor.u32 %v7610, 2147483648
      %v8483 = vxor.u32 %v7612, 2147483648
      %v8484 = vxor.u32 %v7996, 2147483648
      %v8485 = vxor.u32 %v7998, 2147483648
      %v8486 = vxor.u32 %v8348, 2147483648
      %v8487 = vxor.u32 %v7228, 2147483648
      %v8488 = vxor.u32 %v7230, 2147483648
      %v8489 = vxor.u32 %v7614, 2147483648
      %v8490 = vxor.u32 %v7616, 2147483648
      %v8491 = vxor.u32 %v8000, 2147483648
      %v8492 = vxor.u32 %v8002, 2147483648
      %v8493 = vxor.u32 %v8351, 2147483648
      %v8494 = vxor.u32 %v7234, 2147483648
      %v8495 = vxor.u32 %v7236, 2147483648
      %v8496 = vxor.u32 %v7620, 2147483648
      %v8497 = vxor.u32 %v7622, 2147483648
      %v8498 = vxor.u32 %v8006, 2147483648
      %v8499 = vxor.u32 %v8008, 2147483648
      %v8500 = vxor.u32 %v8356, 2147483648
      %v8501 = vxor.u32 %v7238, 2147483648
      %v8502 = vxor.u32 %v7240, 2147483648
      %v8503 = vxor.u32 %v7624, 2147483648
      %v8504 = vxor.u32 %v7626, 2147483648
      %v8505 = vxor.u32 %v8010, 2147483648
      %v8506 = vxor.u32 %v8012, 2147483648
      %v8507 = vxor.u32 %v8359, 2147483648
      %v8508 = vxor.u32 %v7244, 2147483648
      %v8509 = vxor.u32 %v7246, 2147483648
      %v8510 = vxor.u32 %v7630, 2147483648
      %v8511 = vxor.u32 %v7632, 2147483648
      %v8512 = vxor.u32 %v8016, 2147483648
      %v8513 = vxor.u32 %v8018, 2147483648
      %v8514 = vxor.u32 %v8364, 2147483648
      %v8515 = vxor.u32 %v7248, 2147483648
      %v8516 = vxor.u32 %v7250, 2147483648
      %v8517 = vxor.u32 %v7634, 2147483648
      %v8518 = vxor.u32 %v7636, 2147483648
      %v8519 = vxor.u32 %v8020, 2147483648
      %v8520 = vxor.u32 %v8022, 2147483648
      %v8521 = vxor.u32 %v8367, 2147483648
      %v8522 = vxor.u32 %v7254, 2147483648
      %v8523 = vxor.u32 %v7256, 2147483648
      %v8524 = vxor.u32 %v7640, 2147483648
      %v8525 = vxor.u32 %v7642, 2147483648
      %v8526 = vxor.u32 %v8026, 2147483648
      %v8527 = vxor.u32 %v8028, 2147483648
      %v8528 = vxor.u32 %v8372, 2147483648
      %v8529 = vxor.u32 %v7258, 2147483648
      %v8530 = vxor.u32 %v7260, 2147483648
      %v8531 = vxor.u32 %v7644, 2147483648
      %v8532 = vxor.u32 %v7646, 2147483648
      %v8533 = vxor.u32 %v8030, 2147483648
      %v8534 = vxor.u32 %v8032, 2147483648
      %v8535 = vxor.u32 %v8375, 2147483648
      %v8536 = vxor.u32 %v7264, 2147483648
      %v8537 = vxor.u32 %v7266, 2147483648
      %v8538 = vxor.u32 %v7650, 2147483648
      %v8539 = vxor.u32 %v7652, 2147483648
      %v8540 = vxor.u32 %v8036, 2147483648
      %v8541 = vxor.u32 %v8038, 2147483648
      %v8542 = vxor.u32 %v8380, 2147483648
      %v8543 = vxor.u32 %v7268, 2147483648
      %v8544 = vxor.u32 %v7270, 2147483648
      %v8545 = vxor.u32 %v7654, 2147483648
      %v8546 = vxor.u32 %v7656, 2147483648
      %v8547 = vxor.u32 %v8040, 2147483648
      %v8548 = vxor.u32 %v8042, 2147483648
      %v8549 = vxor.u32 %v8383, 2147483648
      %v8550 = vxor.u32 %v7274, 2147483648
      %v8551 = vxor.u32 %v7276, 2147483648
      %v8552 = vxor.u32 %v7660, 2147483648
      %v8553 = vxor.u32 %v7662, 2147483648
      %v8554 = vxor.u32 %v8046, 2147483648
      %v8555 = vxor.u32 %v8048, 2147483648
      %v8556 = vxor.u32 %v8388, 2147483648
      %v8557 = vxor.u32 %v7278, 2147483648
      %v8558 = vxor.u32 %v7280, 2147483648
      %v8559 = vxor.u32 %v7664, 2147483648
      %v8560 = vxor.u32 %v7666, 2147483648
      %v8561 = vxor.u32 %v8050, 2147483648
      %v8562 = vxor.u32 %v8052, 2147483648
      %v8563 = vxor.u32 %v8391, 2147483648
      %v8564 = vxor.u32 %v7284, 2147483648
      %v8565 = vxor.u32 %v7286, 2147483648
      %v8566 = vxor.u32 %v7670, 2147483648
      %v8567 = vxor.u32 %v7672, 2147483648
      %v8568 = vxor.u32 %v8056, 2147483648
      %v8569 = vxor.u32 %v8058, 2147483648
      %v8570 = vxor.u32 %v8396, 2147483648
      %v8571 = vxor.u32 %v7288, 2147483648
      %v8572 = vxor.u32 %v7290, 2147483648
      %v8573 = vxor.u32 %v7674, 2147483648
      %v8574 = vxor.u32 %v7676, 2147483648
      %v8575 = vxor.u32 %v8060, 2147483648
      %v8576 = vxor.u32 %v8062, 2147483648
      %v8577 = vxor.u32 %v8399, 2147483648
      %v8578 = vxor.u32 %v7294, 2147483648
      %v8579 = vxor.u32 %v7296, 2147483648
      %v8580 = vxor.u32 %v7680, 2147483648
      %v8581 = vxor.u32 %v7682, 2147483648
      %v8582 = vxor.u32 %v8066, 2147483648
      %v8583 = vxor.u32 %v8068, 2147483648
      %v8584 = vxor.u32 %v8404, 2147483648
      %v8585 = vxor.u32 %v7298, 2147483648
      %v8586 = vxor.u32 %v7300, 2147483648
      %v8587 = vxor.u32 %v7684, 2147483648
      %v8588 = vxor.u32 %v7686, 2147483648
      %v8589 = vxor.u32 %v8070, 2147483648
      %v8590 = vxor.u32 %v8072, 2147483648
      %v8591 = vxor.u32 %v8407, 2147483648
      %v8592 = vxor.u32 %v7304, 2147483648
      %v8593 = vxor.u32 %v7306, 2147483648
      %v8594 = vxor.u32 %v7690, 2147483648
      %v8595 = vxor.u32 %v7692, 2147483648
      %v8596 = vxor.u32 %v8076, 2147483648
      %v8597 = vxor.u32 %v8078, 2147483648
      %v8598 = vxor.u32 %v8412, 2147483648
      %v8599 = vxor.u32 %v7308, 2147483648
      %v8600 = vxor.u32 %v7310, 2147483648
      %v8601 = vxor.u32 %v7694, 2147483648
      %v8602 = vxor.u32 %v7696, 2147483648
      %v8603 = vxor.u32 %v8080, 2147483648
      %v8604 = vxor.u32 %v8082, 2147483648
      %v8605 = vxor.u32 %v8415, 2147483648
      %v8606 = vxor.u32 %v7314, 2147483648
      %v8607 = vxor.u32 %v7316, 2147483648
      %v8608 = vxor.u32 %v7700, 2147483648
      %v8609 = vxor.u32 %v7702, 2147483648
      %v8610 = vxor.u32 %v8086, 2147483648
      %v8611 = vxor.u32 %v8088, 2147483648
      %v8612 = vxor.u32 %v8420, 2147483648
      %v8613 = vxor.u32 %v7318, 2147483648
      %v8614 = vxor.u32 %v7320, 2147483648
      %v8615 = vxor.u32 %v7704, 2147483648
      %v8616 = vxor.u32 %v7706, 2147483648
      %v8617 = vxor.u32 %v8090, 2147483648
      %v8618 = vxor.u32 %v8092, 2147483648
      %v8619 = vxor.u32 %v8423, 2147483648
      %v8620 = vxor.u32 %v7324, 2147483648
      %v8621 = vxor.u32 %v7326, 2147483648
      %v8622 = vxor.u32 %v7710, 2147483648
      %v8623 = vxor.u32 %v7712, 2147483648
      %v8624 = vxor.u32 %v8096, 2147483648
      %v8625 = vxor.u32 %v8098, 2147483648
      %v8626 = vxor.u32 %v8428, 2147483648
      %v8627 = vxor.u32 %v7328, 2147483648
      %v8628 = vxor.u32 %v7330, 2147483648
      %v8629 = vxor.u32 %v7714, 2147483648
      %v8630 = vxor.u32 %v7716, 2147483648
      %v8631 = vxor.u32 %v8100, 2147483648
      %v8632 = vxor.u32 %v8102, 2147483648
      %v8633 = vxor.u32 %v8431, 2147483648
      %v8634 = vxor.u32 %v7334, 2147483648
      %v8635 = vxor.u32 %v7336, 2147483648
      %v8636 = vxor.u32 %v7720, 2147483648
      %v8637 = vxor.u32 %v7722, 2147483648
      %v8638 = vxor.u32 %v8106, 2147483648
      %v8639 = vxor.u32 %v8108, 2147483648
      %v8640 = vxor.u32 %v8436, 2147483648
      %v8641 = vxor.u32 %v7338, 2147483648
      %v8642 = vxor.u32 %v7340, 2147483648
      %v8643 = vxor.u32 %v7724, 2147483648
      %v8644 = vxor.u32 %v7726, 2147483648
      %v8645 = vxor.u32 %v8110, 2147483648
      %v8646 = vxor.u32 %v8112, 2147483648
      %v8647 = vxor.u32 %v8439, 2147483648
      %v8648 = vxor.u32 %v7344, 2147483648
      %v8649 = vxor.u32 %v7346, 2147483648
      %v8650 = vxor.u32 %v7730, 2147483648
      %v8651 = vxor.u32 %v7732, 2147483648
      %v8652 = vxor.u32 %v8116, 2147483648
      %v8653 = vxor.u32 %v8118, 2147483648
      %v8654 = vxor.u32 %v8444, 2147483648
      %v8655 = vxor.u32 %v7348, 2147483648
      %v8656 = vxor.u32 %v7350, 2147483648
      %v8657 = vxor.u32 %v7734, 2147483648
      %v8658 = vxor.u32 %v7736, 2147483648
      %v8659 = vxor.u32 %v8120, 2147483648
      %v8660 = vxor.u32 %v8122, 2147483648
      %v8661 = vxor.u32 %v8447, 2147483648
      %v8662 = vxor.u32 %v7354, 2147483648
      %v8663 = vxor.u32 %v7356, 2147483648
      %v8664 = vxor.u32 %v7740, 2147483648
      %v8665 = vxor.u32 %v7742, 2147483648
      %v8666 = vxor.u32 %v8126, 2147483648
      %v8667 = vxor.u32 %v8128, 2147483648
      %v8668 = vxor.u32 %v8452, 2147483648
      %v8669 = vxor.u32 %v7358, 2147483648
      %v8670 = vxor.u32 %v7360, 2147483648
      %v8671 = vxor.u32 %v7744, 2147483648
      %v8672 = vxor.u32 %v7746, 2147483648
      %v8673 = vxor.u32 %v8130, 2147483648
      %v8674 = vxor.u32 %v8132, 2147483648
      %v8675 = vxor.u32 %v8455, 2147483648
      %v8676 = vxor.u32 %v7364, 2147483648
      %v8677 = vxor.u32 %v7366, 2147483648
      %v8678 = vxor.u32 %v7750, 2147483648
      %v8679 = vxor.u32 %v7752, 2147483648
      %v8680 = vxor.u32 %v8136, 2147483648
      %v8681 = vxor.u32 %v8138, 2147483648
      %v8682 = vxor.u32 %v8460, 2147483648
      %v8683 = vxor.u32 %v7368, 2147483648
      %v8684 = vxor.u32 %v7370, 2147483648
      %v8685 = vxor.u32 %v7754, 2147483648
      %v8686 = vxor.u32 %v7756, 2147483648
      %v8687 = vxor.u32 %v8140, 2147483648
      %v8688 = vxor.u32 %v8142, 2147483648
      %v8689 = vxor.u32 %v8463, 2147483648
      %v8690 = vmul.f32 %v8466, 1.442695
      %v8691 = vpow.pop %v8690
      %v8692 = vmul.f32 %v8467, 1.442695
      %v8693 = vpow.pop %v8692
      %v8694 = vmul.f32 %v8468, 1.442695
      %v8695 = vpow.pop %v8694
      %v8696 = vmul.f32 %v8469, 1.442695
      %v8697 = vpow.pop %v8696
      %v8698 = vmul.f32 %v8470, 1.442695
      %v8699 = vpow.pop %v8698
      %v8700 = vmul.f32 %v8471, 1.442695
      %v8701 = vpow.pop %v8700
      %v8702 = vmul.f32 %v8472, 1.442695
      %v8703 = vpow.pop %v8702
      %v8704 = vmul.f32 %v8473, 1.442695
      %v8705 = vpow.pop %v8704
      %v8706 = vmul.f32 %v8474, 1.442695
      %v8707 = vpow.pop %v8706
      %v8708 = vmul.f32 %v8475, 1.442695
      %v8709 = vpow.pop %v8708
      %v8710 = vmul.f32 %v8476, 1.442695
      %v8711 = vpow.pop %v8710
      %v8712 = vmul.f32 %v8477, 1.442695
      %v8713 = vpow.pop %v8712
      %v8714 = vmul.f32 %v8478, 1.442695
      %v8715 = vpow.pop %v8714
      %v8716 = vmul.f32 %v8479, 1.442695
      %v8717 = vpow.pop %v8716
      %v8718 = vmul.f32 %v8480, 1.442695
      %v8719 = vpow.pop %v8718
      %v8720 = vmul.f32 %v8481, 1.442695
      %v8721 = vpow.pop %v8720
      %v8722 = vmul.f32 %v8482, 1.442695
      %v8723 = vpow.pop %v8722
      %v8724 = vmul.f32 %v8483, 1.442695
      %v8725 = vpow.pop %v8724
      %v8726 = vmul.f32 %v8484, 1.442695
      %v8727 = vpow.pop %v8726
      %v8728 = vmul.f32 %v8485, 1.442695
      %v8729 = vpow.pop %v8728
      %v8730 = vmul.f32 %v8486, 1.442695
      %v8731 = vpow.pop %v8730
      %v8732 = vmul.f32 %v8487, 1.442695
      %v8733 = vpow.pop %v8732
      %v8734 = vmul.f32 %v8488, 1.442695
      %v8735 = vpow.pop %v8734
      %v8736 = vmul.f32 %v8489, 1.442695
      %v8737 = vpow.pop %v8736
      %v8738 = vmul.f32 %v8490, 1.442695
      %v8739 = vpow.pop %v8738
      %v8740 = vmul.f32 %v8491, 1.442695
      %v8741 = vpow.pop %v8740
      %v8742 = vmul.f32 %v8492, 1.442695
      %v8743 = vpow.pop %v8742
      %v8744 = vmul.f32 %v8493, 1.442695
      %v8745 = vpow.pop %v8744
      %v8746 = vmul.f32 %v8494, 1.442695
      %v8747 = vpow.pop %v8746
      %v8748 = vmul.f32 %v8495, 1.442695
      %v8749 = vpow.pop %v8748
      %v8750 = vmul.f32 %v8496, 1.442695
      %v8751 = vpow.pop %v8750
      %v8752 = vmul.f32 %v8497, 1.442695
      %v8753 = vpow.pop %v8752
      %v8754 = vmul.f32 %v8498, 1.442695
      %v8755 = vpow.pop %v8754
      %v8756 = vmul.f32 %v8499, 1.442695
      %v8757 = vpow.pop %v8756
      %v8758 = vmul.f32 %v8500, 1.442695
      %v8759 = vpow.pop %v8758
      %v8760 = vmul.f32 %v8501, 1.442695
      %v8761 = vpow.pop %v8760
      %v8762 = vmul.f32 %v8502, 1.442695
      %v8763 = vpow.pop %v8762
      %v8764 = vmul.f32 %v8503, 1.442695
      %v8765 = vpow.pop %v8764
      %v8766 = vmul.f32 %v8504, 1.442695
      %v8767 = vpow.pop %v8766
      %v8768 = vmul.f32 %v8505, 1.442695
      %v8769 = vpow.pop %v8768
      %v8770 = vmul.f32 %v8506, 1.442695
      %v8771 = vpow.pop %v8770
      %v8772 = vmul.f32 %v8507, 1.442695
      %v8773 = vpow.pop %v8772
      %v8774 = vmul.f32 %v8508, 1.442695
      %v8775 = vpow.pop %v8774
      %v8776 = vmul.f32 %v8509, 1.442695
      %v8777 = vpow.pop %v8776
      %v8778 = vmul.f32 %v8510, 1.442695
      %v8779 = vpow.pop %v8778
      %v8780 = vmul.f32 %v8511, 1.442695
      %v8781 = vpow.pop %v8780
      %v8782 = vmul.f32 %v8512, 1.442695
      %v8783 = vpow.pop %v8782
      %v8784 = vmul.f32 %v8513, 1.442695
      %v8785 = vpow.pop %v8784
      %v8786 = vmul.f32 %v8514, 1.442695
      %v8787 = vpow.pop %v8786
      %v8788 = vmul.f32 %v8515, 1.442695
      %v8789 = vpow.pop %v8788
      %v8790 = vmul.f32 %v8516, 1.442695
      %v8791 = vpow.pop %v8790
      %v8792 = vmul.f32 %v8517, 1.442695
      %v8793 = vpow.pop %v8792
      %v8794 = vmul.f32 %v8518, 1.442695
      %v8795 = vpow.pop %v8794
      %v8796 = vmul.f32 %v8519, 1.442695
      %v8797 = vpow.pop %v8796
      %v8798 = vmul.f32 %v8520, 1.442695
      %v8799 = vpow.pop %v8798
      %v8800 = vmul.f32 %v8521, 1.442695
      %v8801 = vpow.pop %v8800
      %v8802 = vmul.f32 %v8522, 1.442695
      %v8803 = vpow.pop %v8802
      %v8804 = vmul.f32 %v8523, 1.442695
      %v8805 = vpow.pop %v8804
      %v8806 = vmul.f32 %v8524, 1.442695
      %v8807 = vpow.pop %v8806
      %v8808 = vmul.f32 %v8525, 1.442695
      %v8809 = vpow.pop %v8808
      %v8810 = vmul.f32 %v8526, 1.442695
      %v8811 = vpow.pop %v8810
      %v8812 = vmul.f32 %v8527, 1.442695
      %v8813 = vpow.pop %v8812
      %v8814 = vmul.f32 %v8528, 1.442695
      %v8815 = vpow.pop %v8814
      %v8816 = vmul.f32 %v8529, 1.442695
      %v8817 = vpow.pop %v8816
      %v8818 = vmul.f32 %v8530, 1.442695
      %v8819 = vpow.pop %v8818
      %v8820 = vmul.f32 %v8531, 1.442695
      %v8821 = vpow.pop %v8820
      %v8822 = vmul.f32 %v8532, 1.442695
      %v8823 = vpow.pop %v8822
      %v8824 = vmul.f32 %v8533, 1.442695
      %v8825 = vpow.pop %v8824
      %v8826 = vmul.f32 %v8534, 1.442695
      %v8827 = vpow.pop %v8826
      %v8828 = vmul.f32 %v8535, 1.442695
      %v8829 = vpow.pop %v8828
      %v8830 = vmul.f32 %v8536, 1.442695
      %v8831 = vpow.pop %v8830
      %v8832 = vmul.f32 %v8537, 1.442695
      %v8833 = vpow.pop %v8832
      %v8834 = vmul.f32 %v8538, 1.442695
      %v8835 = vpow.pop %v8834
      %v8836 = vmul.f32 %v8539, 1.442695
      %v8837 = vpow.pop %v8836
      %v8838 = vmul.f32 %v8540, 1.442695
      %v8839 = vpow.pop %v8838
      %v8840 = vmul.f32 %v8541, 1.442695
      %v8841 = vpow.pop %v8840
      %v8842 = vmul.f32 %v8542, 1.442695
      %v8843 = vpow.pop %v8842
      %v8844 = vmul.f32 %v8543, 1.442695
      %v8845 = vpow.pop %v8844
      %v8846 = vmul.f32 %v8544, 1.442695
      %v8847 = vpow.pop %v8846
      %v8848 = vmul.f32 %v8545, 1.442695
      %v8849 = vpow.pop %v8848
      %v8850 = vmul.f32 %v8546, 1.442695
      %v8851 = vpow.pop %v8850
      %v8852 = vmul.f32 %v8547, 1.442695
      %v8853 = vpow.pop %v8852
      %v8854 = vmul.f32 %v8548, 1.442695
      %v8855 = vpow.pop %v8854
      %v8856 = vmul.f32 %v8549, 1.442695
      %v8857 = vpow.pop %v8856
      %v8858 = vmul.f32 %v8550, 1.442695
      %v8859 = vpow.pop %v8858
      %v8860 = vmul.f32 %v8551, 1.442695
      %v8861 = vpow.pop %v8860
      %v8862 = vmul.f32 %v8552, 1.442695
      %v8863 = vpow.pop %v8862
      %v8864 = vmul.f32 %v8553, 1.442695
      %v8865 = vpow.pop %v8864
      %v8866 = vmul.f32 %v8554, 1.442695
      %v8867 = vpow.pop %v8866
      %v8868 = vmul.f32 %v8555, 1.442695
      %v8869 = vpow.pop %v8868
      %v8870 = vmul.f32 %v8556, 1.442695
      %v8871 = vpow.pop %v8870
      %v8872 = vmul.f32 %v8557, 1.442695
      %v8873 = vpow.pop %v8872
      %v8874 = vmul.f32 %v8558, 1.442695
      %v8875 = vpow.pop %v8874
      %v8876 = vmul.f32 %v8559, 1.442695
      %v8877 = vpow.pop %v8876
      %v8878 = vmul.f32 %v8560, 1.442695
      %v8879 = vpow.pop %v8878
      %v8880 = vmul.f32 %v8561, 1.442695
      %v8881 = vpow.pop %v8880
      %v8882 = vmul.f32 %v8562, 1.442695
      %v8883 = vpow.pop %v8882
      %v8884 = vmul.f32 %v8563, 1.442695
      %v8885 = vpow.pop %v8884
      %v8886 = vmul.f32 %v8564, 1.442695
      %v8887 = vpow.pop %v8886
      %v8888 = vmul.f32 %v8565, 1.442695
      %v8889 = vpow.pop %v8888
      %v8890 = vmul.f32 %v8566, 1.442695
      %v8891 = vpow.pop %v8890
      %v8892 = vmul.f32 %v8567, 1.442695
      %v8893 = vpow.pop %v8892
      %v8894 = vmul.f32 %v8568, 1.442695
      %v8895 = vpow.pop %v8894
      %v8896 = vmul.f32 %v8569, 1.442695
      %v8897 = vpow.pop %v8896
      %v8898 = vmul.f32 %v8570, 1.442695
      %v8899 = vpow.pop %v8898
      %v8900 = vmul.f32 %v8571, 1.442695
      %v8901 = vpow.pop %v8900
      %v8902 = vmul.f32 %v8572, 1.442695
      %v8903 = vpow.pop %v8902
      %v8904 = vmul.f32 %v8573, 1.442695
      %v8905 = vpow.pop %v8904
      %v8906 = vmul.f32 %v8574, 1.442695
      %v8907 = vpow.pop %v8906
      %v8908 = vmul.f32 %v8575, 1.442695
      %v8909 = vpow.pop %v8908
      %v8910 = vmul.f32 %v8576, 1.442695
      %v8911 = vpow.pop %v8910
      %v8912 = vmul.f32 %v8577, 1.442695
      %v8913 = vpow.pop %v8912
      %v8914 = vmul.f32 %v8578, 1.442695
      %v8915 = vpow.pop %v8914
      %v8916 = vmul.f32 %v8579, 1.442695
      %v8917 = vpow.pop %v8916
      %v8918 = vmul.f32 %v8580, 1.442695
      %v8919 = vpow.pop %v8918
      %v8920 = vmul.f32 %v8581, 1.442695
      %v8921 = vpow.pop %v8920
      %v8922 = vmul.f32 %v8582, 1.442695
      %v8923 = vpow.pop %v8922
      %v8924 = vmul.f32 %v8583, 1.442695
      %v8925 = vpow.pop %v8924
      %v8926 = vmul.f32 %v8584, 1.442695
      %v8927 = vpow.pop %v8926
      %v8928 = vmul.f32 %v8585, 1.442695
      %v8929 = vpow.pop %v8928
      %v8930 = vmul.f32 %v8586, 1.442695
      %v8931 = vpow.pop %v8930
      %v8932 = vmul.f32 %v8587, 1.442695
      %v8933 = vpow.pop %v8932
      %v8934 = vmul.f32 %v8588, 1.442695
      %v8935 = vpow.pop %v8934
      %v8936 = vmul.f32 %v8589, 1.442695
      %v8937 = vpow.pop %v8936
      %v8938 = vmul.f32 %v8590, 1.442695
      %v8939 = vpow.pop %v8938
      %v8940 = vmul.f32 %v8591, 1.442695
      %v8941 = vpow.pop %v8940
      %v8942 = vmul.f32 %v8592, 1.442695
      %v8943 = vpow.pop %v8942
      %v8944 = vmul.f32 %v8593, 1.442695
      %v8945 = vpow.pop %v8944
      %v8946 = vmul.f32 %v8594, 1.442695
      %v8947 = vpow.pop %v8946
      %v8948 = vmul.f32 %v8595, 1.442695
      %v8949 = vpow.pop %v8948
      %v8950 = vmul.f32 %v8596, 1.442695
      %v8951 = vpow.pop %v8950
      %v8952 = vmul.f32 %v8597, 1.442695
      %v8953 = vpow.pop %v8952
      %v8954 = vmul.f32 %v8598, 1.442695
      %v8955 = vpow.pop %v8954
      %v8956 = vmul.f32 %v8599, 1.442695
      %v8957 = vpow.pop %v8956
      %v8958 = vmul.f32 %v8600, 1.442695
      %v8959 = vpow.pop %v8958
      %v8960 = vmul.f32 %v8601, 1.442695
      %v8961 = vpow.pop %v8960
      %v8962 = vmul.f32 %v8602, 1.442695
      %v8963 = vpow.pop %v8962
      %v8964 = vmul.f32 %v8603, 1.442695
      %v8965 = vpow.pop %v8964
      %v8966 = vmul.f32 %v8604, 1.442695
      %v8967 = vpow.pop %v8966
      %v8968 = vmul.f32 %v8605, 1.442695
      %v8969 = vpow.pop %v8968
      %v8970 = vmul.f32 %v8606, 1.442695
      %v8971 = vpow.pop %v8970
      %v8972 = vmul.f32 %v8607, 1.442695
      %v8973 = vpow.pop %v8972
      %v8974 = vmul.f32 %v8608, 1.442695
      %v8975 = vpow.pop %v8974
      %v8976 = vmul.f32 %v8609, 1.442695
      %v8977 = vpow.pop %v8976
      %v8978 = vmul.f32 %v8610, 1.442695
      %v8979 = vpow.pop %v8978
      %v8980 = vmul.f32 %v8611, 1.442695
      %v8981 = vpow.pop %v8980
      %v8982 = vmul.f32 %v8612, 1.442695
      %v8983 = vpow.pop %v8982
      %v8984 = vmul.f32 %v8613, 1.442695
      %v8985 = vpow.pop %v8984
      %v8986 = vmul.f32 %v8614, 1.442695
      %v8987 = vpow.pop %v8986
      %v8988 = vmul.f32 %v8615, 1.442695
      %v8989 = vpow.pop %v8988
      %v8990 = vmul.f32 %v8616, 1.442695
      %v8991 = vpow.pop %v8990
      %v8992 = vmul.f32 %v8617, 1.442695
      %v8993 = vpow.pop %v8992
      %v8994 = vmul.f32 %v8618, 1.442695
      %v8995 = vpow.pop %v8994
      %v8996 = vmul.f32 %v8619, 1.442695
      %v8997 = vpow.pop %v8996
      %v8998 = vmul.f32 %v8620, 1.442695
      %v8999 = vpow.pop %v8998
      %v9000 = vmul.f32 %v8621, 1.442695
      %v9001 = vpow.pop %v9000
      %v9002 = vmul.f32 %v8622, 1.442695
      %v9003 = vpow.pop %v9002
      %v9004 = vmul.f32 %v8623, 1.442695
      %v9005 = vpow.pop %v9004
      %v9006 = vmul.f32 %v8624, 1.442695
      %v9007 = vpow.pop %v9006
      %v9008 = vmul.f32 %v8625, 1.442695
      %v9009 = vpow.pop %v9008
      %v9010 = vmul.f32 %v8626, 1.442695
      %v9011 = vpow.pop %v9010
      %v9012 = vmul.f32 %v8627, 1.442695
      %v9013 = vpow.pop %v9012
      %v9014 = vmul.f32 %v8628, 1.442695
      %v9015 = vpow.pop %v9014
      %v9016 = vmul.f32 %v8629, 1.442695
      %v9017 = vpow.pop %v9016
      %v9018 = vmul.f32 %v8630, 1.442695
      %v9019 = vpow.pop %v9018
      %v9020 = vmul.f32 %v8631, 1.442695
      %v9021 = vpow.pop %v9020
      %v9022 = vmul.f32 %v8632, 1.442695
      %v9023 = vpow.pop %v9022
      %v9024 = vmul.f32 %v8633, 1.442695
      %v9025 = vpow.pop %v9024
      %v9026 = vmul.f32 %v8634, 1.442695
      %v9027 = vpow.pop %v9026
      %v9028 = vmul.f32 %v8635, 1.442695
      %v9029 = vpow.pop %v9028
      %v9030 = vmul.f32 %v8636, 1.442695
      %v9031 = vpow.pop %v9030
      %v9032 = vmul.f32 %v8637, 1.442695
      %v9033 = vpow.pop %v9032
      %v9034 = vmul.f32 %v8638, 1.442695
      %v9035 = vpow.pop %v9034
      %v9036 = vmul.f32 %v8639, 1.442695
      %v9037 = vpow.pop %v9036
      %v9038 = vmul.f32 %v8640, 1.442695
      %v9039 = vpow.pop %v9038
      %v9040 = vmul.f32 %v8641, 1.442695
      %v9041 = vpow.pop %v9040
      %v9042 = vmul.f32 %v8642, 1.442695
      %v9043 = vpow.pop %v9042
      %v9044 = vmul.f32 %v8643, 1.442695
      %v9045 = vpow.pop %v9044
      %v9046 = vmul.f32 %v8644, 1.442695
      %v9047 = vpow.pop %v9046
      %v9048 = vmul.f32 %v8645, 1.442695
      %v9049 = vpow.pop %v9048
      %v9050 = vmul.f32 %v8646, 1.442695
      %v9051 = vpow.pop %v9050
      %v9052 = vmul.f32 %v8647, 1.442695
      %v9053 = vpow.pop %v9052
      %v9054 = vmul.f32 %v8648, 1.442695
      %v9055 = vpow.pop %v9054
      %v9056 = vmul.f32 %v8649, 1.442695
      %v9057 = vpow.pop %v9056
      %v9058 = vmul.f32 %v8650, 1.442695
      %v9059 = vpow.pop %v9058
      %v9060 = vmul.f32 %v8651, 1.442695
      %v9061 = vpow.pop %v9060
      %v9062 = vmul.f32 %v8652, 1.442695
      %v9063 = vpow.pop %v9062
      %v9064 = vmul.f32 %v8653, 1.442695
      %v9065 = vpow.pop %v9064
      %v9066 = vmul.f32 %v8654, 1.442695
      %v9067 = vpow.pop %v9066
      %v9068 = vmul.f32 %v8655, 1.442695
      %v9069 = vpow.pop %v9068
      %v9070 = vmul.f32 %v8656, 1.442695
      %v9071 = vpow.pop %v9070
      %v9072 = vmul.f32 %v8657, 1.442695
      %v9073 = vpow.pop %v9072
      %v9074 = vmul.f32 %v8658, 1.442695
      %v9075 = vpow.pop %v9074
      %v9076 = vmul.f32 %v8659, 1.442695
      %v9077 = vpow.pop %v9076
      %v9078 = vmul.f32 %v8660, 1.442695
      %v9079 = vpow.pop %v9078
      %v9080 = vmul.f32 %v8661, 1.442695
      %v9081 = vpow.pop %v9080
      %v9082 = vmul.f32 %v8662, 1.442695
      %v9083 = vpow.pop %v9082
      %v9084 = vmul.f32 %v8663, 1.442695
      %v9085 = vpow.pop %v9084
      %v9086 = vmul.f32 %v8664, 1.442695
      %v9087 = vpow.pop %v9086
      %v9088 = vmul.f32 %v8665, 1.442695
      %v9089 = vpow.pop %v9088
      %v9090 = vmul.f32 %v8666, 1.442695
      %v9091 = vpow.pop %v9090
      %v9092 = vmul.f32 %v8667, 1.442695
      %v9093 = vpow.pop %v9092
      %v9094 = vmul.f32 %v8668, 1.442695
      %v9095 = vpow.pop %v9094
      %v9096 = vmul.f32 %v8669, 1.442695
      %v9097 = vpow.pop %v9096
      %v9098 = vmul.f32 %v8670, 1.442695
      %v9099 = vpow.pop %v9098
      %v9100 = vmul.f32 %v8671, 1.442695
      %v9101 = vpow.pop %v9100
      %v9102 = vmul.f32 %v8672, 1.442695
      %v9103 = vpow.pop %v9102
      %v9104 = vmul.f32 %v8673, 1.442695
      %v9105 = vpow.pop %v9104
      %v9106 = vmul.f32 %v8674, 1.442695
      %v9107 = vpow.pop %v9106
      %v9108 = vmul.f32 %v8675, 1.442695
      %v9109 = vpow.pop %v9108
      %v9110 = vmul.f32 %v8676, 1.442695
      %v9111 = vpow.pop %v9110
      %v9112 = vmul.f32 %v8677, 1.442695
      %v9113 = vpow.pop %v9112
      %v9114 = vmul.f32 %v8678, 1.442695
      %v9115 = vpow.pop %v9114
      %v9116 = vmul.f32 %v8679, 1.442695
      %v9117 = vpow.pop %v9116
      %v9118 = vmul.f32 %v8680, 1.442695
      %v9119 = vpow.pop %v9118
      %v9120 = vmul.f32 %v8681, 1.442695
      %v9121 = vpow.pop %v9120
      %v9122 = vmul.f32 %v8682, 1.442695
      %v9123 = vpow.pop %v9122
      %v9124 = vmul.f32 %v8683, 1.442695
      %v9125 = vpow.pop %v9124
      %v9126 = vmul.f32 %v8684, 1.442695
      %v9127 = vpow.pop %v9126
      %v9128 = vmul.f32 %v8685, 1.442695
      %v9129 = vpow.pop %v9128
      %v9130 = vmul.f32 %v8686, 1.442695
      %v9131 = vpow.pop %v9130
      %v9132 = vmul.f32 %v8687, 1.442695
      %v9133 = vpow.pop %v9132
      %v9134 = vmul.f32 %v8688, 1.442695
      %v9135 = vpow.pop %v9134
      %v9136 = vmul.f32 %v8689, 1.442695
      %v9137 = vpow.pop %v9136
      %v9138 = vadd.f32 %v8691, 1.0
      %v9139 = vadd.f32 %v8693, 1.0
      %v9140 = vadd.f32 %v8695, 1.0
      %v9141 = vadd.f32 %v8697, 1.0
      %v9142 = vadd.f32 %v8699, 1.0
      %v9143 = vadd.f32 %v8701, 1.0
      %v9144 = vadd.f32 %v8703, 1.0
      %v9145 = vadd.f32 %v8705, 1.0
      %v9146 = vadd.f32 %v8707, 1.0
      %v9147 = vadd.f32 %v8709, 1.0
      %v9148 = vadd.f32 %v8711, 1.0
      %v9149 = vadd.f32 %v8713, 1.0
      %v9150 = vadd.f32 %v8715, 1.0
      %v9151 = vadd.f32 %v8717, 1.0
      %v9152 = vadd.f32 %v8719, 1.0
      %v9153 = vadd.f32 %v8721, 1.0
      %v9154 = vadd.f32 %v8723, 1.0
      %v9155 = vadd.f32 %v8725, 1.0
      %v9156 = vadd.f32 %v8727, 1.0
      %v9157 = vadd.f32 %v8729, 1.0
      %v9158 = vadd.f32 %v8731, 1.0
      %v9159 = vadd.f32 %v8733, 1.0
      %v9160 = vadd.f32 %v8735, 1.0
      %v9161 = vadd.f32 %v8737, 1.0
      %v9162 = vadd.f32 %v8739, 1.0
      %v9163 = vadd.f32 %v8741, 1.0
      %v9164 = vadd.f32 %v8743, 1.0
      %v9165 = vadd.f32 %v8745, 1.0
      %v9166 = vadd.f32 %v8747, 1.0
      %v9167 = vadd.f32 %v8749, 1.0
      %v9168 = vadd.f32 %v8751, 1.0
      %v9169 = vadd.f32 %v8753, 1.0
      %v9170 = vadd.f32 %v8755, 1.0
      %v9171 = vadd.f32 %v8757, 1.0
      %v9172 = vadd.f32 %v8759, 1.0
      %v9173 = vadd.f32 %v8761, 1.0
      %v9174 = vadd.f32 %v8763, 1.0
      %v9175 = vadd.f32 %v8765, 1.0
      %v9176 = vadd.f32 %v8767, 1.0
      %v9177 = vadd.f32 %v8769, 1.0
      %v9178 = vadd.f32 %v8771, 1.0
      %v9179 = vadd.f32 %v8773, 1.0
      %v9180 = vadd.f32 %v8775, 1.0
      %v9181 = vadd.f32 %v8777, 1.0
      %v9182 = vadd.f32 %v8779, 1.0
      %v9183 = vadd.f32 %v8781, 1.0
      %v9184 = vadd.f32 %v8783, 1.0
      %v9185 = vadd.f32 %v8785, 1.0
      %v9186 = vadd.f32 %v8787, 1.0
      %v9187 = vadd.f32 %v8789, 1.0
      %v9188 = vadd.f32 %v8791, 1.0
      %v9189 = vadd.f32 %v8793, 1.0
      %v9190 = vadd.f32 %v8795, 1.0
      %v9191 = vadd.f32 %v8797, 1.0
      %v9192 = vadd.f32 %v8799, 1.0
      %v9193 = vadd.f32 %v8801, 1.0
      %v9194 = vadd.f32 %v8803, 1.0
      %v9195 = vadd.f32 %v8805, 1.0
      %v9196 = vadd.f32 %v8807, 1.0
      %v9197 = vadd.f32 %v8809, 1.0
      %v9198 = vadd.f32 %v8811, 1.0
      %v9199 = vadd.f32 %v8813, 1.0
      %v9200 = vadd.f32 %v8815, 1.0
      %v9201 = vadd.f32 %v8817, 1.0
      %v9202 = vadd.f32 %v8819, 1.0
      %v9203 = vadd.f32 %v8821, 1.0
      %v9204 = vadd.f32 %v8823, 1.0
      %v9205 = vadd.f32 %v8825, 1.0
      %v9206 = vadd.f32 %v8827, 1.0
      %v9207 = vadd.f32 %v8829, 1.0
      %v9208 = vadd.f32 %v8831, 1.0
      %v9209 = vadd.f32 %v8833, 1.0
      %v9210 = vadd.f32 %v8835, 1.0
      %v9211 = vadd.f32 %v8837, 1.0
      %v9212 = vadd.f32 %v8839, 1.0
      %v9213 = vadd.f32 %v8841, 1.0
      %v9214 = vadd.f32 %v8843, 1.0
      %v9215 = vadd.f32 %v8845, 1.0
      %v9216 = vadd.f32 %v8847, 1.0
      %v9217 = vadd.f32 %v8849, 1.0
      %v9218 = vadd.f32 %v8851, 1.0
      %v9219 = vadd.f32 %v8853, 1.0
      %v9220 = vadd.f32 %v8855, 1.0
      %v9221 = vadd.f32 %v8857, 1.0
      %v9222 = vadd.f32 %v8859, 1.0
      %v9223 = vadd.f32 %v8861, 1.0
      %v9224 = vadd.f32 %v8863, 1.0
      %v9225 = vadd.f32 %v8865, 1.0
      %v9226 = vadd.f32 %v8867, 1.0
      %v9227 = vadd.f32 %v8869, 1.0
      %v9228 = vadd.f32 %v8871, 1.0
      %v9229 = vadd.f32 %v8873, 1.0
      %v9230 = vadd.f32 %v8875, 1.0
      %v9231 = vadd.f32 %v8877, 1.0
      %v9232 = vadd.f32 %v8879, 1.0
      %v9233 = vadd.f32 %v8881, 1.0
      %v9234 = vadd.f32 %v8883, 1.0
      %v9235 = vadd.f32 %v8885, 1.0
      %v9236 = vadd.f32 %v8887, 1.0
      %v9237 = vadd.f32 %v8889, 1.0
      %v9238 = vadd.f32 %v8891, 1.0
      %v9239 = vadd.f32 %v8893, 1.0
      %v9240 = vadd.f32 %v8895, 1.0
      %v9241 = vadd.f32 %v8897, 1.0
      %v9242 = vadd.f32 %v8899, 1.0
      %v9243 = vadd.f32 %v8901, 1.0
      %v9244 = vadd.f32 %v8903, 1.0
      %v9245 = vadd.f32 %v8905, 1.0
      %v9246 = vadd.f32 %v8907, 1.0
      %v9247 = vadd.f32 %v8909, 1.0
      %v9248 = vadd.f32 %v8911, 1.0
      %v9249 = vadd.f32 %v8913, 1.0
      %v9250 = vadd.f32 %v8915, 1.0
      %v9251 = vadd.f32 %v8917, 1.0
      %v9252 = vadd.f32 %v8919, 1.0
      %v9253 = vadd.f32 %v8921, 1.0
      %v9254 = vadd.f32 %v8923, 1.0
      %v9255 = vadd.f32 %v8925, 1.0
      %v9256 = vadd.f32 %v8927, 1.0
      %v9257 = vadd.f32 %v8929, 1.0
      %v9258 = vadd.f32 %v8931, 1.0
      %v9259 = vadd.f32 %v8933, 1.0
      %v9260 = vadd.f32 %v8935, 1.0
      %v9261 = vadd.f32 %v8937, 1.0
      %v9262 = vadd.f32 %v8939, 1.0
      %v9263 = vadd.f32 %v8941, 1.0
      %v9264 = vadd.f32 %v8943, 1.0
      %v9265 = vadd.f32 %v8945, 1.0
      %v9266 = vadd.f32 %v8947, 1.0
      %v9267 = vadd.f32 %v8949, 1.0
      %v9268 = vadd.f32 %v8951, 1.0
      %v9269 = vadd.f32 %v8953, 1.0
      %v9270 = vadd.f32 %v8955, 1.0
      %v9271 = vadd.f32 %v8957, 1.0
      %v9272 = vadd.f32 %v8959, 1.0
      %v9273 = vadd.f32 %v8961, 1.0
      %v9274 = vadd.f32 %v8963, 1.0
      %v9275 = vadd.f32 %v8965, 1.0
      %v9276 = vadd.f32 %v8967, 1.0
      %v9277 = vadd.f32 %v8969, 1.0
      %v9278 = vadd.f32 %v8971, 1.0
      %v9279 = vadd.f32 %v8973, 1.0
      %v9280 = vadd.f32 %v8975, 1.0
      %v9281 = vadd.f32 %v8977, 1.0
      %v9282 = vadd.f32 %v8979, 1.0
      %v9283 = vadd.f32 %v8981, 1.0
      %v9284 = vadd.f32 %v8983, 1.0
      %v9285 = vadd.f32 %v8985, 1.0
      %v9286 = vadd.f32 %v8987, 1.0
      %v9287 = vadd.f32 %v8989, 1.0
      %v9288 = vadd.f32 %v8991, 1.0
      %v9289 = vadd.f32 %v8993, 1.0
      %v9290 = vadd.f32 %v8995, 1.0
      %v9291 = vadd.f32 %v8997, 1.0
      %v9292 = vadd.f32 %v8999, 1.0
      %v9293 = vadd.f32 %v9001, 1.0
      %v9294 = vadd.f32 %v9003, 1.0
      %v9295 = vadd.f32 %v9005, 1.0
      %v9296 = vadd.f32 %v9007, 1.0
      %v9297 = vadd.f32 %v9009, 1.0
      %v9298 = vadd.f32 %v9011, 1.0
      %v9299 = vadd.f32 %v9013, 1.0
      %v9300 = vadd.f32 %v9015, 1.0
      %v9301 = vadd.f32 %v9017, 1.0
      %v9302 = vadd.f32 %v9019, 1.0
      %v9303 = vadd.f32 %v9021, 1.0
      %v9304 = vadd.f32 %v9023, 1.0
      %v9305 = vadd.f32 %v9025, 1.0
      %v9306 = vadd.f32 %v9027, 1.0
      %v9307 = vadd.f32 %v9029, 1.0
      %v9308 = vadd.f32 %v9031, 1.0
      %v9309 = vadd.f32 %v9033, 1.0
      %v9310 = vadd.f32 %v9035, 1.0
      %v9311 = vadd.f32 %v9037, 1.0
      %v9312 = vadd.f32 %v9039, 1.0
      %v9313 = vadd.f32 %v9041, 1.0
      %v9314 = vadd.f32 %v9043, 1.0
      %v9315 = vadd.f32 %v9045, 1.0
      %v9316 = vadd.f32 %v9047, 1.0
      %v9317 = vadd.f32 %v9049, 1.0
      %v9318 = vadd.f32 %v9051, 1.0
      %v9319 = vadd.f32 %v9053, 1.0
      %v9320 = vadd.f32 %v9055, 1.0
      %v9321 = vadd.f32 %v9057, 1.0
      %v9322 = vadd.f32 %v9059, 1.0
      %v9323 = vadd.f32 %v9061, 1.0
      %v9324 = vadd.f32 %v9063, 1.0
      %v9325 = vadd.f32 %v9065, 1.0
      %v9326 = vadd.f32 %v9067, 1.0
      %v9327 = vadd.f32 %v9069, 1.0
      %v9328 = vadd.f32 %v9071, 1.0
      %v9329 = vadd.f32 %v9073, 1.0
      %v9330 = vadd.f32 %v9075, 1.0
      %v9331 = vadd.f32 %v9077, 1.0
      %v9332 = vadd.f32 %v9079, 1.0
      %v9333 = vadd.f32 %v9081, 1.0
      %v9334 = vadd.f32 %v9083, 1.0
      %v9335 = vadd.f32 %v9085, 1.0
      %v9336 = vadd.f32 %v9087, 1.0
      %v9337 = vadd.f32 %v9089, 1.0
      %v9338 = vadd.f32 %v9091, 1.0
      %v9339 = vadd.f32 %v9093, 1.0
      %v9340 = vadd.f32 %v9095, 1.0
      %v9341 = vadd.f32 %v9097, 1.0
      %v9342 = vadd.f32 %v9099, 1.0
      %v9343 = vadd.f32 %v9101, 1.0
      %v9344 = vadd.f32 %v9103, 1.0
      %v9345 = vadd.f32 %v9105, 1.0
      %v9346 = vadd.f32 %v9107, 1.0
      %v9347 = vadd.f32 %v9109, 1.0
      %v9348 = vadd.f32 %v9111, 1.0
      %v9349 = vadd.f32 %v9113, 1.0
      %v9350 = vadd.f32 %v9115, 1.0
      %v9351 = vadd.f32 %v9117, 1.0
      %v9352 = vadd.f32 %v9119, 1.0
      %v9353 = vadd.f32 %v9121, 1.0
      %v9354 = vadd.f32 %v9123, 1.0
      %v9355 = vadd.f32 %v9125, 1.0
      %v9356 = vadd.f32 %v9127, 1.0
      %v9357 = vadd.f32 %v9129, 1.0
      %v9358 = vadd.f32 %v9131, 1.0
      %v9359 = vadd.f32 %v9133, 1.0
      %v9360 = vadd.f32 %v9135, 1.0
      %v9361 = vadd.f32 %v9137, 1.0
      %v9362 = vrcp.pop %v9138
      %v9363 = vmul.f32 1.0, %v9362
      %v9364 = vrcp.pop %v9139
      %v9365 = vmul.f32 1.0, %v9364
      %v9366 = vrcp.pop %v9140
      %v9367 = vmul.f32 1.0, %v9366
      %v9368 = vrcp.pop %v9141
      %v9369 = vmul.f32 1.0, %v9368
      %v9370 = vrcp.pop %v9142
      %v9371 = vmul.f32 1.0, %v9370
      %v9372 = vrcp.pop %v9143
      %v9373 = vmul.f32 1.0, %v9372
      %v9374 = vrcp.pop %v9144
      %v9375 = vmul.f32 1.0, %v9374
      %v9376 = vrcp.pop %v9145
      %v9377 = vmul.f32 1.0, %v9376
      %v9378 = vrcp.pop %v9146
      %v9379 = vmul.f32 1.0, %v9378
      %v9380 = vrcp.pop %v9147
      %v9381 = vmul.f32 1.0, %v9380
      %v9382 = vrcp.pop %v9148
      %v9383 = vmul.f32 1.0, %v9382
      %v9384 = vrcp.pop %v9149
      %v9385 = vmul.f32 1.0, %v9384
      %v9386 = vrcp.pop %v9150
      %v9387 = vmul.f32 1.0, %v9386
      %v9388 = vrcp.pop %v9151
      %v9389 = vmul.f32 1.0, %v9388
      %v9390 = vrcp.pop %v9152
      %v9391 = vmul.f32 1.0, %v9390
      %v9392 = vrcp.pop %v9153
      %v9393 = vmul.f32 1.0, %v9392
      %v9394 = vrcp.pop %v9154
      %v9395 = vmul.f32 1.0, %v9394
      %v9396 = vrcp.pop %v9155
      %v9397 = vmul.f32 1.0, %v9396
      %v9398 = vrcp.pop %v9156
      %v9399 = vmul.f32 1.0, %v9398
      %v9400 = vrcp.pop %v9157
      %v9401 = vmul.f32 1.0, %v9400
      %v9402 = vrcp.pop %v9158
      %v9403 = vmul.f32 1.0, %v9402
      %v9404 = vrcp.pop %v9159
      %v9405 = vmul.f32 1.0, %v9404
      %v9406 = vrcp.pop %v9160
      %v9407 = vmul.f32 1.0, %v9406
      %v9408 = vrcp.pop %v9161
      %v9409 = vmul.f32 1.0, %v9408
      %v9410 = vrcp.pop %v9162
      %v9411 = vmul.f32 1.0, %v9410
      %v9412 = vrcp.pop %v9163
      %v9413 = vmul.f32 1.0, %v9412
      %v9414 = vrcp.pop %v9164
      %v9415 = vmul.f32 1.0, %v9414
      %v9416 = vrcp.pop %v9165
      %v9417 = vmul.f32 1.0, %v9416
      %v9418 = vrcp.pop %v9166
      %v9419 = vmul.f32 1.0, %v9418
      %v9420 = vrcp.pop %v9167
      %v9421 = vmul.f32 1.0, %v9420
      %v9422 = vrcp.pop %v9168
      %v9423 = vmul.f32 1.0, %v9422
      %v9424 = vrcp.pop %v9169
      %v9425 = vmul.f32 1.0, %v9424
      %v9426 = vrcp.pop %v9170
      %v9427 = vmul.f32 1.0, %v9426
      %v9428 = vrcp.pop %v9171
      %v9429 = vmul.f32 1.0, %v9428
      %v9430 = vrcp.pop %v9172
      %v9431 = vmul.f32 1.0, %v9430
      %v9432 = vrcp.pop %v9173
      %v9433 = vmul.f32 1.0, %v9432
      %v9434 = vrcp.pop %v9174
      %v9435 = vmul.f32 1.0, %v9434
      %v9436 = vrcp.pop %v9175
      %v9437 = vmul.f32 1.0, %v9436
      %v9438 = vrcp.pop %v9176
      %v9439 = vmul.f32 1.0, %v9438
      %v9440 = vrcp.pop %v9177
      %v9441 = vmul.f32 1.0, %v9440
      %v9442 = vrcp.pop %v9178
      %v9443 = vmul.f32 1.0, %v9442
      %v9444 = vrcp.pop %v9179
      %v9445 = vmul.f32 1.0, %v9444
      %v9446 = vrcp.pop %v9180
      %v9447 = vmul.f32 1.0, %v9446
      %v9448 = vrcp.pop %v9181
      %v9449 = vmul.f32 1.0, %v9448
      %v9450 = vrcp.pop %v9182
      %v9451 = vmul.f32 1.0, %v9450
      %v9452 = vrcp.pop %v9183
      %v9453 = vmul.f32 1.0, %v9452
      %v9454 = vrcp.pop %v9184
      %v9455 = vmul.f32 1.0, %v9454
      %v9456 = vrcp.pop %v9185
      %v9457 = vmul.f32 1.0, %v9456
      %v9458 = vrcp.pop %v9186
      %v9459 = vmul.f32 1.0, %v9458
      %v9460 = vrcp.pop %v9187
      %v9461 = vmul.f32 1.0, %v9460
      %v9462 = vrcp.pop %v9188
      %v9463 = vmul.f32 1.0, %v9462
      %v9464 = vrcp.pop %v9189
      %v9465 = vmul.f32 1.0, %v9464
      %v9466 = vrcp.pop %v9190
      %v9467 = vmul.f32 1.0, %v9466
      %v9468 = vrcp.pop %v9191
      %v9469 = vmul.f32 1.0, %v9468
      %v9470 = vrcp.pop %v9192
      %v9471 = vmul.f32 1.0, %v9470
      %v9472 = vrcp.pop %v9193
      %v9473 = vmul.f32 1.0, %v9472
      %v9474 = vrcp.pop %v9194
      %v9475 = vmul.f32 1.0, %v9474
      %v9476 = vrcp.pop %v9195
      %v9477 = vmul.f32 1.0, %v9476
      %v9478 = vrcp.pop %v9196
      %v9479 = vmul.f32 1.0, %v9478
      %v9480 = vrcp.pop %v9197
      %v9481 = vmul.f32 1.0, %v9480
      %v9482 = vrcp.pop %v9198
      %v9483 = vmul.f32 1.0, %v9482
      %v9484 = vrcp.pop %v9199
      %v9485 = vmul.f32 1.0, %v9484
      %v9486 = vrcp.pop %v9200
      %v9487 = vmul.f32 1.0, %v9486
      %v9488 = vrcp.pop %v9201
      %v9489 = vmul.f32 1.0, %v9488
      %v9490 = vrcp.pop %v9202
      %v9491 = vmul.f32 1.0, %v9490
      %v9492 = vrcp.pop %v9203
      %v9493 = vmul.f32 1.0, %v9492
      %v9494 = vrcp.pop %v9204
      %v9495 = vmul.f32 1.0, %v9494
      %v9496 = vrcp.pop %v9205
      %v9497 = vmul.f32 1.0, %v9496
      %v9498 = vrcp.pop %v9206
      %v9499 = vmul.f32 1.0, %v9498
      %v9500 = vrcp.pop %v9207
      %v9501 = vmul.f32 1.0, %v9500
      %v9502 = vrcp.pop %v9208
      %v9503 = vmul.f32 1.0, %v9502
      %v9504 = vrcp.pop %v9209
      %v9505 = vmul.f32 1.0, %v9504
      %v9506 = vrcp.pop %v9210
      %v9507 = vmul.f32 1.0, %v9506
      %v9508 = vrcp.pop %v9211
      %v9509 = vmul.f32 1.0, %v9508
      %v9510 = vrcp.pop %v9212
      %v9511 = vmul.f32 1.0, %v9510
      %v9512 = vrcp.pop %v9213
      %v9513 = vmul.f32 1.0, %v9512
      %v9514 = vrcp.pop %v9214
      %v9515 = vmul.f32 1.0, %v9514
      %v9516 = vrcp.pop %v9215
      %v9517 = vmul.f32 1.0, %v9516
      %v9518 = vrcp.pop %v9216
      %v9519 = vmul.f32 1.0, %v9518
      %v9520 = vrcp.pop %v9217
      %v9521 = vmul.f32 1.0, %v9520
      %v9522 = vrcp.pop %v9218
      %v9523 = vmul.f32 1.0, %v9522
      %v9524 = vrcp.pop %v9219
      %v9525 = vmul.f32 1.0, %v9524
      %v9526 = vrcp.pop %v9220
      %v9527 = vmul.f32 1.0, %v9526
      %v9528 = vrcp.pop %v9221
      %v9529 = vmul.f32 1.0, %v9528
      %v9530 = vrcp.pop %v9222
      %v9531 = vmul.f32 1.0, %v9530
      %v9532 = vrcp.pop %v9223
      %v9533 = vmul.f32 1.0, %v9532
      %v9534 = vrcp.pop %v9224
      %v9535 = vmul.f32 1.0, %v9534
      %v9536 = vrcp.pop %v9225
      %v9537 = vmul.f32 1.0, %v9536
      %v9538 = vrcp.pop %v9226
      %v9539 = vmul.f32 1.0, %v9538
      %v9540 = vrcp.pop %v9227
      %v9541 = vmul.f32 1.0, %v9540
      %v9542 = vrcp.pop %v9228
      %v9543 = vmul.f32 1.0, %v9542
      %v9544 = vrcp.pop %v9229
      %v9545 = vmul.f32 1.0, %v9544
      %v9546 = vrcp.pop %v9230
      %v9547 = vmul.f32 1.0, %v9546
      %v9548 = vrcp.pop %v9231
      %v9549 = vmul.f32 1.0, %v9548
      %v9550 = vrcp.pop %v9232
      %v9551 = vmul.f32 1.0, %v9550
      %v9552 = vrcp.pop %v9233
      %v9553 = vmul.f32 1.0, %v9552
      %v9554 = vrcp.pop %v9234
      %v9555 = vmul.f32 1.0, %v9554
      %v9556 = vrcp.pop %v9235
      %v9557 = vmul.f32 1.0, %v9556
      %v9558 = vrcp.pop %v9236
      %v9559 = vmul.f32 1.0, %v9558
      %v9560 = vrcp.pop %v9237
      %v9561 = vmul.f32 1.0, %v9560
      %v9562 = vrcp.pop %v9238
      %v9563 = vmul.f32 1.0, %v9562
      %v9564 = vrcp.pop %v9239
      %v9565 = vmul.f32 1.0, %v9564
      %v9566 = vrcp.pop %v9240
      %v9567 = vmul.f32 1.0, %v9566
      %v9568 = vrcp.pop %v9241
      %v9569 = vmul.f32 1.0, %v9568
      %v9570 = vrcp.pop %v9242
      %v9571 = vmul.f32 1.0, %v9570
      %v9572 = vrcp.pop %v9243
      %v9573 = vmul.f32 1.0, %v9572
      %v9574 = vrcp.pop %v9244
      %v9575 = vmul.f32 1.0, %v9574
      %v9576 = vrcp.pop %v9245
      %v9577 = vmul.f32 1.0, %v9576
      %v9578 = vrcp.pop %v9246
      %v9579 = vmul.f32 1.0, %v9578
      %v9580 = vrcp.pop %v9247
      %v9581 = vmul.f32 1.0, %v9580
      %v9582 = vrcp.pop %v9248
      %v9583 = vmul.f32 1.0, %v9582
      %v9584 = vrcp.pop %v9249
      %v9585 = vmul.f32 1.0, %v9584
      %v9586 = vrcp.pop %v9250
      %v9587 = vmul.f32 1.0, %v9586
      %v9588 = vrcp.pop %v9251
      %v9589 = vmul.f32 1.0, %v9588
      %v9590 = vrcp.pop %v9252
      %v9591 = vmul.f32 1.0, %v9590
      %v9592 = vrcp.pop %v9253
      %v9593 = vmul.f32 1.0, %v9592
      %v9594 = vrcp.pop %v9254
      %v9595 = vmul.f32 1.0, %v9594
      %v9596 = vrcp.pop %v9255
      %v9597 = vmul.f32 1.0, %v9596
      %v9598 = vrcp.pop %v9256
      %v9599 = vmul.f32 1.0, %v9598
      %v9600 = vrcp.pop %v9257
      %v9601 = vmul.f32 1.0, %v9600
      %v9602 = vrcp.pop %v9258
      %v9603 = vmul.f32 1.0, %v9602
      %v9604 = vrcp.pop %v9259
      %v9605 = vmul.f32 1.0, %v9604
      %v9606 = vrcp.pop %v9260
      %v9607 = vmul.f32 1.0, %v9606
      %v9608 = vrcp.pop %v9261
      %v9609 = vmul.f32 1.0, %v9608
      %v9610 = vrcp.pop %v9262
      %v9611 = vmul.f32 1.0, %v9610
      %v9612 = vrcp.pop %v9263
      %v9613 = vmul.f32 1.0, %v9612
      %v9614 = vrcp.pop %v9264
      %v9615 = vmul.f32 1.0, %v9614
      %v9616 = vrcp.pop %v9265
      %v9617 = vmul.f32 1.0, %v9616
      %v9618 = vrcp.pop %v9266
      %v9619 = vmul.f32 1.0, %v9618
      %v9620 = vrcp.pop %v9267
      %v9621 = vmul.f32 1.0, %v9620
      %v9622 = vrcp.pop %v9268
      %v9623 = vmul.f32 1.0, %v9622
      %v9624 = vrcp.pop %v9269
      %v9625 = vmul.f32 1.0, %v9624
      %v9626 = vrcp.pop %v9270
      %v9627 = vmul.f32 1.0, %v9626
      %v9628 = vrcp.pop %v9271
      %v9629 = vmul.f32 1.0, %v9628
      %v9630 = vrcp.pop %v9272
      %v9631 = vmul.f32 1.0, %v9630
      %v9632 = vrcp.pop %v9273
      %v9633 = vmul.f32 1.0, %v9632
      %v9634 = vrcp.pop %v9274
      %v9635 = vmul.f32 1.0, %v9634
      %v9636 = vrcp.pop %v9275
      %v9637 = vmul.f32 1.0, %v9636
      %v9638 = vrcp.pop %v9276
      %v9639 = vmul.f32 1.0, %v9638
      %v9640 = vrcp.pop %v9277
      %v9641 = vmul.f32 1.0, %v9640
      %v9642 = vrcp.pop %v9278
      %v9643 = vmul.f32 1.0, %v9642
      %v9644 = vrcp.pop %v9279
      %v9645 = vmul.f32 1.0, %v9644
      %v9646 = vrcp.pop %v9280
      %v9647 = vmul.f32 1.0, %v9646
      %v9648 = vrcp.pop %v9281
      %v9649 = vmul.f32 1.0, %v9648
      %v9650 = vrcp.pop %v9282
      %v9651 = vmul.f32 1.0, %v9650
      %v9652 = vrcp.pop %v9283
      %v9653 = vmul.f32 1.0, %v9652
      %v9654 = vrcp.pop %v9284
      %v9655 = vmul.f32 1.0, %v9654
      %v9656 = vrcp.pop %v9285
      %v9657 = vmul.f32 1.0, %v9656
      %v9658 = vrcp.pop %v9286
      %v9659 = vmul.f32 1.0, %v9658
      %v9660 = vrcp.pop %v9287
      %v9661 = vmul.f32 1.0, %v9660
      %v9662 = vrcp.pop %v9288
      %v9663 = vmul.f32 1.0, %v9662
      %v9664 = vrcp.pop %v9289
      %v9665 = vmul.f32 1.0, %v9664
      %v9666 = vrcp.pop %v9290
      %v9667 = vmul.f32 1.0, %v9666
      %v9668 = vrcp.pop %v9291
      %v9669 = vmul.f32 1.0, %v9668
      %v9670 = vrcp.pop %v9292
      %v9671 = vmul.f32 1.0, %v9670
      %v9672 = vrcp.pop %v9293
      %v9673 = vmul.f32 1.0, %v9672
      %v9674 = vrcp.pop %v9294
      %v9675 = vmul.f32 1.0, %v9674
      %v9676 = vrcp.pop %v9295
      %v9677 = vmul.f32 1.0, %v9676
      %v9678 = vrcp.pop %v9296
      %v9679 = vmul.f32 1.0, %v9678
      %v9680 = vrcp.pop %v9297
      %v9681 = vmul.f32 1.0, %v9680
      %v9682 = vrcp.pop %v9298
      %v9683 = vmul.f32 1.0, %v9682
      %v9684 = vrcp.pop %v9299
      %v9685 = vmul.f32 1.0, %v9684
      %v9686 = vrcp.pop %v9300
      %v9687 = vmul.f32 1.0, %v9686
      %v9688 = vrcp.pop %v9301
      %v9689 = vmul.f32 1.0, %v9688
      %v9690 = vrcp.pop %v9302
      %v9691 = vmul.f32 1.0, %v9690
      %v9692 = vrcp.pop %v9303
      %v9693 = vmul.f32 1.0, %v9692
      %v9694 = vrcp.pop %v9304
      %v9695 = vmul.f32 1.0, %v9694
      %v9696 = vrcp.pop %v9305
      %v9697 = vmul.f32 1.0, %v9696
      %v9698 = vrcp.pop %v9306
      %v9699 = vmul.f32 1.0, %v9698
      %v9700 = vrcp.pop %v9307
      %v9701 = vmul.f32 1.0, %v9700
      %v9702 = vrcp.pop %v9308
      %v9703 = vmul.f32 1.0, %v9702
      %v9704 = vrcp.pop %v9309
      %v9705 = vmul.f32 1.0, %v9704
      %v9706 = vrcp.pop %v9310
      %v9707 = vmul.f32 1.0, %v9706
      %v9708 = vrcp.pop %v9311
      %v9709 = vmul.f32 1.0, %v9708
      %v9710 = vrcp.pop %v9312
      %v9711 = vmul.f32 1.0, %v9710
      %v9712 = vrcp.pop %v9313
      %v9713 = vmul.f32 1.0, %v9712
      %v9714 = vrcp.pop %v9314
      %v9715 = vmul.f32 1.0, %v9714
      %v9716 = vrcp.pop %v9315
      %v9717 = vmul.f32 1.0, %v9716
      %v9718 = vrcp.pop %v9316
      %v9719 = vmul.f32 1.0, %v9718
      %v9720 = vrcp.pop %v9317
      %v9721 = vmul.f32 1.0, %v9720
      %v9722 = vrcp.pop %v9318
      %v9723 = vmul.f32 1.0, %v9722
      %v9724 = vrcp.pop %v9319
      %v9725 = vmul.f32 1.0, %v9724
      %v9726 = vrcp.pop %v9320
      %v9727 = vmul.f32 1.0, %v9726
      %v9728 = vrcp.pop %v9321
      %v9729 = vmul.f32 1.0, %v9728
      %v9730 = vrcp.pop %v9322
      %v9731 = vmul.f32 1.0, %v9730
      %v9732 = vrcp.pop %v9323
      %v9733 = vmul.f32 1.0, %v9732
      %v9734 = vrcp.pop %v9324
      %v9735 = vmul.f32 1.0, %v9734
      %v9736 = vrcp.pop %v9325
      %v9737 = vmul.f32 1.0, %v9736
      %v9738 = vrcp.pop %v9326
      %v9739 = vmul.f32 1.0, %v9738
      %v9740 = vrcp.pop %v9327
      %v9741 = vmul.f32 1.0, %v9740
      %v9742 = vrcp.pop %v9328
      %v9743 = vmul.f32 1.0, %v9742
      %v9744 = vrcp.pop %v9329
      %v9745 = vmul.f32 1.0, %v9744
      %v9746 = vrcp.pop %v9330
      %v9747 = vmul.f32 1.0, %v9746
      %v9748 = vrcp.pop %v9331
      %v9749 = vmul.f32 1.0, %v9748
      %v9750 = vrcp.pop %v9332
      %v9751 = vmul.f32 1.0, %v9750
      %v9752 = vrcp.pop %v9333
      %v9753 = vmul.f32 1.0, %v9752
      %v9754 = vrcp.pop %v9334
      %v9755 = vmul.f32 1.0, %v9754
      %v9756 = vrcp.pop %v9335
      %v9757 = vmul.f32 1.0, %v9756
      %v9758 = vrcp.pop %v9336
      %v9759 = vmul.f32 1.0, %v9758
      %v9760 = vrcp.pop %v9337
      %v9761 = vmul.f32 1.0, %v9760
      %v9762 = vrcp.pop %v9338
      %v9763 = vmul.f32 1.0, %v9762
      %v9764 = vrcp.pop %v9339
      %v9765 = vmul.f32 1.0, %v9764
      %v9766 = vrcp.pop %v9340
      %v9767 = vmul.f32 1.0, %v9766
      %v9768 = vrcp.pop %v9341
      %v9769 = vmul.f32 1.0, %v9768
      %v9770 = vrcp.pop %v9342
      %v9771 = vmul.f32 1.0, %v9770
      %v9772 = vrcp.pop %v9343
      %v9773 = vmul.f32 1.0, %v9772
      %v9774 = vrcp.pop %v9344
      %v9775 = vmul.f32 1.0, %v9774
      %v9776 = vrcp.pop %v9345
      %v9777 = vmul.f32 1.0, %v9776
      %v9778 = vrcp.pop %v9346
      %v9779 = vmul.f32 1.0, %v9778
      %v9780 = vrcp.pop %v9347
      %v9781 = vmul.f32 1.0, %v9780
      %v9782 = vrcp.pop %v9348
      %v9783 = vmul.f32 1.0, %v9782
      %v9784 = vrcp.pop %v9349
      %v9785 = vmul.f32 1.0, %v9784
      %v9786 = vrcp.pop %v9350
      %v9787 = vmul.f32 1.0, %v9786
      %v9788 = vrcp.pop %v9351
      %v9789 = vmul.f32 1.0, %v9788
      %v9790 = vrcp.pop %v9352
      %v9791 = vmul.f32 1.0, %v9790
      %v9792 = vrcp.pop %v9353
      %v9793 = vmul.f32 1.0, %v9792
      %v9794 = vrcp.pop %v9354
      %v9795 = vmul.f32 1.0, %v9794
      %v9796 = vrcp.pop %v9355
      %v9797 = vmul.f32 1.0, %v9796
      %v9798 = vrcp.pop %v9356
      %v9799 = vmul.f32 1.0, %v9798
      %v9800 = vrcp.pop %v9357
      %v9801 = vmul.f32 1.0, %v9800
      %v9802 = vrcp.pop %v9358
      %v9803 = vmul.f32 1.0, %v9802
      %v9804 = vrcp.pop %v9359
      %v9805 = vmul.f32 1.0, %v9804
      %v9806 = vrcp.pop %v9360
      %v9807 = vmul.f32 1.0, %v9806
      %v9808 = vrcp.pop %v9361
      %v9809 = vmul.f32 1.0, %v9808
      %9810 = vst [vmem:[%s339] sm:$0xff] %v9363
      %9811 = vst [vmem:[%s339 + $0x8] sm:$0xff] %v9365
      %9812 = vst [vmem:[%s339 + $0x10] sm:$0xff] %v9367
      %9813 = vst [vmem:[%s339 + $0x18] sm:$0xff] %v9369
      %9814 = vst [vmem:[%s339 + $0x20] sm:$0xff] %v9371
      %9815 = vst [vmem:[%s339 + $0x28] sm:$0xff] %v9373
      %9816 = vst [vmem:[%s339 + $0x30] sm:$0xff] %v9375
      %9817 = vst [vmem:[%s339 + $0x38] sm:$0xff] %v9377
      %9818 = vst [vmem:[%s339 + $0x40] sm:$0xff] %v9379
      %9819 = vst [vmem:[%s339 + $0x48] sm:$0xff] %v9381
      %9820 = vst [vmem:[%s339 + $0x50] sm:$0xff] %v9383
      %9821 = vst [vmem:[%s339 + $0x58] sm:$0xff] %v9385
      %9822 = vst [vmem:[%s339 + $0x60] sm:$0xff] %v9387
      %9823 = vst [vmem:[%s339 + $0x68] sm:$0xff] %v9389
      %9824 = vst [vmem:[%s339 + $0x70] sm:$0xff] %v9391
      %9825 = vst [vmem:[%s339 + $0x78] sm:$0xff] %v9393
      %9826 = vst [vmem:[%s339 + $0x80] sm:$0xff] %v9395
      %9827 = vst [vmem:[%s339 + $0x88] sm:$0xff] %v9397
      %9828 = vst [vmem:[%s339 + $0x90] sm:$0xff] %v9399
      %9829 = vst [vmem:[%s339 + $0x98] sm:$0xff] %v9401
      %9830 = vst [vmem:[%s339 + $0xa0] sm:$0xff] %v9403
      %9831 = vst [vmem:[%s339 + $0xa8] sm:$0xff] %v9405
      %9832 = vst [vmem:[%s339 + $0xb0] sm:$0xff] %v9407
      %9833 = vst [vmem:[%s339 + $0xb8] sm:$0xff] %v9409
      %9834 = vst [vmem:[%s339 + $0xc0] sm:$0xff] %v9411
      %9835 = vst [vmem:[%s339 + $0xc8] sm:$0xff] %v9413
      %9836 = vst [vmem:[%s339 + $0xd0] sm:$0xff] %v9415
      %9837 = vst [vmem:[%s339 + $0xd8] sm:$0xff] %v9417
      %9838 = vst [vmem:[%s339 + $0xe0] sm:$0xff] %v9419
      %9839 = vst [vmem:[%s339 + $0xe8] sm:$0xff] %v9421
      %9840 = vst [vmem:[%s339 + $0xf0] sm:$0xff] %v9423
      %9841 = vst [vmem:[%s339 + $0xf8] sm:$0xff] %v9425
      %9842 = vst [vmem:[%s339 + $0x100] sm:$0xff] %v9427
      %9843 = vst [vmem:[%s339 + $0x108] sm:$0xff] %v9429
      %9844 = vst [vmem:[%s339 + $0x110] sm:$0xff] %v9431
      %9845 = vst [vmem:[%s339 + $0x118] sm:$0xff] %v9433
      %9846 = vst [vmem:[%s339 + $0x120] sm:$0xff] %v9435
      %9847 = vst [vmem:[%s339 + $0x128] sm:$0xff] %v9437
      %9848 = vst [vmem:[%s339 + $0x130] sm:$0xff] %v9439
      %9849 = vst [vmem:[%s339 + $0x138] sm:$0xff] %v9441
      %9850 = vst [vmem:[%s339 + $0x140] sm:$0xff] %v9443
      %9851 = vst [vmem:[%s339 + $0x148] sm:$0xff] %v9445
      %9852 = vst [vmem:[%s339 + $0x150] sm:$0xff] %v9447
      %9853 = vst [vmem:[%s339 + $0x158] sm:$0xff] %v9449
      %9854 = vst [vmem:[%s339 + $0x160] sm:$0xff] %v9451
      %9855 = vst [vmem:[%s339 + $0x168] sm:$0xff] %v9453
      %9856 = vst [vmem:[%s339 + $0x170] sm:$0xff] %v9455
      %9857 = vst [vmem:[%s339 + $0x178] sm:$0xff] %v9457
      %9858 = vst [vmem:[%s339 + $0x180] sm:$0xff] %v9459
      %9859 = vst [vmem:[%s339 + $0x188] sm:$0xff] %v9461
      %9860 = vst [vmem:[%s339 + $0x190] sm:$0xff] %v9463
      %9861 = vst [vmem:[%s339 + $0x198] sm:$0xff] %v9465
      %9862 = vst [vmem:[%s339 + $0x1a0] sm:$0xff] %v9467
      %9863 = vst [vmem:[%s339 + $0x1a8] sm:$0xff] %v9469
      %9864 = vst [vmem:[%s339 + $0x1b0] sm:$0xff] %v9471
      %9865 = vst [vmem:[%s339 + $0x1b8] sm:$0xff] %v9473
      %9866 = vst [vmem:[%s339 + $0x1c0] sm:$0xff] %v9475
      %9867 = vst [vmem:[%s339 + $0x1c8] sm:$0xff] %v9477
      %9868 = vst [vmem:[%s339 + $0x1d0] sm:$0xff] %v9479
      %9869 = vst [vmem:[%s339 + $0x1d8] sm:$0xff] %v9481
      %9870 = vst [vmem:[%s339 + $0x1e0] sm:$0xff] %v9483
      %9871 = vst [vmem:[%s339 + $0x1e8] sm:$0xff] %v9485
      %9872 = vst [vmem:[%s339 + $0x1f0] sm:$0xff] %v9487
      %9873 = vst [vmem:[%s339 + $0x1f8] sm:$0xff] %v9489
      %9874 = vst [vmem:[%s339 + $0x200] sm:$0xff] %v9491
      %9875 = vst [vmem:[%s339 + $0x208] sm:$0xff] %v9493
      %9876 = vst [vmem:[%s339 + $0x210] sm:$0xff] %v9495
      %9877 = vst [vmem:[%s339 + $0x218] sm:$0xff] %v9497
      %9878 = vst [vmem:[%s339 + $0x220] sm:$0xff] %v9499
      %9879 = vst [vmem:[%s339 + $0x228] sm:$0xff] %v9501
      %9880 = vst [vmem:[%s339 + $0x230] sm:$0xff] %v9503
      %9881 = vst [vmem:[%s339 + $0x238] sm:$0xff] %v9505
      %9882 = vst [vmem:[%s339 + $0x240] sm:$0xff] %v9507
      %9883 = vst [vmem:[%s339 + $0x248] sm:$0xff] %v9509
      %9884 = vst [vmem:[%s339 + $0x250] sm:$0xff] %v9511
      %9885 = vst [vmem:[%s339 + $0x258] sm:$0xff] %v9513
      %9886 = vst [vmem:[%s339 + $0x260] sm:$0xff] %v9515
      %9887 = vst [vmem:[%s339 + $0x268] sm:$0xff] %v9517
      %9888 = vst [vmem:[%s339 + $0x270] sm:$0xff] %v9519
      %9889 = vst [vmem:[%s339 + $0x278] sm:$0xff] %v9521
      %9890 = vst [vmem:[%s339 + $0x280] sm:$0xff] %v9523
      %9891 = vst [vmem:[%s339 + $0x288] sm:$0xff] %v9525
      %9892 = vst [vmem:[%s339 + $0x290] sm:$0xff] %v9527
      %9893 = vst [vmem:[%s339 + $0x298] sm:$0xff] %v9529
      %9894 = vst [vmem:[%s339 + $0x2a0] sm:$0xff] %v9531
      %9895 = vst [vmem:[%s339 + $0x2a8] sm:$0xff] %v9533
      %9896 = vst [vmem:[%s339 + $0x2b0] sm:$0xff] %v9535
      %9897 = vst [vmem:[%s339 + $0x2b8] sm:$0xff] %v9537
      %9898 = vst [vmem:[%s339 + $0x2c0] sm:$0xff] %v9539
      %9899 = vst [vmem:[%s339 + $0x2c8] sm:$0xff] %v9541
      %9900 = vst [vmem:[%s339 + $0x2d0] sm:$0xff] %v9543
      %9901 = vst [vmem:[%s339 + $0x2d8] sm:$0xff] %v9545
      %9902 = vst [vmem:[%s339 + $0x2e0] sm:$0xff] %v9547
      %9903 = vst [vmem:[%s339 + $0x2e8] sm:$0xff] %v9549
      %9904 = vst [vmem:[%s339 + $0x2f0] sm:$0xff] %v9551
      %9905 = vst [vmem:[%s339 + $0x2f8] sm:$0xff] %v9553
      %9906 = vst [vmem:[%s339 + $0x300] sm:$0xff] %v9555
      %9907 = vst [vmem:[%s339 + $0x308] sm:$0xff] %v9557
      %9908 = vst [vmem:[%s339 + $0x310] sm:$0xff] %v9559
      %9909 = vst [vmem:[%s339 + $0x318] sm:$0xff] %v9561
      %9910 = vst [vmem:[%s339 + $0x320] sm:$0xff] %v9563
      %9911 = vst [vmem:[%s339 + $0x328] sm:$0xff] %v9565
      %9912 = vst [vmem:[%s339 + $0x330] sm:$0xff] %v9567
      %9913 = vst [vmem:[%s339 + $0x338] sm:$0xff] %v9569
      %9914 = vst [vmem:[%s339 + $0x340] sm:$0xff] %v9571
      %9915 = vst [vmem:[%s339 + $0x348] sm:$0xff] %v9573
      %9916 = vst [vmem:[%s339 + $0x350] sm:$0xff] %v9575
      %9917 = vst [vmem:[%s339 + $0x358] sm:$0xff] %v9577
      %9918 = vst [vmem:[%s339 + $0x360] sm:$0xff] %v9579
      %9919 = vst [vmem:[%s339 + $0x368] sm:$0xff] %v9581
      %9920 = vst [vmem:[%s339 + $0x370] sm:$0xff] %v9583
      %9921 = vst [vmem:[%s339 + $0x378] sm:$0xff] %v9585
      %9922 = vst [vmem:[%s339 + $0x380] sm:$0xff] %v9587
      %9923 = vst [vmem:[%s339 + $0x388] sm:$0xff] %v9589
      %9924 = vst [vmem:[%s339 + $0x390] sm:$0xff] %v9591
      %9925 = vst [vmem:[%s339 + $0x398] sm:$0xff] %v9593
      %9926 = vst [vmem:[%s339 + $0x3a0] sm:$0xff] %v9595
      %9927 = vst [vmem:[%s339 + $0x3a8] sm:$0xff] %v9597
      %9928 = vst [vmem:[%s339 + $0x3b0] sm:$0xff] %v9599
      %9929 = vst [vmem:[%s339 + $0x3b8] sm:$0xff] %v9601
      %9930 = vst [vmem:[%s339 + $0x3c0] sm:$0xff] %v9603
      %9931 = vst [vmem:[%s339 + $0x3c8] sm:$0xff] %v9605
      %9932 = vst [vmem:[%s339 + $0x3d0] sm:$0xff] %v9607
      %9933 = vst [vmem:[%s339 + $0x3d8] sm:$0xff] %v9609
      %9934 = vst [vmem:[%s339 + $0x3e0] sm:$0xff] %v9611
      %9935 = vst [vmem:[%s339 + $0x3e8] sm:$0xff] %v9613
      %9936 = vst [vmem:[%s339 + $0x3f0] sm:$0xff] %v9615
      %9937 = vst [vmem:[%s339 + $0x3f8] sm:$0xff] %v9617
      %9938 = vst [vmem:[%s339 + $0x400] sm:$0xff] %v9619
      %9939 = vst [vmem:[%s339 + $0x408] sm:$0xff] %v9621
      %9940 = vst [vmem:[%s339 + $0x410] sm:$0xff] %v9623
      %9941 = vst [vmem:[%s339 + $0x418] sm:$0xff] %v9625
      %9942 = vst [vmem:[%s339 + $0x420] sm:$0xff] %v9627
      %9943 = vst [vmem:[%s339 + $0x428] sm:$0xff] %v9629
      %9944 = vst [vmem:[%s339 + $0x430] sm:$0xff] %v9631
      %9945 = vst [vmem:[%s339 + $0x438] sm:$0xff] %v9633
      %9946 = vst [vmem:[%s339 + $0x440] sm:$0xff] %v9635
      %9947 = vst [vmem:[%s339 + $0x448] sm:$0xff] %v9637
      %9948 = vst [vmem:[%s339 + $0x450] sm:$0xff] %v9639
      %9949 = vst [vmem:[%s339 + $0x458] sm:$0xff] %v9641
      %9950 = vst [vmem:[%s339 + $0x460] sm:$0xff] %v9643
      %9951 = vst [vmem:[%s339 + $0x468] sm:$0xff] %v9645
      %9952 = vst [vmem:[%s339 + $0x470] sm:$0xff] %v9647
      %9953 = vst [vmem:[%s339 + $0x478] sm:$0xff] %v9649
      %9954 = vst [vmem:[%s339 + $0x480] sm:$0xff] %v9651
      %9955 = vst [vmem:[%s339 + $0x488] sm:$0xff] %v9653
      %9956 = vst [vmem:[%s339 + $0x490] sm:$0xff] %v9655
      %9957 = vst [vmem:[%s339 + $0x498] sm:$0xff] %v9657
      %9958 = vst [vmem:[%s339 + $0x4a0] sm:$0xff] %v9659
      %9959 = vst [vmem:[%s339 + $0x4a8] sm:$0xff] %v9661
      %9960 = vst [vmem:[%s339 + $0x4b0] sm:$0xff] %v9663
      %9961 = vst [vmem:[%s339 + $0x4b8] sm:$0xff] %v9665
      %9962 = vst [vmem:[%s339 + $0x4c0] sm:$0xff] %v9667
      %9963 = vst [vmem:[%s339 + $0x4c8] sm:$0xff] %v9669
      %9964 = vst [vmem:[%s339 + $0x4d0] sm:$0xff] %v9671
      %9965 = vst [vmem:[%s339 + $0x4d8] sm:$0xff] %v9673
      %9966 = vst [vmem:[%s339 + $0x4e0] sm:$0xff] %v9675
      %9967 = vst [vmem:[%s339 + $0x4e8] sm:$0xff] %v9677
      %9968 = vst [vmem:[%s339 + $0x4f0] sm:$0xff] %v9679
      %9969 = vst [vmem:[%s339 + $0x4f8] sm:$0xff] %v9681
      %9970 = vst [vmem:[%s339 + $0x500] sm:$0xff] %v9683
      %9971 = vst [vmem:[%s339 + $0x508] sm:$0xff] %v9685
      %9972 = vst [vmem:[%s339 + $0x510] sm:$0xff] %v9687
      %9973 = vst [vmem:[%s339 + $0x518] sm:$0xff] %v9689
      %9974 = vst [vmem:[%s339 + $0x520] sm:$0xff] %v9691
      %9975 = vst [vmem:[%s339 + $0x528] sm:$0xff] %v9693
      %9976 = vst [vmem:[%s339 + $0x530] sm:$0xff] %v9695
      %9977 = vst [vmem:[%s339 + $0x538] sm:$0xff] %v9697
      %9978 = vst [vmem:[%s339 + $0x540] sm:$0xff] %v9699
      %9979 = vst [vmem:[%s339 + $0x548] sm:$0xff] %v9701
      %9980 = vst [vmem:[%s339 + $0x550] sm:$0xff] %v9703
      %9981 = vst [vmem:[%s339 + $0x558] sm:$0xff] %v9705
      %9982 = vst [vmem:[%s339 + $0x560] sm:$0xff] %v9707
      %9983 = vst [vmem:[%s339 + $0x568] sm:$0xff] %v9709
      %9984 = vst [vmem:[%s339 + $0x570] sm:$0xff] %v9711
      %9985 = vst [vmem:[%s339 + $0x578] sm:$0xff] %v9713
      %9986 = vst [vmem:[%s339 + $0x580] sm:$0xff] %v9715
      %9987 = vst [vmem:[%s339 + $0x588] sm:$0xff] %v9717
      %9988 = vst [vmem:[%s339 + $0x590] sm:$0xff] %v9719
      %9989 = vst [vmem:[%s339 + $0x598] sm:$0xff] %v9721
      %9990 = vst [vmem:[%s339 + $0x5a0] sm:$0xff] %v9723
      %9991 = vst [vmem:[%s339 + $0x5a8] sm:$0xff] %v9725
      %9992 = vst [vmem:[%s339 + $0x5b0] sm:$0xff] %v9727
      %9993 = vst [vmem:[%s339 + $0x5b8] sm:$0xff] %v9729
      %9994 = vst [vmem:[%s339 + $0x5c0] sm:$0xff] %v9731
      %9995 = vst [vmem:[%s339 + $0x5c8] sm:$0xff] %v9733
      %9996 = vst [vmem:[%s339 + $0x5d0] sm:$0xff] %v9735
      %9997 = vst [vmem:[%s339 + $0x5d8] sm:$0xff] %v9737
      %9998 = vst [vmem:[%s339 + $0x5e0] sm:$0xff] %v9739
      %9999 = vst [vmem:[%s339 + $0x5e8] sm:$0xff] %v9741
      %10000 = vst [vmem:[%s339 + $0x5f0] sm:$0xff] %v9743
      %10001 = vst [vmem:[%s339 + $0x5f8] sm:$0xff] %v9745
      %10002 = vst [vmem:[%s339 + $0x600] sm:$0xff] %v9747
      %10003 = vst [vmem:[%s339 + $0x608] sm:$0xff] %v9749
      %10004 = vst [vmem:[%s339 + $0x610] sm:$0xff] %v9751
      %10005 = vst [vmem:[%s339 + $0x618] sm:$0xff] %v9753
      %10006 = vst [vmem:[%s339 + $0x620] sm:$0xff] %v9755
      %10007 = vst [vmem:[%s339 + $0x628] sm:$0xff] %v9757
      %10008 = vst [vmem:[%s339 + $0x630] sm:$0xff] %v9759
      %10009 = vst [vmem:[%s339 + $0x638] sm:$0xff] %v9761
      %10010 = vst [vmem:[%s339 + $0x640] sm:$0xff] %v9763
      %10011 = vst [vmem:[%s339 + $0x648] sm:$0xff] %v9765
      %10012 = vst [vmem:[%s339 + $0x650] sm:$0xff] %v9767
      %10013 = vst [vmem:[%s339 + $0x658] sm:$0xff] %v9769
      %10014 = vst [vmem:[%s339 + $0x660] sm:$0xff] %v9771
      %10015 = vst [vmem:[%s339 + $0x668] sm:$0xff] %v9773
      %10016 = vst [vmem:[%s339 + $0x670] sm:$0xff] %v9775
      %10017 = vst [vmem:[%s339 + $0x678] sm:$0xff] %v9777
      %10018 = vst [vmem:[%s339 + $0x680] sm:$0xff] %v9779
      %10019 = vst [vmem:[%s339 + $0x688] sm:$0xff] %v9781
      %10020 = vst [vmem:[%s339 + $0x690] sm:$0xff] %v9783
      %10021 = vst [vmem:[%s339 + $0x698] sm:$0xff] %v9785
      %10022 = vst [vmem:[%s339 + $0x6a0] sm:$0xff] %v9787
      %10023 = vst [vmem:[%s339 + $0x6a8] sm:$0xff] %v9789
      %10024 = vst [vmem:[%s339 + $0x6b0] sm:$0xff] %v9791
      %10025 = vst [vmem:[%s339 + $0x6b8] sm:$0xff] %v9793
      %10026 = vst [vmem:[%s339 + $0x6c0] sm:$0xff] %v9795
      %10027 = vst [vmem:[%s339 + $0x6c8] sm:$0xff] %v9797
      %10028 = vst [vmem:[%s339 + $0x6d0] sm:$0xff] %v9799
      %10029 = vst [vmem:[%s339 + $0x6d8] sm:$0xff] %v9801
      %10030 = vst [vmem:[%s339 + $0x6e0] sm:$0xff] %v9803
      %10031 = vst [vmem:[%s339 + $0x6e8] sm:$0xff] %v9805
      %10032 = vst [vmem:[%s339 + $0x6f0] sm:$0xff] %v9807
      %10033 = vst [vmem:[%s339 + $0x6f8] sm:$0xff] %v9809
      %s10034 = smul.u32 32, %s20
      %p10035 = scmp.lt.s32.totalorder %s10034, 63
      %s10036 = scalar_select %p10035, %s10034, 63
      %s10037 = smul.addr %s10036, 7
      %s10038 = smul.addr %s10037, 8
      %s10039 = scalar_lea.vmem %s9, %s10038
      // Predicated region
      $region57: #{autoencoder_forward.1} parent=55 // pred_check
        %p10040 = pneg %p232
      $region58: #{autoencoder_forward.1} parent=55 // pred_check_branch
        %10042 = sbr.rel (%p10040) target = $region60
      $region59: #{autoencoder_forward.1} parent=55 // pred_region
        %s10043 = smul.u32 32, %s20
      $region60: #{autoencoder_forward.1} parent=55 // pred_fallthru
        _
    $region56: #{autoencoder_forward.1} parent=5 // pred_fallthru
      _
    %p10044 = scmp.le.s32.totalorder 2, %s15
    // Predicated region
    $region61: #{autoencoder_forward.1} parent=5 // pred_check
      %p10045 = pneg %p10044
    $region62: #{autoencoder_forward.1} parent=5 // pred_check_branch
      %10047 = sbr.rel (%p10045) target = $region64
    $region63: #{autoencoder_forward.1} parent=5 // pred_region
      %s10048 = ssub.s32 %s15, 2
      // Predicated region
      $region65: #{autoencoder_forward.1} parent=63 // pred_check
        %p10049 = pneg %p238
      $region66: #{autoencoder_forward.1} parent=63 // pred_check_branch
        %10051 = sbr.rel (%p10049) target = $region68
      $region67: #{autoencoder_forward.1} parent=63 // pred_region
        %s10052 = smul.u32 32, %s21
        %p10053 = scmp.lt.s32.totalorder %s10052, 63
        %s10054 = scalar_select %p10053, %s10052, 63
        %s10055 = smul.addr %s10054, 7
        %s10056 = smul.addr %s10055, 8
        %s10057 = scalar_lea.vmem %s9, %s10056
      $region68: #{autoencoder_forward.1} parent=63 // pred_fallthru
        _
    $region64: #{autoencoder_forward.1} parent=5 // pred_fallthru
      _
  $region6: #{autoencoder_forward.1} parent=0 // loop_footer
    %s19 = sadd.s32 1, %s15
  $region7: #{autoencoder_forward.1} parent=0 // loop_footer_branch
    %14 = sbr.rel target = $region3
  $region8: #{autoencoder_forward.1} parent=0 // loop_exit
    _

</llo_original>
